<compile_context>
chip_gen: v5e
topology: v5e:2x2
jax: 0.10.0
libtpu: 0.0.40
codegen_flags: <defaults>
</compile_context>

<pallas_src>
import jax
import jax.numpy as jnp
from jax.experimental import pallas as pl
from jax.experimental.pallas import tpu as pltpu


OMIC_IN = 19962            # nn.Linear(19962, 256) in OmicNetwork
OMIC_IN_PAD = 19968        # next multiple of 128 (zero-padded; extra rows/cols contribute 0)
OMIC_HID = 256
OMIC_TK = 9984             # 78 * 128  -> 2 reduction steps over the padded K
DINO_DIM = 384             # WSIEncoder (Lunit-DINO ViT-S) embedding dim


# --------------------- single fused forward kernel ---------------------------
def _forward_kernel(x_ref, w1_ref, b1_ref,
                    xw_ref, wsi_w_ref, wsi_b_ref,
                    o2_w_ref, o2_b_ref,
                    f1w_wsi_ref, f1w_omic_ref, f1_b_ref,
                    f2_w_ref, f2_b_ref,
                    o_ref, acc_ref):
    """K-tiled omic layer-1 matmul; full multimodal head fused into last-K epilogue."""
    k = pl.program_id(0)

    @pl.when(k == 0)
    def _():
        acc_ref[...] = jnp.zeros_like(acc_ref)

    # Partial (B, tk) x (tk, 256) matmul into the f32 accumulator (bf16 inputs, MXU).
    acc_ref[...] += jnp.dot(
        x_ref[...], w1_ref[...], preferred_element_type=jnp.float32
    )

    @pl.when(k == pl.num_programs(0) - 1)
    def _():
        # OmicNetwork layer 1 epilogue: bias + ReLU.
        h = jnp.maximum(acc_ref[...] + b1_ref[...], 0.0)
        # OmicNetwork layer 2: Linear(256, ed_omic).
        omic = (
            jnp.dot(h, o2_w_ref[...], preferred_element_type=jnp.float32)
            + o2_b_ref[...]
        )
        # WSINetwork head: Linear(384, ed_wsi) + ReLU.
        wsi = jnp.maximum(
            jnp.dot(xw_ref[...], wsi_w_ref[...], preferred_element_type=jnp.float32)
            + wsi_b_ref[...],
            0.0,
        )
        # joint fusion concat + fused_mlp layer 1:
        # concat([wsi, omic]) @ W1 == wsi @ W1[:ed_wsi] + omic @ W1[ed_wsi:]
        f = (
            jnp.dot(wsi, f1w_wsi_ref[...], preferred_element_type=jnp.float32)
            + jnp.dot(omic, f1w_omic_ref[...], preferred_element_type=jnp.float32)
            + f1_b_ref[...]
        )
        f = jnp.maximum(f, 0.0)
        # fused_mlp layer 2: Linear(256, 1).
        out = (
            jnp.dot(f, f2_w_ref[...], preferred_element_type=jnp.float32)
            + f2_b_ref[...]
        )
        o_ref[...] = out.astype(o_ref.dtype)


def _multimodal_pallas(params, x_wsi_emb, x_pad_bf16):
    """One pallas_call for the whole forward. x_pad_bf16: (B, 19968) bf16."""
    B = x_pad_bf16.shape[0]
    nk = OMIC_IN_PAD // OMIC_TK

    args = (
        x_pad_bf16,
        params["omic_w1_pad_bf16"],
        params["omic_b1"],
        x_wsi_emb,
        params["wsi_w"], params["wsi_b"],
        params["omic_w2"], params["omic_b2"],
        params["fused_w1_wsi"], params["fused_w1_omic"], params["fused_b1"],
        params["fused_w2"], params["fused_b2"],
    )

    def resident(a):
        # Full-array block, constant index map -> VMEM-resident across the K grid.
        return pl.BlockSpec(a.shape, lambda k: (0, 0))

    in_specs = [
        pl.BlockSpec((B, OMIC_TK), lambda k: (0, k)),          # x (K-tiled)
        pl.BlockSpec((OMIC_TK, OMIC_HID), lambda k: (k, 0)),   # big weight (K-tiled)
    ] + [resident(a) for a in args[2:]]                        # ~150 KB of head params

    return pl.pallas_call(
        _forward_kernel,
        out_shape=jax.ShapeDtypeStruct((B, 1), jnp.float32),
        grid_spec=pltpu.PrefetchScalarGridSpec(
            num_scalar_prefetch=0,
            grid=(nk,),
            in_specs=in_specs,
            out_specs=pl.BlockSpec((B, 1), lambda k: (0, 0)),
            scratch_shapes=[pltpu.VMEM((B, OMIC_HID), jnp.float32)],
        ),
        compiler_params=pltpu.CompilerParams(
            dimension_semantics=("arbitrary",),        # K is a pure reduction axis
            vmem_limit_bytes=32 * 1024 * 1024,         # explicit: v5e default is only 16 MiB
        ),
    )(*args)


# ----------------------------- parameters ------------------------------------
def init_params(key, embedding_dim_wsi, embedding_dim_omic):
    ks = jax.random.split(key, 10)
    scale = 0.02

    def w(k, shape):
        return (scale * jax.random.normal(k, shape)).astype(jnp.float32)

    omic_w1 = w(ks[0], (OMIC_IN, OMIC_HID))
    # Pre-pad ONCE at init (not per forward) and store in bf16: the layer is pure HBM
    # bandwidth on this ~10 MB weight stream.
    omic_w1_pad = (
        jnp.zeros((OMIC_IN_PAD, OMIC_HID), jnp.float32).at[:OMIC_IN, :].set(omic_w1)
    )

    fused_w1 = w(ks[6], (embedding_dim_wsi + embedding_dim_omic, OMIC_HID))

    params = {
        # OmicNetwork: Linear(19962, 256) -> ReLU -> Linear(256, ed_omic)
        "omic_w1_pad_bf16": omic_w1_pad.astype(jnp.bfloat16),
        "omic_b1": w(ks[1], (1, OMIC_HID)),
        "omic_w2": w(ks[2], (OMIC_HID, embedding_dim_omic)),
        "omic_b2": w(ks[3], (1, embedding_dim_omic)),
        # WSINetwork head: Linear(384, ed_wsi) -> ReLU
        "wsi_w": w(ks[4], (DINO_DIM, embedding_dim_wsi)),
        "wsi_b": w(ks[5], (1, embedding_dim_wsi)),
        # fused_mlp: Linear(ed_wsi + ed_omic, 256) -> ReLU -> Linear(256, 1)
        # stored pre-split so the concat is a split matmul inside the kernel
        "fused_w1_wsi": fused_w1[:embedding_dim_wsi, :],
        "fused_w1_omic": fused_w1[embedding_dim_wsi:, :],
        "fused_b1": w(ks[7], (1, OMIC_HID)),
        "fused_w2": w(ks[8], (OMIC_HID, 1)),
        "fused_b2": w(ks[9], (1, 1)),
    }
    return params


# ----------------------------- forward ----------------------------------------
@jax.jit
def multimodal_forward(params, x_wsi_emb, x_omic):
    """Forward of MultimodalNetwork(mode='wsi_omic', fusion_type='joint').

    x_wsi_emb: (B, 384)   pre-extracted DINO embeddings (stand-in for WSIEncoder output)
    x_omic:    (B, 19962) omic features
    returns:   (B, 1)     risk score
    """
    # Pad K to a multiple of 128 and cast to bf16 (activation is ~80 KB: negligible).
    x_pad = jnp.pad(x_omic, ((0, 0), (0, OMIC_IN_PAD - OMIC_IN))).astype(jnp.bfloat16)
    return _multimodal_pallas(params, x_wsi_emb, x_pad)


# ----------------------------- Pure-JAX reference check ----------------------
def reference_forward(params, x_wsi_emb, x_omic):
    # Use the same bf16-rounded big weight/input as the kernel so the check isolates
    # kernel numerics rather than quantization.
    w1 = params["omic_w1_pad_bf16"][:OMIC_IN, :].astype(jnp.float32)
    x_bf = x_omic.astype(jnp.bfloat16).astype(jnp.float32)
    h = jnp.maximum(x_bf @ w1 + params["omic_b1"], 0.0)
    omic = h @ params["omic_w2"] + params["omic_b2"]
    wsi = jnp.maximum(x_wsi_emb @ params["wsi_w"] + params["wsi_b"], 0.0)
    comb = jnp.concatenate([wsi, omic], axis=1)
    w_f1 = jnp.concatenate([params["fused_w1_wsi"], params["fused_w1_omic"]], axis=0)
    f = jnp.maximum(comb @ w_f1 + params["fused_b1"], 0.0)
    return f @ params["fused_w2"] + params["fused_b2"]


# ----------------------------- main -------------------------------------------
if __name__ == "__main__":
    key = jax.random.PRNGKey(0)
    k_params, k_wsi, k_omic = jax.random.split(key, 3)

    batch = 2
    embedding_dim_wsi = 32
    embedding_dim_omic = 32

    params = init_params(k_params, embedding_dim_wsi, embedding_dim_omic)

    # x_wsi: pre-extracted DINO ViT-S embeddings; x_omic: raw omic feature vector.
    x_wsi_emb = jax.random.normal(k_wsi, (batch, DINO_DIM), dtype=jnp.float32)
    x_omic = jax.random.normal(k_omic, (batch, OMIC_IN), dtype=jnp.float32)

    out = multimodal_forward(params, x_wsi_emb, x_omic)
    out = jax.block_until_ready(out)
    assert out.shape == (batch, 1), out.shape

    ref = reference_forward(params, x_wsi_emb, x_omic)
    assert jnp.allclose(out, ref, atol=1e-2, rtol=1e-2), (out, ref)

    print("KERNEL_OK")
</pallas_src>

<mosaic_0001>
module attributes {stable_mosaic.version = 11 : i64} {
  func.func @_forward_kernel(%arg0: i32, %arg1: memref<2x9984xbf16, #tpu.memory_space<vmem>>, %arg2: memref<9984x256xbf16, #tpu.memory_space<vmem>>, %arg3: memref<1x256xf32, #tpu.memory_space<vmem>>, %arg4: memref<2x384xf32, #tpu.memory_space<vmem>>, %arg5: memref<384x32xf32, #tpu.memory_space<vmem>>, %arg6: memref<1x32xf32, #tpu.memory_space<vmem>>, %arg7: memref<256x32xf32, #tpu.memory_space<vmem>>, %arg8: memref<1x32xf32, #tpu.memory_space<vmem>>, %arg9: memref<32x256xf32, #tpu.memory_space<vmem>>, %arg10: memref<32x256xf32, #tpu.memory_space<vmem>>, %arg11: memref<1x256xf32, #tpu.memory_space<vmem>>, %arg12: memref<256x1xf32, #tpu.memory_space<vmem>>, %arg13: memref<1x1xf32, #tpu.memory_space<vmem>>, %arg14: memref<2x1xf32, #tpu.memory_space<vmem>>, %arg15: memref<2x256xf32, #tpu.memory_space<vmem>>) attributes {dimension_semantics = [#tpu.dimension_semantics<arbitrary>], iteration_bounds = array<i64: 2>, scalar_prefetch = 0 : i64, scratch_operands = 1 : i64, tpu.core_type = #tpu.core_type<tc>, window_params = [{transform_indices = @transform_0, window_bounds = array<i64: 2, 9984>}, {transform_indices = @transform_1, window_bounds = array<i64: 9984, 256>}, {pipeline_mode = #tpu.pipeline_mode<synchronous>, transform_indices = @transform_2, window_bounds = array<i64: 1, 256>}, {pipeline_mode = #tpu.pipeline_mode<synchronous>, transform_indices = @transform_3, window_bounds = array<i64: 2, 384>}, {pipeline_mode = #tpu.pipeline_mode<synchronous>, transform_indices = @transform_4, window_bounds = array<i64: 384, 32>}, {pipeline_mode = #tpu.pipeline_mode<synchronous>, transform_indices = @transform_5, window_bounds = array<i64: 1, 32>}, {pipeline_mode = #tpu.pipeline_mode<synchronous>, transform_indices = @transform_6, window_bounds = array<i64: 256, 32>}, {pipeline_mode = #tpu.pipeline_mode<synchronous>, transform_indices = @transform_7, window_bounds = array<i64: 1, 32>}, {pipeline_mode = #tpu.pipeline_mode<synchronous>, transform_indices = @transform_8, window_bounds = array<i64: 32, 256>}, {pipeline_mode = #tpu.pipeline_mode<synchronous>, transform_indices = @transform_9, window_bounds = array<i64: 32, 256>}, {pipeline_mode = #tpu.pipeline_mode<synchronous>, transform_indices = @transform_10, window_bounds = array<i64: 1, 256>}, {pipeline_mode = #tpu.pipeline_mode<synchronous>, transform_indices = @transform_11, window_bounds = array<i64: 256, 1>}, {pipeline_mode = #tpu.pipeline_mode<synchronous>, transform_indices = @transform_12, window_bounds = array<i64: 1, 1>}, {pipeline_mode = #tpu.pipeline_mode<synchronous>, transform_indices = @transform_13, window_bounds = array<i64: 2, 1>}]} {
    %c0_i32 = arith.constant 0 : i32
    %0 = arith.cmpi eq, %arg0, %c0_i32 : i32
    %1 = arith.extui %0 : i1 to i32
    %c0_i32_0 = arith.constant 0 : i32
    %2 = arith.cmpi ne, %1, %c0_i32_0 : i32
    scf.if %2 {
      %cst_9 = arith.constant 0.000000e+00 : f32
      %12 = vector.broadcast %cst_9 : f32 to vector<2x256xf32>
      %c0_10 = arith.constant 0 : index
      %c0_11 = arith.constant 0 : index
      %13 = vector.load %arg15[%c0_10, %c0_11] : memref<2x256xf32, #tpu.memory_space<vmem>>, vector<2x256xf32>
      tpu.vector_store %arg15[%c0_10, %c0_11], %12 {strides = array<i32>} : memref<2x256xf32, #tpu.memory_space<vmem>>, vector<2x256xf32>,
    } else {
    }
    %c0 = arith.constant 0 : index
    %c0_1 = arith.constant 0 : index
    %3 = vector.load %arg15[%c0, %c0_1] : memref<2x256xf32, #tpu.memory_space<vmem>>, vector<2x256xf32>
    %c0_2 = arith.constant 0 : index
    %c0_3 = arith.constant 0 : index
    %4 = vector.load %arg1[%c0_2, %c0_3] : memref<2x9984xbf16, #tpu.memory_space<vmem>>, vector<2x9984xbf16>
    %c0_4 = arith.constant 0 : index
    %c0_5 = arith.constant 0 : index
    %5 = vector.load %arg2[%c0_4, %c0_5] : memref<9984x256xbf16, #tpu.memory_space<vmem>>, vector<9984x256xbf16>
    %cst = arith.constant dense<0.000000e+00> : vector<2x256xf32>
    %6 = tpu.matmul %4, %5, %cst {dimension_numbers = #tpu.dot_dimension_numbers<[1], [0], [0], [1], [0, 0, 1, 1], [], []>} : vector<2x9984xbf16>, vector<9984x256xbf16>, vector<2x256xf32> -> vector<2x256xf32>
    %7 = arith.addf %3, %6 : vector<2x256xf32>
    %c0_6 = arith.constant 0 : index
    %c0_7 = arith.constant 0 : index
    %8 = vector.load %arg15[%c0_6, %c0_7] : memref<2x256xf32, #tpu.memory_space<vmem>>, vector<2x256xf32>
    tpu.vector_store %arg15[%c0_6, %c0_7], %7 {strides = array<i32>} : memref<2x256xf32, #tpu.memory_space<vmem>>, vector<2x256xf32>,
    %c1_i32 = arith.constant 1 : i32
    %9 = arith.cmpi eq, %arg0, %c1_i32 : i32
    %10 = arith.extui %9 : i1 to i32
    %c0_i32_8 = arith.constant 0 : i32
    %11 = arith.cmpi ne, %10, %c0_i32_8 : i32
    scf.if %11 {
      %c0_9 = arith.constant 0 : index
      %c0_10 = arith.constant 0 : index
      %12 = vector.load %arg15[%c0_9, %c0_10] : memref<2x256xf32, #tpu.memory_space<vmem>>, vector<2x256xf32>
      %c0_11 = arith.constant 0 : index
      %c0_12 = arith.constant 0 : index
      %13 = vector.load %arg3[%c0_11, %c0_12] : memref<1x256xf32, #tpu.memory_space<vmem>>, vector<1x256xf32>
      %14 = vector.broadcast %13 : vector<1x256xf32> to vector<2x256xf32>
      %15 = arith.addf %12, %14 : vector<2x256xf32>
      %cst_13 = arith.constant 0.000000e+00 : f32
      %16 = vector.broadcast %cst_13 : f32 to vector<2x256xf32>
      %17 = arith.maximumf %15, %16 : vector<2x256xf32>
      %c0_14 = arith.constant 0 : index
      %c0_15 = arith.constant 0 : index
      %18 = vector.load %arg7[%c0_14, %c0_15] : memref<256x32xf32, #tpu.memory_space<vmem>>, vector<256x32xf32>
      %cst_16 = arith.constant dense<0.000000e+00> : vector<2x32xf32>
      %19 = tpu.matmul %17, %18, %cst_16 {dimension_numbers = #tpu.dot_dimension_numbers<[1], [0], [0], [1], [0, 0, 1, 1], [], []>} : vector<2x256xf32>, vector<256x32xf32>, vector<2x32xf32> -> vector<2x32xf32>
      %c0_17 = arith.constant 0 : index
      %c0_18 = arith.constant 0 : index
      %20 = vector.load %arg8[%c0_17, %c0_18] : memref<1x32xf32, #tpu.memory_space<vmem>>, vector<1x32xf32>
      %21 = vector.broadcast %20 : vector<1x32xf32> to vector<2x32xf32>
      %22 = arith.addf %19, %21 : vector<2x32xf32>
      %c0_19 = arith.constant 0 : index
      %c0_20 = arith.constant 0 : index
      %23 = vector.load %arg4[%c0_19, %c0_20] : memref<2x384xf32, #tpu.memory_space<vmem>>, vector<2x384xf32>
      %c0_21 = arith.constant 0 : index
      %c0_22 = arith.constant 0 : index
      %24 = vector.load %arg5[%c0_21, %c0_22] : memref<384x32xf32, #tpu.memory_space<vmem>>, vector<384x32xf32>
      %cst_23 = arith.constant dense<0.000000e+00> : vector<2x32xf32>
      %25 = tpu.matmul %23, %24, %cst_23 {dimension_numbers = #tpu.dot_dimension_numbers<[1], [0], [0], [1], [0, 0, 1, 1], [], []>} : vector<2x384xf32>, vector<384x32xf32>, vector<2x32xf32> -> vector<2x32xf32>
      %c0_24 = arith.constant 0 : index
      %c0_25 = arith.constant 0 : index
      %26 = vector.load %arg6[%c0_24, %c0_25] : memref<1x32xf32, #tpu.memory_space<vmem>>, vector<1x32xf32>
      %27 = vector.broadcast %26 : vector<1x32xf32> to vector<2x32xf32>
      %28 = arith.addf %25, %27 : vector<2x32xf32>
      %cst_26 = arith.constant 0.000000e+00 : f32
      %29 = vector.broadcast %cst_26 : f32 to vector<2x32xf32>
      %30 = arith.maximumf %28, %29 : vector<2x32xf32>
      %c0_27 = arith.constant 0 : index
      %c0_28 = arith.constant 0 : index
      %31 = vector.load %arg9[%c0_27, %c0_28] : memref<32x256xf32, #tpu.memory_space<vmem>>, vector<32x256xf32>
      %cst_29 = arith.constant dense<0.000000e+00> : vector<2x256xf32>
      %32 = tpu.matmul %30, %31, %cst_29 {dimension_numbers = #tpu.dot_dimension_numbers<[1], [0], [0], [1], [0, 0, 1, 1], [], []>} : vector<2x32xf32>, vector<32x256xf32>, vector<2x256xf32> -> vector<2x256xf32>
      %c0_30 = arith.constant 0 : index
      %c0_31 = arith.constant 0 : index
      %33 = vector.load %arg10[%c0_30, %c0_31] : memref<32x256xf32, #tpu.memory_space<vmem>>, vector<32x256xf32>
      %cst_32 = arith.constant dense<0.000000e+00> : vector<2x256xf32>
      %34 = tpu.matmul %22, %33, %cst_32 {dimension_numbers = #tpu.dot_dimension_numbers<[1], [0], [0], [1], [0, 0, 1, 1], [], []>} : vector<2x32xf32>, vector<32x256xf32>, vector<2x256xf32> -> vector<2x256xf32>
      %35 = arith.addf %32, %34 : vector<2x256xf32>
      %c0_33 = arith.constant 0 : index
      %c0_34 = arith.constant 0 : index
      %36 = vector.load %arg11[%c0_33, %c0_34] : memref<1x256xf32, #tpu.memory_space<vmem>>, vector<1x256xf32>
      %37 = vector.broadcast %36 : vector<1x256xf32> to vector<2x256xf32>
      %38 = arith.addf %35, %37 : vector<2x256xf32>
      %cst_35 = arith.constant 0.000000e+00 : f32
      %39 = vector.broadcast %cst_35 : f32 to vector<2x256xf32>
      %40 = arith.maximumf %38, %39 : vector<2x256xf32>
      %c0_36 = arith.constant 0 : index
      %c0_37 = arith.constant 0 : index
      %41 = vector.load %arg12[%c0_36, %c0_37] : memref<256x1xf32, #tpu.memory_space<vmem>>, vector<256x1xf32>
      %cst_38 = arith.constant dense<0.000000e+00> : vector<2x1xf32>
      %42 = tpu.matmul %40, %41, %cst_38 {dimension_numbers = #tpu.dot_dimension_numbers<[1], [0], [0], [1], [0, 0, 1, 1], [], []>} : vector<2x256xf32>, vector<256x1xf32>, vector<2x1xf32> -> vector<2x1xf32>
      %c0_39 = arith.constant 0 : index
      %c0_40 = arith.constant 0 : index
      %43 = vector.load %arg13[%c0_39, %c0_40] : memref<1x1xf32, #tpu.memory_space<vmem>>, vector<1x1xf32>
      %44 = vector.broadcast %43 : vector<1x1xf32> to vector<2x1xf32>
      %45 = arith.addf %42, %44 : vector<2x1xf32>
      %c0_41 = arith.constant 0 : index
      %c0_42 = arith.constant 0 : index
      %46 = vector.load %arg14[%c0_41, %c0_42] : memref<2x1xf32, #tpu.memory_space<vmem>>, vector<2x1xf32>
      tpu.vector_store %arg14[%c0_41, %c0_42], %45 {strides = array<i32>} : memref<2x1xf32, #tpu.memory_space<vmem>>, vector<2x1xf32>,
    } else {
    }
    return
  }
  func.func @transform_0(%arg0: i32) -> (i32, i32) {
    %c0_i32 = arith.constant 0 : i32
    %c0_i32_0 = arith.constant 0 : i32
    return %c0_i32, %arg0 : i32, i32
  }
  func.func @transform_1(%arg0: i32) -> (i32, i32) {
    %c0_i32 = arith.constant 0 : i32
    %c0_i32_0 = arith.constant 0 : i32
    return %arg0, %c0_i32 : i32, i32
  }
  func.func @transform_2(%arg0: i32) -> (i32, i32) {
    %c0_i32 = arith.constant 0 : i32
    %c0_i32_0 = arith.constant 0 : i32
    %c0_i32_1 = arith.constant 0 : i32
    return %c0_i32, %c0_i32_0 : i32, i32
  }
  func.func @transform_3(%arg0: i32) -> (i32, i32) {
    %c0_i32 = arith.constant 0 : i32
    %c0_i32_0 = arith.constant 0 : i32
    %c0_i32_1 = arith.constant 0 : i32
    return %c0_i32, %c0_i32_0 : i32, i32
  }
  func.func @transform_4(%arg0: i32) -> (i32, i32) {
    %c0_i32 = arith.constant 0 : i32
    %c0_i32_0 = arith.constant 0 : i32
    %c0_i32_1 = arith.constant 0 : i32
    return %c0_i32, %c0_i32_0 : i32, i32
  }
  func.func @transform_5(%arg0: i32) -> (i32, i32) {
    %c0_i32 = arith.constant 0 : i32
    %c0_i32_0 = arith.constant 0 : i32
    %c0_i32_1 = arith.constant 0 : i32
    return %c0_i32, %c0_i32_0 : i32, i32
  }
  func.func @transform_6(%arg0: i32) -> (i32, i32) {
    %c0_i32 = arith.constant 0 : i32
    %c0_i32_0 = arith.constant 0 : i32
    %c0_i32_1 = arith.constant 0 : i32
    return %c0_i32, %c0_i32_0 : i32, i32
  }
  func.func @transform_7(%arg0: i32) -> (i32, i32) {
    %c0_i32 = arith.constant 0 : i32
    %c0_i32_0 = arith.constant 0 : i32
    %c0_i32_1 = arith.constant 0 : i32
    return %c0_i32, %c0_i32_0 : i32, i32
  }
  func.func @transform_8(%arg0: i32) -> (i32, i32) {
    %c0_i32 = arith.constant 0 : i32
    %c0_i32_0 = arith.constant 0 : i32
    %c0_i32_1 = arith.constant 0 : i32
    return %c0_i32, %c0_i32_0 : i32, i32
  }
  func.func @transform_9(%arg0: i32) -> (i32, i32) {
    %c0_i32 = arith.constant 0 : i32
    %c0_i32_0 = arith.constant 0 : i32
    %c0_i32_1 = arith.constant 0 : i32
    return %c0_i32, %c0_i32_0 : i32, i32
  }
  func.func @transform_10(%arg0: i32) -> (i32, i32) {
    %c0_i32 = arith.constant 0 : i32
    %c0_i32_0 = arith.constant 0 : i32
    %c0_i32_1 = arith.constant 0 : i32
    return %c0_i32, %c0_i32_0 : i32, i32
  }
  func.func @transform_11(%arg0: i32) -> (i32, i32) {
    %c0_i32 = arith.constant 0 : i32
    %c0_i32_0 = arith.constant 0 : i32
    %c0_i32_1 = arith.constant 0 : i32
    return %c0_i32, %c0_i32_0 : i32, i32
  }
  func.func @transform_12(%arg0: i32) -> (i32, i32) {
    %c0_i32 = arith.constant 0 : i32
    %c0_i32_0 = arith.constant 0 : i32
    %c0_i32_1 = arith.constant 0 : i32
    return %c0_i32, %c0_i32_0 : i32, i32
  }
  func.func @transform_13(%arg0: i32) -> (i32, i32) {
    %c0_i32 = arith.constant 0 : i32
    %c0_i32_0 = arith.constant 0 : i32
    %c0_i32_1 = arith.constant 0 : i32
    return %c0_i32, %c0_i32_0 : i32, i32
  }
}

</mosaic_0001>

<llo_original>
// kernel: multimodal_forward.1
$region0: #{multimodal_forward.1}
  #allocation0 [shape = 'u32[]', space=smem, size = 0x4, offset = 0x4, fixed_abs, tag = 'smem constant byte address 0x4 - core index']
  #allocation1 [shape = 'u32[72,128]{1,0:T(1,128)}', space=vmem, size = 0x9000, scoped, tag = 'internal scratch']
  #allocation2 [shape = 'f32[2,256]{1,0:T(2,128)}', space=vmem, size = 0x800, scoped, tag = 'scratch operand']
  #allocation3 [shape = 'f32[1,1]{1,0:T(1,128)S(1)}', space=vmem, size = 0x200, scoped, tag = 'scoped memory for multimodal_forward.1']
  %s0 = inlined_call_operand.vmem [shape: bf16[2,19968], index: 0, kind: input, shape index: {}]
  %s1 = inlined_call_operand.hbm [shape: bf16[19968,256], index: 1, kind: input, shape index: {}]
  %s2 = inlined_call_operand.hbm [shape: f32[1,256], index: 2, kind: input, shape index: {}]
  %s3 = inlined_call_operand.hbm [shape: f32[2,384], index: 3, kind: input, shape index: {}]
  %s4 = inlined_call_operand.vmem [shape: f32[384,32], index: 4, kind: input, shape index: {}]
  %s5 = inlined_call_operand.hbm [shape: f32[1,32], index: 5, kind: input, shape index: {}]
  %s6 = inlined_call_operand.vmem [shape: f32[256,32], index: 6, kind: input, shape index: {}]
  %s7 = inlined_call_operand.hbm [shape: f32[1,32], index: 7, kind: input, shape index: {}]
  %s8 = inlined_call_operand.hbm [shape: f32[32,256], index: 8, kind: input, shape index: {}]
  %s9 = inlined_call_operand.hbm [shape: f32[32,256], index: 9, kind: input, shape index: {}]
  %s10 = inlined_call_operand.hbm [shape: f32[1,256], index: 10, kind: input, shape index: {}]
  %s11 = inlined_call_operand.vmem [shape: f32[256,1], index: 11, kind: input, shape index: {}]
  %s12 = inlined_call_operand.<no memory space> [shape: f32[1,1], index: 12, kind: input, shape index: {}]
  %s13 = inlined_call_operand.vmem [shape: f32[2,1], index: 13, kind: output, shape index: {}]
  %s14 = sld [smem:[#allocation0]]
  $region125: #{multimodal_forward.1} parent=0
    _
  %s16 = ssub.s32 1, %s14
  %s17 = scalar_select 0, %s16, %s14
  %v18 = vstv %s12
  %19 = vst [vmem:[#allocation3] sm:$0x1] %v18
  $region1: #{multimodal_forward.1} parent=0
    #allocation4 [shape = 'u8[10223616]{0}', space=vmem, size = 0x9c0000, scoped, tag = 'input window, operand 1']
    #allocation5 [shape = 's32[2]{0}', space=sflag, size = 0x8, scoped, tag = 'scoped memory for multimodal_forward.1']
    #allocation6 [shape = 'u8[1024]{0}', space=vmem, size = 0x400, scoped, tag = 'input window, operand 2, single buffered']
    #allocation7 [shape = 's32[1]{0}', space=sflag, size = 0x4, scoped, tag = 'scoped memory for multimodal_forward.1']
    #allocation8 [shape = 'u8[3072]{0}', space=vmem, size = 0xc00, scoped, tag = 'input window, operand 3, single buffered']
    #allocation9 [shape = 'u8[512]{0}', space=vmem, size = 0x400, scoped, tag = 'input window, operand 5, single buffered']
    #allocation10 [shape = 's32[1]{0}', space=sflag, size = 0x4, scoped, tag = 'scoped memory for multimodal_forward.1']
    #allocation11 [shape = 'u8[512]{0}', space=vmem, size = 0x400, scoped, tag = 'input window, operand 7, single buffered']
    #allocation12 [shape = 'u8[32768]{0}', space=vmem, size = 0x8000, scoped, tag = 'input window, operand 8, single buffered']
    #allocation13 [shape = 's32[1]{0}', space=sflag, size = 0x4, scoped, tag = 'scoped memory for multimodal_forward.1']
    #allocation14 [shape = 'u8[32768]{0}', space=vmem, size = 0x8000, scoped, tag = 'input window, operand 9, single buffered']
    #allocation15 [shape = 'u8[1024]{0}', space=vmem, size = 0x400, scoped, tag = 'input window, operand 10, single buffered']
    #allocation16 [shape = 's32[1]{0}', space=sflag, size = 0x4, scoped, tag = 'scoped memory for multimodal_forward.1']
    %20 = vsyncpa [#allocation5], 0
    %s21 = scalar_lea.sflag [#allocation5], 1
    %22 = vsyncpa %s21, 0
    %23 = vsyncpa [#allocation7], 0
    %24 = vsyncpa [#allocation10], 0
    %25 = vsyncpa [#allocation13], 0
    %26 = vsyncpa [#allocation16], 0
    loop: start=0, step=1, limit=4
    $region2: #{multimodal_forward.1} parent=1 // loop_pre_header
      _
    $region3: #{multimodal_forward.1} parent=1 // loop_header
      %s28 = sphi 0, %s32
      %p29 = scmp.ge.s32.totalorder %s28, 4
      %s38 = sphi 0, %s40
      %s41 = sphi 0, %s38
      %s42 = sphi 0, %s41
      %s58 = sphi 0, %s42
      %s64 = sphi 0, %s66
      %s67 = sphi 0, %s64
      %s68 = sphi 0, %s67
      %s84 = sphi 0, %s68
      %s88 = sphi 0, %s88
      %s90 = sphi 0, %s88
      %s91 = sphi 0, %s90
      %s105 = sphi 0, %s91
      %s109 = sphi 0, %s109
      %s111 = sphi 0, %s109
      %s112 = sphi 0, %s111
      %s126 = sphi 0, %s112
      %s130 = sphi 0, %s130
      %s132 = sphi 0, %s130
      %s133 = sphi 0, %s132
      %s147 = sphi 0, %s133
      %s151 = sphi 0, %s151
      %s153 = sphi 0, %s151
      %s154 = sphi 0, %s153
      %s168 = sphi 0, %s154
      %s172 = sphi 0, %s172
      %s174 = sphi 0, %s172
      %s175 = sphi 0, %s174
      %s189 = sphi 0, %s175
      %s193 = sphi 0, %s193
      %s195 = sphi 0, %s193
      %s196 = sphi 0, %s195
      %s210 = sphi 0, %s196
      %s214 = sphi 0, %s214
      %s216 = sphi 0, %s214
      %s217 = sphi 0, %s216
      %s231 = sphi 0, %s217
      %s235 = sphi 0, %s235
      %s237 = sphi 0, %s235
      %s238 = sphi 0, %s237
      %s252 = sphi 0, %s238
      %s256 = sphi 0, %s256
      %s258 = sphi 0, %s256
      %s259 = sphi 0, %s258
      %s273 = sphi 0, %s259
      %s277 = sphi 0, %s277
      %s279 = sphi 0, %s277
      %s280 = sphi 0, %s279
      %s294 = sphi 0, %s280
      %s298 = sphi 0, %s298
      %s300 = sphi 0, %s298
      %s301 = sphi 0, %s300
      %s315 = sphi 0, %s301
      %s319 = sphi 0, %s319
      %s321 = sphi 0, %s319
      %s322 = sphi 0, %s321
      %s336 = sphi 0, %s322
    $region4: #{multimodal_forward.1} parent=1 // loop_header_branch
      %31 = sbr.rel (%p29) target = $region8
    $region5: #{multimodal_forward.1} parent=1 // loop_body
      %s33 = ssub.s32 %s28, 1
      %s34 = ssub.s32 %s28, 2
      %s35 = sadd.s32 %s28, 1
      %s36 = ssub.s32 %s28, %s35
      %p37 = scmp.eq.s32.totalorder %s36, 0
      %s39 = sadd.s32 %s38, 1
      %s40 = scalar_select %p37, %s38, %s39
      %p43 = pneg %p37
      %p44 = scmp.eq.s32.totalorder %s28, 1
      %p45 = por %p43, %p44
      %p46 = scmp.ne.s32.totalorder %s38, %s41
      %p47 = scmp.eq.s32.totalorder %s28, 0
      %p48 = por %p46, %p47
      %p49 = scmp.ne.s32.totalorder %s38, %s41
      %p50 = scmp.eq.s32.totalorder %s33, 1
      %p51 = por %p49, %p50
      %p52 = scmp.ne.s32.totalorder %s41, %s42
      %p53 = scmp.eq.s32.totalorder %s33, 0
      %p54 = por %p52, %p53
      %p55 = scmp.ne.s32.totalorder %s41, %s42
      %p56 = scmp.eq.s32.totalorder %s34, 1
      %p57 = por %p55, %p56
      %p59 = scmp.ne.s32.totalorder %s42, %s58
      %p60 = scmp.eq.s32.totalorder %s34, 0
      %p61 = por %p59, %p60
      %s62 = ssub.s32 %s28, %s35
      %p63 = scmp.eq.s32.totalorder %s62, 0
      %s65 = sadd.s32 %s64, 1
      %s66 = scalar_select %p63, %s64, %s65
      %p69 = pneg %p63
      %p70 = scmp.eq.s32.totalorder %s28, 1
      %p71 = por %p69, %p70
      %p72 = scmp.ne.s32.totalorder %s64, %s67
      %p73 = scmp.eq.s32.totalorder %s28, 0
      %p74 = por %p72, %p73
      %p75 = scmp.ne.s32.totalorder %s64, %s67
      %p76 = scmp.eq.s32.totalorder %s33, 1
      %p77 = por %p75, %p76
      %p78 = scmp.ne.s32.totalorder %s67, %s68
      %p79 = scmp.eq.s32.totalorder %s33, 0
      %p80 = por %p78, %p79
      %p81 = scmp.ne.s32.totalorder %s67, %s68
      %p82 = scmp.eq.s32.totalorder %s34, 1
      %p83 = por %p81, %p82
      %p85 = scmp.ne.s32.totalorder %s68, %s84
      %p86 = scmp.eq.s32.totalorder %s34, 0
      %p87 = por %p85, %p86
      %s89 = sadd.s32 %s88, 1
      %p92 = scmp.eq.s32.totalorder %s28, 1
      %p93 = scmp.ne.s32.totalorder %s88, %s90
      %p94 = scmp.eq.s32.totalorder %s28, 0
      %p95 = por %p93, %p94
      %p96 = scmp.ne.s32.totalorder %s88, %s90
      %p97 = scmp.eq.s32.totalorder %s33, 1
      %p98 = por %p96, %p97
      %p99 = scmp.ne.s32.totalorder %s90, %s91
      %p100 = scmp.eq.s32.totalorder %s33, 0
      %p101 = por %p99, %p100
      %p102 = scmp.ne.s32.totalorder %s90, %s91
      %p103 = scmp.eq.s32.totalorder %s34, 1
      %p104 = por %p102, %p103
      %p106 = scmp.ne.s32.totalorder %s91, %s105
      %p107 = scmp.eq.s32.totalorder %s34, 0
      %p108 = por %p106, %p107
      %s110 = sadd.s32 %s109, 1
      %p113 = scmp.eq.s32.totalorder %s28, 1
      %p114 = scmp.ne.s32.totalorder %s109, %s111
      %p115 = scmp.eq.s32.totalorder %s28, 0
      %p116 = por %p114, %p115
      %p117 = scmp.ne.s32.totalorder %s109, %s111
      %p118 = scmp.eq.s32.totalorder %s33, 1
      %p119 = por %p117, %p118
      %p120 = scmp.ne.s32.totalorder %s111, %s112
      %p121 = scmp.eq.s32.totalorder %s33, 0
      %p122 = por %p120, %p121
      %p123 = scmp.ne.s32.totalorder %s111, %s112
      %p124 = scmp.eq.s32.totalorder %s34, 1
      %p125 = por %p123, %p124
      %p127 = scmp.ne.s32.totalorder %s112, %s126
      %p128 = scmp.eq.s32.totalorder %s34, 0
      %p129 = por %p127, %p128
      %s131 = sadd.s32 %s130, 1
      %p134 = scmp.eq.s32.totalorder %s28, 1
      %p135 = scmp.ne.s32.totalorder %s130, %s132
      %p136 = scmp.eq.s32.totalorder %s28, 0
      %p137 = por %p135, %p136
      %p138 = scmp.ne.s32.totalorder %s130, %s132
      %p139 = scmp.eq.s32.totalorder %s33, 1
      %p140 = por %p138, %p139
      %p141 = scmp.ne.s32.totalorder %s132, %s133
      %p142 = scmp.eq.s32.totalorder %s33, 0
      %p143 = por %p141, %p142
      %p144 = scmp.ne.s32.totalorder %s132, %s133
      %p145 = scmp.eq.s32.totalorder %s34, 1
      %p146 = por %p144, %p145
      %p148 = scmp.ne.s32.totalorder %s133, %s147
      %p149 = scmp.eq.s32.totalorder %s34, 0
      %p150 = por %p148, %p149
      %s152 = sadd.s32 %s151, 1
      %p155 = scmp.eq.s32.totalorder %s28, 1
      %p156 = scmp.ne.s32.totalorder %s151, %s153
      %p157 = scmp.eq.s32.totalorder %s28, 0
      %p158 = por %p156, %p157
      %p159 = scmp.ne.s32.totalorder %s151, %s153
      %p160 = scmp.eq.s32.totalorder %s33, 1
      %p161 = por %p159, %p160
      %p162 = scmp.ne.s32.totalorder %s153, %s154
      %p163 = scmp.eq.s32.totalorder %s33, 0
      %p164 = por %p162, %p163
      %p165 = scmp.ne.s32.totalorder %s153, %s154
      %p166 = scmp.eq.s32.totalorder %s34, 1
      %p167 = por %p165, %p166
      %p169 = scmp.ne.s32.totalorder %s154, %s168
      %p170 = scmp.eq.s32.totalorder %s34, 0
      %p171 = por %p169, %p170
      %s173 = sadd.s32 %s172, 1
      %p176 = scmp.eq.s32.totalorder %s28, 1
      %p177 = scmp.ne.s32.totalorder %s172, %s174
      %p178 = scmp.eq.s32.totalorder %s28, 0
      %p179 = por %p177, %p178
      %p180 = scmp.ne.s32.totalorder %s172, %s174
      %p181 = scmp.eq.s32.totalorder %s33, 1
      %p182 = por %p180, %p181
      %p183 = scmp.ne.s32.totalorder %s174, %s175
      %p184 = scmp.eq.s32.totalorder %s33, 0
      %p185 = por %p183, %p184
      %p186 = scmp.ne.s32.totalorder %s174, %s175
      %p187 = scmp.eq.s32.totalorder %s34, 1
      %p188 = por %p186, %p187
      %p190 = scmp.ne.s32.totalorder %s175, %s189
      %p191 = scmp.eq.s32.totalorder %s34, 0
      %p192 = por %p190, %p191
      %s194 = sadd.s32 %s193, 1
      %p197 = scmp.eq.s32.totalorder %s28, 1
      %p198 = scmp.ne.s32.totalorder %s193, %s195
      %p199 = scmp.eq.s32.totalorder %s28, 0
      %p200 = por %p198, %p199
      %p201 = scmp.ne.s32.totalorder %s193, %s195
      %p202 = scmp.eq.s32.totalorder %s33, 1
      %p203 = por %p201, %p202
      %p204 = scmp.ne.s32.totalorder %s195, %s196
      %p205 = scmp.eq.s32.totalorder %s33, 0
      %p206 = por %p204, %p205
      %p207 = scmp.ne.s32.totalorder %s195, %s196
      %p208 = scmp.eq.s32.totalorder %s34, 1
      %p209 = por %p207, %p208
      %p211 = scmp.ne.s32.totalorder %s196, %s210
      %p212 = scmp.eq.s32.totalorder %s34, 0
      %p213 = por %p211, %p212
      %s215 = sadd.s32 %s214, 1
      %p218 = scmp.eq.s32.totalorder %s28, 1
      %p219 = scmp.ne.s32.totalorder %s214, %s216
      %p220 = scmp.eq.s32.totalorder %s28, 0
      %p221 = por %p219, %p220
      %p222 = scmp.ne.s32.totalorder %s214, %s216
      %p223 = scmp.eq.s32.totalorder %s33, 1
      %p224 = por %p222, %p223
      %p225 = scmp.ne.s32.totalorder %s216, %s217
      %p226 = scmp.eq.s32.totalorder %s33, 0
      %p227 = por %p225, %p226
      %p228 = scmp.ne.s32.totalorder %s216, %s217
      %p229 = scmp.eq.s32.totalorder %s34, 1
      %p230 = por %p228, %p229
      %p232 = scmp.ne.s32.totalorder %s217, %s231
      %p233 = scmp.eq.s32.totalorder %s34, 0
      %p234 = por %p232, %p233
      %s236 = sadd.s32 %s235, 1
      %p239 = scmp.eq.s32.totalorder %s28, 1
      %p240 = scmp.ne.s32.totalorder %s235, %s237
      %p241 = scmp.eq.s32.totalorder %s28, 0
      %p242 = por %p240, %p241
      %p243 = scmp.ne.s32.totalorder %s235, %s237
      %p244 = scmp.eq.s32.totalorder %s33, 1
      %p245 = por %p243, %p244
      %p246 = scmp.ne.s32.totalorder %s237, %s238
      %p247 = scmp.eq.s32.totalorder %s33, 0
      %p248 = por %p246, %p247
      %p249 = scmp.ne.s32.totalorder %s237, %s238
      %p250 = scmp.eq.s32.totalorder %s34, 1
      %p251 = por %p249, %p250
      %p253 = scmp.ne.s32.totalorder %s238, %s252
      %p254 = scmp.eq.s32.totalorder %s34, 0
      %p255 = por %p253, %p254
      %s257 = sadd.s32 %s256, 1
      %p260 = scmp.eq.s32.totalorder %s28, 1
      %p261 = scmp.ne.s32.totalorder %s256, %s258
      %p262 = scmp.eq.s32.totalorder %s28, 0
      %p263 = por %p261, %p262
      %p264 = scmp.ne.s32.totalorder %s256, %s258
      %p265 = scmp.eq.s32.totalorder %s33, 1
      %p266 = por %p264, %p265
      %p267 = scmp.ne.s32.totalorder %s258, %s259
      %p268 = scmp.eq.s32.totalorder %s33, 0
      %p269 = por %p267, %p268
      %p270 = scmp.ne.s32.totalorder %s258, %s259
      %p271 = scmp.eq.s32.totalorder %s34, 1
      %p272 = por %p270, %p271
      %p274 = scmp.ne.s32.totalorder %s259, %s273
      %p275 = scmp.eq.s32.totalorder %s34, 0
      %p276 = por %p274, %p275
      %s278 = sadd.s32 %s277, 1
      %p281 = scmp.eq.s32.totalorder %s28, 1
      %p282 = scmp.ne.s32.totalorder %s277, %s279
      %p283 = scmp.eq.s32.totalorder %s28, 0
      %p284 = por %p282, %p283
      %p285 = scmp.ne.s32.totalorder %s277, %s279
      %p286 = scmp.eq.s32.totalorder %s33, 1
      %p287 = por %p285, %p286
      %p288 = scmp.ne.s32.totalorder %s279, %s280
      %p289 = scmp.eq.s32.totalorder %s33, 0
      %p290 = por %p288, %p289
      %p291 = scmp.ne.s32.totalorder %s279, %s280
      %p292 = scmp.eq.s32.totalorder %s34, 1
      %p293 = por %p291, %p292
      %p295 = scmp.ne.s32.totalorder %s280, %s294
      %p296 = scmp.eq.s32.totalorder %s34, 0
      %p297 = por %p295, %p296
      %s299 = sadd.s32 %s298, 1
      %p302 = scmp.eq.s32.totalorder %s28, 1
      %p303 = scmp.ne.s32.totalorder %s298, %s300
      %p304 = scmp.eq.s32.totalorder %s28, 0
      %p305 = por %p303, %p304
      %p306 = scmp.ne.s32.totalorder %s298, %s300
      %p307 = scmp.eq.s32.totalorder %s33, 1
      %p308 = por %p306, %p307
      %p309 = scmp.ne.s32.totalorder %s300, %s301
      %p310 = scmp.eq.s32.totalorder %s33, 0
      %p311 = por %p309, %p310
      %p312 = scmp.ne.s32.totalorder %s300, %s301
      %p313 = scmp.eq.s32.totalorder %s34, 1
      %p314 = por %p312, %p313
      %p316 = scmp.ne.s32.totalorder %s301, %s315
      %p317 = scmp.eq.s32.totalorder %s34, 0
      %p318 = por %p316, %p317
      %s320 = sadd.s32 %s319, 1
      %p323 = scmp.eq.s32.totalorder %s28, 1
      %p324 = scmp.ne.s32.totalorder %s319, %s321
      %p325 = scmp.eq.s32.totalorder %s28, 0
      %p326 = por %p324, %p325
      %p327 = scmp.ne.s32.totalorder %s319, %s321
      %p328 = scmp.eq.s32.totalorder %s33, 1
      %p329 = por %p327, %p328
      %p330 = scmp.ne.s32.totalorder %s321, %s322
      %p331 = scmp.eq.s32.totalorder %s33, 0
      %p332 = por %p330, %p331
      %p333 = scmp.ne.s32.totalorder %s321, %s322
      %p334 = scmp.eq.s32.totalorder %s34, 1
      %p335 = por %p333, %p334
      %p337 = scmp.ne.s32.totalorder %s322, %s336
      %p338 = scmp.eq.s32.totalorder %s34, 0
      %p339 = por %p337, %p338
      %p340 = scmp.le.s32.totalorder 1, %s28
      %p341 = scmp.lt.s32.totalorder %s28, 3
      %p342 = pnand %p340, %p341
      %p343 = pneg %p342
      // Predicated region
      $region9: #{multimodal_forward.1} parent=5 // pred_check
        _
      $region10: #{multimodal_forward.1} parent=5 // pred_check_branch
        %345 = sbr.rel (%p342) target = $region12
      $region11: #{multimodal_forward.1} parent=5 // pred_region
        %s346 = ssub.s32 %s28, 1
        // Predicated region
        $region13: #{multimodal_forward.1} parent=11 // pred_check
          %p347 = pneg %p101
        $region14: #{multimodal_forward.1} parent=11 // pred_check_branch
          %349 = sbr.rel (%p347) target = $region16
        $region15: #{multimodal_forward.1} parent=11 // pred_region
          %351 = vsyncadd [#allocation7], 0
          %s353 = sshll.u32 %s2, 4
          %s354 = int_to_ptr.hbm [resolvable:$true] %s353
          %s355 = sshll.u32 [#allocation6], 4
          %s356 = int_to_ptr.vmem [resolvable:$true] %s355
          %358 = dma.hbm_to_vmem [thread:$0]  %s354, 32, %s356, [#allocation7]
        $region16: #{multimodal_forward.1} parent=11 // pred_fallthru
          _
        // Predicated region
        $region17: #{multimodal_forward.1} parent=11 // pred_check
          %p359 = pneg %p122
        $region18: #{multimodal_forward.1} parent=11 // pred_check_branch
          %361 = sbr.rel (%p359) target = $region20
        $region19: #{multimodal_forward.1} parent=11 // pred_region
          %363 = vsyncadd [#allocation7], 0
          %s365 = sshll.u32 %s3, 4
          %s366 = int_to_ptr.hbm [resolvable:$true] %s365
          %s367 = sshll.u32 [#allocation8], 4
          %s368 = int_to_ptr.vmem [resolvable:$true] %s367
          %370 = dma.hbm_to_vmem [thread:$0]  %s366, 96, %s368, [#allocation7]
        $region20: #{multimodal_forward.1} parent=11 // pred_fallthru
          _
        // Predicated region
        $region21: #{multimodal_forward.1} parent=11 // pred_check
          %p371 = pneg %p143
        $region22: #{multimodal_forward.1} parent=11 // pred_check_branch
          %373 = sbr.rel (%p371) target = $region24
        $region23: #{multimodal_forward.1} parent=11 // pred_region
          _
        $region24: #{multimodal_forward.1} parent=11 // pred_fallthru
          _
        // Predicated region
        $region25: #{multimodal_forward.1} parent=11 // pred_check
          %p374 = pneg %p164
        $region26: #{multimodal_forward.1} parent=11 // pred_check_branch
          %376 = sbr.rel (%p374) target = $region28
        $region27: #{multimodal_forward.1} parent=11 // pred_region
          %378 = vsyncadd [#allocation10], 0
          %s380 = sshll.u32 %s5, 4
          %s381 = int_to_ptr.hbm [resolvable:$true] %s380
          %s382 = sshll.u32 [#allocation9], 4
          %s383 = int_to_ptr.vmem [resolvable:$true] %s382
          %385 = dma.hbm_to_vmem [thread:$0]  %s381, 16, %s383, [#allocation10]
        $region28: #{multimodal_forward.1} parent=11 // pred_fallthru
          _
        // Predicated region
        $region29: #{multimodal_forward.1} parent=11 // pred_check
          %p386 = pneg %p185
        $region30: #{multimodal_forward.1} parent=11 // pred_check_branch
          %388 = sbr.rel (%p386) target = $region32
        $region31: #{multimodal_forward.1} parent=11 // pred_region
          _
        $region32: #{multimodal_forward.1} parent=11 // pred_fallthru
          _
        // Predicated region
        $region33: #{multimodal_forward.1} parent=11 // pred_check
          %p389 = pneg %p206
        $region34: #{multimodal_forward.1} parent=11 // pred_check_branch
          %391 = sbr.rel (%p389) target = $region36
        $region35: #{multimodal_forward.1} parent=11 // pred_region
          %393 = vsyncadd [#allocation10], 0
          %s395 = sshll.u32 %s7, 4
          %s396 = int_to_ptr.hbm [resolvable:$true] %s395
          %s397 = sshll.u32 [#allocation11], 4
          %s398 = int_to_ptr.vmem [resolvable:$true] %s397
          %400 = dma.hbm_to_vmem [thread:$0]  %s396, 16, %s398, [#allocation10]
        $region36: #{multimodal_forward.1} parent=11 // pred_fallthru
          _
        // Predicated region
        $region37: #{multimodal_forward.1} parent=11 // pred_check
          %p401 = pneg %p227
        $region38: #{multimodal_forward.1} parent=11 // pred_check_branch
          %403 = sbr.rel (%p401) target = $region40
        $region39: #{multimodal_forward.1} parent=11 // pred_region
          %405 = vsyncadd [#allocation13], 0
          %s406 = sshll.u32 %s8, 4
          %s407 = int_to_ptr.hbm [resolvable:$true] %s406
          %s408 = sshll.u32 [#allocation12], 4
          %s409 = int_to_ptr.vmem [resolvable:$true] %s408
          %414 = dma.hbm_to_vmem [thread:$0]  %s407, 1024, %s409, [#allocation13], 256, 256, 16
        $region40: #{multimodal_forward.1} parent=11 // pred_fallthru
          _
        // Predicated region
        $region41: #{multimodal_forward.1} parent=11 // pred_check
          %p415 = pneg %p248
        $region42: #{multimodal_forward.1} parent=11 // pred_check_branch
          %417 = sbr.rel (%p415) target = $region44
        $region43: #{multimodal_forward.1} parent=11 // pred_region
          %419 = vsyncadd [#allocation13], 0
          %s420 = sshll.u32 %s9, 4
          %s421 = int_to_ptr.hbm [resolvable:$true] %s420
          %s422 = sshll.u32 [#allocation14], 4
          %s423 = int_to_ptr.vmem [resolvable:$true] %s422
          %428 = dma.hbm_to_vmem [thread:$0]  %s421, 1024, %s423, [#allocation13], 256, 256, 16
        $region44: #{multimodal_forward.1} parent=11 // pred_fallthru
          _
        // Predicated region
        $region45: #{multimodal_forward.1} parent=11 // pred_check
          %p429 = pneg %p269
        $region46: #{multimodal_forward.1} parent=11 // pred_check_branch
          %431 = sbr.rel (%p429) target = $region48
        $region47: #{multimodal_forward.1} parent=11 // pred_region
          %433 = vsyncadd [#allocation16], 0
          %s435 = sshll.u32 %s10, 4
          %s436 = int_to_ptr.hbm [resolvable:$true] %s435
          %s437 = sshll.u32 [#allocation15], 4
          %s438 = int_to_ptr.vmem [resolvable:$true] %s437
          %440 = dma.hbm_to_vmem [thread:$0]  %s436, 32, %s438, [#allocation16]
        $region48: #{multimodal_forward.1} parent=11 // pred_fallthru
          _
        // Predicated region
        $region49: #{multimodal_forward.1} parent=11 // pred_check
          %p441 = pneg %p290
        $region50: #{multimodal_forward.1} parent=11 // pred_check_branch
          %443 = sbr.rel (%p441) target = $region52
        $region51: #{multimodal_forward.1} parent=11 // pred_region
          _
        $region52: #{multimodal_forward.1} parent=11 // pred_fallthru
          _
        // Predicated region
        $region53: #{multimodal_forward.1} parent=11 // pred_check
          %p444 = pneg %p311
        $region54: #{multimodal_forward.1} parent=11 // pred_check_branch
          %446 = sbr.rel (%p444) target = $region56
        $region55: #{multimodal_forward.1} parent=11 // pred_region
          _
        $region56: #{multimodal_forward.1} parent=11 // pred_fallthru
          _
      $region12: #{multimodal_forward.1} parent=5 // pred_fallthru
        _
      %p447 = scmp.lt.s32.totalorder %s28, 2
      // Predicated region
      $region57: #{multimodal_forward.1} parent=5 // pred_check
        %p448 = pneg %p447
      $region58: #{multimodal_forward.1} parent=5 // pred_check_branch
        %450 = sbr.rel (%p448) target = $region60
      $region59: #{multimodal_forward.1} parent=5 // pred_region
        // Predicated region
        $region61: #{multimodal_forward.1} parent=59 // pred_check
          %p451 = pneg %p48
        $region62: #{multimodal_forward.1} parent=59 // pred_check_branch
          %453 = sbr.rel (%p451) target = $region64
        $region63: #{multimodal_forward.1} parent=59 // pred_region
          %s454 = smul.u32 78, %s28
          %p455 = scmp.lt.s32.totalorder %s454, 155
          %s456 = scalar_select %p455, %s454, 155
          %s457 = scalar_lea.vmem %s0, %s456
          %s458 = smul.u32 78, %s28
        $region64: #{multimodal_forward.1} parent=59 // pred_fallthru
          _
        // Predicated region
        $region65: #{multimodal_forward.1} parent=59 // pred_check
          %p459 = pneg %p74
        $region66: #{multimodal_forward.1} parent=59 // pred_check_branch
          %461 = sbr.rel (%p459) target = $region68
        $region67: #{multimodal_forward.1} parent=59 // pred_region
          %s462 = sand.u32 %s64, 1
          %s463 = scalar_lea.sflag [#allocation5], %s462
          %s464 = sand.u32 %s64, 1
          %s465 = smul.addr %s464, 9984
          %s466 = scalar_lea.vmem [#allocation4], %s465
          %s467 = smul.u32 1248, %s28
          %469 = vsyncadd %s463, 0
          %s470 = smul.addr %s467, 2
          %s471 = smul.addr %s470, 4
          %s472 = scalar_lea.hbm %s1, %s471
          %s473 = sshll.u32 %s472, 4
          %s474 = int_to_ptr.hbm [resolvable:$true] %s473
          %s475 = sshll.u32 %s466, 4
          %s476 = int_to_ptr.vmem [resolvable:$true] %s475
          %481 = dma.hbm_to_vmem [thread:$0]  %s474, 159744, %s476, %s463, 128, 128, 8
        $region68: #{multimodal_forward.1} parent=59 // pred_fallthru
          _
      $region60: #{multimodal_forward.1} parent=5 // pred_fallthru
        _
      %p482 = scmp.le.s32.totalorder 1, %s28
      %p483 = scmp.lt.s32.totalorder %s28, 3
      %p484 = pnand %p482, %p483
      %p485 = pneg %p484
      // Predicated region
      $region69: #{multimodal_forward.1} parent=5 // pred_check
        _
      $region70: #{multimodal_forward.1} parent=5 // pred_check_branch
        %487 = sbr.rel (%p484) target = $region72
      $region71: #{multimodal_forward.1} parent=5 // pred_region
        %s488 = ssub.s32 %s28, 1
        %s489 = sand.u32 %s67, 1
        %s490 = scalar_lea.sflag [#allocation5], %s489
        %s491 = sand.u32 %s67, 1
        %s492 = smul.addr %s491, 9984
        %s493 = scalar_lea.vmem [#allocation4], %s492
        // Predicated region
        $region73: #{multimodal_forward.1} parent=71 // pred_check
          %p494 = pneg %p80
        $region74: #{multimodal_forward.1} parent=71 // pred_check_branch
          %496 = sbr.rel (%p494) target = $region76
        $region75: #{multimodal_forward.1} parent=71 // pred_region
          %498 = dma.done %s490, 159744
        $region76: #{multimodal_forward.1} parent=71 // pred_fallthru
          _
        // Predicated region
        $region77: #{multimodal_forward.1} parent=71 // pred_check
          %p499 = pneg %p101
        $region78: #{multimodal_forward.1} parent=71 // pred_check_branch
          %501 = sbr.rel (%p499) target = $region80
        $region79: #{multimodal_forward.1} parent=71 // pred_region
          %503 = dma.done [#allocation7], 32
        $region80: #{multimodal_forward.1} parent=71 // pred_fallthru
          _
        // Predicated region
        $region81: #{multimodal_forward.1} parent=71 // pred_check
          %p504 = pneg %p122
        $region82: #{multimodal_forward.1} parent=71 // pred_check_branch
          %506 = sbr.rel (%p504) target = $region84
        $region83: #{multimodal_forward.1} parent=71 // pred_region
          %508 = dma.done [#allocation7], 96
        $region84: #{multimodal_forward.1} parent=71 // pred_fallthru
          _
        // Predicated region
        $region85: #{multimodal_forward.1} parent=71 // pred_check
          %p509 = pneg %p164
        $region86: #{multimodal_forward.1} parent=71 // pred_check_branch
          %511 = sbr.rel (%p509) target = $region88
        $region87: #{multimodal_forward.1} parent=71 // pred_region
          %513 = dma.done [#allocation10], 16
        $region88: #{multimodal_forward.1} parent=71 // pred_fallthru
          _
        // Predicated region
        $region89: #{multimodal_forward.1} parent=71 // pred_check
          %p514 = pneg %p206
        $region90: #{multimodal_forward.1} parent=71 // pred_check_branch
          %516 = sbr.rel (%p514) target = $region92
        $region91: #{multimodal_forward.1} parent=71 // pred_region
          %518 = dma.done [#allocation10], 16
        $region92: #{multimodal_forward.1} parent=71 // pred_fallthru
          _
        // Predicated region
        $region93: #{multimodal_forward.1} parent=71 // pred_check
          %p519 = pneg %p227
        $region94: #{multimodal_forward.1} parent=71 // pred_check_branch
          %521 = sbr.rel (%p519) target = $region96
        $region95: #{multimodal_forward.1} parent=71 // pred_region
          %523 = dma.done [#allocation13], 1024
        $region96: #{multimodal_forward.1} parent=71 // pred_fallthru
          _
        // Predicated region
        $region97: #{multimodal_forward.1} parent=71 // pred_check
          %p524 = pneg %p248
        $region98: #{multimodal_forward.1} parent=71 // pred_check_branch
          %526 = sbr.rel (%p524) target = $region100
        $region99: #{multimodal_forward.1} parent=71 // pred_region
          %528 = dma.done [#allocation13], 1024
        $region100: #{multimodal_forward.1} parent=71 // pred_fallthru
          _
        // Predicated region
        $region101: #{multimodal_forward.1} parent=71 // pred_check
          %p529 = pneg %p269
        $region102: #{multimodal_forward.1} parent=71 // pred_check_branch
          %531 = sbr.rel (%p529) target = $region104
        $region103: #{multimodal_forward.1} parent=71 // pred_region
          %533 = dma.done [#allocation16], 32
        $region104: #{multimodal_forward.1} parent=71 // pred_fallthru
          _
        %s534 = smul.u32 78, %s33
        %p535 = scmp.lt.s32.totalorder %s534, 155
        %s536 = scalar_select %p535, %s534, 155
        %s537 = scalar_lea.vmem %s0, %s536
        %p538 = pneg %p54
        %p539 = pneg %p51
        %s540 = sand.u32 %s67, 1
        %s541 = scalar_lea.sflag [#allocation5], %s540
        %s542 = sand.u32 %s67, 1
        %s543 = smul.addr %s542, 9984
        %s544 = scalar_lea.vmem [#allocation4], %s543
        %p545 = pneg %p80
        %p546 = pneg %p77
        %p547 = pneg %p101
        %p548 = pneg %p98
        %p549 = pneg %p122
        %p550 = pneg %p119
        %p551 = pneg %p143
        %p552 = pneg %p140
        %p553 = pneg %p164
        %p554 = pneg %p161
        %p555 = pneg %p185
        %p556 = pneg %p182
        %p557 = pneg %p206
        %p558 = pneg %p203
        %p559 = pneg %p227
        %p560 = pneg %p224
        %p561 = pneg %p248
        %p562 = pneg %p245
        %p563 = pneg %p269
        %p564 = pneg %p266
        %p565 = pneg %p290
        %p566 = pneg %p287
        %p567 = pneg %p311
        %p568 = pneg %p308
        %p569 = pneg %p332
        %p570 = pneg %p329
        %s571 = smul.u32 78, %s33
        %p572 = scmp.lt.s32.totalorder %s571, 155
        %s573 = scalar_select %p572, %s571, 155
        %s574 = scalar_lea.vmem %s0, %s573
        %s575 = smul.u32 78, %s33
        %s576 = smul.u32 1248, %s33
        %p577 = scmp.eq.s32.totalorder %s33, 0
        // Predicated region
        $region105: #{multimodal_forward.1} parent=71 // pred_check
          %p578 = pneg %p577
        $region106: #{multimodal_forward.1} parent=71 // pred_check_branch
          %580 = sbr.rel (%p578) target = $region108
        $region107: #{multimodal_forward.1} parent=71 // pred_region
          %581 = vst [vmem:[#allocation2] sm:$0xf] 0.0
        $region108: #{multimodal_forward.1} parent=71 // pred_fallthru
          _
        %v582 = vld [vmem:[#allocation2] sm:$0xf]
        %v583 = vld [vmem:[%s574] sm:$0xff]
        %v584 = vld [vmem:[%s574 + $0x8] sm:$0xff]
        %v585 = vld [vmem:[%s574 + $0x10] sm:$0xff]
        %v586 = vld [vmem:[%s574 + $0x18] sm:$0xff]
        %v587 = vld [vmem:[%s574 + $0x20] sm:$0xff]
        %v588 = vld [vmem:[%s574 + $0x28] sm:$0xff]
        %v589 = vld [vmem:[%s574 + $0x30] sm:$0xff]
        %v590 = vld [vmem:[%s574 + $0x38] sm:$0xff]
        %v591 = vld [vmem:[%s574 + $0x40] sm:$0xff]
        %v592 = vld [vmem:[%s574 + $0x48] sm:$0x3f]
        %v593 = vld [vmem:[%s493] sm:$0xff]
        %v594 = vld [vmem:[%s493 + $0x8] sm:$0xff]
        %v595 = vld [vmem:[%s493 + $0x10] sm:$0xff]
        %v596 = vld [vmem:[%s493 + $0x18] sm:$0xff]
        %v597 = vld [vmem:[%s493 + $0x20] sm:$0xff]
        %v598 = vld [vmem:[%s493 + $0x28] sm:$0xff]
        %v599 = vld [vmem:[%s493 + $0x30] sm:$0xff]
        %v600 = vld [vmem:[%s493 + $0x38] sm:$0xff]
        %v601 = vld [vmem:[%s493 + $0x40] sm:$0xff]
        %v602 = vld [vmem:[%s493 + $0x48] sm:$0xff]
        %v603 = vld [vmem:[%s493 + $0x50] sm:$0xff]
        %v604 = vld [vmem:[%s493 + $0x58] sm:$0xff]
        %v605 = vld [vmem:[%s493 + $0x60] sm:$0xff]
        %v606 = vld [vmem:[%s493 + $0x68] sm:$0xff]
        %v607 = vld [vmem:[%s493 + $0x70] sm:$0xff]
        %v608 = vld [vmem:[%s493 + $0x78] sm:$0xff]
        %v609 = vld [vmem:[%s493 + $0x80] sm:$0xff]
        %v610 = vld [vmem:[%s493 + $0x88] sm:$0xff]
        %v611 = vld [vmem:[%s493 + $0x90] sm:$0xff]
        %v612 = vld [vmem:[%s493 + $0x98] sm:$0xff]
        %v613 = vld [vmem:[%s493 + $0xa0] sm:$0xff]
        %v614 = vld [vmem:[%s493 + $0xa8] sm:$0xff]
        %v615 = vld [vmem:[%s493 + $0xb0] sm:$0xff]
        %v616 = vld [vmem:[%s493 + $0xb8] sm:$0xff]
        %v617 = vld [vmem:[%s493 + $0xc0] sm:$0xff]
        %v618 = vld [vmem:[%s493 + $0xc8] sm:$0xff]
        %v619 = vld [vmem:[%s493 + $0xd0] sm:$0xff]
        %v620 = vld [vmem:[%s493 + $0xd8] sm:$0xff]
        %v621 = vld [vmem:[%s493 + $0xe0] sm:$0xff]
        %v622 = vld [vmem:[%s493 + $0xe8] sm:$0xff]
        %v623 = vld [vmem:[%s493 + $0xf0] sm:$0xff]
        %v624 = vld [vmem:[%s493 + $0xf8] sm:$0xff]
        %v625 = vld [vmem:[%s493 + $0x100] sm:$0xff]
        %v626 = vld [vmem:[%s493 + $0x108] sm:$0xff]
        %v627 = vld [vmem:[%s493 + $0x110] sm:$0xff]
        %v628 = vld [vmem:[%s493 + $0x118] sm:$0xff]
        %v629 = vld [vmem:[%s493 + $0x120] sm:$0xff]
        %v630 = vld [vmem:[%s493 + $0x128] sm:$0xff]
        %v631 = vld [vmem:[%s493 + $0x130] sm:$0xff]
        %v632 = vld [vmem:[%s493 + $0x138] sm:$0xff]
        %v633 = vld [vmem:[%s493 + $0x140] sm:$0xff]
        %v634 = vld [vmem:[%s493 + $0x148] sm:$0xff]
        %v635 = vld [vmem:[%s493 + $0x150] sm:$0xff]
        %v636 = vld [vmem:[%s493 + $0x158] sm:$0xff]
        %v637 = vld [vmem:[%s493 + $0x160] sm:$0xff]
        %v638 = vld [vmem:[%s493 + $0x168] sm:$0xff]
        %v639 = vld [vmem:[%s493 + $0x170] sm:$0xff]
        %v640 = vld [vmem:[%s493 + $0x178] sm:$0xff]
        %v641 = vld [vmem:[%s493 + $0x180] sm:$0xff]
        %v642 = vld [vmem:[%s493 + $0x188] sm:$0xff]
        %v643 = vld [vmem:[%s493 + $0x190] sm:$0xff]
        %v644 = vld [vmem:[%s493 + $0x198] sm:$0xff]
        %v645 = vld [vmem:[%s493 + $0x1a0] sm:$0xff]
        %v646 = vld [vmem:[%s493 + $0x1a8] sm:$0xff]
        %v647 = vld [vmem:[%s493 + $0x1b0] sm:$0xff]
        %v648 = vld [vmem:[%s493 + $0x1b8] sm:$0xff]
        %v649 = vld [vmem:[%s493 + $0x1c0] sm:$0xff]
        %v650 = vld [vmem:[%s493 + $0x1c8] sm:$0xff]
        %v651 = vld [vmem:[%s493 + $0x1d0] sm:$0xff]
        %v652 = vld [vmem:[%s493 + $0x1d8] sm:$0xff]
        %v653 = vld [vmem:[%s493 + $0x1e0] sm:$0xff]
        %v654 = vld [vmem:[%s493 + $0x1e8] sm:$0xff]
        %v655 = vld [vmem:[%s493 + $0x1f0] sm:$0xff]
        %v656 = vld [vmem:[%s493 + $0x1f8] sm:$0xff]
        %v657 = vld [vmem:[%s493 + $0x200] sm:$0xff]
        %v658 = vld [vmem:[%s493 + $0x208] sm:$0xff]
        %v659 = vld [vmem:[%s493 + $0x210] sm:$0xff]
        %v660 = vld [vmem:[%s493 + $0x218] sm:$0xff]
        %v661 = vld [vmem:[%s493 + $0x220] sm:$0xff]
        %v662 = vld [vmem:[%s493 + $0x228] sm:$0xff]
        %v663 = vld [vmem:[%s493 + $0x230] sm:$0xff]
        %v664 = vld [vmem:[%s493 + $0x238] sm:$0xff]
        %v665 = vld [vmem:[%s493 + $0x240] sm:$0xff]
        %v666 = vld [vmem:[%s493 + $0x248] sm:$0xff]
        %v667 = vld [vmem:[%s493 + $0x250] sm:$0xff]
        %v668 = vld [vmem:[%s493 + $0x258] sm:$0xff]
        %v669 = vld [vmem:[%s493 + $0x260] sm:$0xff]
        %v670 = vld [vmem:[%s493 + $0x268] sm:$0xff]
        %v671 = vld [vmem:[%s493 + $0x270] sm:$0xff]
        %v672 = vld [vmem:[%s493 + $0x278] sm:$0xff]
        %v673 = vld [vmem:[%s493 + $0x280] sm:$0xff]
        %v674 = vld [vmem:[%s493 + $0x288] sm:$0xff]
        %v675 = vld [vmem:[%s493 + $0x290] sm:$0xff]
        %v676 = vld [vmem:[%s493 + $0x298] sm:$0xff]
        %v677 = vld [vmem:[%s493 + $0x2a0] sm:$0xff]
        %v678 = vld [vmem:[%s493 + $0x2a8] sm:$0xff]
        %v679 = vld [vmem:[%s493 + $0x2b0] sm:$0xff]
        %v680 = vld [vmem:[%s493 + $0x2b8] sm:$0xff]
        %v681 = vld [vmem:[%s493 + $0x2c0] sm:$0xff]
        %v682 = vld [vmem:[%s493 + $0x2c8] sm:$0xff]
        %v683 = vld [vmem:[%s493 + $0x2d0] sm:$0xff]
        %v684 = vld [vmem:[%s493 + $0x2d8] sm:$0xff]
        %v685 = vld [vmem:[%s493 + $0x2e0] sm:$0xff]
        %v686 = vld [vmem:[%s493 + $0x2e8] sm:$0xff]
        %v687 = vld [vmem:[%s493 + $0x2f0] sm:$0xff]
        %v688 = vld [vmem:[%s493 + $0x2f8] sm:$0xff]
        %v689 = vld [vmem:[%s493 + $0x300] sm:$0xff]
        %v690 = vld [vmem:[%s493 + $0x308] sm:$0xff]
        %v691 = vld [vmem:[%s493 + $0x310] sm:$0xff]
        %v692 = vld [vmem:[%s493 + $0x318] sm:$0xff]
        %v693 = vld [vmem:[%s493 + $0x320] sm:$0xff]
        %v694 = vld [vmem:[%s493 + $0x328] sm:$0xff]
        %v695 = vld [vmem:[%s493 + $0x330] sm:$0xff]
        %v696 = vld [vmem:[%s493 + $0x338] sm:$0xff]
        %v697 = vld [vmem:[%s493 + $0x340] sm:$0xff]
        %v698 = vld [vmem:[%s493 + $0x348] sm:$0xff]
        %v699 = vld [vmem:[%s493 + $0x350] sm:$0xff]
        %v700 = vld [vmem:[%s493 + $0x358] sm:$0xff]
        %v701 = vld [vmem:[%s493 + $0x360] sm:$0xff]
        %v702 = vld [vmem:[%s493 + $0x368] sm:$0xff]
        %v703 = vld [vmem:[%s493 + $0x370] sm:$0xff]
        %v704 = vld [vmem:[%s493 + $0x378] sm:$0xff]
        %v705 = vld [vmem:[%s493 + $0x380] sm:$0xff]
        %v706 = vld [vmem:[%s493 + $0x388] sm:$0xff]
        %v707 = vld [vmem:[%s493 + $0x390] sm:$0xff]
        %v708 = vld [vmem:[%s493 + $0x398] sm:$0xff]
        %v709 = vld [vmem:[%s493 + $0x3a0] sm:$0xff]
        %v710 = vld [vmem:[%s493 + $0x3a8] sm:$0xff]
        %v711 = vld [vmem:[%s493 + $0x3b0] sm:$0xff]
        %v712 = vld [vmem:[%s493 + $0x3b8] sm:$0xff]
        %v713 = vld [vmem:[%s493 + $0x3c0] sm:$0xff]
        %v714 = vld [vmem:[%s493 + $0x3c8] sm:$0xff]
        %v715 = vld [vmem:[%s493 + $0x3d0] sm:$0xff]
        %v716 = vld [vmem:[%s493 + $0x3d8] sm:$0xff]
        %v717 = vld [vmem:[%s493 + $0x3e0] sm:$0xff]
        %v718 = vld [vmem:[%s493 + $0x3e8] sm:$0xff]
        %v719 = vld [vmem:[%s493 + $0x3f0] sm:$0xff]
        %v720 = vld [vmem:[%s493 + $0x3f8] sm:$0xff]
        %v721 = vld [vmem:[%s493 + $0x400] sm:$0xff]
        %v722 = vld [vmem:[%s493 + $0x408] sm:$0xff]
        %v723 = vld [vmem:[%s493 + $0x410] sm:$0xff]
        %v724 = vld [vmem:[%s493 + $0x418] sm:$0xff]
        %v725 = vld [vmem:[%s493 + $0x420] sm:$0xff]
        %v726 = vld [vmem:[%s493 + $0x428] sm:$0xff]
        %v727 = vld [vmem:[%s493 + $0x430] sm:$0xff]
        %v728 = vld [vmem:[%s493 + $0x438] sm:$0xff]
        %v729 = vld [vmem:[%s493 + $0x440] sm:$0xff]
        %v730 = vld [vmem:[%s493 + $0x448] sm:$0xff]
        %v731 = vld [vmem:[%s493 + $0x450] sm:$0xff]
        %v732 = vld [vmem:[%s493 + $0x458] sm:$0xff]
        %v733 = vld [vmem:[%s493 + $0x460] sm:$0xff]
        %v734 = vld [vmem:[%s493 + $0x468] sm:$0xff]
        %v735 = vld [vmem:[%s493 + $0x470] sm:$0xff]
        %v736 = vld [vmem:[%s493 + $0x478] sm:$0xff]
        %v737 = vld [vmem:[%s493 + $0x480] sm:$0xff]
        %v738 = vld [vmem:[%s493 + $0x488] sm:$0xff]
        %v739 = vld [vmem:[%s493 + $0x490] sm:$0xff]
        %v740 = vld [vmem:[%s493 + $0x498] sm:$0xff]
        %v741 = vld [vmem:[%s493 + $0x4a0] sm:$0xff]
        %v742 = vld [vmem:[%s493 + $0x4a8] sm:$0xff]
        %v743 = vld [vmem:[%s493 + $0x4b0] sm:$0xff]
        %v744 = vld [vmem:[%s493 + $0x4b8] sm:$0xff]
        %v745 = vld [vmem:[%s493 + $0x4c0] sm:$0xff]
        %v746 = vld [vmem:[%s493 + $0x4c8] sm:$0xff]
        %v747 = vld [vmem:[%s493 + $0x4d0] sm:$0xff]
        %v748 = vld [vmem:[%s493 + $0x4d8] sm:$0xff]
        %v749 = vld [vmem:[%s493 + $0x4e0] sm:$0xff]
        %v750 = vld [vmem:[%s493 + $0x4e8] sm:$0xff]
        %v751 = vld [vmem:[%s493 + $0x4f0] sm:$0xff]
        %v752 = vld [vmem:[%s493 + $0x4f8] sm:$0xff]
        %v753 = vld [vmem:[%s493 + $0x500] sm:$0xff]
        %v754 = vld [vmem:[%s493 + $0x508] sm:$0xff]
        %v755 = vld [vmem:[%s493 + $0x510] sm:$0xff]
        %v756 = vld [vmem:[%s493 + $0x518] sm:$0xff]
        %v757 = vld [vmem:[%s493 + $0x520] sm:$0xff]
        %v758 = vld [vmem:[%s493 + $0x528] sm:$0xff]
        %v759 = vld [vmem:[%s493 + $0x530] sm:$0xff]
        %v760 = vld [vmem:[%s493 + $0x538] sm:$0xff]
        %v761 = vld [vmem:[%s493 + $0x540] sm:$0xff]
        %v762 = vld [vmem:[%s493 + $0x548] sm:$0xff]
        %v763 = vld [vmem:[%s493 + $0x550] sm:$0xff]
        %v764 = vld [vmem:[%s493 + $0x558] sm:$0xff]
        %v765 = vld [vmem:[%s493 + $0x560] sm:$0xff]
        %v766 = vld [vmem:[%s493 + $0x568] sm:$0xff]
        %v767 = vld [vmem:[%s493 + $0x570] sm:$0xff]
        %v768 = vld [vmem:[%s493 + $0x578] sm:$0xff]
        %v769 = vld [vmem:[%s493 + $0x580] sm:$0xff]
        %v770 = vld [vmem:[%s493 + $0x588] sm:$0xff]
        %v771 = vld [vmem:[%s493 + $0x590] sm:$0xff]
        %v772 = vld [vmem:[%s493 + $0x598] sm:$0xff]
        %v773 = vld [vmem:[%s493 + $0x5a0] sm:$0xff]
        %v774 = vld [vmem:[%s493 + $0x5a8] sm:$0xff]
        %v775 = vld [vmem:[%s493 + $0x5b0] sm:$0xff]
        %v776 = vld [vmem:[%s493 + $0x5b8] sm:$0xff]
        %v777 = vld [vmem:[%s493 + $0x5c0] sm:$0xff]
        %v778 = vld [vmem:[%s493 + $0x5c8] sm:$0xff]
        %v779 = vld [vmem:[%s493 + $0x5d0] sm:$0xff]
        %v780 = vld [vmem:[%s493 + $0x5d8] sm:$0xff]
        %v781 = vld [vmem:[%s493 + $0x5e0] sm:$0xff]
        %v782 = vld [vmem:[%s493 + $0x5e8] sm:$0xff]
        %v783 = vld [vmem:[%s493 + $0x5f0] sm:$0xff]
        %v784 = vld [vmem:[%s493 + $0x5f8] sm:$0xff]
        %v785 = vld [vmem:[%s493 + $0x600] sm:$0xff]
        %v786 = vld [vmem:[%s493 + $0x608] sm:$0xff]
        %v787 = vld [vmem:[%s493 + $0x610] sm:$0xff]
        %v788 = vld [vmem:[%s493 + $0x618] sm:$0xff]
        %v789 = vld [vmem:[%s493 + $0x620] sm:$0xff]
        %v790 = vld [vmem:[%s493 + $0x628] sm:$0xff]
        %v791 = vld [vmem:[%s493 + $0x630] sm:$0xff]
        %v792 = vld [vmem:[%s493 + $0x638] sm:$0xff]
        %v793 = vld [vmem:[%s493 + $0x640] sm:$0xff]
        %v794 = vld [vmem:[%s493 + $0x648] sm:$0xff]
        %v795 = vld [vmem:[%s493 + $0x650] sm:$0xff]
        %v796 = vld [vmem:[%s493 + $0x658] sm:$0xff]
        %v797 = vld [vmem:[%s493 + $0x660] sm:$0xff]
        %v798 = vld [vmem:[%s493 + $0x668] sm:$0xff]
        %v799 = vld [vmem:[%s493 + $0x670] sm:$0xff]
        %v800 = vld [vmem:[%s493 + $0x678] sm:$0xff]
        %v801 = vld [vmem:[%s493 + $0x680] sm:$0xff]
        %v802 = vld [vmem:[%s493 + $0x688] sm:$0xff]
        %v803 = vld [vmem:[%s493 + $0x690] sm:$0xff]
        %v804 = vld [vmem:[%s493 + $0x698] sm:$0xff]
        %v805 = vld [vmem:[%s493 + $0x6a0] sm:$0xff]
        %v806 = vld [vmem:[%s493 + $0x6a8] sm:$0xff]
        %v807 = vld [vmem:[%s493 + $0x6b0] sm:$0xff]
        %v808 = vld [vmem:[%s493 + $0x6b8] sm:$0xff]
        %v809 = vld [vmem:[%s493 + $0x6c0] sm:$0xff]
        %v810 = vld [vmem:[%s493 + $0x6c8] sm:$0xff]
        %v811 = vld [vmem:[%s493 + $0x6d0] sm:$0xff]
        %v812 = vld [vmem:[%s493 + $0x6d8] sm:$0xff]
        %v813 = vld [vmem:[%s493 + $0x6e0] sm:$0xff]
        %v814 = vld [vmem:[%s493 + $0x6e8] sm:$0xff]
        %v815 = vld [vmem:[%s493 + $0x6f0] sm:$0xff]
        %v816 = vld [vmem:[%s493 + $0x6f8] sm:$0xff]
        %v817 = vld [vmem:[%s493 + $0x700] sm:$0xff]
        %v818 = vld [vmem:[%s493 + $0x708] sm:$0xff]
        %v819 = vld [vmem:[%s493 + $0x710] sm:$0xff]
        %v820 = vld [vmem:[%s493 + $0x718] sm:$0xff]
        %v821 = vld [vmem:[%s493 + $0x720] sm:$0xff]
        %v822 = vld [vmem:[%s493 + $0x728] sm:$0xff]
        %v823 = vld [vmem:[%s493 + $0x730] sm:$0xff]
        %v824 = vld [vmem:[%s493 + $0x738] sm:$0xff]
        %v825 = vld [vmem:[%s493 + $0x740] sm:$0xff]
        %v826 = vld [vmem:[%s493 + $0x748] sm:$0xff]
        %v827 = vld [vmem:[%s493 + $0x750] sm:$0xff]
        %v828 = vld [vmem:[%s493 + $0x758] sm:$0xff]
        %v829 = vld [vmem:[%s493 + $0x760] sm:$0xff]
        %v830 = vld [vmem:[%s493 + $0x768] sm:$0xff]
        %v831 = vld [vmem:[%s493 + $0x770] sm:$0xff]
        %v832 = vld [vmem:[%s493 + $0x778] sm:$0xff]
        %v833 = vld [vmem:[%s493 + $0x780] sm:$0xff]
        %v834 = vld [vmem:[%s493 + $0x788] sm:$0xff]
        %v835 = vld [vmem:[%s493 + $0x790] sm:$0xff]
        %v836 = vld [vmem:[%s493 + $0x798] sm:$0xff]
        %v837 = vld [vmem:[%s493 + $0x7a0] sm:$0xff]
        %v838 = vld [vmem:[%s493 + $0x7a8] sm:$0xff]
        %v839 = vld [vmem:[%s493 + $0x7b0] sm:$0xff]
        %v840 = vld [vmem:[%s493 + $0x7b8] sm:$0xff]
        %v841 = vld [vmem:[%s493 + $0x7c0] sm:$0xff]
        %v842 = vld [vmem:[%s493 + $0x7c8] sm:$0xff]
        %v843 = vld [vmem:[%s493 + $0x7d0] sm:$0xff]
        %v844 = vld [vmem:[%s493 + $0x7d8] sm:$0xff]
        %v845 = vld [vmem:[%s493 + $0x7e0] sm:$0xff]
        %v846 = vld [vmem:[%s493 + $0x7e8] sm:$0xff]
        %v847 = vld [vmem:[%s493 + $0x7f0] sm:$0xff]
        %v848 = vld [vmem:[%s493 + $0x7f8] sm:$0xff]
        %v849 = vld [vmem:[%s493 + $0x800] sm:$0xff]
        %v850 = vld [vmem:[%s493 + $0x808] sm:$0xff]
        %v851 = vld [vmem:[%s493 + $0x810] sm:$0xff]
        %v852 = vld [vmem:[%s493 + $0x818] sm:$0xff]
        %v853 = vld [vmem:[%s493 + $0x820] sm:$0xff]
        %v854 = vld [vmem:[%s493 + $0x828] sm:$0xff]
        %v855 = vld [vmem:[%s493 + $0x830] sm:$0xff]
        %v856 = vld [vmem:[%s493 + $0x838] sm:$0xff]
        %v857 = vld [vmem:[%s493 + $0x840] sm:$0xff]
        %v858 = vld [vmem:[%s493 + $0x848] sm:$0xff]
        %v859 = vld [vmem:[%s493 + $0x850] sm:$0xff]
        %v860 = vld [vmem:[%s493 + $0x858] sm:$0xff]
        %v861 = vld [vmem:[%s493 + $0x860] sm:$0xff]
        %v862 = vld [vmem:[%s493 + $0x868] sm:$0xff]
        %v863 = vld [vmem:[%s493 + $0x870] sm:$0xff]
        %v864 = vld [vmem:[%s493 + $0x878] sm:$0xff]
        %v865 = vld [vmem:[%s493 + $0x880] sm:$0xff]
        %v866 = vld [vmem:[%s493 + $0x888] sm:$0xff]
        %v867 = vld [vmem:[%s493 + $0x890] sm:$0xff]
        %v868 = vld [vmem:[%s493 + $0x898] sm:$0xff]
        %v869 = vld [vmem:[%s493 + $0x8a0] sm:$0xff]
        %v870 = vld [vmem:[%s493 + $0x8a8] sm:$0xff]
        %v871 = vld [vmem:[%s493 + $0x8b0] sm:$0xff]
        %v872 = vld [vmem:[%s493 + $0x8b8] sm:$0xff]
        %v873 = vld [vmem:[%s493 + $0x8c0] sm:$0xff]
        %v874 = vld [vmem:[%s493 + $0x8c8] sm:$0xff]
        %v875 = vld [vmem:[%s493 + $0x8d0] sm:$0xff]
        %v876 = vld [vmem:[%s493 + $0x8d8] sm:$0xff]
        %v877 = vld [vmem:[%s493 + $0x8e0] sm:$0xff]
        %v878 = vld [vmem:[%s493 + $0x8e8] sm:$0xff]
        %v879 = vld [vmem:[%s493 + $0x8f0] sm:$0xff]
        %v880 = vld [vmem:[%s493 + $0x8f8] sm:$0xff]
        %v881 = vld [vmem:[%s493 + $0x900] sm:$0xff]
        %v882 = vld [vmem:[%s493 + $0x908] sm:$0xff]
        %v883 = vld [vmem:[%s493 + $0x910] sm:$0xff]
        %v884 = vld [vmem:[%s493 + $0x918] sm:$0xff]
        %v885 = vld [vmem:[%s493 + $0x920] sm:$0xff]
        %v886 = vld [vmem:[%s493 + $0x928] sm:$0xff]
        %v887 = vld [vmem:[%s493 + $0x930] sm:$0xff]
        %v888 = vld [vmem:[%s493 + $0x938] sm:$0xff]
        %v889 = vld [vmem:[%s493 + $0x940] sm:$0xff]
        %v890 = vld [vmem:[%s493 + $0x948] sm:$0xff]
        %v891 = vld [vmem:[%s493 + $0x950] sm:$0xff]
        %v892 = vld [vmem:[%s493 + $0x958] sm:$0xff]
        %v893 = vld [vmem:[%s493 + $0x960] sm:$0xff]
        %v894 = vld [vmem:[%s493 + $0x968] sm:$0xff]
        %v895 = vld [vmem:[%s493 + $0x970] sm:$0xff]
        %v896 = vld [vmem:[%s493 + $0x978] sm:$0xff]
        %v897 = vld [vmem:[%s493 + $0x980] sm:$0xff]
        %v898 = vld [vmem:[%s493 + $0x988] sm:$0xff]
        %v899 = vld [vmem:[%s493 + $0x990] sm:$0xff]
        %v900 = vld [vmem:[%s493 + $0x998] sm:$0xff]
        %v901 = vld [vmem:[%s493 + $0x9a0] sm:$0xff]
        %v902 = vld [vmem:[%s493 + $0x9a8] sm:$0xff]
        %v903 = vld [vmem:[%s493 + $0x9b0] sm:$0xff]
        %v904 = vld [vmem:[%s493 + $0x9b8] sm:$0xff]
        %v905 = vld [vmem:[%s493 + $0x9c0] sm:$0xff]
        %v906 = vld [vmem:[%s493 + $0x9c8] sm:$0xff]
        %v907 = vld [vmem:[%s493 + $0x9d0] sm:$0xff]
        %v908 = vld [vmem:[%s493 + $0x9d8] sm:$0xff]
        %v909 = vld [vmem:[%s493 + $0x9e0] sm:$0xff]
        %v910 = vld [vmem:[%s493 + $0x9e8] sm:$0xff]
        %v911 = vld [vmem:[%s493 + $0x9f0] sm:$0xff]
        %v912 = vld [vmem:[%s493 + $0x9f8] sm:$0xff]
        %v913 = vld [vmem:[%s493 + $0xa00] sm:$0xff]
        %v914 = vld [vmem:[%s493 + $0xa08] sm:$0xff]
        %v915 = vld [vmem:[%s493 + $0xa10] sm:$0xff]
        %v916 = vld [vmem:[%s493 + $0xa18] sm:$0xff]
        %v917 = vld [vmem:[%s493 + $0xa20] sm:$0xff]
        %v918 = vld [vmem:[%s493 + $0xa28] sm:$0xff]
        %v919 = vld [vmem:[%s493 + $0xa30] sm:$0xff]
        %v920 = vld [vmem:[%s493 + $0xa38] sm:$0xff]
        %v921 = vld [vmem:[%s493 + $0xa40] sm:$0xff]
        %v922 = vld [vmem:[%s493 + $0xa48] sm:$0xff]
        %v923 = vld [vmem:[%s493 + $0xa50] sm:$0xff]
        %v924 = vld [vmem:[%s493 + $0xa58] sm:$0xff]
        %v925 = vld [vmem:[%s493 + $0xa60] sm:$0xff]
        %v926 = vld [vmem:[%s493 + $0xa68] sm:$0xff]
        %v927 = vld [vmem:[%s493 + $0xa70] sm:$0xff]
        %v928 = vld [vmem:[%s493 + $0xa78] sm:$0xff]
        %v929 = vld [vmem:[%s493 + $0xa80] sm:$0xff]
        %v930 = vld [vmem:[%s493 + $0xa88] sm:$0xff]
        %v931 = vld [vmem:[%s493 + $0xa90] sm:$0xff]
        %v932 = vld [vmem:[%s493 + $0xa98] sm:$0xff]
        %v933 = vld [vmem:[%s493 + $0xaa0] sm:$0xff]
        %v934 = vld [vmem:[%s493 + $0xaa8] sm:$0xff]
        %v935 = vld [vmem:[%s493 + $0xab0] sm:$0xff]
        %v936 = vld [vmem:[%s493 + $0xab8] sm:$0xff]
        %v937 = vld [vmem:[%s493 + $0xac0] sm:$0xff]
        %v938 = vld [vmem:[%s493 + $0xac8] sm:$0xff]
        %v939 = vld [vmem:[%s493 + $0xad0] sm:$0xff]
        %v940 = vld [vmem:[%s493 + $0xad8] sm:$0xff]
        %v941 = vld [vmem:[%s493 + $0xae0] sm:$0xff]
        %v942 = vld [vmem:[%s493 + $0xae8] sm:$0xff]
        %v943 = vld [vmem:[%s493 + $0xaf0] sm:$0xff]
        %v944 = vld [vmem:[%s493 + $0xaf8] sm:$0xff]
        %v945 = vld [vmem:[%s493 + $0xb00] sm:$0xff]
        %v946 = vld [vmem:[%s493 + $0xb08] sm:$0xff]
        %v947 = vld [vmem:[%s493 + $0xb10] sm:$0xff]
        %v948 = vld [vmem:[%s493 + $0xb18] sm:$0xff]
        %v949 = vld [vmem:[%s493 + $0xb20] sm:$0xff]
        %v950 = vld [vmem:[%s493 + $0xb28] sm:$0xff]
        %v951 = vld [vmem:[%s493 + $0xb30] sm:$0xff]
        %v952 = vld [vmem:[%s493 + $0xb38] sm:$0xff]
        %v953 = vld [vmem:[%s493 + $0xb40] sm:$0xff]
        %v954 = vld [vmem:[%s493 + $0xb48] sm:$0xff]
        %v955 = vld [vmem:[%s493 + $0xb50] sm:$0xff]
        %v956 = vld [vmem:[%s493 + $0xb58] sm:$0xff]
        %v957 = vld [vmem:[%s493 + $0xb60] sm:$0xff]
        %v958 = vld [vmem:[%s493 + $0xb68] sm:$0xff]
        %v959 = vld [vmem:[%s493 + $0xb70] sm:$0xff]
        %v960 = vld [vmem:[%s493 + $0xb78] sm:$0xff]
        %v961 = vld [vmem:[%s493 + $0xb80] sm:$0xff]
        %v962 = vld [vmem:[%s493 + $0xb88] sm:$0xff]
        %v963 = vld [vmem:[%s493 + $0xb90] sm:$0xff]
        %v964 = vld [vmem:[%s493 + $0xb98] sm:$0xff]
        %v965 = vld [vmem:[%s493 + $0xba0] sm:$0xff]
        %v966 = vld [vmem:[%s493 + $0xba8] sm:$0xff]
        %v967 = vld [vmem:[%s493 + $0xbb0] sm:$0xff]
        %v968 = vld [vmem:[%s493 + $0xbb8] sm:$0xff]
        %v969 = vld [vmem:[%s493 + $0xbc0] sm:$0xff]
        %v970 = vld [vmem:[%s493 + $0xbc8] sm:$0xff]
        %v971 = vld [vmem:[%s493 + $0xbd0] sm:$0xff]
        %v972 = vld [vmem:[%s493 + $0xbd8] sm:$0xff]
        %v973 = vld [vmem:[%s493 + $0xbe0] sm:$0xff]
        %v974 = vld [vmem:[%s493 + $0xbe8] sm:$0xff]
        %v975 = vld [vmem:[%s493 + $0xbf0] sm:$0xff]
        %v976 = vld [vmem:[%s493 + $0xbf8] sm:$0xff]
        %v977 = vld [vmem:[%s493 + $0xc00] sm:$0xff]
        %v978 = vld [vmem:[%s493 + $0xc08] sm:$0xff]
        %v979 = vld [vmem:[%s493 + $0xc10] sm:$0xff]
        %v980 = vld [vmem:[%s493 + $0xc18] sm:$0xff]
        %v981 = vld [vmem:[%s493 + $0xc20] sm:$0xff]
        %v982 = vld [vmem:[%s493 + $0xc28] sm:$0xff]
        %v983 = vld [vmem:[%s493 + $0xc30] sm:$0xff]
        %v984 = vld [vmem:[%s493 + $0xc38] sm:$0xff]
        %v985 = vld [vmem:[%s493 + $0xc40] sm:$0xff]
        %v986 = vld [vmem:[%s493 + $0xc48] sm:$0xff]
        %v987 = vld [vmem:[%s493 + $0xc50] sm:$0xff]
        %v988 = vld [vmem:[%s493 + $0xc58] sm:$0xff]
        %v989 = vld [vmem:[%s493 + $0xc60] sm:$0xff]
        %v990 = vld [vmem:[%s493 + $0xc68] sm:$0xff]
        %v991 = vld [vmem:[%s493 + $0xc70] sm:$0xff]
        %v992 = vld [vmem:[%s493 + $0xc78] sm:$0xff]
        %v993 = vld [vmem:[%s493 + $0xc80] sm:$0xff]
        %v994 = vld [vmem:[%s493 + $0xc88] sm:$0xff]
        %v995 = vld [vmem:[%s493 + $0xc90] sm:$0xff]
        %v996 = vld [vmem:[%s493 + $0xc98] sm:$0xff]
        %v997 = vld [vmem:[%s493 + $0xca0] sm:$0xff]
        %v998 = vld [vmem:[%s493 + $0xca8] sm:$0xff]
        %v999 = vld [vmem:[%s493 + $0xcb0] sm:$0xff]
        %v1000 = vld [vmem:[%s493 + $0xcb8] sm:$0xff]
        %v1001 = vld [vmem:[%s493 + $0xcc0] sm:$0xff]
        %v1002 = vld [vmem:[%s493 + $0xcc8] sm:$0xff]
        %v1003 = vld [vmem:[%s493 + $0xcd0] sm:$0xff]
        %v1004 = vld [vmem:[%s493 + $0xcd8] sm:$0xff]
        %v1005 = vld [vmem:[%s493 + $0xce0] sm:$0xff]
        %v1006 = vld [vmem:[%s493 + $0xce8] sm:$0xff]
        %v1007 = vld [vmem:[%s493 + $0xcf0] sm:$0xff]
        %v1008 = vld [vmem:[%s493 + $0xcf8] sm:$0xff]
        %v1009 = vld [vmem:[%s493 + $0xd00] sm:$0xff]
        %v1010 = vld [vmem:[%s493 + $0xd08] sm:$0xff]
        %v1011 = vld [vmem:[%s493 + $0xd10] sm:$0xff]
        %v1012 = vld [vmem:[%s493 + $0xd18] sm:$0xff]
        %v1013 = vld [vmem:[%s493 + $0xd20] sm:$0xff]
        %v1014 = vld [vmem:[%s493 + $0xd28] sm:$0xff]
        %v1015 = vld [vmem:[%s493 + $0xd30] sm:$0xff]
        %v1016 = vld [vmem:[%s493 + $0xd38] sm:$0xff]
        %v1017 = vld [vmem:[%s493 + $0xd40] sm:$0xff]
        %v1018 = vld [vmem:[%s493 + $0xd48] sm:$0xff]
        %v1019 = vld [vmem:[%s493 + $0xd50] sm:$0xff]
        %v1020 = vld [vmem:[%s493 + $0xd58] sm:$0xff]
        %v1021 = vld [vmem:[%s493 + $0xd60] sm:$0xff]
        %v1022 = vld [vmem:[%s493 + $0xd68] sm:$0xff]
        %v1023 = vld [vmem:[%s493 + $0xd70] sm:$0xff]
        %v1024 = vld [vmem:[%s493 + $0xd78] sm:$0xff]
        %v1025 = vld [vmem:[%s493 + $0xd80] sm:$0xff]
        %v1026 = vld [vmem:[%s493 + $0xd88] sm:$0xff]
        %v1027 = vld [vmem:[%s493 + $0xd90] sm:$0xff]
        %v1028 = vld [vmem:[%s493 + $0xd98] sm:$0xff]
        %v1029 = vld [vmem:[%s493 + $0xda0] sm:$0xff]
        %v1030 = vld [vmem:[%s493 + $0xda8] sm:$0xff]
        %v1031 = vld [vmem:[%s493 + $0xdb0] sm:$0xff]
        %v1032 = vld [vmem:[%s493 + $0xdb8] sm:$0xff]
        %v1033 = vld [vmem:[%s493 + $0xdc0] sm:$0xff]
        %v1034 = vld [vmem:[%s493 + $0xdc8] sm:$0xff]
        %v1035 = vld [vmem:[%s493 + $0xdd0] sm:$0xff]
        %v1036 = vld [vmem:[%s493 + $0xdd8] sm:$0xff]
        %v1037 = vld [vmem:[%s493 + $0xde0] sm:$0xff]
        %v1038 = vld [vmem:[%s493 + $0xde8] sm:$0xff]
        %v1039 = vld [vmem:[%s493 + $0xdf0] sm:$0xff]
        %v1040 = vld [vmem:[%s493 + $0xdf8] sm:$0xff]
        %v1041 = vld [vmem:[%s493 + $0xe00] sm:$0xff]
        %v1042 = vld [vmem:[%s493 + $0xe08] sm:$0xff]
        %v1043 = vld [vmem:[%s493 + $0xe10] sm:$0xff]
        %v1044 = vld [vmem:[%s493 + $0xe18] sm:$0xff]
        %v1045 = vld [vmem:[%s493 + $0xe20] sm:$0xff]
        %v1046 = vld [vmem:[%s493 + $0xe28] sm:$0xff]
        %v1047 = vld [vmem:[%s493 + $0xe30] sm:$0xff]
        %v1048 = vld [vmem:[%s493 + $0xe38] sm:$0xff]
        %v1049 = vld [vmem:[%s493 + $0xe40] sm:$0xff]
        %v1050 = vld [vmem:[%s493 + $0xe48] sm:$0xff]
        %v1051 = vld [vmem:[%s493 + $0xe50] sm:$0xff]
        %v1052 = vld [vmem:[%s493 + $0xe58] sm:$0xff]
        %v1053 = vld [vmem:[%s493 + $0xe60] sm:$0xff]
        %v1054 = vld [vmem:[%s493 + $0xe68] sm:$0xff]
        %v1055 = vld [vmem:[%s493 + $0xe70] sm:$0xff]
        %v1056 = vld [vmem:[%s493 + $0xe78] sm:$0xff]
        %v1057 = vld [vmem:[%s493 + $0xe80] sm:$0xff]
        %v1058 = vld [vmem:[%s493 + $0xe88] sm:$0xff]
        %v1059 = vld [vmem:[%s493 + $0xe90] sm:$0xff]
        %v1060 = vld [vmem:[%s493 + $0xe98] sm:$0xff]
        %v1061 = vld [vmem:[%s493 + $0xea0] sm:$0xff]
        %v1062 = vld [vmem:[%s493 + $0xea8] sm:$0xff]
        %v1063 = vld [vmem:[%s493 + $0xeb0] sm:$0xff]
        %v1064 = vld [vmem:[%s493 + $0xeb8] sm:$0xff]
        %v1065 = vld [vmem:[%s493 + $0xec0] sm:$0xff]
        %v1066 = vld [vmem:[%s493 + $0xec8] sm:$0xff]
        %v1067 = vld [vmem:[%s493 + $0xed0] sm:$0xff]
        %v1068 = vld [vmem:[%s493 + $0xed8] sm:$0xff]
        %v1069 = vld [vmem:[%s493 + $0xee0] sm:$0xff]
        %v1070 = vld [vmem:[%s493 + $0xee8] sm:$0xff]
        %v1071 = vld [vmem:[%s493 + $0xef0] sm:$0xff]
        %v1072 = vld [vmem:[%s493 + $0xef8] sm:$0xff]
        %v1073 = vld [vmem:[%s493 + $0xf00] sm:$0xff]
        %v1074 = vld [vmem:[%s493 + $0xf08] sm:$0xff]
        %v1075 = vld [vmem:[%s493 + $0xf10] sm:$0xff]
        %v1076 = vld [vmem:[%s493 + $0xf18] sm:$0xff]
        %v1077 = vld [vmem:[%s493 + $0xf20] sm:$0xff]
        %v1078 = vld [vmem:[%s493 + $0xf28] sm:$0xff]
        %v1079 = vld [vmem:[%s493 + $0xf30] sm:$0xff]
        %v1080 = vld [vmem:[%s493 + $0xf38] sm:$0xff]
        %v1081 = vld [vmem:[%s493 + $0xf40] sm:$0xff]
        %v1082 = vld [vmem:[%s493 + $0xf48] sm:$0xff]
        %v1083 = vld [vmem:[%s493 + $0xf50] sm:$0xff]
        %v1084 = vld [vmem:[%s493 + $0xf58] sm:$0xff]
        %v1085 = vld [vmem:[%s493 + $0xf60] sm:$0xff]
        %v1086 = vld [vmem:[%s493 + $0xf68] sm:$0xff]
        %v1087 = vld [vmem:[%s493 + $0xf70] sm:$0xff]
        %v1088 = vld [vmem:[%s493 + $0xf78] sm:$0xff]
        %v1089 = vld [vmem:[%s493 + $0xf80] sm:$0xff]
        %v1090 = vld [vmem:[%s493 + $0xf88] sm:$0xff]
        %v1091 = vld [vmem:[%s493 + $0xf90] sm:$0xff]
        %v1092 = vld [vmem:[%s493 + $0xf98] sm:$0xff]
        %v1093 = vld [vmem:[%s493 + $0xfa0] sm:$0xff]
        %v1094 = vld [vmem:[%s493 + $0xfa8] sm:$0xff]
        %v1095 = vld [vmem:[%s493 + $0xfb0] sm:$0xff]
        %v1096 = vld [vmem:[%s493 + $0xfb8] sm:$0xff]
        %v1097 = vld [vmem:[%s493 + $0xfc0] sm:$0xff]
        %v1098 = vld [vmem:[%s493 + $0xfc8] sm:$0xff]
        %v1099 = vld [vmem:[%s493 + $0xfd0] sm:$0xff]
        %v1100 = vld [vmem:[%s493 + $0xfd8] sm:$0xff]
        %v1101 = vld [vmem:[%s493 + $0xfe0] sm:$0xff]
        %v1102 = vld [vmem:[%s493 + $0xfe8] sm:$0xff]
        %v1103 = vld [vmem:[%s493 + $0xff0] sm:$0xff]
        %v1104 = vld [vmem:[%s493 + $0xff8] sm:$0xff]
        %v1105 = vld [vmem:[%s493 + $0x1000] sm:$0xff]
        %v1106 = vld [vmem:[%s493 + $0x1008] sm:$0xff]
        %v1107 = vld [vmem:[%s493 + $0x1010] sm:$0xff]
        %v1108 = vld [vmem:[%s493 + $0x1018] sm:$0xff]
        %v1109 = vld [vmem:[%s493 + $0x1020] sm:$0xff]
        %v1110 = vld [vmem:[%s493 + $0x1028] sm:$0xff]
        %v1111 = vld [vmem:[%s493 + $0x1030] sm:$0xff]
        %v1112 = vld [vmem:[%s493 + $0x1038] sm:$0xff]
        %v1113 = vld [vmem:[%s493 + $0x1040] sm:$0xff]
        %v1114 = vld [vmem:[%s493 + $0x1048] sm:$0xff]
        %v1115 = vld [vmem:[%s493 + $0x1050] sm:$0xff]
        %v1116 = vld [vmem:[%s493 + $0x1058] sm:$0xff]
        %v1117 = vld [vmem:[%s493 + $0x1060] sm:$0xff]
        %v1118 = vld [vmem:[%s493 + $0x1068] sm:$0xff]
        %v1119 = vld [vmem:[%s493 + $0x1070] sm:$0xff]
        %v1120 = vld [vmem:[%s493 + $0x1078] sm:$0xff]
        %v1121 = vld [vmem:[%s493 + $0x1080] sm:$0xff]
        %v1122 = vld [vmem:[%s493 + $0x1088] sm:$0xff]
        %v1123 = vld [vmem:[%s493 + $0x1090] sm:$0xff]
        %v1124 = vld [vmem:[%s493 + $0x1098] sm:$0xff]
        %v1125 = vld [vmem:[%s493 + $0x10a0] sm:$0xff]
        %v1126 = vld [vmem:[%s493 + $0x10a8] sm:$0xff]
        %v1127 = vld [vmem:[%s493 + $0x10b0] sm:$0xff]
        %v1128 = vld [vmem:[%s493 + $0x10b8] sm:$0xff]
        %v1129 = vld [vmem:[%s493 + $0x10c0] sm:$0xff]
        %v1130 = vld [vmem:[%s493 + $0x10c8] sm:$0xff]
        %v1131 = vld [vmem:[%s493 + $0x10d0] sm:$0xff]
        %v1132 = vld [vmem:[%s493 + $0x10d8] sm:$0xff]
        %v1133 = vld [vmem:[%s493 + $0x10e0] sm:$0xff]
        %v1134 = vld [vmem:[%s493 + $0x10e8] sm:$0xff]
        %v1135 = vld [vmem:[%s493 + $0x10f0] sm:$0xff]
        %v1136 = vld [vmem:[%s493 + $0x10f8] sm:$0xff]
        %v1137 = vld [vmem:[%s493 + $0x1100] sm:$0xff]
        %v1138 = vld [vmem:[%s493 + $0x1108] sm:$0xff]
        %v1139 = vld [vmem:[%s493 + $0x1110] sm:$0xff]
        %v1140 = vld [vmem:[%s493 + $0x1118] sm:$0xff]
        %v1141 = vld [vmem:[%s493 + $0x1120] sm:$0xff]
        %v1142 = vld [vmem:[%s493 + $0x1128] sm:$0xff]
        %v1143 = vld [vmem:[%s493 + $0x1130] sm:$0xff]
        %v1144 = vld [vmem:[%s493 + $0x1138] sm:$0xff]
        %v1145 = vld [vmem:[%s493 + $0x1140] sm:$0xff]
        %v1146 = vld [vmem:[%s493 + $0x1148] sm:$0xff]
        %v1147 = vld [vmem:[%s493 + $0x1150] sm:$0xff]
        %v1148 = vld [vmem:[%s493 + $0x1158] sm:$0xff]
        %v1149 = vld [vmem:[%s493 + $0x1160] sm:$0xff]
        %v1150 = vld [vmem:[%s493 + $0x1168] sm:$0xff]
        %v1151 = vld [vmem:[%s493 + $0x1170] sm:$0xff]
        %v1152 = vld [vmem:[%s493 + $0x1178] sm:$0xff]
        %v1153 = vld [vmem:[%s493 + $0x1180] sm:$0xff]
        %v1154 = vld [vmem:[%s493 + $0x1188] sm:$0xff]
        %v1155 = vld [vmem:[%s493 + $0x1190] sm:$0xff]
        %v1156 = vld [vmem:[%s493 + $0x1198] sm:$0xff]
        %v1157 = vld [vmem:[%s493 + $0x11a0] sm:$0xff]
        %v1158 = vld [vmem:[%s493 + $0x11a8] sm:$0xff]
        %v1159 = vld [vmem:[%s493 + $0x11b0] sm:$0xff]
        %v1160 = vld [vmem:[%s493 + $0x11b8] sm:$0xff]
        %v1161 = vld [vmem:[%s493 + $0x11c0] sm:$0xff]
        %v1162 = vld [vmem:[%s493 + $0x11c8] sm:$0xff]
        %v1163 = vld [vmem:[%s493 + $0x11d0] sm:$0xff]
        %v1164 = vld [vmem:[%s493 + $0x11d8] sm:$0xff]
        %v1165 = vld [vmem:[%s493 + $0x11e0] sm:$0xff]
        %v1166 = vld [vmem:[%s493 + $0x11e8] sm:$0xff]
        %v1167 = vld [vmem:[%s493 + $0x11f0] sm:$0xff]
        %v1168 = vld [vmem:[%s493 + $0x11f8] sm:$0xff]
        %v1169 = vld [vmem:[%s493 + $0x1200] sm:$0xff]
        %v1170 = vld [vmem:[%s493 + $0x1208] sm:$0xff]
        %v1171 = vld [vmem:[%s493 + $0x1210] sm:$0xff]
        %v1172 = vld [vmem:[%s493 + $0x1218] sm:$0xff]
        %v1173 = vld [vmem:[%s493 + $0x1220] sm:$0xff]
        %v1174 = vld [vmem:[%s493 + $0x1228] sm:$0xff]
        %v1175 = vld [vmem:[%s493 + $0x1230] sm:$0xff]
        %v1176 = vld [vmem:[%s493 + $0x1238] sm:$0xff]
        %v1177 = vld [vmem:[%s493 + $0x1240] sm:$0xff]
        %v1178 = vld [vmem:[%s493 + $0x1248] sm:$0xff]
        %v1179 = vld [vmem:[%s493 + $0x1250] sm:$0xff]
        %v1180 = vld [vmem:[%s493 + $0x1258] sm:$0xff]
        %v1181 = vld [vmem:[%s493 + $0x1260] sm:$0xff]
        %v1182 = vld [vmem:[%s493 + $0x1268] sm:$0xff]
        %v1183 = vld [vmem:[%s493 + $0x1270] sm:$0xff]
        %v1184 = vld [vmem:[%s493 + $0x1278] sm:$0xff]
        %v1185 = vld [vmem:[%s493 + $0x1280] sm:$0xff]
        %v1186 = vld [vmem:[%s493 + $0x1288] sm:$0xff]
        %v1187 = vld [vmem:[%s493 + $0x1290] sm:$0xff]
        %v1188 = vld [vmem:[%s493 + $0x1298] sm:$0xff]
        %v1189 = vld [vmem:[%s493 + $0x12a0] sm:$0xff]
        %v1190 = vld [vmem:[%s493 + $0x12a8] sm:$0xff]
        %v1191 = vld [vmem:[%s493 + $0x12b0] sm:$0xff]
        %v1192 = vld [vmem:[%s493 + $0x12b8] sm:$0xff]
        %v1193 = vld [vmem:[%s493 + $0x12c0] sm:$0xff]
        %v1194 = vld [vmem:[%s493 + $0x12c8] sm:$0xff]
        %v1195 = vld [vmem:[%s493 + $0x12d0] sm:$0xff]
        %v1196 = vld [vmem:[%s493 + $0x12d8] sm:$0xff]
        %v1197 = vld [vmem:[%s493 + $0x12e0] sm:$0xff]
        %v1198 = vld [vmem:[%s493 + $0x12e8] sm:$0xff]
        %v1199 = vld [vmem:[%s493 + $0x12f0] sm:$0xff]
        %v1200 = vld [vmem:[%s493 + $0x12f8] sm:$0xff]
        %v1201 = vld [vmem:[%s493 + $0x1300] sm:$0xff]
        %v1202 = vld [vmem:[%s493 + $0x1308] sm:$0xff]
        %v1203 = vld [vmem:[%s493 + $0x1310] sm:$0xff]
        %v1204 = vld [vmem:[%s493 + $0x1318] sm:$0xff]
        %v1205 = vld [vmem:[%s493 + $0x1320] sm:$0xff]
        %v1206 = vld [vmem:[%s493 + $0x1328] sm:$0xff]
        %v1207 = vld [vmem:[%s493 + $0x1330] sm:$0xff]
        %v1208 = vld [vmem:[%s493 + $0x1338] sm:$0xff]
        %v1209 = vld [vmem:[%s493 + $0x1340] sm:$0xff]
        %v1210 = vld [vmem:[%s493 + $0x1348] sm:$0xff]
        %v1211 = vld [vmem:[%s493 + $0x1350] sm:$0xff]
        %v1212 = vld [vmem:[%s493 + $0x1358] sm:$0xff]
        %v1213 = vld [vmem:[%s493 + $0x1360] sm:$0xff]
        %v1214 = vld [vmem:[%s493 + $0x1368] sm:$0xff]
        %v1215 = vld [vmem:[%s493 + $0x1370] sm:$0xff]
        %v1216 = vld [vmem:[%s493 + $0x1378] sm:$0xff]
        %v1217 = vld [vmem:[%s493 + $0x1380] sm:$0xff]
        %v1218 = vld [vmem:[%s493 + $0x1388] sm:$0xff]
        %v1219 = vld [vmem:[%s493 + $0x1390] sm:$0xff]
        %v1220 = vld [vmem:[%s493 + $0x1398] sm:$0xff]
        %v1221 = vld [vmem:[%s493 + $0x13a0] sm:$0xff]
        %v1222 = vld [vmem:[%s493 + $0x13a8] sm:$0xff]
        %v1223 = vld [vmem:[%s493 + $0x13b0] sm:$0xff]
        %v1224 = vld [vmem:[%s493 + $0x13b8] sm:$0xff]
        %v1225 = vld [vmem:[%s493 + $0x13c0] sm:$0xff]
        %v1226 = vld [vmem:[%s493 + $0x13c8] sm:$0xff]
        %v1227 = vld [vmem:[%s493 + $0x13d0] sm:$0xff]
        %v1228 = vld [vmem:[%s493 + $0x13d8] sm:$0xff]
        %v1229 = vld [vmem:[%s493 + $0x13e0] sm:$0xff]
        %v1230 = vld [vmem:[%s493 + $0x13e8] sm:$0xff]
        %v1231 = vld [vmem:[%s493 + $0x13f0] sm:$0xff]
        %v1232 = vld [vmem:[%s493 + $0x13f8] sm:$0xff]
        %v1233 = vld [vmem:[%s493 + $0x1400] sm:$0xff]
        %v1234 = vld [vmem:[%s493 + $0x1408] sm:$0xff]
        %v1235 = vld [vmem:[%s493 + $0x1410] sm:$0xff]
        %v1236 = vld [vmem:[%s493 + $0x1418] sm:$0xff]
        %v1237 = vld [vmem:[%s493 + $0x1420] sm:$0xff]
        %v1238 = vld [vmem:[%s493 + $0x1428] sm:$0xff]
        %v1239 = vld [vmem:[%s493 + $0x1430] sm:$0xff]
        %v1240 = vld [vmem:[%s493 + $0x1438] sm:$0xff]
        %v1241 = vld [vmem:[%s493 + $0x1440] sm:$0xff]
        %v1242 = vld [vmem:[%s493 + $0x1448] sm:$0xff]
        %v1243 = vld [vmem:[%s493 + $0x1450] sm:$0xff]
        %v1244 = vld [vmem:[%s493 + $0x1458] sm:$0xff]
        %v1245 = vld [vmem:[%s493 + $0x1460] sm:$0xff]
        %v1246 = vld [vmem:[%s493 + $0x1468] sm:$0xff]
        %v1247 = vld [vmem:[%s493 + $0x1470] sm:$0xff]
        %v1248 = vld [vmem:[%s493 + $0x1478] sm:$0xff]
        %v1249 = vld [vmem:[%s493 + $0x1480] sm:$0xff]
        %v1250 = vld [vmem:[%s493 + $0x1488] sm:$0xff]
        %v1251 = vld [vmem:[%s493 + $0x1490] sm:$0xff]
        %v1252 = vld [vmem:[%s493 + $0x1498] sm:$0xff]
        %v1253 = vld [vmem:[%s493 + $0x14a0] sm:$0xff]
        %v1254 = vld [vmem:[%s493 + $0x14a8] sm:$0xff]
        %v1255 = vld [vmem:[%s493 + $0x14b0] sm:$0xff]
        %v1256 = vld [vmem:[%s493 + $0x14b8] sm:$0xff]
        %v1257 = vld [vmem:[%s493 + $0x14c0] sm:$0xff]
        %v1258 = vld [vmem:[%s493 + $0x14c8] sm:$0xff]
        %v1259 = vld [vmem:[%s493 + $0x14d0] sm:$0xff]
        %v1260 = vld [vmem:[%s493 + $0x14d8] sm:$0xff]
        %v1261 = vld [vmem:[%s493 + $0x14e0] sm:$0xff]
        %v1262 = vld [vmem:[%s493 + $0x14e8] sm:$0xff]
        %v1263 = vld [vmem:[%s493 + $0x14f0] sm:$0xff]
        %v1264 = vld [vmem:[%s493 + $0x14f8] sm:$0xff]
        %v1265 = vld [vmem:[%s493 + $0x1500] sm:$0xff]
        %v1266 = vld [vmem:[%s493 + $0x1508] sm:$0xff]
        %v1267 = vld [vmem:[%s493 + $0x1510] sm:$0xff]
        %v1268 = vld [vmem:[%s493 + $0x1518] sm:$0xff]
        %v1269 = vld [vmem:[%s493 + $0x1520] sm:$0xff]
        %v1270 = vld [vmem:[%s493 + $0x1528] sm:$0xff]
        %v1271 = vld [vmem:[%s493 + $0x1530] sm:$0xff]
        %v1272 = vld [vmem:[%s493 + $0x1538] sm:$0xff]
        %v1273 = vld [vmem:[%s493 + $0x1540] sm:$0xff]
        %v1274 = vld [vmem:[%s493 + $0x1548] sm:$0xff]
        %v1275 = vld [vmem:[%s493 + $0x1550] sm:$0xff]
        %v1276 = vld [vmem:[%s493 + $0x1558] sm:$0xff]
        %v1277 = vld [vmem:[%s493 + $0x1560] sm:$0xff]
        %v1278 = vld [vmem:[%s493 + $0x1568] sm:$0xff]
        %v1279 = vld [vmem:[%s493 + $0x1570] sm:$0xff]
        %v1280 = vld [vmem:[%s493 + $0x1578] sm:$0xff]
        %v1281 = vld [vmem:[%s493 + $0x1580] sm:$0xff]
        %v1282 = vld [vmem:[%s493 + $0x1588] sm:$0xff]
        %v1283 = vld [vmem:[%s493 + $0x1590] sm:$0xff]
        %v1284 = vld [vmem:[%s493 + $0x1598] sm:$0xff]
        %v1285 = vld [vmem:[%s493 + $0x15a0] sm:$0xff]
        %v1286 = vld [vmem:[%s493 + $0x15a8] sm:$0xff]
        %v1287 = vld [vmem:[%s493 + $0x15b0] sm:$0xff]
        %v1288 = vld [vmem:[%s493 + $0x15b8] sm:$0xff]
        %v1289 = vld [vmem:[%s493 + $0x15c0] sm:$0xff]
        %v1290 = vld [vmem:[%s493 + $0x15c8] sm:$0xff]
        %v1291 = vld [vmem:[%s493 + $0x15d0] sm:$0xff]
        %v1292 = vld [vmem:[%s493 + $0x15d8] sm:$0xff]
        %v1293 = vld [vmem:[%s493 + $0x15e0] sm:$0xff]
        %v1294 = vld [vmem:[%s493 + $0x15e8] sm:$0xff]
        %v1295 = vld [vmem:[%s493 + $0x15f0] sm:$0xff]
        %v1296 = vld [vmem:[%s493 + $0x15f8] sm:$0xff]
        %v1297 = vld [vmem:[%s493 + $0x1600] sm:$0xff]
        %v1298 = vld [vmem:[%s493 + $0x1608] sm:$0xff]
        %v1299 = vld [vmem:[%s493 + $0x1610] sm:$0xff]
        %v1300 = vld [vmem:[%s493 + $0x1618] sm:$0xff]
        %v1301 = vld [vmem:[%s493 + $0x1620] sm:$0xff]
        %v1302 = vld [vmem:[%s493 + $0x1628] sm:$0xff]
        %v1303 = vld [vmem:[%s493 + $0x1630] sm:$0xff]
        %v1304 = vld [vmem:[%s493 + $0x1638] sm:$0xff]
        %v1305 = vld [vmem:[%s493 + $0x1640] sm:$0xff]
        %v1306 = vld [vmem:[%s493 + $0x1648] sm:$0xff]
        %v1307 = vld [vmem:[%s493 + $0x1650] sm:$0xff]
        %v1308 = vld [vmem:[%s493 + $0x1658] sm:$0xff]
        %v1309 = vld [vmem:[%s493 + $0x1660] sm:$0xff]
        %v1310 = vld [vmem:[%s493 + $0x1668] sm:$0xff]
        %v1311 = vld [vmem:[%s493 + $0x1670] sm:$0xff]
        %v1312 = vld [vmem:[%s493 + $0x1678] sm:$0xff]
        %v1313 = vld [vmem:[%s493 + $0x1680] sm:$0xff]
        %v1314 = vld [vmem:[%s493 + $0x1688] sm:$0xff]
        %v1315 = vld [vmem:[%s493 + $0x1690] sm:$0xff]
        %v1316 = vld [vmem:[%s493 + $0x1698] sm:$0xff]
        %v1317 = vld [vmem:[%s493 + $0x16a0] sm:$0xff]
        %v1318 = vld [vmem:[%s493 + $0x16a8] sm:$0xff]
        %v1319 = vld [vmem:[%s493 + $0x16b0] sm:$0xff]
        %v1320 = vld [vmem:[%s493 + $0x16b8] sm:$0xff]
        %v1321 = vld [vmem:[%s493 + $0x16c0] sm:$0xff]
        %v1322 = vld [vmem:[%s493 + $0x16c8] sm:$0xff]
        %v1323 = vld [vmem:[%s493 + $0x16d0] sm:$0xff]
        %v1324 = vld [vmem:[%s493 + $0x16d8] sm:$0xff]
        %v1325 = vld [vmem:[%s493 + $0x16e0] sm:$0xff]
        %v1326 = vld [vmem:[%s493 + $0x16e8] sm:$0xff]
        %v1327 = vld [vmem:[%s493 + $0x16f0] sm:$0xff]
        %v1328 = vld [vmem:[%s493 + $0x16f8] sm:$0xff]
        %v1329 = vld [vmem:[%s493 + $0x1700] sm:$0xff]
        %v1330 = vld [vmem:[%s493 + $0x1708] sm:$0xff]
        %v1331 = vld [vmem:[%s493 + $0x1710] sm:$0xff]
        %v1332 = vld [vmem:[%s493 + $0x1718] sm:$0xff]
        %v1333 = vld [vmem:[%s493 + $0x1720] sm:$0xff]
        %v1334 = vld [vmem:[%s493 + $0x1728] sm:$0xff]
        %v1335 = vld [vmem:[%s493 + $0x1730] sm:$0xff]
        %v1336 = vld [vmem:[%s493 + $0x1738] sm:$0xff]
        %v1337 = vld [vmem:[%s493 + $0x1740] sm:$0xff]
        %v1338 = vld [vmem:[%s493 + $0x1748] sm:$0xff]
        %v1339 = vld [vmem:[%s493 + $0x1750] sm:$0xff]
        %v1340 = vld [vmem:[%s493 + $0x1758] sm:$0xff]
        %v1341 = vld [vmem:[%s493 + $0x1760] sm:$0xff]
        %v1342 = vld [vmem:[%s493 + $0x1768] sm:$0xff]
        %v1343 = vld [vmem:[%s493 + $0x1770] sm:$0xff]
        %v1344 = vld [vmem:[%s493 + $0x1778] sm:$0xff]
        %v1345 = vld [vmem:[%s493 + $0x1780] sm:$0xff]
        %v1346 = vld [vmem:[%s493 + $0x1788] sm:$0xff]
        %v1347 = vld [vmem:[%s493 + $0x1790] sm:$0xff]
        %v1348 = vld [vmem:[%s493 + $0x1798] sm:$0xff]
        %v1349 = vld [vmem:[%s493 + $0x17a0] sm:$0xff]
        %v1350 = vld [vmem:[%s493 + $0x17a8] sm:$0xff]
        %v1351 = vld [vmem:[%s493 + $0x17b0] sm:$0xff]
        %v1352 = vld [vmem:[%s493 + $0x17b8] sm:$0xff]
        %v1353 = vld [vmem:[%s493 + $0x17c0] sm:$0xff]
        %v1354 = vld [vmem:[%s493 + $0x17c8] sm:$0xff]
        %v1355 = vld [vmem:[%s493 + $0x17d0] sm:$0xff]
        %v1356 = vld [vmem:[%s493 + $0x17d8] sm:$0xff]
        %v1357 = vld [vmem:[%s493 + $0x17e0] sm:$0xff]
        %v1358 = vld [vmem:[%s493 + $0x17e8] sm:$0xff]
        %v1359 = vld [vmem:[%s493 + $0x17f0] sm:$0xff]
        %v1360 = vld [vmem:[%s493 + $0x17f8] sm:$0xff]
        %v1361 = vld [vmem:[%s493 + $0x1800] sm:$0xff]
        %v1362 = vld [vmem:[%s493 + $0x1808] sm:$0xff]
        %v1363 = vld [vmem:[%s493 + $0x1810] sm:$0xff]
        %v1364 = vld [vmem:[%s493 + $0x1818] sm:$0xff]
        %v1365 = vld [vmem:[%s493 + $0x1820] sm:$0xff]
        %v1366 = vld [vmem:[%s493 + $0x1828] sm:$0xff]
        %v1367 = vld [vmem:[%s493 + $0x1830] sm:$0xff]
        %v1368 = vld [vmem:[%s493 + $0x1838] sm:$0xff]
        %v1369 = vld [vmem:[%s493 + $0x1840] sm:$0xff]
        %v1370 = vld [vmem:[%s493 + $0x1848] sm:$0xff]
        %v1371 = vld [vmem:[%s493 + $0x1850] sm:$0xff]
        %v1372 = vld [vmem:[%s493 + $0x1858] sm:$0xff]
        %v1373 = vld [vmem:[%s493 + $0x1860] sm:$0xff]
        %v1374 = vld [vmem:[%s493 + $0x1868] sm:$0xff]
        %v1375 = vld [vmem:[%s493 + $0x1870] sm:$0xff]
        %v1376 = vld [vmem:[%s493 + $0x1878] sm:$0xff]
        %v1377 = vld [vmem:[%s493 + $0x1880] sm:$0xff]
        %v1378 = vld [vmem:[%s493 + $0x1888] sm:$0xff]
        %v1379 = vld [vmem:[%s493 + $0x1890] sm:$0xff]
        %v1380 = vld [vmem:[%s493 + $0x1898] sm:$0xff]
        %v1381 = vld [vmem:[%s493 + $0x18a0] sm:$0xff]
        %v1382 = vld [vmem:[%s493 + $0x18a8] sm:$0xff]
        %v1383 = vld [vmem:[%s493 + $0x18b0] sm:$0xff]
        %v1384 = vld [vmem:[%s493 + $0x18b8] sm:$0xff]
        %v1385 = vld [vmem:[%s493 + $0x18c0] sm:$0xff]
        %v1386 = vld [vmem:[%s493 + $0x18c8] sm:$0xff]
        %v1387 = vld [vmem:[%s493 + $0x18d0] sm:$0xff]
        %v1388 = vld [vmem:[%s493 + $0x18d8] sm:$0xff]
        %v1389 = vld [vmem:[%s493 + $0x18e0] sm:$0xff]
        %v1390 = vld [vmem:[%s493 + $0x18e8] sm:$0xff]
        %v1391 = vld [vmem:[%s493 + $0x18f0] sm:$0xff]
        %v1392 = vld [vmem:[%s493 + $0x18f8] sm:$0xff]
        %v1393 = vld [vmem:[%s493 + $0x1900] sm:$0xff]
        %v1394 = vld [vmem:[%s493 + $0x1908] sm:$0xff]
        %v1395 = vld [vmem:[%s493 + $0x1910] sm:$0xff]
        %v1396 = vld [vmem:[%s493 + $0x1918] sm:$0xff]
        %v1397 = vld [vmem:[%s493 + $0x1920] sm:$0xff]
        %v1398 = vld [vmem:[%s493 + $0x1928] sm:$0xff]
        %v1399 = vld [vmem:[%s493 + $0x1930] sm:$0xff]
        %v1400 = vld [vmem:[%s493 + $0x1938] sm:$0xff]
        %v1401 = vld [vmem:[%s493 + $0x1940] sm:$0xff]
        %v1402 = vld [vmem:[%s493 + $0x1948] sm:$0xff]
        %v1403 = vld [vmem:[%s493 + $0x1950] sm:$0xff]
        %v1404 = vld [vmem:[%s493 + $0x1958] sm:$0xff]
        %v1405 = vld [vmem:[%s493 + $0x1960] sm:$0xff]
        %v1406 = vld [vmem:[%s493 + $0x1968] sm:$0xff]
        %v1407 = vld [vmem:[%s493 + $0x1970] sm:$0xff]
        %v1408 = vld [vmem:[%s493 + $0x1978] sm:$0xff]
        %v1409 = vld [vmem:[%s493 + $0x1980] sm:$0xff]
        %v1410 = vld [vmem:[%s493 + $0x1988] sm:$0xff]
        %v1411 = vld [vmem:[%s493 + $0x1990] sm:$0xff]
        %v1412 = vld [vmem:[%s493 + $0x1998] sm:$0xff]
        %v1413 = vld [vmem:[%s493 + $0x19a0] sm:$0xff]
        %v1414 = vld [vmem:[%s493 + $0x19a8] sm:$0xff]
        %v1415 = vld [vmem:[%s493 + $0x19b0] sm:$0xff]
        %v1416 = vld [vmem:[%s493 + $0x19b8] sm:$0xff]
        %v1417 = vld [vmem:[%s493 + $0x19c0] sm:$0xff]
        %v1418 = vld [vmem:[%s493 + $0x19c8] sm:$0xff]
        %v1419 = vld [vmem:[%s493 + $0x19d0] sm:$0xff]
        %v1420 = vld [vmem:[%s493 + $0x19d8] sm:$0xff]
        %v1421 = vld [vmem:[%s493 + $0x19e0] sm:$0xff]
        %v1422 = vld [vmem:[%s493 + $0x19e8] sm:$0xff]
        %v1423 = vld [vmem:[%s493 + $0x19f0] sm:$0xff]
        %v1424 = vld [vmem:[%s493 + $0x19f8] sm:$0xff]
        %v1425 = vld [vmem:[%s493 + $0x1a00] sm:$0xff]
        %v1426 = vld [vmem:[%s493 + $0x1a08] sm:$0xff]
        %v1427 = vld [vmem:[%s493 + $0x1a10] sm:$0xff]
        %v1428 = vld [vmem:[%s493 + $0x1a18] sm:$0xff]
        %v1429 = vld [vmem:[%s493 + $0x1a20] sm:$0xff]
        %v1430 = vld [vmem:[%s493 + $0x1a28] sm:$0xff]
        %v1431 = vld [vmem:[%s493 + $0x1a30] sm:$0xff]
        %v1432 = vld [vmem:[%s493 + $0x1a38] sm:$0xff]
        %v1433 = vld [vmem:[%s493 + $0x1a40] sm:$0xff]
        %v1434 = vld [vmem:[%s493 + $0x1a48] sm:$0xff]
        %v1435 = vld [vmem:[%s493 + $0x1a50] sm:$0xff]
        %v1436 = vld [vmem:[%s493 + $0x1a58] sm:$0xff]
        %v1437 = vld [vmem:[%s493 + $0x1a60] sm:$0xff]
        %v1438 = vld [vmem:[%s493 + $0x1a68] sm:$0xff]
        %v1439 = vld [vmem:[%s493 + $0x1a70] sm:$0xff]
        %v1440 = vld [vmem:[%s493 + $0x1a78] sm:$0xff]
        %v1441 = vld [vmem:[%s493 + $0x1a80] sm:$0xff]
        %v1442 = vld [vmem:[%s493 + $0x1a88] sm:$0xff]
        %v1443 = vld [vmem:[%s493 + $0x1a90] sm:$0xff]
        %v1444 = vld [vmem:[%s493 + $0x1a98] sm:$0xff]
        %v1445 = vld [vmem:[%s493 + $0x1aa0] sm:$0xff]
        %v1446 = vld [vmem:[%s493 + $0x1aa8] sm:$0xff]
        %v1447 = vld [vmem:[%s493 + $0x1ab0] sm:$0xff]
        %v1448 = vld [vmem:[%s493 + $0x1ab8] sm:$0xff]
        %v1449 = vld [vmem:[%s493 + $0x1ac0] sm:$0xff]
        %v1450 = vld [vmem:[%s493 + $0x1ac8] sm:$0xff]
        %v1451 = vld [vmem:[%s493 + $0x1ad0] sm:$0xff]
        %v1452 = vld [vmem:[%s493 + $0x1ad8] sm:$0xff]
        %v1453 = vld [vmem:[%s493 + $0x1ae0] sm:$0xff]
        %v1454 = vld [vmem:[%s493 + $0x1ae8] sm:$0xff]
        %v1455 = vld [vmem:[%s493 + $0x1af0] sm:$0xff]
        %v1456 = vld [vmem:[%s493 + $0x1af8] sm:$0xff]
        %v1457 = vld [vmem:[%s493 + $0x1b00] sm:$0xff]
        %v1458 = vld [vmem:[%s493 + $0x1b08] sm:$0xff]
        %v1459 = vld [vmem:[%s493 + $0x1b10] sm:$0xff]
        %v1460 = vld [vmem:[%s493 + $0x1b18] sm:$0xff]
        %v1461 = vld [vmem:[%s493 + $0x1b20] sm:$0xff]
        %v1462 = vld [vmem:[%s493 + $0x1b28] sm:$0xff]
        %v1463 = vld [vmem:[%s493 + $0x1b30] sm:$0xff]
        %v1464 = vld [vmem:[%s493 + $0x1b38] sm:$0xff]
        %v1465 = vld [vmem:[%s493 + $0x1b40] sm:$0xff]
        %v1466 = vld [vmem:[%s493 + $0x1b48] sm:$0xff]
        %v1467 = vld [vmem:[%s493 + $0x1b50] sm:$0xff]
        %v1468 = vld [vmem:[%s493 + $0x1b58] sm:$0xff]
        %v1469 = vld [vmem:[%s493 + $0x1b60] sm:$0xff]
        %v1470 = vld [vmem:[%s493 + $0x1b68] sm:$0xff]
        %v1471 = vld [vmem:[%s493 + $0x1b70] sm:$0xff]
        %v1472 = vld [vmem:[%s493 + $0x1b78] sm:$0xff]
        %v1473 = vld [vmem:[%s493 + $0x1b80] sm:$0xff]
        %v1474 = vld [vmem:[%s493 + $0x1b88] sm:$0xff]
        %v1475 = vld [vmem:[%s493 + $0x1b90] sm:$0xff]
        %v1476 = vld [vmem:[%s493 + $0x1b98] sm:$0xff]
        %v1477 = vld [vmem:[%s493 + $0x1ba0] sm:$0xff]
        %v1478 = vld [vmem:[%s493 + $0x1ba8] sm:$0xff]
        %v1479 = vld [vmem:[%s493 + $0x1bb0] sm:$0xff]
        %v1480 = vld [vmem:[%s493 + $0x1bb8] sm:$0xff]
        %v1481 = vld [vmem:[%s493 + $0x1bc0] sm:$0xff]
        %v1482 = vld [vmem:[%s493 + $0x1bc8] sm:$0xff]
        %v1483 = vld [vmem:[%s493 + $0x1bd0] sm:$0xff]
        %v1484 = vld [vmem:[%s493 + $0x1bd8] sm:$0xff]
        %v1485 = vld [vmem:[%s493 + $0x1be0] sm:$0xff]
        %v1486 = vld [vmem:[%s493 + $0x1be8] sm:$0xff]
        %v1487 = vld [vmem:[%s493 + $0x1bf0] sm:$0xff]
        %v1488 = vld [vmem:[%s493 + $0x1bf8] sm:$0xff]
        %v1489 = vld [vmem:[%s493 + $0x1c00] sm:$0xff]
        %v1490 = vld [vmem:[%s493 + $0x1c08] sm:$0xff]
        %v1491 = vld [vmem:[%s493 + $0x1c10] sm:$0xff]
        %v1492 = vld [vmem:[%s493 + $0x1c18] sm:$0xff]
        %v1493 = vld [vmem:[%s493 + $0x1c20] sm:$0xff]
        %v1494 = vld [vmem:[%s493 + $0x1c28] sm:$0xff]
        %v1495 = vld [vmem:[%s493 + $0x1c30] sm:$0xff]
        %v1496 = vld [vmem:[%s493 + $0x1c38] sm:$0xff]
        %v1497 = vld [vmem:[%s493 + $0x1c40] sm:$0xff]
        %v1498 = vld [vmem:[%s493 + $0x1c48] sm:$0xff]
        %v1499 = vld [vmem:[%s493 + $0x1c50] sm:$0xff]
        %v1500 = vld [vmem:[%s493 + $0x1c58] sm:$0xff]
        %v1501 = vld [vmem:[%s493 + $0x1c60] sm:$0xff]
        %v1502 = vld [vmem:[%s493 + $0x1c68] sm:$0xff]
        %v1503 = vld [vmem:[%s493 + $0x1c70] sm:$0xff]
        %v1504 = vld [vmem:[%s493 + $0x1c78] sm:$0xff]
        %v1505 = vld [vmem:[%s493 + $0x1c80] sm:$0xff]
        %v1506 = vld [vmem:[%s493 + $0x1c88] sm:$0xff]
        %v1507 = vld [vmem:[%s493 + $0x1c90] sm:$0xff]
        %v1508 = vld [vmem:[%s493 + $0x1c98] sm:$0xff]
        %v1509 = vld [vmem:[%s493 + $0x1ca0] sm:$0xff]
        %v1510 = vld [vmem:[%s493 + $0x1ca8] sm:$0xff]
        %v1511 = vld [vmem:[%s493 + $0x1cb0] sm:$0xff]
        %v1512 = vld [vmem:[%s493 + $0x1cb8] sm:$0xff]
        %v1513 = vld [vmem:[%s493 + $0x1cc0] sm:$0xff]
        %v1514 = vld [vmem:[%s493 + $0x1cc8] sm:$0xff]
        %v1515 = vld [vmem:[%s493 + $0x1cd0] sm:$0xff]
        %v1516 = vld [vmem:[%s493 + $0x1cd8] sm:$0xff]
        %v1517 = vld [vmem:[%s493 + $0x1ce0] sm:$0xff]
        %v1518 = vld [vmem:[%s493 + $0x1ce8] sm:$0xff]
        %v1519 = vld [vmem:[%s493 + $0x1cf0] sm:$0xff]
        %v1520 = vld [vmem:[%s493 + $0x1cf8] sm:$0xff]
        %v1521 = vld [vmem:[%s493 + $0x1d00] sm:$0xff]
        %v1522 = vld [vmem:[%s493 + $0x1d08] sm:$0xff]
        %v1523 = vld [vmem:[%s493 + $0x1d10] sm:$0xff]
        %v1524 = vld [vmem:[%s493 + $0x1d18] sm:$0xff]
        %v1525 = vld [vmem:[%s493 + $0x1d20] sm:$0xff]
        %v1526 = vld [vmem:[%s493 + $0x1d28] sm:$0xff]
        %v1527 = vld [vmem:[%s493 + $0x1d30] sm:$0xff]
        %v1528 = vld [vmem:[%s493 + $0x1d38] sm:$0xff]
        %v1529 = vld [vmem:[%s493 + $0x1d40] sm:$0xff]
        %v1530 = vld [vmem:[%s493 + $0x1d48] sm:$0xff]
        %v1531 = vld [vmem:[%s493 + $0x1d50] sm:$0xff]
        %v1532 = vld [vmem:[%s493 + $0x1d58] sm:$0xff]
        %v1533 = vld [vmem:[%s493 + $0x1d60] sm:$0xff]
        %v1534 = vld [vmem:[%s493 + $0x1d68] sm:$0xff]
        %v1535 = vld [vmem:[%s493 + $0x1d70] sm:$0xff]
        %v1536 = vld [vmem:[%s493 + $0x1d78] sm:$0xff]
        %v1537 = vld [vmem:[%s493 + $0x1d80] sm:$0xff]
        %v1538 = vld [vmem:[%s493 + $0x1d88] sm:$0xff]
        %v1539 = vld [vmem:[%s493 + $0x1d90] sm:$0xff]
        %v1540 = vld [vmem:[%s493 + $0x1d98] sm:$0xff]
        %v1541 = vld [vmem:[%s493 + $0x1da0] sm:$0xff]
        %v1542 = vld [vmem:[%s493 + $0x1da8] sm:$0xff]
        %v1543 = vld [vmem:[%s493 + $0x1db0] sm:$0xff]
        %v1544 = vld [vmem:[%s493 + $0x1db8] sm:$0xff]
        %v1545 = vld [vmem:[%s493 + $0x1dc0] sm:$0xff]
        %v1546 = vld [vmem:[%s493 + $0x1dc8] sm:$0xff]
        %v1547 = vld [vmem:[%s493 + $0x1dd0] sm:$0xff]
        %v1548 = vld [vmem:[%s493 + $0x1dd8] sm:$0xff]
        %v1549 = vld [vmem:[%s493 + $0x1de0] sm:$0xff]
        %v1550 = vld [vmem:[%s493 + $0x1de8] sm:$0xff]
        %v1551 = vld [vmem:[%s493 + $0x1df0] sm:$0xff]
        %v1552 = vld [vmem:[%s493 + $0x1df8] sm:$0xff]
        %v1553 = vld [vmem:[%s493 + $0x1e00] sm:$0xff]
        %v1554 = vld [vmem:[%s493 + $0x1e08] sm:$0xff]
        %v1555 = vld [vmem:[%s493 + $0x1e10] sm:$0xff]
        %v1556 = vld [vmem:[%s493 + $0x1e18] sm:$0xff]
        %v1557 = vld [vmem:[%s493 + $0x1e20] sm:$0xff]
        %v1558 = vld [vmem:[%s493 + $0x1e28] sm:$0xff]
        %v1559 = vld [vmem:[%s493 + $0x1e30] sm:$0xff]
        %v1560 = vld [vmem:[%s493 + $0x1e38] sm:$0xff]
        %v1561 = vld [vmem:[%s493 + $0x1e40] sm:$0xff]
        %v1562 = vld [vmem:[%s493 + $0x1e48] sm:$0xff]
        %v1563 = vld [vmem:[%s493 + $0x1e50] sm:$0xff]
        %v1564 = vld [vmem:[%s493 + $0x1e58] sm:$0xff]
        %v1565 = vld [vmem:[%s493 + $0x1e60] sm:$0xff]
        %v1566 = vld [vmem:[%s493 + $0x1e68] sm:$0xff]
        %v1567 = vld [vmem:[%s493 + $0x1e70] sm:$0xff]
        %v1568 = vld [vmem:[%s493 + $0x1e78] sm:$0xff]
        %v1569 = vld [vmem:[%s493 + $0x1e80] sm:$0xff]
        %v1570 = vld [vmem:[%s493 + $0x1e88] sm:$0xff]
        %v1571 = vld [vmem:[%s493 + $0x1e90] sm:$0xff]
        %v1572 = vld [vmem:[%s493 + $0x1e98] sm:$0xff]
        %v1573 = vld [vmem:[%s493 + $0x1ea0] sm:$0xff]
        %v1574 = vld [vmem:[%s493 + $0x1ea8] sm:$0xff]
        %v1575 = vld [vmem:[%s493 + $0x1eb0] sm:$0xff]
        %v1576 = vld [vmem:[%s493 + $0x1eb8] sm:$0xff]
        %v1577 = vld [vmem:[%s493 + $0x1ec0] sm:$0xff]
        %v1578 = vld [vmem:[%s493 + $0x1ec8] sm:$0xff]
        %v1579 = vld [vmem:[%s493 + $0x1ed0] sm:$0xff]
        %v1580 = vld [vmem:[%s493 + $0x1ed8] sm:$0xff]
        %v1581 = vld [vmem:[%s493 + $0x1ee0] sm:$0xff]
        %v1582 = vld [vmem:[%s493 + $0x1ee8] sm:$0xff]
        %v1583 = vld [vmem:[%s493 + $0x1ef0] sm:$0xff]
        %v1584 = vld [vmem:[%s493 + $0x1ef8] sm:$0xff]
        %v1585 = vld [vmem:[%s493 + $0x1f00] sm:$0xff]
        %v1586 = vld [vmem:[%s493 + $0x1f08] sm:$0xff]
        %v1587 = vld [vmem:[%s493 + $0x1f10] sm:$0xff]
        %v1588 = vld [vmem:[%s493 + $0x1f18] sm:$0xff]
        %v1589 = vld [vmem:[%s493 + $0x1f20] sm:$0xff]
        %v1590 = vld [vmem:[%s493 + $0x1f28] sm:$0xff]
        %v1591 = vld [vmem:[%s493 + $0x1f30] sm:$0xff]
        %v1592 = vld [vmem:[%s493 + $0x1f38] sm:$0xff]
        %v1593 = vld [vmem:[%s493 + $0x1f40] sm:$0xff]
        %v1594 = vld [vmem:[%s493 + $0x1f48] sm:$0xff]
        %v1595 = vld [vmem:[%s493 + $0x1f50] sm:$0xff]
        %v1596 = vld [vmem:[%s493 + $0x1f58] sm:$0xff]
        %v1597 = vld [vmem:[%s493 + $0x1f60] sm:$0xff]
        %v1598 = vld [vmem:[%s493 + $0x1f68] sm:$0xff]
        %v1599 = vld [vmem:[%s493 + $0x1f70] sm:$0xff]
        %v1600 = vld [vmem:[%s493 + $0x1f78] sm:$0xff]
        %v1601 = vld [vmem:[%s493 + $0x1f80] sm:$0xff]
        %v1602 = vld [vmem:[%s493 + $0x1f88] sm:$0xff]
        %v1603 = vld [vmem:[%s493 + $0x1f90] sm:$0xff]
        %v1604 = vld [vmem:[%s493 + $0x1f98] sm:$0xff]
        %v1605 = vld [vmem:[%s493 + $0x1fa0] sm:$0xff]
        %v1606 = vld [vmem:[%s493 + $0x1fa8] sm:$0xff]
        %v1607 = vld [vmem:[%s493 + $0x1fb0] sm:$0xff]
        %v1608 = vld [vmem:[%s493 + $0x1fb8] sm:$0xff]
        %v1609 = vld [vmem:[%s493 + $0x1fc0] sm:$0xff]
        %v1610 = vld [vmem:[%s493 + $0x1fc8] sm:$0xff]
        %v1611 = vld [vmem:[%s493 + $0x1fd0] sm:$0xff]
        %v1612 = vld [vmem:[%s493 + $0x1fd8] sm:$0xff]
        %v1613 = vld [vmem:[%s493 + $0x1fe0] sm:$0xff]
        %v1614 = vld [vmem:[%s493 + $0x1fe8] sm:$0xff]
        %v1615 = vld [vmem:[%s493 + $0x1ff0] sm:$0xff]
        %v1616 = vld [vmem:[%s493 + $0x1ff8] sm:$0xff]
        %v1617 = vld [vmem:[%s493 + $0x2000] sm:$0xff]
        %v1618 = vld [vmem:[%s493 + $0x2008] sm:$0xff]
        %v1619 = vld [vmem:[%s493 + $0x2010] sm:$0xff]
        %v1620 = vld [vmem:[%s493 + $0x2018] sm:$0xff]
        %v1621 = vld [vmem:[%s493 + $0x2020] sm:$0xff]
        %v1622 = vld [vmem:[%s493 + $0x2028] sm:$0xff]
        %v1623 = vld [vmem:[%s493 + $0x2030] sm:$0xff]
        %v1624 = vld [vmem:[%s493 + $0x2038] sm:$0xff]
        %v1625 = vld [vmem:[%s493 + $0x2040] sm:$0xff]
        %v1626 = vld [vmem:[%s493 + $0x2048] sm:$0xff]
        %v1627 = vld [vmem:[%s493 + $0x2050] sm:$0xff]
        %v1628 = vld [vmem:[%s493 + $0x2058] sm:$0xff]
        %v1629 = vld [vmem:[%s493 + $0x2060] sm:$0xff]
        %v1630 = vld [vmem:[%s493 + $0x2068] sm:$0xff]
        %v1631 = vld [vmem:[%s493 + $0x2070] sm:$0xff]
        %v1632 = vld [vmem:[%s493 + $0x2078] sm:$0xff]
        %v1633 = vld [vmem:[%s493 + $0x2080] sm:$0xff]
        %v1634 = vld [vmem:[%s493 + $0x2088] sm:$0xff]
        %v1635 = vld [vmem:[%s493 + $0x2090] sm:$0xff]
        %v1636 = vld [vmem:[%s493 + $0x2098] sm:$0xff]
        %v1637 = vld [vmem:[%s493 + $0x20a0] sm:$0xff]
        %v1638 = vld [vmem:[%s493 + $0x20a8] sm:$0xff]
        %v1639 = vld [vmem:[%s493 + $0x20b0] sm:$0xff]
        %v1640 = vld [vmem:[%s493 + $0x20b8] sm:$0xff]
        %v1641 = vld [vmem:[%s493 + $0x20c0] sm:$0xff]
        %v1642 = vld [vmem:[%s493 + $0x20c8] sm:$0xff]
        %v1643 = vld [vmem:[%s493 + $0x20d0] sm:$0xff]
        %v1644 = vld [vmem:[%s493 + $0x20d8] sm:$0xff]
        %v1645 = vld [vmem:[%s493 + $0x20e0] sm:$0xff]
        %v1646 = vld [vmem:[%s493 + $0x20e8] sm:$0xff]
        %v1647 = vld [vmem:[%s493 + $0x20f0] sm:$0xff]
        %v1648 = vld [vmem:[%s493 + $0x20f8] sm:$0xff]
        %v1649 = vld [vmem:[%s493 + $0x2100] sm:$0xff]
        %v1650 = vld [vmem:[%s493 + $0x2108] sm:$0xff]
        %v1651 = vld [vmem:[%s493 + $0x2110] sm:$0xff]
        %v1652 = vld [vmem:[%s493 + $0x2118] sm:$0xff]
        %v1653 = vld [vmem:[%s493 + $0x2120] sm:$0xff]
        %v1654 = vld [vmem:[%s493 + $0x2128] sm:$0xff]
        %v1655 = vld [vmem:[%s493 + $0x2130] sm:$0xff]
        %v1656 = vld [vmem:[%s493 + $0x2138] sm:$0xff]
        %v1657 = vld [vmem:[%s493 + $0x2140] sm:$0xff]
        %v1658 = vld [vmem:[%s493 + $0x2148] sm:$0xff]
        %v1659 = vld [vmem:[%s493 + $0x2150] sm:$0xff]
        %v1660 = vld [vmem:[%s493 + $0x2158] sm:$0xff]
        %v1661 = vld [vmem:[%s493 + $0x2160] sm:$0xff]
        %v1662 = vld [vmem:[%s493 + $0x2168] sm:$0xff]
        %v1663 = vld [vmem:[%s493 + $0x2170] sm:$0xff]
        %v1664 = vld [vmem:[%s493 + $0x2178] sm:$0xff]
        %v1665 = vld [vmem:[%s493 + $0x2180] sm:$0xff]
        %v1666 = vld [vmem:[%s493 + $0x2188] sm:$0xff]
        %v1667 = vld [vmem:[%s493 + $0x2190] sm:$0xff]
        %v1668 = vld [vmem:[%s493 + $0x2198] sm:$0xff]
        %v1669 = vld [vmem:[%s493 + $0x21a0] sm:$0xff]
        %v1670 = vld [vmem:[%s493 + $0x21a8] sm:$0xff]
        %v1671 = vld [vmem:[%s493 + $0x21b0] sm:$0xff]
        %v1672 = vld [vmem:[%s493 + $0x21b8] sm:$0xff]
        %v1673 = vld [vmem:[%s493 + $0x21c0] sm:$0xff]
        %v1674 = vld [vmem:[%s493 + $0x21c8] sm:$0xff]
        %v1675 = vld [vmem:[%s493 + $0x21d0] sm:$0xff]
        %v1676 = vld [vmem:[%s493 + $0x21d8] sm:$0xff]
        %v1677 = vld [vmem:[%s493 + $0x21e0] sm:$0xff]
        %v1678 = vld [vmem:[%s493 + $0x21e8] sm:$0xff]
        %v1679 = vld [vmem:[%s493 + $0x21f0] sm:$0xff]
        %v1680 = vld [vmem:[%s493 + $0x21f8] sm:$0xff]
        %v1681 = vld [vmem:[%s493 + $0x2200] sm:$0xff]
        %v1682 = vld [vmem:[%s493 + $0x2208] sm:$0xff]
        %v1683 = vld [vmem:[%s493 + $0x2210] sm:$0xff]
        %v1684 = vld [vmem:[%s493 + $0x2218] sm:$0xff]
        %v1685 = vld [vmem:[%s493 + $0x2220] sm:$0xff]
        %v1686 = vld [vmem:[%s493 + $0x2228] sm:$0xff]
        %v1687 = vld [vmem:[%s493 + $0x2230] sm:$0xff]
        %v1688 = vld [vmem:[%s493 + $0x2238] sm:$0xff]
        %v1689 = vld [vmem:[%s493 + $0x2240] sm:$0xff]
        %v1690 = vld [vmem:[%s493 + $0x2248] sm:$0xff]
        %v1691 = vld [vmem:[%s493 + $0x2250] sm:$0xff]
        %v1692 = vld [vmem:[%s493 + $0x2258] sm:$0xff]
        %v1693 = vld [vmem:[%s493 + $0x2260] sm:$0xff]
        %v1694 = vld [vmem:[%s493 + $0x2268] sm:$0xff]
        %v1695 = vld [vmem:[%s493 + $0x2270] sm:$0xff]
        %v1696 = vld [vmem:[%s493 + $0x2278] sm:$0xff]
        %v1697 = vld [vmem:[%s493 + $0x2280] sm:$0xff]
        %v1698 = vld [vmem:[%s493 + $0x2288] sm:$0xff]
        %v1699 = vld [vmem:[%s493 + $0x2290] sm:$0xff]
        %v1700 = vld [vmem:[%s493 + $0x2298] sm:$0xff]
        %v1701 = vld [vmem:[%s493 + $0x22a0] sm:$0xff]
        %v1702 = vld [vmem:[%s493 + $0x22a8] sm:$0xff]
        %v1703 = vld [vmem:[%s493 + $0x22b0] sm:$0xff]
        %v1704 = vld [vmem:[%s493 + $0x22b8] sm:$0xff]
        %v1705 = vld [vmem:[%s493 + $0x22c0] sm:$0xff]
        %v1706 = vld [vmem:[%s493 + $0x22c8] sm:$0xff]
        %v1707 = vld [vmem:[%s493 + $0x22d0] sm:$0xff]
        %v1708 = vld [vmem:[%s493 + $0x22d8] sm:$0xff]
        %v1709 = vld [vmem:[%s493 + $0x22e0] sm:$0xff]
        %v1710 = vld [vmem:[%s493 + $0x22e8] sm:$0xff]
        %v1711 = vld [vmem:[%s493 + $0x22f0] sm:$0xff]
        %v1712 = vld [vmem:[%s493 + $0x22f8] sm:$0xff]
        %v1713 = vld [vmem:[%s493 + $0x2300] sm:$0xff]
        %v1714 = vld [vmem:[%s493 + $0x2308] sm:$0xff]
        %v1715 = vld [vmem:[%s493 + $0x2310] sm:$0xff]
        %v1716 = vld [vmem:[%s493 + $0x2318] sm:$0xff]
        %v1717 = vld [vmem:[%s493 + $0x2320] sm:$0xff]
        %v1718 = vld [vmem:[%s493 + $0x2328] sm:$0xff]
        %v1719 = vld [vmem:[%s493 + $0x2330] sm:$0xff]
        %v1720 = vld [vmem:[%s493 + $0x2338] sm:$0xff]
        %v1721 = vld [vmem:[%s493 + $0x2340] sm:$0xff]
        %v1722 = vld [vmem:[%s493 + $0x2348] sm:$0xff]
        %v1723 = vld [vmem:[%s493 + $0x2350] sm:$0xff]
        %v1724 = vld [vmem:[%s493 + $0x2358] sm:$0xff]
        %v1725 = vld [vmem:[%s493 + $0x2360] sm:$0xff]
        %v1726 = vld [vmem:[%s493 + $0x2368] sm:$0xff]
        %v1727 = vld [vmem:[%s493 + $0x2370] sm:$0xff]
        %v1728 = vld [vmem:[%s493 + $0x2378] sm:$0xff]
        %v1729 = vld [vmem:[%s493 + $0x2380] sm:$0xff]
        %v1730 = vld [vmem:[%s493 + $0x2388] sm:$0xff]
        %v1731 = vld [vmem:[%s493 + $0x2390] sm:$0xff]
        %v1732 = vld [vmem:[%s493 + $0x2398] sm:$0xff]
        %v1733 = vld [vmem:[%s493 + $0x23a0] sm:$0xff]
        %v1734 = vld [vmem:[%s493 + $0x23a8] sm:$0xff]
        %v1735 = vld [vmem:[%s493 + $0x23b0] sm:$0xff]
        %v1736 = vld [vmem:[%s493 + $0x23b8] sm:$0xff]
        %v1737 = vld [vmem:[%s493 + $0x23c0] sm:$0xff]
        %v1738 = vld [vmem:[%s493 + $0x23c8] sm:$0xff]
        %v1739 = vld [vmem:[%s493 + $0x23d0] sm:$0xff]
        %v1740 = vld [vmem:[%s493 + $0x23d8] sm:$0xff]
        %v1741 = vld [vmem:[%s493 + $0x23e0] sm:$0xff]
        %v1742 = vld [vmem:[%s493 + $0x23e8] sm:$0xff]
        %v1743 = vld [vmem:[%s493 + $0x23f0] sm:$0xff]
        %v1744 = vld [vmem:[%s493 + $0x23f8] sm:$0xff]
        %v1745 = vld [vmem:[%s493 + $0x2400] sm:$0xff]
        %v1746 = vld [vmem:[%s493 + $0x2408] sm:$0xff]
        %v1747 = vld [vmem:[%s493 + $0x2410] sm:$0xff]
        %v1748 = vld [vmem:[%s493 + $0x2418] sm:$0xff]
        %v1749 = vld [vmem:[%s493 + $0x2420] sm:$0xff]
        %v1750 = vld [vmem:[%s493 + $0x2428] sm:$0xff]
        %v1751 = vld [vmem:[%s493 + $0x2430] sm:$0xff]
        %v1752 = vld [vmem:[%s493 + $0x2438] sm:$0xff]
        %v1753 = vld [vmem:[%s493 + $0x2440] sm:$0xff]
        %v1754 = vld [vmem:[%s493 + $0x2448] sm:$0xff]
        %v1755 = vld [vmem:[%s493 + $0x2450] sm:$0xff]
        %v1756 = vld [vmem:[%s493 + $0x2458] sm:$0xff]
        %v1757 = vld [vmem:[%s493 + $0x2460] sm:$0xff]
        %v1758 = vld [vmem:[%s493 + $0x2468] sm:$0xff]
        %v1759 = vld [vmem:[%s493 + $0x2470] sm:$0xff]
        %v1760 = vld [vmem:[%s493 + $0x2478] sm:$0xff]
        %v1761 = vld [vmem:[%s493 + $0x2480] sm:$0xff]
        %v1762 = vld [vmem:[%s493 + $0x2488] sm:$0xff]
        %v1763 = vld [vmem:[%s493 + $0x2490] sm:$0xff]
        %v1764 = vld [vmem:[%s493 + $0x2498] sm:$0xff]
        %v1765 = vld [vmem:[%s493 + $0x24a0] sm:$0xff]
        %v1766 = vld [vmem:[%s493 + $0x24a8] sm:$0xff]
        %v1767 = vld [vmem:[%s493 + $0x24b0] sm:$0xff]
        %v1768 = vld [vmem:[%s493 + $0x24b8] sm:$0xff]
        %v1769 = vld [vmem:[%s493 + $0x24c0] sm:$0xff]
        %v1770 = vld [vmem:[%s493 + $0x24c8] sm:$0xff]
        %v1771 = vld [vmem:[%s493 + $0x24d0] sm:$0xff]
        %v1772 = vld [vmem:[%s493 + $0x24d8] sm:$0xff]
        %v1773 = vld [vmem:[%s493 + $0x24e0] sm:$0xff]
        %v1774 = vld [vmem:[%s493 + $0x24e8] sm:$0xff]
        %v1775 = vld [vmem:[%s493 + $0x24f0] sm:$0xff]
        %v1776 = vld [vmem:[%s493 + $0x24f8] sm:$0xff]
        %v1777 = vld [vmem:[%s493 + $0x2500] sm:$0xff]
        %v1778 = vld [vmem:[%s493 + $0x2508] sm:$0xff]
        %v1779 = vld [vmem:[%s493 + $0x2510] sm:$0xff]
        %v1780 = vld [vmem:[%s493 + $0x2518] sm:$0xff]
        %v1781 = vld [vmem:[%s493 + $0x2520] sm:$0xff]
        %v1782 = vld [vmem:[%s493 + $0x2528] sm:$0xff]
        %v1783 = vld [vmem:[%s493 + $0x2530] sm:$0xff]
        %v1784 = vld [vmem:[%s493 + $0x2538] sm:$0xff]
        %v1785 = vld [vmem:[%s493 + $0x2540] sm:$0xff]
        %v1786 = vld [vmem:[%s493 + $0x2548] sm:$0xff]
        %v1787 = vld [vmem:[%s493 + $0x2550] sm:$0xff]
        %v1788 = vld [vmem:[%s493 + $0x2558] sm:$0xff]
        %v1789 = vld [vmem:[%s493 + $0x2560] sm:$0xff]
        %v1790 = vld [vmem:[%s493 + $0x2568] sm:$0xff]
        %v1791 = vld [vmem:[%s493 + $0x2570] sm:$0xff]
        %v1792 = vld [vmem:[%s493 + $0x2578] sm:$0xff]
        %v1793 = vld [vmem:[%s493 + $0x2580] sm:$0xff]
        %v1794 = vld [vmem:[%s493 + $0x2588] sm:$0xff]
        %v1795 = vld [vmem:[%s493 + $0x2590] sm:$0xff]
        %v1796 = vld [vmem:[%s493 + $0x2598] sm:$0xff]
        %v1797 = vld [vmem:[%s493 + $0x25a0] sm:$0xff]
        %v1798 = vld [vmem:[%s493 + $0x25a8] sm:$0xff]
        %v1799 = vld [vmem:[%s493 + $0x25b0] sm:$0xff]
        %v1800 = vld [vmem:[%s493 + $0x25b8] sm:$0xff]
        %v1801 = vld [vmem:[%s493 + $0x25c0] sm:$0xff]
        %v1802 = vld [vmem:[%s493 + $0x25c8] sm:$0xff]
        %v1803 = vld [vmem:[%s493 + $0x25d0] sm:$0xff]
        %v1804 = vld [vmem:[%s493 + $0x25d8] sm:$0xff]
        %v1805 = vld [vmem:[%s493 + $0x25e0] sm:$0xff]
        %v1806 = vld [vmem:[%s493 + $0x25e8] sm:$0xff]
        %v1807 = vld [vmem:[%s493 + $0x25f0] sm:$0xff]
        %v1808 = vld [vmem:[%s493 + $0x25f8] sm:$0xff]
        %v1809 = vld [vmem:[%s493 + $0x2600] sm:$0xff]
        %v1810 = vld [vmem:[%s493 + $0x2608] sm:$0xff]
        %v1811 = vld [vmem:[%s493 + $0x2610] sm:$0xff]
        %v1812 = vld [vmem:[%s493 + $0x2618] sm:$0xff]
        %v1813 = vld [vmem:[%s493 + $0x2620] sm:$0xff]
        %v1814 = vld [vmem:[%s493 + $0x2628] sm:$0xff]
        %v1815 = vld [vmem:[%s493 + $0x2630] sm:$0xff]
        %v1816 = vld [vmem:[%s493 + $0x2638] sm:$0xff]
        %v1817 = vld [vmem:[%s493 + $0x2640] sm:$0xff]
        %v1818 = vld [vmem:[%s493 + $0x2648] sm:$0xff]
        %v1819 = vld [vmem:[%s493 + $0x2650] sm:$0xff]
        %v1820 = vld [vmem:[%s493 + $0x2658] sm:$0xff]
        %v1821 = vld [vmem:[%s493 + $0x2660] sm:$0xff]
        %v1822 = vld [vmem:[%s493 + $0x2668] sm:$0xff]
        %v1823 = vld [vmem:[%s493 + $0x2670] sm:$0xff]
        %v1824 = vld [vmem:[%s493 + $0x2678] sm:$0xff]
        %v1825 = vld [vmem:[%s493 + $0x2680] sm:$0xff]
        %v1826 = vld [vmem:[%s493 + $0x2688] sm:$0xff]
        %v1827 = vld [vmem:[%s493 + $0x2690] sm:$0xff]
        %v1828 = vld [vmem:[%s493 + $0x2698] sm:$0xff]
        %v1829 = vld [vmem:[%s493 + $0x26a0] sm:$0xff]
        %v1830 = vld [vmem:[%s493 + $0x26a8] sm:$0xff]
        %v1831 = vld [vmem:[%s493 + $0x26b0] sm:$0xff]
        %v1832 = vld [vmem:[%s493 + $0x26b8] sm:$0xff]
        %v1833 = vld [vmem:[%s493 + $0x26c0] sm:$0xff]
        %v1834 = vld [vmem:[%s493 + $0x26c8] sm:$0xff]
        %v1835 = vld [vmem:[%s493 + $0x26d0] sm:$0xff]
        %v1836 = vld [vmem:[%s493 + $0x26d8] sm:$0xff]
        %v1837 = vld [vmem:[%s493 + $0x26e0] sm:$0xff]
        %v1838 = vld [vmem:[%s493 + $0x26e8] sm:$0xff]
        %v1839 = vld [vmem:[%s493 + $0x26f0] sm:$0xff]
        %v1840 = vld [vmem:[%s493 + $0x26f8] sm:$0xff]
        %1842 = vst [vmem:[#allocation1] ss:$9 sm:$0xff] %v583
        %v1843 = vld [vmem:[#allocation1] sm:$0xff]
        %v1844 = vld [vmem:[#allocation1 + $0x9] sm:$0xff]
        %v1845 = vld [vmem:[#allocation1 + $0x12] sm:$0xff]
        %v1846 = vld [vmem:[#allocation1 + $0x1b] sm:$0xff]
        %v1847 = vld [vmem:[#allocation1 + $0x24] sm:$0xff]
        %v1848 = vld [vmem:[#allocation1 + $0x2d] sm:$0xff]
        %v1849 = vld [vmem:[#allocation1 + $0x36] sm:$0xff]
        %v1850 = vld [vmem:[#allocation1 + $0x3f] sm:$0xff]
        %1852 = vst [vmem:[#allocation1] ss:$9 sm:$0xff] %v584
        %v1853 = vld [vmem:[#allocation1] sm:$0xff]
        %v1854 = vld [vmem:[#allocation1 + $0x9] sm:$0xff]
        %v1855 = vld [vmem:[#allocation1 + $0x12] sm:$0xff]
        %v1856 = vld [vmem:[#allocation1 + $0x1b] sm:$0xff]
        %v1857 = vld [vmem:[#allocation1 + $0x24] sm:$0xff]
        %v1858 = vld [vmem:[#allocation1 + $0x2d] sm:$0xff]
        %v1859 = vld [vmem:[#allocation1 + $0x36] sm:$0xff]
        %v1860 = vld [vmem:[#allocation1 + $0x3f] sm:$0xff]
        %1862 = vst [vmem:[#allocation1] ss:$9 sm:$0xff] %v585
        %v1863 = vld [vmem:[#allocation1] sm:$0xff]
        %v1864 = vld [vmem:[#allocation1 + $0x9] sm:$0xff]
        %v1865 = vld [vmem:[#allocation1 + $0x12] sm:$0xff]
        %v1866 = vld [vmem:[#allocation1 + $0x1b] sm:$0xff]
        %v1867 = vld [vmem:[#allocation1 + $0x24] sm:$0xff]
        %v1868 = vld [vmem:[#allocation1 + $0x2d] sm:$0xff]
        %v1869 = vld [vmem:[#allocation1 + $0x36] sm:$0xff]
        %v1870 = vld [vmem:[#allocation1 + $0x3f] sm:$0xff]
        %1872 = vst [vmem:[#allocation1] ss:$9 sm:$0xff] %v586
        %v1873 = vld [vmem:[#allocation1] sm:$0xff]
        %v1874 = vld [vmem:[#allocation1 + $0x9] sm:$0xff]
        %v1875 = vld [vmem:[#allocation1 + $0x12] sm:$0xff]
        %v1876 = vld [vmem:[#allocation1 + $0x1b] sm:$0xff]
        %v1877 = vld [vmem:[#allocation1 + $0x24] sm:$0xff]
        %v1878 = vld [vmem:[#allocation1 + $0x2d] sm:$0xff]
        %v1879 = vld [vmem:[#allocation1 + $0x36] sm:$0xff]
        %v1880 = vld [vmem:[#allocation1 + $0x3f] sm:$0xff]
        %1882 = vst [vmem:[#allocation1] ss:$9 sm:$0xff] %v587
        %v1883 = vld [vmem:[#allocation1] sm:$0xff]
        %v1884 = vld [vmem:[#allocation1 + $0x9] sm:$0xff]
        %v1885 = vld [vmem:[#allocation1 + $0x12] sm:$0xff]
        %v1886 = vld [vmem:[#allocation1 + $0x1b] sm:$0xff]
        %v1887 = vld [vmem:[#allocation1 + $0x24] sm:$0xff]
        %v1888 = vld [vmem:[#allocation1 + $0x2d] sm:$0xff]
        %v1889 = vld [vmem:[#allocation1 + $0x36] sm:$0xff]
        %v1890 = vld [vmem:[#allocation1 + $0x3f] sm:$0xff]
        %1892 = vst [vmem:[#allocation1] ss:$9 sm:$0xff] %v588
        %v1893 = vld [vmem:[#allocation1] sm:$0xff]
        %v1894 = vld [vmem:[#allocation1 + $0x9] sm:$0xff]
        %v1895 = vld [vmem:[#allocation1 + $0x12] sm:$0xff]
        %v1896 = vld [vmem:[#allocation1 + $0x1b] sm:$0xff]
        %v1897 = vld [vmem:[#allocation1 + $0x24] sm:$0xff]
        %v1898 = vld [vmem:[#allocation1 + $0x2d] sm:$0xff]
        %v1899 = vld [vmem:[#allocation1 + $0x36] sm:$0xff]
        %v1900 = vld [vmem:[#allocation1 + $0x3f] sm:$0xff]
        %1902 = vst [vmem:[#allocation1] ss:$9 sm:$0xff] %v589
        %v1903 = vld [vmem:[#allocation1] sm:$0xff]
        %v1904 = vld [vmem:[#allocation1 + $0x9] sm:$0xff]
        %v1905 = vld [vmem:[#allocation1 + $0x12] sm:$0xff]
        %v1906 = vld [vmem:[#allocation1 + $0x1b] sm:$0xff]
        %v1907 = vld [vmem:[#allocation1 + $0x24] sm:$0xff]
        %v1908 = vld [vmem:[#allocation1 + $0x2d] sm:$0xff]
        %v1909 = vld [vmem:[#allocation1 + $0x36] sm:$0xff]
        %v1910 = vld [vmem:[#allocation1 + $0x3f] sm:$0xff]
        %1912 = vst [vmem:[#allocation1] ss:$9 sm:$0xff] %v590
        %v1913 = vld [vmem:[#allocation1] sm:$0xff]
        %v1914 = vld [vmem:[#allocation1 + $0x9] sm:$0xff]
        %v1915 = vld [vmem:[#allocation1 + $0x12] sm:$0xff]
        %v1916 = vld [vmem:[#allocation1 + $0x1b] sm:$0xff]
        %v1917 = vld [vmem:[#allocation1 + $0x24] sm:$0xff]
        %v1918 = vld [vmem:[#allocation1 + $0x2d] sm:$0xff]
        %v1919 = vld [vmem:[#allocation1 + $0x36] sm:$0xff]
        %v1920 = vld [vmem:[#allocation1 + $0x3f] sm:$0xff]
        %1922 = vst [vmem:[#allocation1] ss:$9 sm:$0xff] %v591
        %v1923 = vld [vmem:[#allocation1] sm:$0xff]
        %v1924 = vld [vmem:[#allocation1 + $0x9] sm:$0xff]
        %v1925 = vld [vmem:[#allocation1 + $0x12] sm:$0xff]
        %v1926 = vld [vmem:[#allocation1 + $0x1b] sm:$0xff]
        %v1927 = vld [vmem:[#allocation1 + $0x24] sm:$0xff]
        %v1928 = vld [vmem:[#allocation1 + $0x2d] sm:$0xff]
        %v1929 = vld [vmem:[#allocation1 + $0x36] sm:$0xff]
        %v1930 = vld [vmem:[#allocation1 + $0x3f] sm:$0xff]
        %1932 = vst [vmem:[#allocation1] ss:$9 sm:$0xff] %v592
        %v1933 = vld [vmem:[#allocation1] sm:$0xff]
        %v1934 = vld [vmem:[#allocation1 + $0x9] sm:$0xff]
        %v1935 = vld [vmem:[#allocation1 + $0x12] sm:$0xff]
        %v1936 = vld [vmem:[#allocation1 + $0x1b] sm:$0xff]
        %v1937 = vld [vmem:[#allocation1 + $0x24] sm:$0xff]
        %v1938 = vld [vmem:[#allocation1 + $0x2d] sm:$0xff]
        %v3265 = vunpack.c.l.b16 %v593
        %v3266 = vunpack.c.h.b16 %v593
        %v3267 = vunpack.c.l.b16 %v594
        %v3268 = vunpack.c.h.b16 %v594
        %v3269 = vunpack.c.l.b16 %v595
        %v3270 = vunpack.c.h.b16 %v595
        %v3271 = vunpack.c.l.b16 %v596
        %v3272 = vunpack.c.h.b16 %v596
        %v3273 = vunpack.c.l.b16 %v597
        %v3274 = vunpack.c.h.b16 %v597
        %v3275 = vunpack.c.l.b16 %v598
        %v3276 = vunpack.c.h.b16 %v598
        %v3277 = vunpack.c.l.b16 %v599
        %v3278 = vunpack.c.h.b16 %v599
        %v3279 = vunpack.c.l.b16 %v600
        %v3280 = vunpack.c.h.b16 %v600
        %v3281 = vunpack.c.l.b16 %v601
        %v3282 = vunpack.c.h.b16 %v601
        %v3283 = vunpack.c.l.b16 %v602
        %v3284 = vunpack.c.h.b16 %v602
        %v3285 = vunpack.c.l.b16 %v603
        %v3286 = vunpack.c.h.b16 %v603
        %v3287 = vunpack.c.l.b16 %v604
        %v3288 = vunpack.c.h.b16 %v604
        %v3289 = vunpack.c.l.b16 %v605
        %v3290 = vunpack.c.h.b16 %v605
        %v3291 = vunpack.c.l.b16 %v606
        %v3292 = vunpack.c.h.b16 %v606
        %v3293 = vunpack.c.l.b16 %v607
        %v3294 = vunpack.c.h.b16 %v607
        %v3295 = vunpack.c.l.b16 %v608
        %v3296 = vunpack.c.h.b16 %v608
        %v3297 = vunpack.c.l.b16 %v609
        %v3298 = vunpack.c.h.b16 %v609
        %v3299 = vunpack.c.l.b16 %v610
        %v3300 = vunpack.c.h.b16 %v610
        %v3301 = vunpack.c.l.b16 %v611
        %v3302 = vunpack.c.h.b16 %v611
        %v3303 = vunpack.c.l.b16 %v612
        %v3304 = vunpack.c.h.b16 %v612
        %v3305 = vunpack.c.l.b16 %v613
        %v3306 = vunpack.c.h.b16 %v613
        %v3307 = vunpack.c.l.b16 %v614
        %v3308 = vunpack.c.h.b16 %v614
        %v3309 = vunpack.c.l.b16 %v615
        %v3310 = vunpack.c.h.b16 %v615
        %v3311 = vunpack.c.l.b16 %v616
        %v3312 = vunpack.c.h.b16 %v616
        %v3313 = vunpack.c.l.b16 %v617
        %v3314 = vunpack.c.h.b16 %v617
        %v3315 = vunpack.c.l.b16 %v618
        %v3316 = vunpack.c.h.b16 %v618
        %v3317 = vunpack.c.l.b16 %v619
        %v3318 = vunpack.c.h.b16 %v619
        %v3319 = vunpack.c.l.b16 %v620
        %v3320 = vunpack.c.h.b16 %v620
        %v3321 = vunpack.c.l.b16 %v621
        %v3322 = vunpack.c.h.b16 %v621
        %v3323 = vunpack.c.l.b16 %v622
        %v3324 = vunpack.c.h.b16 %v622
        %v3325 = vunpack.c.l.b16 %v623
        %v3326 = vunpack.c.h.b16 %v623
        %v3327 = vunpack.c.l.b16 %v624
        %v3328 = vunpack.c.h.b16 %v624
        %v3329 = vunpack.c.l.b16 %v625
        %v3330 = vunpack.c.h.b16 %v625
        %v3331 = vunpack.c.l.b16 %v626
        %v3332 = vunpack.c.h.b16 %v626
        %v3333 = vunpack.c.l.b16 %v627
        %v3334 = vunpack.c.h.b16 %v627
        %v3335 = vunpack.c.l.b16 %v628
        %v3336 = vunpack.c.h.b16 %v628
        %v3337 = vunpack.c.l.b16 %v629
        %v3338 = vunpack.c.h.b16 %v629
        %v3339 = vunpack.c.l.b16 %v630
        %v3340 = vunpack.c.h.b16 %v630
        %v3341 = vunpack.c.l.b16 %v631
        %v3342 = vunpack.c.h.b16 %v631
        %v3343 = vunpack.c.l.b16 %v632
        %v3344 = vunpack.c.h.b16 %v632
        %v3345 = vunpack.c.l.b16 %v633
        %v3346 = vunpack.c.h.b16 %v633
        %v3347 = vunpack.c.l.b16 %v634
        %v3348 = vunpack.c.h.b16 %v634
        %v3349 = vunpack.c.l.b16 %v635
        %v3350 = vunpack.c.h.b16 %v635
        %v3351 = vunpack.c.l.b16 %v636
        %v3352 = vunpack.c.h.b16 %v636
        %v3353 = vunpack.c.l.b16 %v637
        %v3354 = vunpack.c.h.b16 %v637
        %v3355 = vunpack.c.l.b16 %v638
        %v3356 = vunpack.c.h.b16 %v638
        %v3357 = vunpack.c.l.b16 %v639
        %v3358 = vunpack.c.h.b16 %v639
        %v3359 = vunpack.c.l.b16 %v640
        %v3360 = vunpack.c.h.b16 %v640
        %v3361 = vunpack.c.l.b16 %v641
        %v3362 = vunpack.c.h.b16 %v641
        %v3363 = vunpack.c.l.b16 %v642
        %v3364 = vunpack.c.h.b16 %v642
        %v3365 = vunpack.c.l.b16 %v643
        %v3366 = vunpack.c.h.b16 %v643
        %v3367 = vunpack.c.l.b16 %v644
        %v3368 = vunpack.c.h.b16 %v644
        %v3369 = vunpack.c.l.b16 %v645
        %v3370 = vunpack.c.h.b16 %v645
        %v3371 = vunpack.c.l.b16 %v646
        %v3372 = vunpack.c.h.b16 %v646
        %v3373 = vunpack.c.l.b16 %v647
        %v3374 = vunpack.c.h.b16 %v647
        %v3375 = vunpack.c.l.b16 %v648
        %v3376 = vunpack.c.h.b16 %v648
        %v3377 = vunpack.c.l.b16 %v649
        %v3378 = vunpack.c.h.b16 %v649
        %v3379 = vunpack.c.l.b16 %v650
        %v3380 = vunpack.c.h.b16 %v650
        %v3381 = vunpack.c.l.b16 %v651
        %v3382 = vunpack.c.h.b16 %v651
        %v3383 = vunpack.c.l.b16 %v652
        %v3384 = vunpack.c.h.b16 %v652
        %v3385 = vunpack.c.l.b16 %v653
        %v3386 = vunpack.c.h.b16 %v653
        %v3387 = vunpack.c.l.b16 %v654
        %v3388 = vunpack.c.h.b16 %v654
        %v3389 = vunpack.c.l.b16 %v655
        %v3390 = vunpack.c.h.b16 %v655
        %v3391 = vunpack.c.l.b16 %v656
        %v3392 = vunpack.c.h.b16 %v656
        %v3393 = vunpack.c.l.b16 %v657
        %v3394 = vunpack.c.h.b16 %v657
        %v3395 = vunpack.c.l.b16 %v658
        %v3396 = vunpack.c.h.b16 %v658
        %v3397 = vunpack.c.l.b16 %v659
        %v3398 = vunpack.c.h.b16 %v659
        %v3399 = vunpack.c.l.b16 %v660
        %v3400 = vunpack.c.h.b16 %v660
        %v3401 = vunpack.c.l.b16 %v661
        %v3402 = vunpack.c.h.b16 %v661
        %v3403 = vunpack.c.l.b16 %v662
        %v3404 = vunpack.c.h.b16 %v662
        %v3405 = vunpack.c.l.b16 %v663
        %v3406 = vunpack.c.h.b16 %v663
        %v3407 = vunpack.c.l.b16 %v664
        %v3408 = vunpack.c.h.b16 %v664
        %v3409 = vunpack.c.l.b16 %v665
        %v3410 = vunpack.c.h.b16 %v665
        %v3411 = vunpack.c.l.b16 %v666
        %v3412 = vunpack.c.h.b16 %v666
        %v3413 = vunpack.c.l.b16 %v667
        %v3414 = vunpack.c.h.b16 %v667
        %v3415 = vunpack.c.l.b16 %v668
        %v3416 = vunpack.c.h.b16 %v668
        %v3417 = vunpack.c.l.b16 %v669
        %v3418 = vunpack.c.h.b16 %v669
        %v3419 = vunpack.c.l.b16 %v670
        %v3420 = vunpack.c.h.b16 %v670
        %v3421 = vunpack.c.l.b16 %v671
        %v3422 = vunpack.c.h.b16 %v671
        %v3423 = vunpack.c.l.b16 %v672
        %v3424 = vunpack.c.h.b16 %v672
        %v3425 = vunpack.c.l.b16 %v673
        %v3426 = vunpack.c.h.b16 %v673
        %v3427 = vunpack.c.l.b16 %v674
        %v3428 = vunpack.c.h.b16 %v674
        %v3429 = vunpack.c.l.b16 %v675
        %v3430 = vunpack.c.h.b16 %v675
        %v3431 = vunpack.c.l.b16 %v676
        %v3432 = vunpack.c.h.b16 %v676
        %v3433 = vunpack.c.l.b16 %v677
        %v3434 = vunpack.c.h.b16 %v677
        %v3435 = vunpack.c.l.b16 %v678
        %v3436 = vunpack.c.h.b16 %v678
        %v3437 = vunpack.c.l.b16 %v679
        %v3438 = vunpack.c.h.b16 %v679
        %v3439 = vunpack.c.l.b16 %v680
        %v3440 = vunpack.c.h.b16 %v680
        %v3441 = vunpack.c.l.b16 %v681
        %v3442 = vunpack.c.h.b16 %v681
        %v3443 = vunpack.c.l.b16 %v682
        %v3444 = vunpack.c.h.b16 %v682
        %v3445 = vunpack.c.l.b16 %v683
        %v3446 = vunpack.c.h.b16 %v683
        %v3447 = vunpack.c.l.b16 %v684
        %v3448 = vunpack.c.h.b16 %v684
        %v3449 = vunpack.c.l.b16 %v685
        %v3450 = vunpack.c.h.b16 %v685
        %v3451 = vunpack.c.l.b16 %v686
        %v3452 = vunpack.c.h.b16 %v686
        %v3453 = vunpack.c.l.b16 %v687
        %v3454 = vunpack.c.h.b16 %v687
        %v3455 = vunpack.c.l.b16 %v688
        %v3456 = vunpack.c.h.b16 %v688
        %v3457 = vunpack.c.l.b16 %v689
        %v3458 = vunpack.c.h.b16 %v689
        %v3459 = vunpack.c.l.b16 %v690
        %v3460 = vunpack.c.h.b16 %v690
        %v3461 = vunpack.c.l.b16 %v691
        %v3462 = vunpack.c.h.b16 %v691
        %v3463 = vunpack.c.l.b16 %v692
        %v3464 = vunpack.c.h.b16 %v692
        %v3465 = vunpack.c.l.b16 %v693
        %v3466 = vunpack.c.h.b16 %v693
        %v3467 = vunpack.c.l.b16 %v694
        %v3468 = vunpack.c.h.b16 %v694
        %v3469 = vunpack.c.l.b16 %v695
        %v3470 = vunpack.c.h.b16 %v695
        %v3471 = vunpack.c.l.b16 %v696
        %v3472 = vunpack.c.h.b16 %v696
        %v3473 = vunpack.c.l.b16 %v697
        %v3474 = vunpack.c.h.b16 %v697
        %v3475 = vunpack.c.l.b16 %v698
        %v3476 = vunpack.c.h.b16 %v698
        %v3477 = vunpack.c.l.b16 %v699
        %v3478 = vunpack.c.h.b16 %v699
        %v3479 = vunpack.c.l.b16 %v700
        %v3480 = vunpack.c.h.b16 %v700
        %v3481 = vunpack.c.l.b16 %v701
        %v3482 = vunpack.c.h.b16 %v701
        %v3483 = vunpack.c.l.b16 %v702
        %v3484 = vunpack.c.h.b16 %v702
        %v3485 = vunpack.c.l.b16 %v703
        %v3486 = vunpack.c.h.b16 %v703
        %v3487 = vunpack.c.l.b16 %v704
        %v3488 = vunpack.c.h.b16 %v704
        %v3489 = vunpack.c.l.b16 %v705
        %v3490 = vunpack.c.h.b16 %v705
        %v3491 = vunpack.c.l.b16 %v706
        %v3492 = vunpack.c.h.b16 %v706
        %v3493 = vunpack.c.l.b16 %v707
        %v3494 = vunpack.c.h.b16 %v707
        %v3495 = vunpack.c.l.b16 %v708
        %v3496 = vunpack.c.h.b16 %v708
        %v3497 = vunpack.c.l.b16 %v709
        %v3498 = vunpack.c.h.b16 %v709
        %v3499 = vunpack.c.l.b16 %v710
        %v3500 = vunpack.c.h.b16 %v710
        %v3501 = vunpack.c.l.b16 %v711
        %v3502 = vunpack.c.h.b16 %v711
        %v3503 = vunpack.c.l.b16 %v712
        %v3504 = vunpack.c.h.b16 %v712
        %v3505 = vunpack.c.l.b16 %v713
        %v3506 = vunpack.c.h.b16 %v713
        %v3507 = vunpack.c.l.b16 %v714
        %v3508 = vunpack.c.h.b16 %v714
        %v3509 = vunpack.c.l.b16 %v715
        %v3510 = vunpack.c.h.b16 %v715
        %v3511 = vunpack.c.l.b16 %v716
        %v3512 = vunpack.c.h.b16 %v716
        %v3513 = vunpack.c.l.b16 %v717
        %v3514 = vunpack.c.h.b16 %v717
        %v3515 = vunpack.c.l.b16 %v718
        %v3516 = vunpack.c.h.b16 %v718
        %v3517 = vunpack.c.l.b16 %v719
        %v3518 = vunpack.c.h.b16 %v719
        %v3519 = vunpack.c.l.b16 %v720
        %v3520 = vunpack.c.h.b16 %v720
        %v3521 = vunpack.c.l.b16 %v721
        %v3522 = vunpack.c.h.b16 %v721
        %v3523 = vunpack.c.l.b16 %v722
        %v3524 = vunpack.c.h.b16 %v722
        %v3525 = vunpack.c.l.b16 %v723
        %v3526 = vunpack.c.h.b16 %v723
        %v3527 = vunpack.c.l.b16 %v724
        %v3528 = vunpack.c.h.b16 %v724
        %v3529 = vunpack.c.l.b16 %v725
        %v3530 = vunpack.c.h.b16 %v725
        %v3531 = vunpack.c.l.b16 %v726
        %v3532 = vunpack.c.h.b16 %v726
        %v3533 = vunpack.c.l.b16 %v727
        %v3534 = vunpack.c.h.b16 %v727
        %v3535 = vunpack.c.l.b16 %v728
        %v3536 = vunpack.c.h.b16 %v728
        %v3537 = vunpack.c.l.b16 %v729
        %v3538 = vunpack.c.h.b16 %v729
        %v3539 = vunpack.c.l.b16 %v730
        %v3540 = vunpack.c.h.b16 %v730
        %v3541 = vunpack.c.l.b16 %v731
        %v3542 = vunpack.c.h.b16 %v731
        %v3543 = vunpack.c.l.b16 %v732
        %v3544 = vunpack.c.h.b16 %v732
        %v3545 = vunpack.c.l.b16 %v733
        %v3546 = vunpack.c.h.b16 %v733
        %v3547 = vunpack.c.l.b16 %v734
        %v3548 = vunpack.c.h.b16 %v734
        %v3549 = vunpack.c.l.b16 %v735
        %v3550 = vunpack.c.h.b16 %v735
        %v3551 = vunpack.c.l.b16 %v736
        %v3552 = vunpack.c.h.b16 %v736
        %v3553 = vunpack.c.l.b16 %v737
        %v3554 = vunpack.c.h.b16 %v737
        %v3555 = vunpack.c.l.b16 %v738
        %v3556 = vunpack.c.h.b16 %v738
        %v3557 = vunpack.c.l.b16 %v739
        %v3558 = vunpack.c.h.b16 %v739
        %v3559 = vunpack.c.l.b16 %v740
        %v3560 = vunpack.c.h.b16 %v740
        %v3561 = vunpack.c.l.b16 %v741
        %v3562 = vunpack.c.h.b16 %v741
        %v3563 = vunpack.c.l.b16 %v742
        %v3564 = vunpack.c.h.b16 %v742
        %v3565 = vunpack.c.l.b16 %v743
        %v3566 = vunpack.c.h.b16 %v743
        %v3567 = vunpack.c.l.b16 %v744
        %v3568 = vunpack.c.h.b16 %v744
        %v3569 = vunpack.c.l.b16 %v745
        %v3570 = vunpack.c.h.b16 %v745
        %v3571 = vunpack.c.l.b16 %v746
        %v3572 = vunpack.c.h.b16 %v746
        %v3573 = vunpack.c.l.b16 %v747
        %v3574 = vunpack.c.h.b16 %v747
        %v3575 = vunpack.c.l.b16 %v748
        %v3576 = vunpack.c.h.b16 %v748
        %v3577 = vunpack.c.l.b16 %v749
        %v3578 = vunpack.c.h.b16 %v749
        %v3579 = vunpack.c.l.b16 %v750
        %v3580 = vunpack.c.h.b16 %v750
        %v3581 = vunpack.c.l.b16 %v751
        %v3582 = vunpack.c.h.b16 %v751
        %v3583 = vunpack.c.l.b16 %v752
        %v3584 = vunpack.c.h.b16 %v752
        %v3585 = vunpack.c.l.b16 %v753
        %v3586 = vunpack.c.h.b16 %v753
        %v3587 = vunpack.c.l.b16 %v754
        %v3588 = vunpack.c.h.b16 %v754
        %v3589 = vunpack.c.l.b16 %v755
        %v3590 = vunpack.c.h.b16 %v755
        %v3591 = vunpack.c.l.b16 %v756
        %v3592 = vunpack.c.h.b16 %v756
        %v3593 = vunpack.c.l.b16 %v757
        %v3594 = vunpack.c.h.b16 %v757
        %v3595 = vunpack.c.l.b16 %v758
        %v3596 = vunpack.c.h.b16 %v758
        %v3597 = vunpack.c.l.b16 %v759
        %v3598 = vunpack.c.h.b16 %v759
        %v3599 = vunpack.c.l.b16 %v760
        %v3600 = vunpack.c.h.b16 %v760
        %v3601 = vunpack.c.l.b16 %v761
        %v3602 = vunpack.c.h.b16 %v761
        %v3603 = vunpack.c.l.b16 %v762
        %v3604 = vunpack.c.h.b16 %v762
        %v3605 = vunpack.c.l.b16 %v763
        %v3606 = vunpack.c.h.b16 %v763
        %v3607 = vunpack.c.l.b16 %v764
        %v3608 = vunpack.c.h.b16 %v764
        %v3609 = vunpack.c.l.b16 %v765
        %v3610 = vunpack.c.h.b16 %v765
        %v3611 = vunpack.c.l.b16 %v766
        %v3612 = vunpack.c.h.b16 %v766
        %v3613 = vunpack.c.l.b16 %v767
        %v3614 = vunpack.c.h.b16 %v767
        %v3615 = vunpack.c.l.b16 %v768
        %v3616 = vunpack.c.h.b16 %v768
        %v3617 = vunpack.c.l.b16 %v769
        %v3618 = vunpack.c.h.b16 %v769
        %v3619 = vunpack.c.l.b16 %v770
        %v3620 = vunpack.c.h.b16 %v770
        %v3621 = vunpack.c.l.b16 %v771
        %v3622 = vunpack.c.h.b16 %v771
        %v3623 = vunpack.c.l.b16 %v772
        %v3624 = vunpack.c.h.b16 %v772
        %v3625 = vunpack.c.l.b16 %v773
        %v3626 = vunpack.c.h.b16 %v773
        %v3627 = vunpack.c.l.b16 %v774
        %v3628 = vunpack.c.h.b16 %v774
        %v3629 = vunpack.c.l.b16 %v775
        %v3630 = vunpack.c.h.b16 %v775
        %v3631 = vunpack.c.l.b16 %v776
        %v3632 = vunpack.c.h.b16 %v776
        %v3633 = vunpack.c.l.b16 %v777
        %v3634 = vunpack.c.h.b16 %v777
        %v3635 = vunpack.c.l.b16 %v778
        %v3636 = vunpack.c.h.b16 %v778
        %v3637 = vunpack.c.l.b16 %v779
        %v3638 = vunpack.c.h.b16 %v779
        %v3639 = vunpack.c.l.b16 %v780
        %v3640 = vunpack.c.h.b16 %v780
        %v3641 = vunpack.c.l.b16 %v781
        %v3642 = vunpack.c.h.b16 %v781
        %v3643 = vunpack.c.l.b16 %v782
        %v3644 = vunpack.c.h.b16 %v782
        %v3645 = vunpack.c.l.b16 %v783
        %v3646 = vunpack.c.h.b16 %v783
        %v3647 = vunpack.c.l.b16 %v784
        %v3648 = vunpack.c.h.b16 %v784
        %v3649 = vunpack.c.l.b16 %v785
        %v3650 = vunpack.c.h.b16 %v785
        %v3651 = vunpack.c.l.b16 %v786
        %v3652 = vunpack.c.h.b16 %v786
        %v3653 = vunpack.c.l.b16 %v787
        %v3654 = vunpack.c.h.b16 %v787
        %v3655 = vunpack.c.l.b16 %v788
        %v3656 = vunpack.c.h.b16 %v788
        %v3657 = vunpack.c.l.b16 %v789
        %v3658 = vunpack.c.h.b16 %v789
        %v3659 = vunpack.c.l.b16 %v790
        %v3660 = vunpack.c.h.b16 %v790
        %v3661 = vunpack.c.l.b16 %v791
        %v3662 = vunpack.c.h.b16 %v791
        %v3663 = vunpack.c.l.b16 %v792
        %v3664 = vunpack.c.h.b16 %v792
        %v3665 = vunpack.c.l.b16 %v793
        %v3666 = vunpack.c.h.b16 %v793
        %v3667 = vunpack.c.l.b16 %v794
        %v3668 = vunpack.c.h.b16 %v794
        %v3669 = vunpack.c.l.b16 %v795
        %v3670 = vunpack.c.h.b16 %v795
        %v3671 = vunpack.c.l.b16 %v796
        %v3672 = vunpack.c.h.b16 %v796
        %v3673 = vunpack.c.l.b16 %v797
        %v3674 = vunpack.c.h.b16 %v797
        %v3675 = vunpack.c.l.b16 %v798
        %v3676 = vunpack.c.h.b16 %v798
        %v3677 = vunpack.c.l.b16 %v799
        %v3678 = vunpack.c.h.b16 %v799
        %v3679 = vunpack.c.l.b16 %v800
        %v3680 = vunpack.c.h.b16 %v800
        %v3681 = vunpack.c.l.b16 %v801
        %v3682 = vunpack.c.h.b16 %v801
        %v3683 = vunpack.c.l.b16 %v802
        %v3684 = vunpack.c.h.b16 %v802
        %v3685 = vunpack.c.l.b16 %v803
        %v3686 = vunpack.c.h.b16 %v803
        %v3687 = vunpack.c.l.b16 %v804
        %v3688 = vunpack.c.h.b16 %v804
        %v3689 = vunpack.c.l.b16 %v805
        %v3690 = vunpack.c.h.b16 %v805
        %v3691 = vunpack.c.l.b16 %v806
        %v3692 = vunpack.c.h.b16 %v806
        %v3693 = vunpack.c.l.b16 %v807
        %v3694 = vunpack.c.h.b16 %v807
        %v3695 = vunpack.c.l.b16 %v808
        %v3696 = vunpack.c.h.b16 %v808
        %v3697 = vunpack.c.l.b16 %v809
        %v3698 = vunpack.c.h.b16 %v809
        %v3699 = vunpack.c.l.b16 %v810
        %v3700 = vunpack.c.h.b16 %v810
        %v3701 = vunpack.c.l.b16 %v811
        %v3702 = vunpack.c.h.b16 %v811
        %v3703 = vunpack.c.l.b16 %v812
        %v3704 = vunpack.c.h.b16 %v812
        %v3705 = vunpack.c.l.b16 %v813
        %v3706 = vunpack.c.h.b16 %v813
        %v3707 = vunpack.c.l.b16 %v814
        %v3708 = vunpack.c.h.b16 %v814
        %v3709 = vunpack.c.l.b16 %v815
        %v3710 = vunpack.c.h.b16 %v815
        %v3711 = vunpack.c.l.b16 %v816
        %v3712 = vunpack.c.h.b16 %v816
        %v3713 = vunpack.c.l.b16 %v817
        %v3714 = vunpack.c.h.b16 %v817
        %v3715 = vunpack.c.l.b16 %v818
        %v3716 = vunpack.c.h.b16 %v818
        %v3717 = vunpack.c.l.b16 %v819
        %v3718 = vunpack.c.h.b16 %v819
        %v3719 = vunpack.c.l.b16 %v820
        %v3720 = vunpack.c.h.b16 %v820
        %v3721 = vunpack.c.l.b16 %v821
        %v3722 = vunpack.c.h.b16 %v821
        %v3723 = vunpack.c.l.b16 %v822
        %v3724 = vunpack.c.h.b16 %v822
        %v3725 = vunpack.c.l.b16 %v823
        %v3726 = vunpack.c.h.b16 %v823
        %v3727 = vunpack.c.l.b16 %v824
        %v3728 = vunpack.c.h.b16 %v824
        %v3729 = vunpack.c.l.b16 %v825
        %v3730 = vunpack.c.h.b16 %v825
        %v3731 = vunpack.c.l.b16 %v826
        %v3732 = vunpack.c.h.b16 %v826
        %v3733 = vunpack.c.l.b16 %v827
        %v3734 = vunpack.c.h.b16 %v827
        %v3735 = vunpack.c.l.b16 %v828
        %v3736 = vunpack.c.h.b16 %v828
        %v3737 = vunpack.c.l.b16 %v829
        %v3738 = vunpack.c.h.b16 %v829
        %v3739 = vunpack.c.l.b16 %v830
        %v3740 = vunpack.c.h.b16 %v830
        %v3741 = vunpack.c.l.b16 %v831
        %v3742 = vunpack.c.h.b16 %v831
        %v3743 = vunpack.c.l.b16 %v832
        %v3744 = vunpack.c.h.b16 %v832
        %v3745 = vunpack.c.l.b16 %v833
        %v3746 = vunpack.c.h.b16 %v833
        %v3747 = vunpack.c.l.b16 %v834
        %v3748 = vunpack.c.h.b16 %v834
        %v3749 = vunpack.c.l.b16 %v835
        %v3750 = vunpack.c.h.b16 %v835
        %v3751 = vunpack.c.l.b16 %v836
        %v3752 = vunpack.c.h.b16 %v836
        %v3753 = vunpack.c.l.b16 %v837
        %v3754 = vunpack.c.h.b16 %v837
        %v3755 = vunpack.c.l.b16 %v838
        %v3756 = vunpack.c.h.b16 %v838
        %v3757 = vunpack.c.l.b16 %v839
        %v3758 = vunpack.c.h.b16 %v839
        %v3759 = vunpack.c.l.b16 %v840
        %v3760 = vunpack.c.h.b16 %v840
        %v3761 = vunpack.c.l.b16 %v841
        %v3762 = vunpack.c.h.b16 %v841
        %v3763 = vunpack.c.l.b16 %v842
        %v3764 = vunpack.c.h.b16 %v842
        %v3765 = vunpack.c.l.b16 %v843
        %v3766 = vunpack.c.h.b16 %v843
        %v3767 = vunpack.c.l.b16 %v844
        %v3768 = vunpack.c.h.b16 %v844
        %v3769 = vunpack.c.l.b16 %v845
        %v3770 = vunpack.c.h.b16 %v845
        %v3771 = vunpack.c.l.b16 %v846
        %v3772 = vunpack.c.h.b16 %v846
        %v3773 = vunpack.c.l.b16 %v847
        %v3774 = vunpack.c.h.b16 %v847
        %v3775 = vunpack.c.l.b16 %v848
        %v3776 = vunpack.c.h.b16 %v848
        %v3777 = vunpack.c.l.b16 %v849
        %v3778 = vunpack.c.h.b16 %v849
        %v3779 = vunpack.c.l.b16 %v850
        %v3780 = vunpack.c.h.b16 %v850
        %v3781 = vunpack.c.l.b16 %v851
        %v3782 = vunpack.c.h.b16 %v851
        %v3783 = vunpack.c.l.b16 %v852
        %v3784 = vunpack.c.h.b16 %v852
        %v3785 = vunpack.c.l.b16 %v853
        %v3786 = vunpack.c.h.b16 %v853
        %v3787 = vunpack.c.l.b16 %v854
        %v3788 = vunpack.c.h.b16 %v854
        %v3789 = vunpack.c.l.b16 %v855
        %v3790 = vunpack.c.h.b16 %v855
        %v3791 = vunpack.c.l.b16 %v856
        %v3792 = vunpack.c.h.b16 %v856
        %v3793 = vunpack.c.l.b16 %v857
        %v3794 = vunpack.c.h.b16 %v857
        %v3795 = vunpack.c.l.b16 %v858
        %v3796 = vunpack.c.h.b16 %v858
        %v3797 = vunpack.c.l.b16 %v859
        %v3798 = vunpack.c.h.b16 %v859
        %v3799 = vunpack.c.l.b16 %v860
        %v3800 = vunpack.c.h.b16 %v860
        %v3801 = vunpack.c.l.b16 %v861
        %v3802 = vunpack.c.h.b16 %v861
        %v3803 = vunpack.c.l.b16 %v862
        %v3804 = vunpack.c.h.b16 %v862
        %v3805 = vunpack.c.l.b16 %v863
        %v3806 = vunpack.c.h.b16 %v863
        %v3807 = vunpack.c.l.b16 %v864
        %v3808 = vunpack.c.h.b16 %v864
        %v3809 = vunpack.c.l.b16 %v865
        %v3810 = vunpack.c.h.b16 %v865
        %v3811 = vunpack.c.l.b16 %v866
        %v3812 = vunpack.c.h.b16 %v866
        %v3813 = vunpack.c.l.b16 %v867
        %v3814 = vunpack.c.h.b16 %v867
        %v3815 = vunpack.c.l.b16 %v868
        %v3816 = vunpack.c.h.b16 %v868
        %v3817 = vunpack.c.l.b16 %v869
        %v3818 = vunpack.c.h.b16 %v869
        %v3819 = vunpack.c.l.b16 %v870
        %v3820 = vunpack.c.h.b16 %v870
        %v3821 = vunpack.c.l.b16 %v871
        %v3822 = vunpack.c.h.b16 %v871
        %v3823 = vunpack.c.l.b16 %v872
        %v3824 = vunpack.c.h.b16 %v872
        %v3825 = vunpack.c.l.b16 %v873
        %v3826 = vunpack.c.h.b16 %v873
        %v3827 = vunpack.c.l.b16 %v874
        %v3828 = vunpack.c.h.b16 %v874
        %v3829 = vunpack.c.l.b16 %v875
        %v3830 = vunpack.c.h.b16 %v875
        %v3831 = vunpack.c.l.b16 %v876
        %v3832 = vunpack.c.h.b16 %v876
        %v3833 = vunpack.c.l.b16 %v877
        %v3834 = vunpack.c.h.b16 %v877
        %v3835 = vunpack.c.l.b16 %v878
        %v3836 = vunpack.c.h.b16 %v878
        %v3837 = vunpack.c.l.b16 %v879
        %v3838 = vunpack.c.h.b16 %v879
        %v3839 = vunpack.c.l.b16 %v880
        %v3840 = vunpack.c.h.b16 %v880
        %v3841 = vunpack.c.l.b16 %v881
        %v3842 = vunpack.c.h.b16 %v881
        %v3843 = vunpack.c.l.b16 %v882
        %v3844 = vunpack.c.h.b16 %v882
        %v3845 = vunpack.c.l.b16 %v883
        %v3846 = vunpack.c.h.b16 %v883
        %v3847 = vunpack.c.l.b16 %v884
        %v3848 = vunpack.c.h.b16 %v884
        %v3849 = vunpack.c.l.b16 %v885
        %v3850 = vunpack.c.h.b16 %v885
        %v3851 = vunpack.c.l.b16 %v886
        %v3852 = vunpack.c.h.b16 %v886
        %v3853 = vunpack.c.l.b16 %v887
        %v3854 = vunpack.c.h.b16 %v887
        %v3855 = vunpack.c.l.b16 %v888
        %v3856 = vunpack.c.h.b16 %v888
        %v3857 = vunpack.c.l.b16 %v889
        %v3858 = vunpack.c.h.b16 %v889
        %v3859 = vunpack.c.l.b16 %v890
        %v3860 = vunpack.c.h.b16 %v890
        %v3861 = vunpack.c.l.b16 %v891
        %v3862 = vunpack.c.h.b16 %v891
        %v3863 = vunpack.c.l.b16 %v892
        %v3864 = vunpack.c.h.b16 %v892
        %v3865 = vunpack.c.l.b16 %v893
        %v3866 = vunpack.c.h.b16 %v893
        %v3867 = vunpack.c.l.b16 %v894
        %v3868 = vunpack.c.h.b16 %v894
        %v3869 = vunpack.c.l.b16 %v895
        %v3870 = vunpack.c.h.b16 %v895
        %v3871 = vunpack.c.l.b16 %v896
        %v3872 = vunpack.c.h.b16 %v896
        %v3873 = vunpack.c.l.b16 %v897
        %v3874 = vunpack.c.h.b16 %v897
        %v3875 = vunpack.c.l.b16 %v898
        %v3876 = vunpack.c.h.b16 %v898
        %v3877 = vunpack.c.l.b16 %v899
        %v3878 = vunpack.c.h.b16 %v899
        %v3879 = vunpack.c.l.b16 %v900
        %v3880 = vunpack.c.h.b16 %v900
        %v3881 = vunpack.c.l.b16 %v901
        %v3882 = vunpack.c.h.b16 %v901
        %v3883 = vunpack.c.l.b16 %v902
        %v3884 = vunpack.c.h.b16 %v902
        %v3885 = vunpack.c.l.b16 %v903
        %v3886 = vunpack.c.h.b16 %v903
        %v3887 = vunpack.c.l.b16 %v904
        %v3888 = vunpack.c.h.b16 %v904
        %v3889 = vunpack.c.l.b16 %v905
        %v3890 = vunpack.c.h.b16 %v905
        %v3891 = vunpack.c.l.b16 %v906
        %v3892 = vunpack.c.h.b16 %v906
        %v3893 = vunpack.c.l.b16 %v907
        %v3894 = vunpack.c.h.b16 %v907
        %v3895 = vunpack.c.l.b16 %v908
        %v3896 = vunpack.c.h.b16 %v908
        %v3897 = vunpack.c.l.b16 %v909
        %v3898 = vunpack.c.h.b16 %v909
        %v3899 = vunpack.c.l.b16 %v910
        %v3900 = vunpack.c.h.b16 %v910
        %v3901 = vunpack.c.l.b16 %v911
        %v3902 = vunpack.c.h.b16 %v911
        %v3903 = vunpack.c.l.b16 %v912
        %v3904 = vunpack.c.h.b16 %v912
        %v3905 = vunpack.c.l.b16 %v913
        %v3906 = vunpack.c.h.b16 %v913
        %v3907 = vunpack.c.l.b16 %v914
        %v3908 = vunpack.c.h.b16 %v914
        %v3909 = vunpack.c.l.b16 %v915
        %v3910 = vunpack.c.h.b16 %v915
        %v3911 = vunpack.c.l.b16 %v916
        %v3912 = vunpack.c.h.b16 %v916
        %v3913 = vunpack.c.l.b16 %v917
        %v3914 = vunpack.c.h.b16 %v917
        %v3915 = vunpack.c.l.b16 %v918
        %v3916 = vunpack.c.h.b16 %v918
        %v3917 = vunpack.c.l.b16 %v919
        %v3918 = vunpack.c.h.b16 %v919
        %v3919 = vunpack.c.l.b16 %v920
        %v3920 = vunpack.c.h.b16 %v920
        %v3921 = vunpack.c.l.b16 %v921
        %v3922 = vunpack.c.h.b16 %v921
        %v3923 = vunpack.c.l.b16 %v922
        %v3924 = vunpack.c.h.b16 %v922
        %v3925 = vunpack.c.l.b16 %v923
        %v3926 = vunpack.c.h.b16 %v923
        %v3927 = vunpack.c.l.b16 %v924
        %v3928 = vunpack.c.h.b16 %v924
        %v3929 = vunpack.c.l.b16 %v925
        %v3930 = vunpack.c.h.b16 %v925
        %v3931 = vunpack.c.l.b16 %v926
        %v3932 = vunpack.c.h.b16 %v926
        %v3933 = vunpack.c.l.b16 %v927
        %v3934 = vunpack.c.h.b16 %v927
        %v3935 = vunpack.c.l.b16 %v928
        %v3936 = vunpack.c.h.b16 %v928
        %v3937 = vunpack.c.l.b16 %v929
        %v3938 = vunpack.c.h.b16 %v929
        %v3939 = vunpack.c.l.b16 %v930
        %v3940 = vunpack.c.h.b16 %v930
        %v3941 = vunpack.c.l.b16 %v931
        %v3942 = vunpack.c.h.b16 %v931
        %v3943 = vunpack.c.l.b16 %v932
        %v3944 = vunpack.c.h.b16 %v932
        %v3945 = vunpack.c.l.b16 %v933
        %v3946 = vunpack.c.h.b16 %v933
        %v3947 = vunpack.c.l.b16 %v934
        %v3948 = vunpack.c.h.b16 %v934
        %v3949 = vunpack.c.l.b16 %v935
        %v3950 = vunpack.c.h.b16 %v935
        %v3951 = vunpack.c.l.b16 %v936
        %v3952 = vunpack.c.h.b16 %v936
        %v3953 = vunpack.c.l.b16 %v937
        %v3954 = vunpack.c.h.b16 %v937
        %v3955 = vunpack.c.l.b16 %v938
        %v3956 = vunpack.c.h.b16 %v938
        %v3957 = vunpack.c.l.b16 %v939
        %v3958 = vunpack.c.h.b16 %v939
        %v3959 = vunpack.c.l.b16 %v940
        %v3960 = vunpack.c.h.b16 %v940
        %v3961 = vunpack.c.l.b16 %v941
        %v3962 = vunpack.c.h.b16 %v941
        %v3963 = vunpack.c.l.b16 %v942
        %v3964 = vunpack.c.h.b16 %v942
        %v3965 = vunpack.c.l.b16 %v943
        %v3966 = vunpack.c.h.b16 %v943
        %v3967 = vunpack.c.l.b16 %v944
        %v3968 = vunpack.c.h.b16 %v944
        %v3969 = vunpack.c.l.b16 %v945
        %v3970 = vunpack.c.h.b16 %v945
        %v3971 = vunpack.c.l.b16 %v946
        %v3972 = vunpack.c.h.b16 %v946
        %v3973 = vunpack.c.l.b16 %v947
        %v3974 = vunpack.c.h.b16 %v947
        %v3975 = vunpack.c.l.b16 %v948
        %v3976 = vunpack.c.h.b16 %v948
        %v3977 = vunpack.c.l.b16 %v949
        %v3978 = vunpack.c.h.b16 %v949
        %v3979 = vunpack.c.l.b16 %v950
        %v3980 = vunpack.c.h.b16 %v950
        %v3981 = vunpack.c.l.b16 %v951
        %v3982 = vunpack.c.h.b16 %v951
        %v3983 = vunpack.c.l.b16 %v952
        %v3984 = vunpack.c.h.b16 %v952
        %v3985 = vunpack.c.l.b16 %v953
        %v3986 = vunpack.c.h.b16 %v953
        %v3987 = vunpack.c.l.b16 %v954
        %v3988 = vunpack.c.h.b16 %v954
        %v3989 = vunpack.c.l.b16 %v955
        %v3990 = vunpack.c.h.b16 %v955
        %v3991 = vunpack.c.l.b16 %v956
        %v3992 = vunpack.c.h.b16 %v956
        %v3993 = vunpack.c.l.b16 %v957
        %v3994 = vunpack.c.h.b16 %v957
        %v3995 = vunpack.c.l.b16 %v958
        %v3996 = vunpack.c.h.b16 %v958
        %v3997 = vunpack.c.l.b16 %v959
        %v3998 = vunpack.c.h.b16 %v959
        %v3999 = vunpack.c.l.b16 %v960
        %v4000 = vunpack.c.h.b16 %v960
        %v4001 = vunpack.c.l.b16 %v961
        %v4002 = vunpack.c.h.b16 %v961
        %v4003 = vunpack.c.l.b16 %v962
        %v4004 = vunpack.c.h.b16 %v962
        %v4005 = vunpack.c.l.b16 %v963
        %v4006 = vunpack.c.h.b16 %v963
        %v4007 = vunpack.c.l.b16 %v964
        %v4008 = vunpack.c.h.b16 %v964
        %v4009 = vunpack.c.l.b16 %v965
        %v4010 = vunpack.c.h.b16 %v965
        %v4011 = vunpack.c.l.b16 %v966
        %v4012 = vunpack.c.h.b16 %v966
        %v4013 = vunpack.c.l.b16 %v967
        %v4014 = vunpack.c.h.b16 %v967
        %v4015 = vunpack.c.l.b16 %v968
        %v4016 = vunpack.c.h.b16 %v968
        %v4017 = vunpack.c.l.b16 %v969
        %v4018 = vunpack.c.h.b16 %v969
        %v4019 = vunpack.c.l.b16 %v970
        %v4020 = vunpack.c.h.b16 %v970
        %v4021 = vunpack.c.l.b16 %v971
        %v4022 = vunpack.c.h.b16 %v971
        %v4023 = vunpack.c.l.b16 %v972
        %v4024 = vunpack.c.h.b16 %v972
        %v4025 = vunpack.c.l.b16 %v973
        %v4026 = vunpack.c.h.b16 %v973
        %v4027 = vunpack.c.l.b16 %v974
        %v4028 = vunpack.c.h.b16 %v974
        %v4029 = vunpack.c.l.b16 %v975
        %v4030 = vunpack.c.h.b16 %v975
        %v4031 = vunpack.c.l.b16 %v976
        %v4032 = vunpack.c.h.b16 %v976
        %v4033 = vunpack.c.l.b16 %v977
        %v4034 = vunpack.c.h.b16 %v977
        %v4035 = vunpack.c.l.b16 %v978
        %v4036 = vunpack.c.h.b16 %v978
        %v4037 = vunpack.c.l.b16 %v979
        %v4038 = vunpack.c.h.b16 %v979
        %v4039 = vunpack.c.l.b16 %v980
        %v4040 = vunpack.c.h.b16 %v980
        %v4041 = vunpack.c.l.b16 %v981
        %v4042 = vunpack.c.h.b16 %v981
        %v4043 = vunpack.c.l.b16 %v982
        %v4044 = vunpack.c.h.b16 %v982
        %v4045 = vunpack.c.l.b16 %v983
        %v4046 = vunpack.c.h.b16 %v983
        %v4047 = vunpack.c.l.b16 %v984
        %v4048 = vunpack.c.h.b16 %v984
        %v4049 = vunpack.c.l.b16 %v985
        %v4050 = vunpack.c.h.b16 %v985
        %v4051 = vunpack.c.l.b16 %v986
        %v4052 = vunpack.c.h.b16 %v986
        %v4053 = vunpack.c.l.b16 %v987
        %v4054 = vunpack.c.h.b16 %v987
        %v4055 = vunpack.c.l.b16 %v988
        %v4056 = vunpack.c.h.b16 %v988
        %v4057 = vunpack.c.l.b16 %v989
        %v4058 = vunpack.c.h.b16 %v989
        %v4059 = vunpack.c.l.b16 %v990
        %v4060 = vunpack.c.h.b16 %v990
        %v4061 = vunpack.c.l.b16 %v991
        %v4062 = vunpack.c.h.b16 %v991
        %v4063 = vunpack.c.l.b16 %v992
        %v4064 = vunpack.c.h.b16 %v992
        %v4065 = vunpack.c.l.b16 %v993
        %v4066 = vunpack.c.h.b16 %v993
        %v4067 = vunpack.c.l.b16 %v994
        %v4068 = vunpack.c.h.b16 %v994
        %v4069 = vunpack.c.l.b16 %v995
        %v4070 = vunpack.c.h.b16 %v995
        %v4071 = vunpack.c.l.b16 %v996
        %v4072 = vunpack.c.h.b16 %v996
        %v4073 = vunpack.c.l.b16 %v997
        %v4074 = vunpack.c.h.b16 %v997
        %v4075 = vunpack.c.l.b16 %v998
        %v4076 = vunpack.c.h.b16 %v998
        %v4077 = vunpack.c.l.b16 %v999
        %v4078 = vunpack.c.h.b16 %v999
        %v4079 = vunpack.c.l.b16 %v1000
        %v4080 = vunpack.c.h.b16 %v1000
        %v4081 = vunpack.c.l.b16 %v1001
        %v4082 = vunpack.c.h.b16 %v1001
        %v4083 = vunpack.c.l.b16 %v1002
        %v4084 = vunpack.c.h.b16 %v1002
        %v4085 = vunpack.c.l.b16 %v1003
        %v4086 = vunpack.c.h.b16 %v1003
        %v4087 = vunpack.c.l.b16 %v1004
        %v4088 = vunpack.c.h.b16 %v1004
        %v4089 = vunpack.c.l.b16 %v1005
        %v4090 = vunpack.c.h.b16 %v1005
        %v4091 = vunpack.c.l.b16 %v1006
        %v4092 = vunpack.c.h.b16 %v1006
        %v4093 = vunpack.c.l.b16 %v1007
        %v4094 = vunpack.c.h.b16 %v1007
        %v4095 = vunpack.c.l.b16 %v1008
        %v4096 = vunpack.c.h.b16 %v1008
        %v4097 = vunpack.c.l.b16 %v1009
        %v4098 = vunpack.c.h.b16 %v1009
        %v4099 = vunpack.c.l.b16 %v1010
        %v4100 = vunpack.c.h.b16 %v1010
        %v4101 = vunpack.c.l.b16 %v1011
        %v4102 = vunpack.c.h.b16 %v1011
        %v4103 = vunpack.c.l.b16 %v1012
        %v4104 = vunpack.c.h.b16 %v1012
        %v4105 = vunpack.c.l.b16 %v1013
        %v4106 = vunpack.c.h.b16 %v1013
        %v4107 = vunpack.c.l.b16 %v1014
        %v4108 = vunpack.c.h.b16 %v1014
        %v4109 = vunpack.c.l.b16 %v1015
        %v4110 = vunpack.c.h.b16 %v1015
        %v4111 = vunpack.c.l.b16 %v1016
        %v4112 = vunpack.c.h.b16 %v1016
        %v4113 = vunpack.c.l.b16 %v1017
        %v4114 = vunpack.c.h.b16 %v1017
        %v4115 = vunpack.c.l.b16 %v1018
        %v4116 = vunpack.c.h.b16 %v1018
        %v4117 = vunpack.c.l.b16 %v1019
        %v4118 = vunpack.c.h.b16 %v1019
        %v4119 = vunpack.c.l.b16 %v1020
        %v4120 = vunpack.c.h.b16 %v1020
        %v4121 = vunpack.c.l.b16 %v1021
        %v4122 = vunpack.c.h.b16 %v1021
        %v4123 = vunpack.c.l.b16 %v1022
        %v4124 = vunpack.c.h.b16 %v1022
        %v4125 = vunpack.c.l.b16 %v1023
        %v4126 = vunpack.c.h.b16 %v1023
        %v4127 = vunpack.c.l.b16 %v1024
        %v4128 = vunpack.c.h.b16 %v1024
        %v4129 = vunpack.c.l.b16 %v1025
        %v4130 = vunpack.c.h.b16 %v1025
        %v4131 = vunpack.c.l.b16 %v1026
        %v4132 = vunpack.c.h.b16 %v1026
        %v4133 = vunpack.c.l.b16 %v1027
        %v4134 = vunpack.c.h.b16 %v1027
        %v4135 = vunpack.c.l.b16 %v1028
        %v4136 = vunpack.c.h.b16 %v1028
        %v4137 = vunpack.c.l.b16 %v1029
        %v4138 = vunpack.c.h.b16 %v1029
        %v4139 = vunpack.c.l.b16 %v1030
        %v4140 = vunpack.c.h.b16 %v1030
        %v4141 = vunpack.c.l.b16 %v1031
        %v4142 = vunpack.c.h.b16 %v1031
        %v4143 = vunpack.c.l.b16 %v1032
        %v4144 = vunpack.c.h.b16 %v1032
        %v4145 = vunpack.c.l.b16 %v1033
        %v4146 = vunpack.c.h.b16 %v1033
        %v4147 = vunpack.c.l.b16 %v1034
        %v4148 = vunpack.c.h.b16 %v1034
        %v4149 = vunpack.c.l.b16 %v1035
        %v4150 = vunpack.c.h.b16 %v1035
        %v4151 = vunpack.c.l.b16 %v1036
        %v4152 = vunpack.c.h.b16 %v1036
        %v4153 = vunpack.c.l.b16 %v1037
        %v4154 = vunpack.c.h.b16 %v1037
        %v4155 = vunpack.c.l.b16 %v1038
        %v4156 = vunpack.c.h.b16 %v1038
        %v4157 = vunpack.c.l.b16 %v1039
        %v4158 = vunpack.c.h.b16 %v1039
        %v4159 = vunpack.c.l.b16 %v1040
        %v4160 = vunpack.c.h.b16 %v1040
        %v4161 = vunpack.c.l.b16 %v1041
        %v4162 = vunpack.c.h.b16 %v1041
        %v4163 = vunpack.c.l.b16 %v1042
        %v4164 = vunpack.c.h.b16 %v1042
        %v4165 = vunpack.c.l.b16 %v1043
        %v4166 = vunpack.c.h.b16 %v1043
        %v4167 = vunpack.c.l.b16 %v1044
        %v4168 = vunpack.c.h.b16 %v1044
        %v4169 = vunpack.c.l.b16 %v1045
        %v4170 = vunpack.c.h.b16 %v1045
        %v4171 = vunpack.c.l.b16 %v1046
        %v4172 = vunpack.c.h.b16 %v1046
        %v4173 = vunpack.c.l.b16 %v1047
        %v4174 = vunpack.c.h.b16 %v1047
        %v4175 = vunpack.c.l.b16 %v1048
        %v4176 = vunpack.c.h.b16 %v1048
        %v4177 = vunpack.c.l.b16 %v1049
        %v4178 = vunpack.c.h.b16 %v1049
        %v4179 = vunpack.c.l.b16 %v1050
        %v4180 = vunpack.c.h.b16 %v1050
        %v4181 = vunpack.c.l.b16 %v1051
        %v4182 = vunpack.c.h.b16 %v1051
        %v4183 = vunpack.c.l.b16 %v1052
        %v4184 = vunpack.c.h.b16 %v1052
        %v4185 = vunpack.c.l.b16 %v1053
        %v4186 = vunpack.c.h.b16 %v1053
        %v4187 = vunpack.c.l.b16 %v1054
        %v4188 = vunpack.c.h.b16 %v1054
        %v4189 = vunpack.c.l.b16 %v1055
        %v4190 = vunpack.c.h.b16 %v1055
        %v4191 = vunpack.c.l.b16 %v1056
        %v4192 = vunpack.c.h.b16 %v1056
        %v4193 = vunpack.c.l.b16 %v1057
        %v4194 = vunpack.c.h.b16 %v1057
        %v4195 = vunpack.c.l.b16 %v1058
        %v4196 = vunpack.c.h.b16 %v1058
        %v4197 = vunpack.c.l.b16 %v1059
        %v4198 = vunpack.c.h.b16 %v1059
        %v4199 = vunpack.c.l.b16 %v1060
        %v4200 = vunpack.c.h.b16 %v1060
        %v4201 = vunpack.c.l.b16 %v1061
        %v4202 = vunpack.c.h.b16 %v1061
        %v4203 = vunpack.c.l.b16 %v1062
        %v4204 = vunpack.c.h.b16 %v1062
        %v4205 = vunpack.c.l.b16 %v1063
        %v4206 = vunpack.c.h.b16 %v1063
        %v4207 = vunpack.c.l.b16 %v1064
        %v4208 = vunpack.c.h.b16 %v1064
        %v4209 = vunpack.c.l.b16 %v1065
        %v4210 = vunpack.c.h.b16 %v1065
        %v4211 = vunpack.c.l.b16 %v1066
        %v4212 = vunpack.c.h.b16 %v1066
        %v4213 = vunpack.c.l.b16 %v1067
        %v4214 = vunpack.c.h.b16 %v1067
        %v4215 = vunpack.c.l.b16 %v1068
        %v4216 = vunpack.c.h.b16 %v1068
        %v4217 = vunpack.c.l.b16 %v1069
        %v4218 = vunpack.c.h.b16 %v1069
        %v4219 = vunpack.c.l.b16 %v1070
        %v4220 = vunpack.c.h.b16 %v1070
        %v4221 = vunpack.c.l.b16 %v1071
        %v4222 = vunpack.c.h.b16 %v1071
        %v4223 = vunpack.c.l.b16 %v1072
        %v4224 = vunpack.c.h.b16 %v1072
        %v4225 = vunpack.c.l.b16 %v1073
        %v4226 = vunpack.c.h.b16 %v1073
        %v4227 = vunpack.c.l.b16 %v1074
        %v4228 = vunpack.c.h.b16 %v1074
        %v4229 = vunpack.c.l.b16 %v1075
        %v4230 = vunpack.c.h.b16 %v1075
        %v4231 = vunpack.c.l.b16 %v1076
        %v4232 = vunpack.c.h.b16 %v1076
        %v4233 = vunpack.c.l.b16 %v1077
        %v4234 = vunpack.c.h.b16 %v1077
        %v4235 = vunpack.c.l.b16 %v1078
        %v4236 = vunpack.c.h.b16 %v1078
        %v4237 = vunpack.c.l.b16 %v1079
        %v4238 = vunpack.c.h.b16 %v1079
        %v4239 = vunpack.c.l.b16 %v1080
        %v4240 = vunpack.c.h.b16 %v1080
        %v4241 = vunpack.c.l.b16 %v1081
        %v4242 = vunpack.c.h.b16 %v1081
        %v4243 = vunpack.c.l.b16 %v1082
        %v4244 = vunpack.c.h.b16 %v1082
        %v4245 = vunpack.c.l.b16 %v1083
        %v4246 = vunpack.c.h.b16 %v1083
        %v4247 = vunpack.c.l.b16 %v1084
        %v4248 = vunpack.c.h.b16 %v1084
        %v4249 = vunpack.c.l.b16 %v1085
        %v4250 = vunpack.c.h.b16 %v1085
        %v4251 = vunpack.c.l.b16 %v1086
        %v4252 = vunpack.c.h.b16 %v1086
        %v4253 = vunpack.c.l.b16 %v1087
        %v4254 = vunpack.c.h.b16 %v1087
        %v4255 = vunpack.c.l.b16 %v1088
        %v4256 = vunpack.c.h.b16 %v1088
        %v4257 = vunpack.c.l.b16 %v1089
        %v4258 = vunpack.c.h.b16 %v1089
        %v4259 = vunpack.c.l.b16 %v1090
        %v4260 = vunpack.c.h.b16 %v1090
        %v4261 = vunpack.c.l.b16 %v1091
        %v4262 = vunpack.c.h.b16 %v1091
        %v4263 = vunpack.c.l.b16 %v1092
        %v4264 = vunpack.c.h.b16 %v1092
        %v4265 = vunpack.c.l.b16 %v1093
        %v4266 = vunpack.c.h.b16 %v1093
        %v4267 = vunpack.c.l.b16 %v1094
        %v4268 = vunpack.c.h.b16 %v1094
        %v4269 = vunpack.c.l.b16 %v1095
        %v4270 = vunpack.c.h.b16 %v1095
        %v4271 = vunpack.c.l.b16 %v1096
        %v4272 = vunpack.c.h.b16 %v1096
        %v4273 = vunpack.c.l.b16 %v1097
        %v4274 = vunpack.c.h.b16 %v1097
        %v4275 = vunpack.c.l.b16 %v1098
        %v4276 = vunpack.c.h.b16 %v1098
        %v4277 = vunpack.c.l.b16 %v1099
        %v4278 = vunpack.c.h.b16 %v1099
        %v4279 = vunpack.c.l.b16 %v1100
        %v4280 = vunpack.c.h.b16 %v1100
        %v4281 = vunpack.c.l.b16 %v1101
        %v4282 = vunpack.c.h.b16 %v1101
        %v4283 = vunpack.c.l.b16 %v1102
        %v4284 = vunpack.c.h.b16 %v1102
        %v4285 = vunpack.c.l.b16 %v1103
        %v4286 = vunpack.c.h.b16 %v1103
        %v4287 = vunpack.c.l.b16 %v1104
        %v4288 = vunpack.c.h.b16 %v1104
        %v4289 = vunpack.c.l.b16 %v1105
        %v4290 = vunpack.c.h.b16 %v1105
        %v4291 = vunpack.c.l.b16 %v1106
        %v4292 = vunpack.c.h.b16 %v1106
        %v4293 = vunpack.c.l.b16 %v1107
        %v4294 = vunpack.c.h.b16 %v1107
        %v4295 = vunpack.c.l.b16 %v1108
        %v4296 = vunpack.c.h.b16 %v1108
        %v4297 = vunpack.c.l.b16 %v1109
        %v4298 = vunpack.c.h.b16 %v1109
        %v4299 = vunpack.c.l.b16 %v1110
        %v4300 = vunpack.c.h.b16 %v1110
        %v4301 = vunpack.c.l.b16 %v1111
        %v4302 = vunpack.c.h.b16 %v1111
        %v4303 = vunpack.c.l.b16 %v1112
        %v4304 = vunpack.c.h.b16 %v1112
        %v4305 = vunpack.c.l.b16 %v1113
        %v4306 = vunpack.c.h.b16 %v1113
        %v4307 = vunpack.c.l.b16 %v1114
        %v4308 = vunpack.c.h.b16 %v1114
        %v4309 = vunpack.c.l.b16 %v1115
        %v4310 = vunpack.c.h.b16 %v1115
        %v4311 = vunpack.c.l.b16 %v1116
        %v4312 = vunpack.c.h.b16 %v1116
        %v4313 = vunpack.c.l.b16 %v1117
        %v4314 = vunpack.c.h.b16 %v1117
        %v4315 = vunpack.c.l.b16 %v1118
        %v4316 = vunpack.c.h.b16 %v1118
        %v4317 = vunpack.c.l.b16 %v1119
        %v4318 = vunpack.c.h.b16 %v1119
        %v4319 = vunpack.c.l.b16 %v1120
        %v4320 = vunpack.c.h.b16 %v1120
        %v4321 = vunpack.c.l.b16 %v1121
        %v4322 = vunpack.c.h.b16 %v1121
        %v4323 = vunpack.c.l.b16 %v1122
        %v4324 = vunpack.c.h.b16 %v1122
        %v4325 = vunpack.c.l.b16 %v1123
        %v4326 = vunpack.c.h.b16 %v1123
        %v4327 = vunpack.c.l.b16 %v1124
        %v4328 = vunpack.c.h.b16 %v1124
        %v4329 = vunpack.c.l.b16 %v1125
        %v4330 = vunpack.c.h.b16 %v1125
        %v4331 = vunpack.c.l.b16 %v1126
        %v4332 = vunpack.c.h.b16 %v1126
        %v4333 = vunpack.c.l.b16 %v1127
        %v4334 = vunpack.c.h.b16 %v1127
        %v4335 = vunpack.c.l.b16 %v1128
        %v4336 = vunpack.c.h.b16 %v1128
        %v4337 = vunpack.c.l.b16 %v1129
        %v4338 = vunpack.c.h.b16 %v1129
        %v4339 = vunpack.c.l.b16 %v1130
        %v4340 = vunpack.c.h.b16 %v1130
        %v4341 = vunpack.c.l.b16 %v1131
        %v4342 = vunpack.c.h.b16 %v1131
        %v4343 = vunpack.c.l.b16 %v1132
        %v4344 = vunpack.c.h.b16 %v1132
        %v4345 = vunpack.c.l.b16 %v1133
        %v4346 = vunpack.c.h.b16 %v1133
        %v4347 = vunpack.c.l.b16 %v1134
        %v4348 = vunpack.c.h.b16 %v1134
        %v4349 = vunpack.c.l.b16 %v1135
        %v4350 = vunpack.c.h.b16 %v1135
        %v4351 = vunpack.c.l.b16 %v1136
        %v4352 = vunpack.c.h.b16 %v1136
        %v4353 = vunpack.c.l.b16 %v1137
        %v4354 = vunpack.c.h.b16 %v1137
        %v4355 = vunpack.c.l.b16 %v1138
        %v4356 = vunpack.c.h.b16 %v1138
        %v4357 = vunpack.c.l.b16 %v1139
        %v4358 = vunpack.c.h.b16 %v1139
        %v4359 = vunpack.c.l.b16 %v1140
        %v4360 = vunpack.c.h.b16 %v1140
        %v4361 = vunpack.c.l.b16 %v1141
        %v4362 = vunpack.c.h.b16 %v1141
        %v4363 = vunpack.c.l.b16 %v1142
        %v4364 = vunpack.c.h.b16 %v1142
        %v4365 = vunpack.c.l.b16 %v1143
        %v4366 = vunpack.c.h.b16 %v1143
        %v4367 = vunpack.c.l.b16 %v1144
        %v4368 = vunpack.c.h.b16 %v1144
        %v4369 = vunpack.c.l.b16 %v1145
        %v4370 = vunpack.c.h.b16 %v1145
        %v4371 = vunpack.c.l.b16 %v1146
        %v4372 = vunpack.c.h.b16 %v1146
        %v4373 = vunpack.c.l.b16 %v1147
        %v4374 = vunpack.c.h.b16 %v1147
        %v4375 = vunpack.c.l.b16 %v1148
        %v4376 = vunpack.c.h.b16 %v1148
        %v4377 = vunpack.c.l.b16 %v1149
        %v4378 = vunpack.c.h.b16 %v1149
        %v4379 = vunpack.c.l.b16 %v1150
        %v4380 = vunpack.c.h.b16 %v1150
        %v4381 = vunpack.c.l.b16 %v1151
        %v4382 = vunpack.c.h.b16 %v1151
        %v4383 = vunpack.c.l.b16 %v1152
        %v4384 = vunpack.c.h.b16 %v1152
        %v4385 = vunpack.c.l.b16 %v1153
        %v4386 = vunpack.c.h.b16 %v1153
        %v4387 = vunpack.c.l.b16 %v1154
        %v4388 = vunpack.c.h.b16 %v1154
        %v4389 = vunpack.c.l.b16 %v1155
        %v4390 = vunpack.c.h.b16 %v1155
        %v4391 = vunpack.c.l.b16 %v1156
        %v4392 = vunpack.c.h.b16 %v1156
        %v4393 = vunpack.c.l.b16 %v1157
        %v4394 = vunpack.c.h.b16 %v1157
        %v4395 = vunpack.c.l.b16 %v1158
        %v4396 = vunpack.c.h.b16 %v1158
        %v4397 = vunpack.c.l.b16 %v1159
        %v4398 = vunpack.c.h.b16 %v1159
        %v4399 = vunpack.c.l.b16 %v1160
        %v4400 = vunpack.c.h.b16 %v1160
        %v4401 = vunpack.c.l.b16 %v1161
        %v4402 = vunpack.c.h.b16 %v1161
        %v4403 = vunpack.c.l.b16 %v1162
        %v4404 = vunpack.c.h.b16 %v1162
        %v4405 = vunpack.c.l.b16 %v1163
        %v4406 = vunpack.c.h.b16 %v1163
        %v4407 = vunpack.c.l.b16 %v1164
        %v4408 = vunpack.c.h.b16 %v1164
        %v4409 = vunpack.c.l.b16 %v1165
        %v4410 = vunpack.c.h.b16 %v1165
        %v4411 = vunpack.c.l.b16 %v1166
        %v4412 = vunpack.c.h.b16 %v1166
        %v4413 = vunpack.c.l.b16 %v1167
        %v4414 = vunpack.c.h.b16 %v1167
        %v4415 = vunpack.c.l.b16 %v1168
        %v4416 = vunpack.c.h.b16 %v1168
        %v4417 = vunpack.c.l.b16 %v1169
        %v4418 = vunpack.c.h.b16 %v1169
        %v4419 = vunpack.c.l.b16 %v1170
        %v4420 = vunpack.c.h.b16 %v1170
        %v4421 = vunpack.c.l.b16 %v1171
        %v4422 = vunpack.c.h.b16 %v1171
        %v4423 = vunpack.c.l.b16 %v1172
        %v4424 = vunpack.c.h.b16 %v1172
        %v4425 = vunpack.c.l.b16 %v1173
        %v4426 = vunpack.c.h.b16 %v1173
        %v4427 = vunpack.c.l.b16 %v1174
        %v4428 = vunpack.c.h.b16 %v1174
        %v4429 = vunpack.c.l.b16 %v1175
        %v4430 = vunpack.c.h.b16 %v1175
        %v4431 = vunpack.c.l.b16 %v1176
        %v4432 = vunpack.c.h.b16 %v1176
        %v4433 = vunpack.c.l.b16 %v1177
        %v4434 = vunpack.c.h.b16 %v1177
        %v4435 = vunpack.c.l.b16 %v1178
        %v4436 = vunpack.c.h.b16 %v1178
        %v4437 = vunpack.c.l.b16 %v1179
        %v4438 = vunpack.c.h.b16 %v1179
        %v4439 = vunpack.c.l.b16 %v1180
        %v4440 = vunpack.c.h.b16 %v1180
        %v4441 = vunpack.c.l.b16 %v1181
        %v4442 = vunpack.c.h.b16 %v1181
        %v4443 = vunpack.c.l.b16 %v1182
        %v4444 = vunpack.c.h.b16 %v1182
        %v4445 = vunpack.c.l.b16 %v1183
        %v4446 = vunpack.c.h.b16 %v1183
        %v4447 = vunpack.c.l.b16 %v1184
        %v4448 = vunpack.c.h.b16 %v1184
        %v4449 = vunpack.c.l.b16 %v1185
        %v4450 = vunpack.c.h.b16 %v1185
        %v4451 = vunpack.c.l.b16 %v1186
        %v4452 = vunpack.c.h.b16 %v1186
        %v4453 = vunpack.c.l.b16 %v1187
        %v4454 = vunpack.c.h.b16 %v1187
        %v4455 = vunpack.c.l.b16 %v1188
        %v4456 = vunpack.c.h.b16 %v1188
        %v4457 = vunpack.c.l.b16 %v1189
        %v4458 = vunpack.c.h.b16 %v1189
        %v4459 = vunpack.c.l.b16 %v1190
        %v4460 = vunpack.c.h.b16 %v1190
        %v4461 = vunpack.c.l.b16 %v1191
        %v4462 = vunpack.c.h.b16 %v1191
        %v4463 = vunpack.c.l.b16 %v1192
        %v4464 = vunpack.c.h.b16 %v1192
        %v4465 = vunpack.c.l.b16 %v1193
        %v4466 = vunpack.c.h.b16 %v1193
        %v4467 = vunpack.c.l.b16 %v1194
        %v4468 = vunpack.c.h.b16 %v1194
        %v4469 = vunpack.c.l.b16 %v1195
        %v4470 = vunpack.c.h.b16 %v1195
        %v4471 = vunpack.c.l.b16 %v1196
        %v4472 = vunpack.c.h.b16 %v1196
        %v4473 = vunpack.c.l.b16 %v1197
        %v4474 = vunpack.c.h.b16 %v1197
        %v4475 = vunpack.c.l.b16 %v1198
        %v4476 = vunpack.c.h.b16 %v1198
        %v4477 = vunpack.c.l.b16 %v1199
        %v4478 = vunpack.c.h.b16 %v1199
        %v4479 = vunpack.c.l.b16 %v1200
        %v4480 = vunpack.c.h.b16 %v1200
        %v4481 = vunpack.c.l.b16 %v1201
        %v4482 = vunpack.c.h.b16 %v1201
        %v4483 = vunpack.c.l.b16 %v1202
        %v4484 = vunpack.c.h.b16 %v1202
        %v4485 = vunpack.c.l.b16 %v1203
        %v4486 = vunpack.c.h.b16 %v1203
        %v4487 = vunpack.c.l.b16 %v1204
        %v4488 = vunpack.c.h.b16 %v1204
        %v4489 = vunpack.c.l.b16 %v1205
        %v4490 = vunpack.c.h.b16 %v1205
        %v4491 = vunpack.c.l.b16 %v1206
        %v4492 = vunpack.c.h.b16 %v1206
        %v4493 = vunpack.c.l.b16 %v1207
        %v4494 = vunpack.c.h.b16 %v1207
        %v4495 = vunpack.c.l.b16 %v1208
        %v4496 = vunpack.c.h.b16 %v1208
        %v4497 = vunpack.c.l.b16 %v1209
        %v4498 = vunpack.c.h.b16 %v1209
        %v4499 = vunpack.c.l.b16 %v1210
        %v4500 = vunpack.c.h.b16 %v1210
        %v4501 = vunpack.c.l.b16 %v1211
        %v4502 = vunpack.c.h.b16 %v1211
        %v4503 = vunpack.c.l.b16 %v1212
        %v4504 = vunpack.c.h.b16 %v1212
        %v4505 = vunpack.c.l.b16 %v1213
        %v4506 = vunpack.c.h.b16 %v1213
        %v4507 = vunpack.c.l.b16 %v1214
        %v4508 = vunpack.c.h.b16 %v1214
        %v4509 = vunpack.c.l.b16 %v1215
        %v4510 = vunpack.c.h.b16 %v1215
        %v4511 = vunpack.c.l.b16 %v1216
        %v4512 = vunpack.c.h.b16 %v1216
        %v4513 = vunpack.c.l.b16 %v1217
        %v4514 = vunpack.c.h.b16 %v1217
        %v4515 = vunpack.c.l.b16 %v1218
        %v4516 = vunpack.c.h.b16 %v1218
        %v4517 = vunpack.c.l.b16 %v1219
        %v4518 = vunpack.c.h.b16 %v1219
        %v4519 = vunpack.c.l.b16 %v1220
        %v4520 = vunpack.c.h.b16 %v1220
        %v4521 = vunpack.c.l.b16 %v1221
        %v4522 = vunpack.c.h.b16 %v1221
        %v4523 = vunpack.c.l.b16 %v1222
        %v4524 = vunpack.c.h.b16 %v1222
        %v4525 = vunpack.c.l.b16 %v1223
        %v4526 = vunpack.c.h.b16 %v1223
        %v4527 = vunpack.c.l.b16 %v1224
        %v4528 = vunpack.c.h.b16 %v1224
        %v4529 = vunpack.c.l.b16 %v1225
        %v4530 = vunpack.c.h.b16 %v1225
        %v4531 = vunpack.c.l.b16 %v1226
        %v4532 = vunpack.c.h.b16 %v1226
        %v4533 = vunpack.c.l.b16 %v1227
        %v4534 = vunpack.c.h.b16 %v1227
        %v4535 = vunpack.c.l.b16 %v1228
        %v4536 = vunpack.c.h.b16 %v1228
        %v4537 = vunpack.c.l.b16 %v1229
        %v4538 = vunpack.c.h.b16 %v1229
        %v4539 = vunpack.c.l.b16 %v1230
        %v4540 = vunpack.c.h.b16 %v1230
        %v4541 = vunpack.c.l.b16 %v1231
        %v4542 = vunpack.c.h.b16 %v1231
        %v4543 = vunpack.c.l.b16 %v1232
        %v4544 = vunpack.c.h.b16 %v1232
        %v4545 = vunpack.c.l.b16 %v1233
        %v4546 = vunpack.c.h.b16 %v1233
        %v4547 = vunpack.c.l.b16 %v1234
        %v4548 = vunpack.c.h.b16 %v1234
        %v4549 = vunpack.c.l.b16 %v1235
        %v4550 = vunpack.c.h.b16 %v1235
        %v4551 = vunpack.c.l.b16 %v1236
        %v4552 = vunpack.c.h.b16 %v1236
        %v4553 = vunpack.c.l.b16 %v1237
        %v4554 = vunpack.c.h.b16 %v1237
        %v4555 = vunpack.c.l.b16 %v1238
        %v4556 = vunpack.c.h.b16 %v1238
        %v4557 = vunpack.c.l.b16 %v1239
        %v4558 = vunpack.c.h.b16 %v1239
        %v4559 = vunpack.c.l.b16 %v1240
        %v4560 = vunpack.c.h.b16 %v1240
        %v4561 = vunpack.c.l.b16 %v1241
        %v4562 = vunpack.c.h.b16 %v1241
        %v4563 = vunpack.c.l.b16 %v1242
        %v4564 = vunpack.c.h.b16 %v1242
        %v4565 = vunpack.c.l.b16 %v1243
        %v4566 = vunpack.c.h.b16 %v1243
        %v4567 = vunpack.c.l.b16 %v1244
        %v4568 = vunpack.c.h.b16 %v1244
        %v4569 = vunpack.c.l.b16 %v1245
        %v4570 = vunpack.c.h.b16 %v1245
        %v4571 = vunpack.c.l.b16 %v1246
        %v4572 = vunpack.c.h.b16 %v1246
        %v4573 = vunpack.c.l.b16 %v1247
        %v4574 = vunpack.c.h.b16 %v1247
        %v4575 = vunpack.c.l.b16 %v1248
        %v4576 = vunpack.c.h.b16 %v1248
        %v4577 = vunpack.c.l.b16 %v1249
        %v4578 = vunpack.c.h.b16 %v1249
        %v4579 = vunpack.c.l.b16 %v1250
        %v4580 = vunpack.c.h.b16 %v1250
        %v4581 = vunpack.c.l.b16 %v1251
        %v4582 = vunpack.c.h.b16 %v1251
        %v4583 = vunpack.c.l.b16 %v1252
        %v4584 = vunpack.c.h.b16 %v1252
        %v4585 = vunpack.c.l.b16 %v1253
        %v4586 = vunpack.c.h.b16 %v1253
        %v4587 = vunpack.c.l.b16 %v1254
        %v4588 = vunpack.c.h.b16 %v1254
        %v4589 = vunpack.c.l.b16 %v1255
        %v4590 = vunpack.c.h.b16 %v1255
        %v4591 = vunpack.c.l.b16 %v1256
        %v4592 = vunpack.c.h.b16 %v1256
        %v4593 = vunpack.c.l.b16 %v1257
        %v4594 = vunpack.c.h.b16 %v1257
        %v4595 = vunpack.c.l.b16 %v1258
        %v4596 = vunpack.c.h.b16 %v1258
        %v4597 = vunpack.c.l.b16 %v1259
        %v4598 = vunpack.c.h.b16 %v1259
        %v4599 = vunpack.c.l.b16 %v1260
        %v4600 = vunpack.c.h.b16 %v1260
        %v4601 = vunpack.c.l.b16 %v1261
        %v4602 = vunpack.c.h.b16 %v1261
        %v4603 = vunpack.c.l.b16 %v1262
        %v4604 = vunpack.c.h.b16 %v1262
        %v4605 = vunpack.c.l.b16 %v1263
        %v4606 = vunpack.c.h.b16 %v1263
        %v4607 = vunpack.c.l.b16 %v1264
        %v4608 = vunpack.c.h.b16 %v1264
        %v4609 = vunpack.c.l.b16 %v1265
        %v4610 = vunpack.c.h.b16 %v1265
        %v4611 = vunpack.c.l.b16 %v1266
        %v4612 = vunpack.c.h.b16 %v1266
        %v4613 = vunpack.c.l.b16 %v1267
        %v4614 = vunpack.c.h.b16 %v1267
        %v4615 = vunpack.c.l.b16 %v1268
        %v4616 = vunpack.c.h.b16 %v1268
        %v4617 = vunpack.c.l.b16 %v1269
        %v4618 = vunpack.c.h.b16 %v1269
        %v4619 = vunpack.c.l.b16 %v1270
        %v4620 = vunpack.c.h.b16 %v1270
        %v4621 = vunpack.c.l.b16 %v1271
        %v4622 = vunpack.c.h.b16 %v1271
        %v4623 = vunpack.c.l.b16 %v1272
        %v4624 = vunpack.c.h.b16 %v1272
        %v4625 = vunpack.c.l.b16 %v1273
        %v4626 = vunpack.c.h.b16 %v1273
        %v4627 = vunpack.c.l.b16 %v1274
        %v4628 = vunpack.c.h.b16 %v1274
        %v4629 = vunpack.c.l.b16 %v1275
        %v4630 = vunpack.c.h.b16 %v1275
        %v4631 = vunpack.c.l.b16 %v1276
        %v4632 = vunpack.c.h.b16 %v1276
        %v4633 = vunpack.c.l.b16 %v1277
        %v4634 = vunpack.c.h.b16 %v1277
        %v4635 = vunpack.c.l.b16 %v1278
        %v4636 = vunpack.c.h.b16 %v1278
        %v4637 = vunpack.c.l.b16 %v1279
        %v4638 = vunpack.c.h.b16 %v1279
        %v4639 = vunpack.c.l.b16 %v1280
        %v4640 = vunpack.c.h.b16 %v1280
        %v4641 = vunpack.c.l.b16 %v1281
        %v4642 = vunpack.c.h.b16 %v1281
        %v4643 = vunpack.c.l.b16 %v1282
        %v4644 = vunpack.c.h.b16 %v1282
        %v4645 = vunpack.c.l.b16 %v1283
        %v4646 = vunpack.c.h.b16 %v1283
        %v4647 = vunpack.c.l.b16 %v1284
        %v4648 = vunpack.c.h.b16 %v1284
        %v4649 = vunpack.c.l.b16 %v1285
        %v4650 = vunpack.c.h.b16 %v1285
        %v4651 = vunpack.c.l.b16 %v1286
        %v4652 = vunpack.c.h.b16 %v1286
        %v4653 = vunpack.c.l.b16 %v1287
        %v4654 = vunpack.c.h.b16 %v1287
        %v4655 = vunpack.c.l.b16 %v1288
        %v4656 = vunpack.c.h.b16 %v1288
        %v4657 = vunpack.c.l.b16 %v1289
        %v4658 = vunpack.c.h.b16 %v1289
        %v4659 = vunpack.c.l.b16 %v1290
        %v4660 = vunpack.c.h.b16 %v1290
        %v4661 = vunpack.c.l.b16 %v1291
        %v4662 = vunpack.c.h.b16 %v1291
        %v4663 = vunpack.c.l.b16 %v1292
        %v4664 = vunpack.c.h.b16 %v1292
        %v4665 = vunpack.c.l.b16 %v1293
        %v4666 = vunpack.c.h.b16 %v1293
        %v4667 = vunpack.c.l.b16 %v1294
        %v4668 = vunpack.c.h.b16 %v1294
        %v4669 = vunpack.c.l.b16 %v1295
        %v4670 = vunpack.c.h.b16 %v1295
        %v4671 = vunpack.c.l.b16 %v1296
        %v4672 = vunpack.c.h.b16 %v1296
        %v4673 = vunpack.c.l.b16 %v1297
        %v4674 = vunpack.c.h.b16 %v1297
        %v4675 = vunpack.c.l.b16 %v1298
        %v4676 = vunpack.c.h.b16 %v1298
        %v4677 = vunpack.c.l.b16 %v1299
        %v4678 = vunpack.c.h.b16 %v1299
        %v4679 = vunpack.c.l.b16 %v1300
        %v4680 = vunpack.c.h.b16 %v1300
        %v4681 = vunpack.c.l.b16 %v1301
        %v4682 = vunpack.c.h.b16 %v1301
        %v4683 = vunpack.c.l.b16 %v1302
        %v4684 = vunpack.c.h.b16 %v1302
        %v4685 = vunpack.c.l.b16 %v1303
        %v4686 = vunpack.c.h.b16 %v1303
        %v4687 = vunpack.c.l.b16 %v1304
        %v4688 = vunpack.c.h.b16 %v1304
        %v4689 = vunpack.c.l.b16 %v1305
        %v4690 = vunpack.c.h.b16 %v1305
        %v4691 = vunpack.c.l.b16 %v1306
        %v4692 = vunpack.c.h.b16 %v1306
        %v4693 = vunpack.c.l.b16 %v1307
        %v4694 = vunpack.c.h.b16 %v1307
        %v4695 = vunpack.c.l.b16 %v1308
        %v4696 = vunpack.c.h.b16 %v1308
        %v4697 = vunpack.c.l.b16 %v1309
        %v4698 = vunpack.c.h.b16 %v1309
        %v4699 = vunpack.c.l.b16 %v1310
        %v4700 = vunpack.c.h.b16 %v1310
        %v4701 = vunpack.c.l.b16 %v1311
        %v4702 = vunpack.c.h.b16 %v1311
        %v4703 = vunpack.c.l.b16 %v1312
        %v4704 = vunpack.c.h.b16 %v1312
        %v4705 = vunpack.c.l.b16 %v1313
        %v4706 = vunpack.c.h.b16 %v1313
        %v4707 = vunpack.c.l.b16 %v1314
        %v4708 = vunpack.c.h.b16 %v1314
        %v4709 = vunpack.c.l.b16 %v1315
        %v4710 = vunpack.c.h.b16 %v1315
        %v4711 = vunpack.c.l.b16 %v1316
        %v4712 = vunpack.c.h.b16 %v1316
        %v4713 = vunpack.c.l.b16 %v1317
        %v4714 = vunpack.c.h.b16 %v1317
        %v4715 = vunpack.c.l.b16 %v1318
        %v4716 = vunpack.c.h.b16 %v1318
        %v4717 = vunpack.c.l.b16 %v1319
        %v4718 = vunpack.c.h.b16 %v1319
        %v4719 = vunpack.c.l.b16 %v1320
        %v4720 = vunpack.c.h.b16 %v1320
        %v4721 = vunpack.c.l.b16 %v1321
        %v4722 = vunpack.c.h.b16 %v1321
        %v4723 = vunpack.c.l.b16 %v1322
        %v4724 = vunpack.c.h.b16 %v1322
        %v4725 = vunpack.c.l.b16 %v1323
        %v4726 = vunpack.c.h.b16 %v1323
        %v4727 = vunpack.c.l.b16 %v1324
        %v4728 = vunpack.c.h.b16 %v1324
        %v4729 = vunpack.c.l.b16 %v1325
        %v4730 = vunpack.c.h.b16 %v1325
        %v4731 = vunpack.c.l.b16 %v1326
        %v4732 = vunpack.c.h.b16 %v1326
        %v4733 = vunpack.c.l.b16 %v1327
        %v4734 = vunpack.c.h.b16 %v1327
        %v4735 = vunpack.c.l.b16 %v1328
        %v4736 = vunpack.c.h.b16 %v1328
        %v4737 = vunpack.c.l.b16 %v1329
        %v4738 = vunpack.c.h.b16 %v1329
        %v4739 = vunpack.c.l.b16 %v1330
        %v4740 = vunpack.c.h.b16 %v1330
        %v4741 = vunpack.c.l.b16 %v1331
        %v4742 = vunpack.c.h.b16 %v1331
        %v4743 = vunpack.c.l.b16 %v1332
        %v4744 = vunpack.c.h.b16 %v1332
        %v4745 = vunpack.c.l.b16 %v1333
        %v4746 = vunpack.c.h.b16 %v1333
        %v4747 = vunpack.c.l.b16 %v1334
        %v4748 = vunpack.c.h.b16 %v1334
        %v4749 = vunpack.c.l.b16 %v1335
        %v4750 = vunpack.c.h.b16 %v1335
        %v4751 = vunpack.c.l.b16 %v1336
        %v4752 = vunpack.c.h.b16 %v1336
        %v4753 = vunpack.c.l.b16 %v1337
        %v4754 = vunpack.c.h.b16 %v1337
        %v4755 = vunpack.c.l.b16 %v1338
        %v4756 = vunpack.c.h.b16 %v1338
        %v4757 = vunpack.c.l.b16 %v1339
        %v4758 = vunpack.c.h.b16 %v1339
        %v4759 = vunpack.c.l.b16 %v1340
        %v4760 = vunpack.c.h.b16 %v1340
        %v4761 = vunpack.c.l.b16 %v1341
        %v4762 = vunpack.c.h.b16 %v1341
        %v4763 = vunpack.c.l.b16 %v1342
        %v4764 = vunpack.c.h.b16 %v1342
        %v4765 = vunpack.c.l.b16 %v1343
        %v4766 = vunpack.c.h.b16 %v1343
        %v4767 = vunpack.c.l.b16 %v1344
        %v4768 = vunpack.c.h.b16 %v1344
        %v4769 = vunpack.c.l.b16 %v1345
        %v4770 = vunpack.c.h.b16 %v1345
        %v4771 = vunpack.c.l.b16 %v1346
        %v4772 = vunpack.c.h.b16 %v1346
        %v4773 = vunpack.c.l.b16 %v1347
        %v4774 = vunpack.c.h.b16 %v1347
        %v4775 = vunpack.c.l.b16 %v1348
        %v4776 = vunpack.c.h.b16 %v1348
        %v4777 = vunpack.c.l.b16 %v1349
        %v4778 = vunpack.c.h.b16 %v1349
        %v4779 = vunpack.c.l.b16 %v1350
        %v4780 = vunpack.c.h.b16 %v1350
        %v4781 = vunpack.c.l.b16 %v1351
        %v4782 = vunpack.c.h.b16 %v1351
        %v4783 = vunpack.c.l.b16 %v1352
        %v4784 = vunpack.c.h.b16 %v1352
        %v4785 = vunpack.c.l.b16 %v1353
        %v4786 = vunpack.c.h.b16 %v1353
        %v4787 = vunpack.c.l.b16 %v1354
        %v4788 = vunpack.c.h.b16 %v1354
        %v4789 = vunpack.c.l.b16 %v1355
        %v4790 = vunpack.c.h.b16 %v1355
        %v4791 = vunpack.c.l.b16 %v1356
        %v4792 = vunpack.c.h.b16 %v1356
        %v4793 = vunpack.c.l.b16 %v1357
        %v4794 = vunpack.c.h.b16 %v1357
        %v4795 = vunpack.c.l.b16 %v1358
        %v4796 = vunpack.c.h.b16 %v1358
        %v4797 = vunpack.c.l.b16 %v1359
        %v4798 = vunpack.c.h.b16 %v1359
        %v4799 = vunpack.c.l.b16 %v1360
        %v4800 = vunpack.c.h.b16 %v1360
        %v4801 = vunpack.c.l.b16 %v1361
        %v4802 = vunpack.c.h.b16 %v1361
        %v4803 = vunpack.c.l.b16 %v1362
        %v4804 = vunpack.c.h.b16 %v1362
        %v4805 = vunpack.c.l.b16 %v1363
        %v4806 = vunpack.c.h.b16 %v1363
        %v4807 = vunpack.c.l.b16 %v1364
        %v4808 = vunpack.c.h.b16 %v1364
        %v4809 = vunpack.c.l.b16 %v1365
        %v4810 = vunpack.c.h.b16 %v1365
        %v4811 = vunpack.c.l.b16 %v1366
        %v4812 = vunpack.c.h.b16 %v1366
        %v4813 = vunpack.c.l.b16 %v1367
        %v4814 = vunpack.c.h.b16 %v1367
        %v4815 = vunpack.c.l.b16 %v1368
        %v4816 = vunpack.c.h.b16 %v1368
        %v4817 = vunpack.c.l.b16 %v1369
        %v4818 = vunpack.c.h.b16 %v1369
        %v4819 = vunpack.c.l.b16 %v1370
        %v4820 = vunpack.c.h.b16 %v1370
        %v4821 = vunpack.c.l.b16 %v1371
        %v4822 = vunpack.c.h.b16 %v1371
        %v4823 = vunpack.c.l.b16 %v1372
        %v4824 = vunpack.c.h.b16 %v1372
        %v4825 = vunpack.c.l.b16 %v1373
        %v4826 = vunpack.c.h.b16 %v1373
        %v4827 = vunpack.c.l.b16 %v1374
        %v4828 = vunpack.c.h.b16 %v1374
        %v4829 = vunpack.c.l.b16 %v1375
        %v4830 = vunpack.c.h.b16 %v1375
        %v4831 = vunpack.c.l.b16 %v1376
        %v4832 = vunpack.c.h.b16 %v1376
        %v4833 = vunpack.c.l.b16 %v1377
        %v4834 = vunpack.c.h.b16 %v1377
        %v4835 = vunpack.c.l.b16 %v1378
        %v4836 = vunpack.c.h.b16 %v1378
        %v4837 = vunpack.c.l.b16 %v1379
        %v4838 = vunpack.c.h.b16 %v1379
        %v4839 = vunpack.c.l.b16 %v1380
        %v4840 = vunpack.c.h.b16 %v1380
        %v4841 = vunpack.c.l.b16 %v1381
        %v4842 = vunpack.c.h.b16 %v1381
        %v4843 = vunpack.c.l.b16 %v1382
        %v4844 = vunpack.c.h.b16 %v1382
        %v4845 = vunpack.c.l.b16 %v1383
        %v4846 = vunpack.c.h.b16 %v1383
        %v4847 = vunpack.c.l.b16 %v1384
        %v4848 = vunpack.c.h.b16 %v1384
        %v4849 = vunpack.c.l.b16 %v1385
        %v4850 = vunpack.c.h.b16 %v1385
        %v4851 = vunpack.c.l.b16 %v1386
        %v4852 = vunpack.c.h.b16 %v1386
        %v4853 = vunpack.c.l.b16 %v1387
        %v4854 = vunpack.c.h.b16 %v1387
        %v4855 = vunpack.c.l.b16 %v1388
        %v4856 = vunpack.c.h.b16 %v1388
        %v4857 = vunpack.c.l.b16 %v1389
        %v4858 = vunpack.c.h.b16 %v1389
        %v4859 = vunpack.c.l.b16 %v1390
        %v4860 = vunpack.c.h.b16 %v1390
        %v4861 = vunpack.c.l.b16 %v1391
        %v4862 = vunpack.c.h.b16 %v1391
        %v4863 = vunpack.c.l.b16 %v1392
        %v4864 = vunpack.c.h.b16 %v1392
        %v4865 = vunpack.c.l.b16 %v1393
        %v4866 = vunpack.c.h.b16 %v1393
        %v4867 = vunpack.c.l.b16 %v1394
        %v4868 = vunpack.c.h.b16 %v1394
        %v4869 = vunpack.c.l.b16 %v1395
        %v4870 = vunpack.c.h.b16 %v1395
        %v4871 = vunpack.c.l.b16 %v1396
        %v4872 = vunpack.c.h.b16 %v1396
        %v4873 = vunpack.c.l.b16 %v1397
        %v4874 = vunpack.c.h.b16 %v1397
        %v4875 = vunpack.c.l.b16 %v1398
        %v4876 = vunpack.c.h.b16 %v1398
        %v4877 = vunpack.c.l.b16 %v1399
        %v4878 = vunpack.c.h.b16 %v1399
        %v4879 = vunpack.c.l.b16 %v1400
        %v4880 = vunpack.c.h.b16 %v1400
        %v4881 = vunpack.c.l.b16 %v1401
        %v4882 = vunpack.c.h.b16 %v1401
        %v4883 = vunpack.c.l.b16 %v1402
        %v4884 = vunpack.c.h.b16 %v1402
        %v4885 = vunpack.c.l.b16 %v1403
        %v4886 = vunpack.c.h.b16 %v1403
        %v4887 = vunpack.c.l.b16 %v1404
        %v4888 = vunpack.c.h.b16 %v1404
        %v4889 = vunpack.c.l.b16 %v1405
        %v4890 = vunpack.c.h.b16 %v1405
        %v4891 = vunpack.c.l.b16 %v1406
        %v4892 = vunpack.c.h.b16 %v1406
        %v4893 = vunpack.c.l.b16 %v1407
        %v4894 = vunpack.c.h.b16 %v1407
        %v4895 = vunpack.c.l.b16 %v1408
        %v4896 = vunpack.c.h.b16 %v1408
        %v4897 = vunpack.c.l.b16 %v1409
        %v4898 = vunpack.c.h.b16 %v1409
        %v4899 = vunpack.c.l.b16 %v1410
        %v4900 = vunpack.c.h.b16 %v1410
        %v4901 = vunpack.c.l.b16 %v1411
        %v4902 = vunpack.c.h.b16 %v1411
        %v4903 = vunpack.c.l.b16 %v1412
        %v4904 = vunpack.c.h.b16 %v1412
        %v4905 = vunpack.c.l.b16 %v1413
        %v4906 = vunpack.c.h.b16 %v1413
        %v4907 = vunpack.c.l.b16 %v1414
        %v4908 = vunpack.c.h.b16 %v1414
        %v4909 = vunpack.c.l.b16 %v1415
        %v4910 = vunpack.c.h.b16 %v1415
        %v4911 = vunpack.c.l.b16 %v1416
        %v4912 = vunpack.c.h.b16 %v1416
        %v4913 = vunpack.c.l.b16 %v1417
        %v4914 = vunpack.c.h.b16 %v1417
        %v4915 = vunpack.c.l.b16 %v1418
        %v4916 = vunpack.c.h.b16 %v1418
        %v4917 = vunpack.c.l.b16 %v1419
        %v4918 = vunpack.c.h.b16 %v1419
        %v4919 = vunpack.c.l.b16 %v1420
        %v4920 = vunpack.c.h.b16 %v1420
        %v4921 = vunpack.c.l.b16 %v1421
        %v4922 = vunpack.c.h.b16 %v1421
        %v4923 = vunpack.c.l.b16 %v1422
        %v4924 = vunpack.c.h.b16 %v1422
        %v4925 = vunpack.c.l.b16 %v1423
        %v4926 = vunpack.c.h.b16 %v1423
        %v4927 = vunpack.c.l.b16 %v1424
        %v4928 = vunpack.c.h.b16 %v1424
        %v4929 = vunpack.c.l.b16 %v1425
        %v4930 = vunpack.c.h.b16 %v1425
        %v4931 = vunpack.c.l.b16 %v1426
        %v4932 = vunpack.c.h.b16 %v1426
        %v4933 = vunpack.c.l.b16 %v1427
        %v4934 = vunpack.c.h.b16 %v1427
        %v4935 = vunpack.c.l.b16 %v1428
        %v4936 = vunpack.c.h.b16 %v1428
        %v4937 = vunpack.c.l.b16 %v1429
        %v4938 = vunpack.c.h.b16 %v1429
        %v4939 = vunpack.c.l.b16 %v1430
        %v4940 = vunpack.c.h.b16 %v1430
        %v4941 = vunpack.c.l.b16 %v1431
        %v4942 = vunpack.c.h.b16 %v1431
        %v4943 = vunpack.c.l.b16 %v1432
        %v4944 = vunpack.c.h.b16 %v1432
        %v4945 = vunpack.c.l.b16 %v1433
        %v4946 = vunpack.c.h.b16 %v1433
        %v4947 = vunpack.c.l.b16 %v1434
        %v4948 = vunpack.c.h.b16 %v1434
        %v4949 = vunpack.c.l.b16 %v1435
        %v4950 = vunpack.c.h.b16 %v1435
        %v4951 = vunpack.c.l.b16 %v1436
        %v4952 = vunpack.c.h.b16 %v1436
        %v4953 = vunpack.c.l.b16 %v1437
        %v4954 = vunpack.c.h.b16 %v1437
        %v4955 = vunpack.c.l.b16 %v1438
        %v4956 = vunpack.c.h.b16 %v1438
        %v4957 = vunpack.c.l.b16 %v1439
        %v4958 = vunpack.c.h.b16 %v1439
        %v4959 = vunpack.c.l.b16 %v1440
        %v4960 = vunpack.c.h.b16 %v1440
        %v4961 = vunpack.c.l.b16 %v1441
        %v4962 = vunpack.c.h.b16 %v1441
        %v4963 = vunpack.c.l.b16 %v1442
        %v4964 = vunpack.c.h.b16 %v1442
        %v4965 = vunpack.c.l.b16 %v1443
        %v4966 = vunpack.c.h.b16 %v1443
        %v4967 = vunpack.c.l.b16 %v1444
        %v4968 = vunpack.c.h.b16 %v1444
        %v4969 = vunpack.c.l.b16 %v1445
        %v4970 = vunpack.c.h.b16 %v1445
        %v4971 = vunpack.c.l.b16 %v1446
        %v4972 = vunpack.c.h.b16 %v1446
        %v4973 = vunpack.c.l.b16 %v1447
        %v4974 = vunpack.c.h.b16 %v1447
        %v4975 = vunpack.c.l.b16 %v1448
        %v4976 = vunpack.c.h.b16 %v1448
        %v4977 = vunpack.c.l.b16 %v1449
        %v4978 = vunpack.c.h.b16 %v1449
        %v4979 = vunpack.c.l.b16 %v1450
        %v4980 = vunpack.c.h.b16 %v1450
        %v4981 = vunpack.c.l.b16 %v1451
        %v4982 = vunpack.c.h.b16 %v1451
        %v4983 = vunpack.c.l.b16 %v1452
        %v4984 = vunpack.c.h.b16 %v1452
        %v4985 = vunpack.c.l.b16 %v1453
        %v4986 = vunpack.c.h.b16 %v1453
        %v4987 = vunpack.c.l.b16 %v1454
        %v4988 = vunpack.c.h.b16 %v1454
        %v4989 = vunpack.c.l.b16 %v1455
        %v4990 = vunpack.c.h.b16 %v1455
        %v4991 = vunpack.c.l.b16 %v1456
        %v4992 = vunpack.c.h.b16 %v1456
        %v4993 = vunpack.c.l.b16 %v1457
        %v4994 = vunpack.c.h.b16 %v1457
        %v4995 = vunpack.c.l.b16 %v1458
        %v4996 = vunpack.c.h.b16 %v1458
        %v4997 = vunpack.c.l.b16 %v1459
        %v4998 = vunpack.c.h.b16 %v1459
        %v4999 = vunpack.c.l.b16 %v1460
        %v5000 = vunpack.c.h.b16 %v1460
        %v5001 = vunpack.c.l.b16 %v1461
        %v5002 = vunpack.c.h.b16 %v1461
        %v5003 = vunpack.c.l.b16 %v1462
        %v5004 = vunpack.c.h.b16 %v1462
        %v5005 = vunpack.c.l.b16 %v1463
        %v5006 = vunpack.c.h.b16 %v1463
        %v5007 = vunpack.c.l.b16 %v1464
        %v5008 = vunpack.c.h.b16 %v1464
        %v5009 = vunpack.c.l.b16 %v1465
        %v5010 = vunpack.c.h.b16 %v1465
        %v5011 = vunpack.c.l.b16 %v1466
        %v5012 = vunpack.c.h.b16 %v1466
        %v5013 = vunpack.c.l.b16 %v1467
        %v5014 = vunpack.c.h.b16 %v1467
        %v5015 = vunpack.c.l.b16 %v1468
        %v5016 = vunpack.c.h.b16 %v1468
        %v5017 = vunpack.c.l.b16 %v1469
        %v5018 = vunpack.c.h.b16 %v1469
        %v5019 = vunpack.c.l.b16 %v1470
        %v5020 = vunpack.c.h.b16 %v1470
        %v5021 = vunpack.c.l.b16 %v1471
        %v5022 = vunpack.c.h.b16 %v1471
        %v5023 = vunpack.c.l.b16 %v1472
        %v5024 = vunpack.c.h.b16 %v1472
        %v5025 = vunpack.c.l.b16 %v1473
        %v5026 = vunpack.c.h.b16 %v1473
        %v5027 = vunpack.c.l.b16 %v1474
        %v5028 = vunpack.c.h.b16 %v1474
        %v5029 = vunpack.c.l.b16 %v1475
        %v5030 = vunpack.c.h.b16 %v1475
        %v5031 = vunpack.c.l.b16 %v1476
        %v5032 = vunpack.c.h.b16 %v1476
        %v5033 = vunpack.c.l.b16 %v1477
        %v5034 = vunpack.c.h.b16 %v1477
        %v5035 = vunpack.c.l.b16 %v1478
        %v5036 = vunpack.c.h.b16 %v1478
        %v5037 = vunpack.c.l.b16 %v1479
        %v5038 = vunpack.c.h.b16 %v1479
        %v5039 = vunpack.c.l.b16 %v1480
        %v5040 = vunpack.c.h.b16 %v1480
        %v5041 = vunpack.c.l.b16 %v1481
        %v5042 = vunpack.c.h.b16 %v1481
        %v5043 = vunpack.c.l.b16 %v1482
        %v5044 = vunpack.c.h.b16 %v1482
        %v5045 = vunpack.c.l.b16 %v1483
        %v5046 = vunpack.c.h.b16 %v1483
        %v5047 = vunpack.c.l.b16 %v1484
        %v5048 = vunpack.c.h.b16 %v1484
        %v5049 = vunpack.c.l.b16 %v1485
        %v5050 = vunpack.c.h.b16 %v1485
        %v5051 = vunpack.c.l.b16 %v1486
        %v5052 = vunpack.c.h.b16 %v1486
        %v5053 = vunpack.c.l.b16 %v1487
        %v5054 = vunpack.c.h.b16 %v1487
        %v5055 = vunpack.c.l.b16 %v1488
        %v5056 = vunpack.c.h.b16 %v1488
        %v5057 = vunpack.c.l.b16 %v1489
        %v5058 = vunpack.c.h.b16 %v1489
        %v5059 = vunpack.c.l.b16 %v1490
        %v5060 = vunpack.c.h.b16 %v1490
        %v5061 = vunpack.c.l.b16 %v1491
        %v5062 = vunpack.c.h.b16 %v1491
        %v5063 = vunpack.c.l.b16 %v1492
        %v5064 = vunpack.c.h.b16 %v1492
        %v5065 = vunpack.c.l.b16 %v1493
        %v5066 = vunpack.c.h.b16 %v1493
        %v5067 = vunpack.c.l.b16 %v1494
        %v5068 = vunpack.c.h.b16 %v1494
        %v5069 = vunpack.c.l.b16 %v1495
        %v5070 = vunpack.c.h.b16 %v1495
        %v5071 = vunpack.c.l.b16 %v1496
        %v5072 = vunpack.c.h.b16 %v1496
        %v5073 = vunpack.c.l.b16 %v1497
        %v5074 = vunpack.c.h.b16 %v1497
        %v5075 = vunpack.c.l.b16 %v1498
        %v5076 = vunpack.c.h.b16 %v1498
        %v5077 = vunpack.c.l.b16 %v1499
        %v5078 = vunpack.c.h.b16 %v1499
        %v5079 = vunpack.c.l.b16 %v1500
        %v5080 = vunpack.c.h.b16 %v1500
        %v5081 = vunpack.c.l.b16 %v1501
        %v5082 = vunpack.c.h.b16 %v1501
        %v5083 = vunpack.c.l.b16 %v1502
        %v5084 = vunpack.c.h.b16 %v1502
        %v5085 = vunpack.c.l.b16 %v1503
        %v5086 = vunpack.c.h.b16 %v1503
        %v5087 = vunpack.c.l.b16 %v1504
        %v5088 = vunpack.c.h.b16 %v1504
        %v5089 = vunpack.c.l.b16 %v1505
        %v5090 = vunpack.c.h.b16 %v1505
        %v5091 = vunpack.c.l.b16 %v1506
        %v5092 = vunpack.c.h.b16 %v1506
        %v5093 = vunpack.c.l.b16 %v1507
        %v5094 = vunpack.c.h.b16 %v1507
        %v5095 = vunpack.c.l.b16 %v1508
        %v5096 = vunpack.c.h.b16 %v1508
        %v5097 = vunpack.c.l.b16 %v1509
        %v5098 = vunpack.c.h.b16 %v1509
        %v5099 = vunpack.c.l.b16 %v1510
        %v5100 = vunpack.c.h.b16 %v1510
        %v5101 = vunpack.c.l.b16 %v1511
        %v5102 = vunpack.c.h.b16 %v1511
        %v5103 = vunpack.c.l.b16 %v1512
        %v5104 = vunpack.c.h.b16 %v1512
        %v5105 = vunpack.c.l.b16 %v1513
        %v5106 = vunpack.c.h.b16 %v1513
        %v5107 = vunpack.c.l.b16 %v1514
        %v5108 = vunpack.c.h.b16 %v1514
        %v5109 = vunpack.c.l.b16 %v1515
        %v5110 = vunpack.c.h.b16 %v1515
        %v5111 = vunpack.c.l.b16 %v1516
        %v5112 = vunpack.c.h.b16 %v1516
        %v5113 = vunpack.c.l.b16 %v1517
        %v5114 = vunpack.c.h.b16 %v1517
        %v5115 = vunpack.c.l.b16 %v1518
        %v5116 = vunpack.c.h.b16 %v1518
        %v5117 = vunpack.c.l.b16 %v1519
        %v5118 = vunpack.c.h.b16 %v1519
        %v5119 = vunpack.c.l.b16 %v1520
        %v5120 = vunpack.c.h.b16 %v1520
        %v5121 = vunpack.c.l.b16 %v1521
        %v5122 = vunpack.c.h.b16 %v1521
        %v5123 = vunpack.c.l.b16 %v1522
        %v5124 = vunpack.c.h.b16 %v1522
        %v5125 = vunpack.c.l.b16 %v1523
        %v5126 = vunpack.c.h.b16 %v1523
        %v5127 = vunpack.c.l.b16 %v1524
        %v5128 = vunpack.c.h.b16 %v1524
        %v5129 = vunpack.c.l.b16 %v1525
        %v5130 = vunpack.c.h.b16 %v1525
        %v5131 = vunpack.c.l.b16 %v1526
        %v5132 = vunpack.c.h.b16 %v1526
        %v5133 = vunpack.c.l.b16 %v1527
        %v5134 = vunpack.c.h.b16 %v1527
        %v5135 = vunpack.c.l.b16 %v1528
        %v5136 = vunpack.c.h.b16 %v1528
        %v5137 = vunpack.c.l.b16 %v1529
        %v5138 = vunpack.c.h.b16 %v1529
        %v5139 = vunpack.c.l.b16 %v1530
        %v5140 = vunpack.c.h.b16 %v1530
        %v5141 = vunpack.c.l.b16 %v1531
        %v5142 = vunpack.c.h.b16 %v1531
        %v5143 = vunpack.c.l.b16 %v1532
        %v5144 = vunpack.c.h.b16 %v1532
        %v5145 = vunpack.c.l.b16 %v1533
        %v5146 = vunpack.c.h.b16 %v1533
        %v5147 = vunpack.c.l.b16 %v1534
        %v5148 = vunpack.c.h.b16 %v1534
        %v5149 = vunpack.c.l.b16 %v1535
        %v5150 = vunpack.c.h.b16 %v1535
        %v5151 = vunpack.c.l.b16 %v1536
        %v5152 = vunpack.c.h.b16 %v1536
        %v5153 = vunpack.c.l.b16 %v1537
        %v5154 = vunpack.c.h.b16 %v1537
        %v5155 = vunpack.c.l.b16 %v1538
        %v5156 = vunpack.c.h.b16 %v1538
        %v5157 = vunpack.c.l.b16 %v1539
        %v5158 = vunpack.c.h.b16 %v1539
        %v5159 = vunpack.c.l.b16 %v1540
        %v5160 = vunpack.c.h.b16 %v1540
        %v5161 = vunpack.c.l.b16 %v1541
        %v5162 = vunpack.c.h.b16 %v1541
        %v5163 = vunpack.c.l.b16 %v1542
        %v5164 = vunpack.c.h.b16 %v1542
        %v5165 = vunpack.c.l.b16 %v1543
        %v5166 = vunpack.c.h.b16 %v1543
        %v5167 = vunpack.c.l.b16 %v1544
        %v5168 = vunpack.c.h.b16 %v1544
        %v5169 = vunpack.c.l.b16 %v1545
        %v5170 = vunpack.c.h.b16 %v1545
        %v5171 = vunpack.c.l.b16 %v1546
        %v5172 = vunpack.c.h.b16 %v1546
        %v5173 = vunpack.c.l.b16 %v1547
        %v5174 = vunpack.c.h.b16 %v1547
        %v5175 = vunpack.c.l.b16 %v1548
        %v5176 = vunpack.c.h.b16 %v1548
        %v5177 = vunpack.c.l.b16 %v1549
        %v5178 = vunpack.c.h.b16 %v1549
        %v5179 = vunpack.c.l.b16 %v1550
        %v5180 = vunpack.c.h.b16 %v1550
        %v5181 = vunpack.c.l.b16 %v1551
        %v5182 = vunpack.c.h.b16 %v1551
        %v5183 = vunpack.c.l.b16 %v1552
        %v5184 = vunpack.c.h.b16 %v1552
        %v5185 = vunpack.c.l.b16 %v1553
        %v5186 = vunpack.c.h.b16 %v1553
        %v5187 = vunpack.c.l.b16 %v1554
        %v5188 = vunpack.c.h.b16 %v1554
        %v5189 = vunpack.c.l.b16 %v1555
        %v5190 = vunpack.c.h.b16 %v1555
        %v5191 = vunpack.c.l.b16 %v1556
        %v5192 = vunpack.c.h.b16 %v1556
        %v5193 = vunpack.c.l.b16 %v1557
        %v5194 = vunpack.c.h.b16 %v1557
        %v5195 = vunpack.c.l.b16 %v1558
        %v5196 = vunpack.c.h.b16 %v1558
        %v5197 = vunpack.c.l.b16 %v1559
        %v5198 = vunpack.c.h.b16 %v1559
        %v5199 = vunpack.c.l.b16 %v1560
        %v5200 = vunpack.c.h.b16 %v1560
        %v5201 = vunpack.c.l.b16 %v1561
        %v5202 = vunpack.c.h.b16 %v1561
        %v5203 = vunpack.c.l.b16 %v1562
        %v5204 = vunpack.c.h.b16 %v1562
        %v5205 = vunpack.c.l.b16 %v1563
        %v5206 = vunpack.c.h.b16 %v1563
        %v5207 = vunpack.c.l.b16 %v1564
        %v5208 = vunpack.c.h.b16 %v1564
        %v5209 = vunpack.c.l.b16 %v1565
        %v5210 = vunpack.c.h.b16 %v1565
        %v5211 = vunpack.c.l.b16 %v1566
        %v5212 = vunpack.c.h.b16 %v1566
        %v5213 = vunpack.c.l.b16 %v1567
        %v5214 = vunpack.c.h.b16 %v1567
        %v5215 = vunpack.c.l.b16 %v1568
        %v5216 = vunpack.c.h.b16 %v1568
        %v5217 = vunpack.c.l.b16 %v1569
        %v5218 = vunpack.c.h.b16 %v1569
        %v5219 = vunpack.c.l.b16 %v1570
        %v5220 = vunpack.c.h.b16 %v1570
        %v5221 = vunpack.c.l.b16 %v1571
        %v5222 = vunpack.c.h.b16 %v1571
        %v5223 = vunpack.c.l.b16 %v1572
        %v5224 = vunpack.c.h.b16 %v1572
        %v5225 = vunpack.c.l.b16 %v1573
        %v5226 = vunpack.c.h.b16 %v1573
        %v5227 = vunpack.c.l.b16 %v1574
        %v5228 = vunpack.c.h.b16 %v1574
        %v5229 = vunpack.c.l.b16 %v1575
        %v5230 = vunpack.c.h.b16 %v1575
        %v5231 = vunpack.c.l.b16 %v1576
        %v5232 = vunpack.c.h.b16 %v1576
        %v5233 = vunpack.c.l.b16 %v1577
        %v5234 = vunpack.c.h.b16 %v1577
        %v5235 = vunpack.c.l.b16 %v1578
        %v5236 = vunpack.c.h.b16 %v1578
        %v5237 = vunpack.c.l.b16 %v1579
        %v5238 = vunpack.c.h.b16 %v1579
        %v5239 = vunpack.c.l.b16 %v1580
        %v5240 = vunpack.c.h.b16 %v1580
        %v5241 = vunpack.c.l.b16 %v1581
        %v5242 = vunpack.c.h.b16 %v1581
        %v5243 = vunpack.c.l.b16 %v1582
        %v5244 = vunpack.c.h.b16 %v1582
        %v5245 = vunpack.c.l.b16 %v1583
        %v5246 = vunpack.c.h.b16 %v1583
        %v5247 = vunpack.c.l.b16 %v1584
        %v5248 = vunpack.c.h.b16 %v1584
        %v5249 = vunpack.c.l.b16 %v1585
        %v5250 = vunpack.c.h.b16 %v1585
        %v5251 = vunpack.c.l.b16 %v1586
        %v5252 = vunpack.c.h.b16 %v1586
        %v5253 = vunpack.c.l.b16 %v1587
        %v5254 = vunpack.c.h.b16 %v1587
        %v5255 = vunpack.c.l.b16 %v1588
        %v5256 = vunpack.c.h.b16 %v1588
        %v5257 = vunpack.c.l.b16 %v1589
        %v5258 = vunpack.c.h.b16 %v1589
        %v5259 = vunpack.c.l.b16 %v1590
        %v5260 = vunpack.c.h.b16 %v1590
        %v5261 = vunpack.c.l.b16 %v1591
        %v5262 = vunpack.c.h.b16 %v1591
        %v5263 = vunpack.c.l.b16 %v1592
        %v5264 = vunpack.c.h.b16 %v1592
        %v5265 = vunpack.c.l.b16 %v1593
        %v5266 = vunpack.c.h.b16 %v1593
        %v5267 = vunpack.c.l.b16 %v1594
        %v5268 = vunpack.c.h.b16 %v1594
        %v5269 = vunpack.c.l.b16 %v1595
        %v5270 = vunpack.c.h.b16 %v1595
        %v5271 = vunpack.c.l.b16 %v1596
        %v5272 = vunpack.c.h.b16 %v1596
        %v5273 = vunpack.c.l.b16 %v1597
        %v5274 = vunpack.c.h.b16 %v1597
        %v5275 = vunpack.c.l.b16 %v1598
        %v5276 = vunpack.c.h.b16 %v1598
        %v5277 = vunpack.c.l.b16 %v1599
        %v5278 = vunpack.c.h.b16 %v1599
        %v5279 = vunpack.c.l.b16 %v1600
        %v5280 = vunpack.c.h.b16 %v1600
        %v5281 = vunpack.c.l.b16 %v1601
        %v5282 = vunpack.c.h.b16 %v1601
        %v5283 = vunpack.c.l.b16 %v1602
        %v5284 = vunpack.c.h.b16 %v1602
        %v5285 = vunpack.c.l.b16 %v1603
        %v5286 = vunpack.c.h.b16 %v1603
        %v5287 = vunpack.c.l.b16 %v1604
        %v5288 = vunpack.c.h.b16 %v1604
        %v5289 = vunpack.c.l.b16 %v1605
        %v5290 = vunpack.c.h.b16 %v1605
        %v5291 = vunpack.c.l.b16 %v1606
        %v5292 = vunpack.c.h.b16 %v1606
        %v5293 = vunpack.c.l.b16 %v1607
        %v5294 = vunpack.c.h.b16 %v1607
        %v5295 = vunpack.c.l.b16 %v1608
        %v5296 = vunpack.c.h.b16 %v1608
        %v5297 = vunpack.c.l.b16 %v1609
        %v5298 = vunpack.c.h.b16 %v1609
        %v5299 = vunpack.c.l.b16 %v1610
        %v5300 = vunpack.c.h.b16 %v1610
        %v5301 = vunpack.c.l.b16 %v1611
        %v5302 = vunpack.c.h.b16 %v1611
        %v5303 = vunpack.c.l.b16 %v1612
        %v5304 = vunpack.c.h.b16 %v1612
        %v5305 = vunpack.c.l.b16 %v1613
        %v5306 = vunpack.c.h.b16 %v1613
        %v5307 = vunpack.c.l.b16 %v1614
        %v5308 = vunpack.c.h.b16 %v1614
        %v5309 = vunpack.c.l.b16 %v1615
        %v5310 = vunpack.c.h.b16 %v1615
        %v5311 = vunpack.c.l.b16 %v1616
        %v5312 = vunpack.c.h.b16 %v1616
        %v5313 = vunpack.c.l.b16 %v1617
        %v5314 = vunpack.c.h.b16 %v1617
        %v5315 = vunpack.c.l.b16 %v1618
        %v5316 = vunpack.c.h.b16 %v1618
        %v5317 = vunpack.c.l.b16 %v1619
        %v5318 = vunpack.c.h.b16 %v1619
        %v5319 = vunpack.c.l.b16 %v1620
        %v5320 = vunpack.c.h.b16 %v1620
        %v5321 = vunpack.c.l.b16 %v1621
        %v5322 = vunpack.c.h.b16 %v1621
        %v5323 = vunpack.c.l.b16 %v1622
        %v5324 = vunpack.c.h.b16 %v1622
        %v5325 = vunpack.c.l.b16 %v1623
        %v5326 = vunpack.c.h.b16 %v1623
        %v5327 = vunpack.c.l.b16 %v1624
        %v5328 = vunpack.c.h.b16 %v1624
        %v5329 = vunpack.c.l.b16 %v1625
        %v5330 = vunpack.c.h.b16 %v1625
        %v5331 = vunpack.c.l.b16 %v1626
        %v5332 = vunpack.c.h.b16 %v1626
        %v5333 = vunpack.c.l.b16 %v1627
        %v5334 = vunpack.c.h.b16 %v1627
        %v5335 = vunpack.c.l.b16 %v1628
        %v5336 = vunpack.c.h.b16 %v1628
        %v5337 = vunpack.c.l.b16 %v1629
        %v5338 = vunpack.c.h.b16 %v1629
        %v5339 = vunpack.c.l.b16 %v1630
        %v5340 = vunpack.c.h.b16 %v1630
        %v5341 = vunpack.c.l.b16 %v1631
        %v5342 = vunpack.c.h.b16 %v1631
        %v5343 = vunpack.c.l.b16 %v1632
        %v5344 = vunpack.c.h.b16 %v1632
        %v5345 = vunpack.c.l.b16 %v1633
        %v5346 = vunpack.c.h.b16 %v1633
        %v5347 = vunpack.c.l.b16 %v1634
        %v5348 = vunpack.c.h.b16 %v1634
        %v5349 = vunpack.c.l.b16 %v1635
        %v5350 = vunpack.c.h.b16 %v1635
        %v5351 = vunpack.c.l.b16 %v1636
        %v5352 = vunpack.c.h.b16 %v1636
        %v5353 = vunpack.c.l.b16 %v1637
        %v5354 = vunpack.c.h.b16 %v1637
        %v5355 = vunpack.c.l.b16 %v1638
        %v5356 = vunpack.c.h.b16 %v1638
        %v5357 = vunpack.c.l.b16 %v1639
        %v5358 = vunpack.c.h.b16 %v1639
        %v5359 = vunpack.c.l.b16 %v1640
        %v5360 = vunpack.c.h.b16 %v1640
        %v5361 = vunpack.c.l.b16 %v1641
        %v5362 = vunpack.c.h.b16 %v1641
        %v5363 = vunpack.c.l.b16 %v1642
        %v5364 = vunpack.c.h.b16 %v1642
        %v5365 = vunpack.c.l.b16 %v1643
        %v5366 = vunpack.c.h.b16 %v1643
        %v5367 = vunpack.c.l.b16 %v1644
        %v5368 = vunpack.c.h.b16 %v1644
        %v5369 = vunpack.c.l.b16 %v1645
        %v5370 = vunpack.c.h.b16 %v1645
        %v5371 = vunpack.c.l.b16 %v1646
        %v5372 = vunpack.c.h.b16 %v1646
        %v5373 = vunpack.c.l.b16 %v1647
        %v5374 = vunpack.c.h.b16 %v1647
        %v5375 = vunpack.c.l.b16 %v1648
        %v5376 = vunpack.c.h.b16 %v1648
        %v5377 = vunpack.c.l.b16 %v1649
        %v5378 = vunpack.c.h.b16 %v1649
        %v5379 = vunpack.c.l.b16 %v1650
        %v5380 = vunpack.c.h.b16 %v1650
        %v5381 = vunpack.c.l.b16 %v1651
        %v5382 = vunpack.c.h.b16 %v1651
        %v5383 = vunpack.c.l.b16 %v1652
        %v5384 = vunpack.c.h.b16 %v1652
        %v5385 = vunpack.c.l.b16 %v1653
        %v5386 = vunpack.c.h.b16 %v1653
        %v5387 = vunpack.c.l.b16 %v1654
        %v5388 = vunpack.c.h.b16 %v1654
        %v5389 = vunpack.c.l.b16 %v1655
        %v5390 = vunpack.c.h.b16 %v1655
        %v5391 = vunpack.c.l.b16 %v1656
        %v5392 = vunpack.c.h.b16 %v1656
        %v5393 = vunpack.c.l.b16 %v1657
        %v5394 = vunpack.c.h.b16 %v1657
        %v5395 = vunpack.c.l.b16 %v1658
        %v5396 = vunpack.c.h.b16 %v1658
        %v5397 = vunpack.c.l.b16 %v1659
        %v5398 = vunpack.c.h.b16 %v1659
        %v5399 = vunpack.c.l.b16 %v1660
        %v5400 = vunpack.c.h.b16 %v1660
        %v5401 = vunpack.c.l.b16 %v1661
        %v5402 = vunpack.c.h.b16 %v1661
        %v5403 = vunpack.c.l.b16 %v1662
        %v5404 = vunpack.c.h.b16 %v1662
        %v5405 = vunpack.c.l.b16 %v1663
        %v5406 = vunpack.c.h.b16 %v1663
        %v5407 = vunpack.c.l.b16 %v1664
        %v5408 = vunpack.c.h.b16 %v1664
        %v5409 = vunpack.c.l.b16 %v1665
        %v5410 = vunpack.c.h.b16 %v1665
        %v5411 = vunpack.c.l.b16 %v1666
        %v5412 = vunpack.c.h.b16 %v1666
        %v5413 = vunpack.c.l.b16 %v1667
        %v5414 = vunpack.c.h.b16 %v1667
        %v5415 = vunpack.c.l.b16 %v1668
        %v5416 = vunpack.c.h.b16 %v1668
        %v5417 = vunpack.c.l.b16 %v1669
        %v5418 = vunpack.c.h.b16 %v1669
        %v5419 = vunpack.c.l.b16 %v1670
        %v5420 = vunpack.c.h.b16 %v1670
        %v5421 = vunpack.c.l.b16 %v1671
        %v5422 = vunpack.c.h.b16 %v1671
        %v5423 = vunpack.c.l.b16 %v1672
        %v5424 = vunpack.c.h.b16 %v1672
        %v5425 = vunpack.c.l.b16 %v1673
        %v5426 = vunpack.c.h.b16 %v1673
        %v5427 = vunpack.c.l.b16 %v1674
        %v5428 = vunpack.c.h.b16 %v1674
        %v5429 = vunpack.c.l.b16 %v1675
        %v5430 = vunpack.c.h.b16 %v1675
        %v5431 = vunpack.c.l.b16 %v1676
        %v5432 = vunpack.c.h.b16 %v1676
        %v5433 = vunpack.c.l.b16 %v1677
        %v5434 = vunpack.c.h.b16 %v1677
        %v5435 = vunpack.c.l.b16 %v1678
        %v5436 = vunpack.c.h.b16 %v1678
        %v5437 = vunpack.c.l.b16 %v1679
        %v5438 = vunpack.c.h.b16 %v1679
        %v5439 = vunpack.c.l.b16 %v1680
        %v5440 = vunpack.c.h.b16 %v1680
        %v5441 = vunpack.c.l.b16 %v1681
        %v5442 = vunpack.c.h.b16 %v1681
        %v5443 = vunpack.c.l.b16 %v1682
        %v5444 = vunpack.c.h.b16 %v1682
        %v5445 = vunpack.c.l.b16 %v1683
        %v5446 = vunpack.c.h.b16 %v1683
        %v5447 = vunpack.c.l.b16 %v1684
        %v5448 = vunpack.c.h.b16 %v1684
        %v5449 = vunpack.c.l.b16 %v1685
        %v5450 = vunpack.c.h.b16 %v1685
        %v5451 = vunpack.c.l.b16 %v1686
        %v5452 = vunpack.c.h.b16 %v1686
        %v5453 = vunpack.c.l.b16 %v1687
        %v5454 = vunpack.c.h.b16 %v1687
        %v5455 = vunpack.c.l.b16 %v1688
        %v5456 = vunpack.c.h.b16 %v1688
        %v5457 = vunpack.c.l.b16 %v1689
        %v5458 = vunpack.c.h.b16 %v1689
        %v5459 = vunpack.c.l.b16 %v1690
        %v5460 = vunpack.c.h.b16 %v1690
        %v5461 = vunpack.c.l.b16 %v1691
        %v5462 = vunpack.c.h.b16 %v1691
        %v5463 = vunpack.c.l.b16 %v1692
        %v5464 = vunpack.c.h.b16 %v1692
        %v5465 = vunpack.c.l.b16 %v1693
        %v5466 = vunpack.c.h.b16 %v1693
        %v5467 = vunpack.c.l.b16 %v1694
        %v5468 = vunpack.c.h.b16 %v1694
        %v5469 = vunpack.c.l.b16 %v1695
        %v5470 = vunpack.c.h.b16 %v1695
        %v5471 = vunpack.c.l.b16 %v1696
        %v5472 = vunpack.c.h.b16 %v1696
        %v5473 = vunpack.c.l.b16 %v1697
        %v5474 = vunpack.c.h.b16 %v1697
        %v5475 = vunpack.c.l.b16 %v1698
        %v5476 = vunpack.c.h.b16 %v1698
        %v5477 = vunpack.c.l.b16 %v1699
        %v5478 = vunpack.c.h.b16 %v1699
        %v5479 = vunpack.c.l.b16 %v1700
        %v5480 = vunpack.c.h.b16 %v1700
        %v5481 = vunpack.c.l.b16 %v1701
        %v5482 = vunpack.c.h.b16 %v1701
        %v5483 = vunpack.c.l.b16 %v1702
        %v5484 = vunpack.c.h.b16 %v1702
        %v5485 = vunpack.c.l.b16 %v1703
        %v5486 = vunpack.c.h.b16 %v1703
        %v5487 = vunpack.c.l.b16 %v1704
        %v5488 = vunpack.c.h.b16 %v1704
        %v5489 = vunpack.c.l.b16 %v1705
        %v5490 = vunpack.c.h.b16 %v1705
        %v5491 = vunpack.c.l.b16 %v1706
        %v5492 = vunpack.c.h.b16 %v1706
        %v5493 = vunpack.c.l.b16 %v1707
        %v5494 = vunpack.c.h.b16 %v1707
        %v5495 = vunpack.c.l.b16 %v1708
        %v5496 = vunpack.c.h.b16 %v1708
        %v5497 = vunpack.c.l.b16 %v1709
        %v5498 = vunpack.c.h.b16 %v1709
        %v5499 = vunpack.c.l.b16 %v1710
        %v5500 = vunpack.c.h.b16 %v1710
        %v5501 = vunpack.c.l.b16 %v1711
        %v5502 = vunpack.c.h.b16 %v1711
        %v5503 = vunpack.c.l.b16 %v1712
        %v5504 = vunpack.c.h.b16 %v1712
        %v5505 = vunpack.c.l.b16 %v1713
        %v5506 = vunpack.c.h.b16 %v1713
        %v5507 = vunpack.c.l.b16 %v1714
        %v5508 = vunpack.c.h.b16 %v1714
        %v5509 = vunpack.c.l.b16 %v1715
        %v5510 = vunpack.c.h.b16 %v1715
        %v5511 = vunpack.c.l.b16 %v1716
        %v5512 = vunpack.c.h.b16 %v1716
        %v5513 = vunpack.c.l.b16 %v1717
        %v5514 = vunpack.c.h.b16 %v1717
        %v5515 = vunpack.c.l.b16 %v1718
        %v5516 = vunpack.c.h.b16 %v1718
        %v5517 = vunpack.c.l.b16 %v1719
        %v5518 = vunpack.c.h.b16 %v1719
        %v5519 = vunpack.c.l.b16 %v1720
        %v5520 = vunpack.c.h.b16 %v1720
        %v5521 = vunpack.c.l.b16 %v1721
        %v5522 = vunpack.c.h.b16 %v1721
        %v5523 = vunpack.c.l.b16 %v1722
        %v5524 = vunpack.c.h.b16 %v1722
        %v5525 = vunpack.c.l.b16 %v1723
        %v5526 = vunpack.c.h.b16 %v1723
        %v5527 = vunpack.c.l.b16 %v1724
        %v5528 = vunpack.c.h.b16 %v1724
        %v5529 = vunpack.c.l.b16 %v1725
        %v5530 = vunpack.c.h.b16 %v1725
        %v5531 = vunpack.c.l.b16 %v1726
        %v5532 = vunpack.c.h.b16 %v1726
        %v5533 = vunpack.c.l.b16 %v1727
        %v5534 = vunpack.c.h.b16 %v1727
        %v5535 = vunpack.c.l.b16 %v1728
        %v5536 = vunpack.c.h.b16 %v1728
        %v5537 = vunpack.c.l.b16 %v1729
        %v5538 = vunpack.c.h.b16 %v1729
        %v5539 = vunpack.c.l.b16 %v1730
        %v5540 = vunpack.c.h.b16 %v1730
        %v5541 = vunpack.c.l.b16 %v1731
        %v5542 = vunpack.c.h.b16 %v1731
        %v5543 = vunpack.c.l.b16 %v1732
        %v5544 = vunpack.c.h.b16 %v1732
        %v5545 = vunpack.c.l.b16 %v1733
        %v5546 = vunpack.c.h.b16 %v1733
        %v5547 = vunpack.c.l.b16 %v1734
        %v5548 = vunpack.c.h.b16 %v1734
        %v5549 = vunpack.c.l.b16 %v1735
        %v5550 = vunpack.c.h.b16 %v1735
        %v5551 = vunpack.c.l.b16 %v1736
        %v5552 = vunpack.c.h.b16 %v1736
        %v5553 = vunpack.c.l.b16 %v1737
        %v5554 = vunpack.c.h.b16 %v1737
        %v5555 = vunpack.c.l.b16 %v1738
        %v5556 = vunpack.c.h.b16 %v1738
        %v5557 = vunpack.c.l.b16 %v1739
        %v5558 = vunpack.c.h.b16 %v1739
        %v5559 = vunpack.c.l.b16 %v1740
        %v5560 = vunpack.c.h.b16 %v1740
        %v5561 = vunpack.c.l.b16 %v1741
        %v5562 = vunpack.c.h.b16 %v1741
        %v5563 = vunpack.c.l.b16 %v1742
        %v5564 = vunpack.c.h.b16 %v1742
        %v5565 = vunpack.c.l.b16 %v1743
        %v5566 = vunpack.c.h.b16 %v1743
        %v5567 = vunpack.c.l.b16 %v1744
        %v5568 = vunpack.c.h.b16 %v1744
        %v5569 = vunpack.c.l.b16 %v1745
        %v5570 = vunpack.c.h.b16 %v1745
        %v5571 = vunpack.c.l.b16 %v1746
        %v5572 = vunpack.c.h.b16 %v1746
        %v5573 = vunpack.c.l.b16 %v1747
        %v5574 = vunpack.c.h.b16 %v1747
        %v5575 = vunpack.c.l.b16 %v1748
        %v5576 = vunpack.c.h.b16 %v1748
        %v5577 = vunpack.c.l.b16 %v1749
        %v5578 = vunpack.c.h.b16 %v1749
        %v5579 = vunpack.c.l.b16 %v1750
        %v5580 = vunpack.c.h.b16 %v1750
        %v5581 = vunpack.c.l.b16 %v1751
        %v5582 = vunpack.c.h.b16 %v1751
        %v5583 = vunpack.c.l.b16 %v1752
        %v5584 = vunpack.c.h.b16 %v1752
        %v5585 = vunpack.c.l.b16 %v1753
        %v5586 = vunpack.c.h.b16 %v1753
        %v5587 = vunpack.c.l.b16 %v1754
        %v5588 = vunpack.c.h.b16 %v1754
        %v5589 = vunpack.c.l.b16 %v1755
        %v5590 = vunpack.c.h.b16 %v1755
        %v5591 = vunpack.c.l.b16 %v1756
        %v5592 = vunpack.c.h.b16 %v1756
        %v5593 = vunpack.c.l.b16 %v1757
        %v5594 = vunpack.c.h.b16 %v1757
        %v5595 = vunpack.c.l.b16 %v1758
        %v5596 = vunpack.c.h.b16 %v1758
        %v5597 = vunpack.c.l.b16 %v1759
        %v5598 = vunpack.c.h.b16 %v1759
        %v5599 = vunpack.c.l.b16 %v1760
        %v5600 = vunpack.c.h.b16 %v1760
        %v5601 = vunpack.c.l.b16 %v1761
        %v5602 = vunpack.c.h.b16 %v1761
        %v5603 = vunpack.c.l.b16 %v1762
        %v5604 = vunpack.c.h.b16 %v1762
        %v5605 = vunpack.c.l.b16 %v1763
        %v5606 = vunpack.c.h.b16 %v1763
        %v5607 = vunpack.c.l.b16 %v1764
        %v5608 = vunpack.c.h.b16 %v1764
        %v5609 = vunpack.c.l.b16 %v1765
        %v5610 = vunpack.c.h.b16 %v1765
        %v5611 = vunpack.c.l.b16 %v1766
        %v5612 = vunpack.c.h.b16 %v1766
        %v5613 = vunpack.c.l.b16 %v1767
        %v5614 = vunpack.c.h.b16 %v1767
        %v5615 = vunpack.c.l.b16 %v1768
        %v5616 = vunpack.c.h.b16 %v1768
        %v5617 = vunpack.c.l.b16 %v1769
        %v5618 = vunpack.c.h.b16 %v1769
        %v5619 = vunpack.c.l.b16 %v1770
        %v5620 = vunpack.c.h.b16 %v1770
        %v5621 = vunpack.c.l.b16 %v1771
        %v5622 = vunpack.c.h.b16 %v1771
        %v5623 = vunpack.c.l.b16 %v1772
        %v5624 = vunpack.c.h.b16 %v1772
        %v5625 = vunpack.c.l.b16 %v1773
        %v5626 = vunpack.c.h.b16 %v1773
        %v5627 = vunpack.c.l.b16 %v1774
        %v5628 = vunpack.c.h.b16 %v1774
        %v5629 = vunpack.c.l.b16 %v1775
        %v5630 = vunpack.c.h.b16 %v1775
        %v5631 = vunpack.c.l.b16 %v1776
        %v5632 = vunpack.c.h.b16 %v1776
        %v5633 = vunpack.c.l.b16 %v1777
        %v5634 = vunpack.c.h.b16 %v1777
        %v5635 = vunpack.c.l.b16 %v1778
        %v5636 = vunpack.c.h.b16 %v1778
        %v5637 = vunpack.c.l.b16 %v1779
        %v5638 = vunpack.c.h.b16 %v1779
        %v5639 = vunpack.c.l.b16 %v1780
        %v5640 = vunpack.c.h.b16 %v1780
        %v5641 = vunpack.c.l.b16 %v1781
        %v5642 = vunpack.c.h.b16 %v1781
        %v5643 = vunpack.c.l.b16 %v1782
        %v5644 = vunpack.c.h.b16 %v1782
        %v5645 = vunpack.c.l.b16 %v1783
        %v5646 = vunpack.c.h.b16 %v1783
        %v5647 = vunpack.c.l.b16 %v1784
        %v5648 = vunpack.c.h.b16 %v1784
        %v5649 = vunpack.c.l.b16 %v1785
        %v5650 = vunpack.c.h.b16 %v1785
        %v5651 = vunpack.c.l.b16 %v1786
        %v5652 = vunpack.c.h.b16 %v1786
        %v5653 = vunpack.c.l.b16 %v1787
        %v5654 = vunpack.c.h.b16 %v1787
        %v5655 = vunpack.c.l.b16 %v1788
        %v5656 = vunpack.c.h.b16 %v1788
        %v5657 = vunpack.c.l.b16 %v1789
        %v5658 = vunpack.c.h.b16 %v1789
        %v5659 = vunpack.c.l.b16 %v1790
        %v5660 = vunpack.c.h.b16 %v1790
        %v5661 = vunpack.c.l.b16 %v1791
        %v5662 = vunpack.c.h.b16 %v1791
        %v5663 = vunpack.c.l.b16 %v1792
        %v5664 = vunpack.c.h.b16 %v1792
        %v5665 = vunpack.c.l.b16 %v1793
        %v5666 = vunpack.c.h.b16 %v1793
        %v5667 = vunpack.c.l.b16 %v1794
        %v5668 = vunpack.c.h.b16 %v1794
        %v5669 = vunpack.c.l.b16 %v1795
        %v5670 = vunpack.c.h.b16 %v1795
        %v5671 = vunpack.c.l.b16 %v1796
        %v5672 = vunpack.c.h.b16 %v1796
        %v5673 = vunpack.c.l.b16 %v1797
        %v5674 = vunpack.c.h.b16 %v1797
        %v5675 = vunpack.c.l.b16 %v1798
        %v5676 = vunpack.c.h.b16 %v1798
        %v5677 = vunpack.c.l.b16 %v1799
        %v5678 = vunpack.c.h.b16 %v1799
        %v5679 = vunpack.c.l.b16 %v1800
        %v5680 = vunpack.c.h.b16 %v1800
        %v5681 = vunpack.c.l.b16 %v1801
        %v5682 = vunpack.c.h.b16 %v1801
        %v5683 = vunpack.c.l.b16 %v1802
        %v5684 = vunpack.c.h.b16 %v1802
        %v5685 = vunpack.c.l.b16 %v1803
        %v5686 = vunpack.c.h.b16 %v1803
        %v5687 = vunpack.c.l.b16 %v1804
        %v5688 = vunpack.c.h.b16 %v1804
        %v5689 = vunpack.c.l.b16 %v1805
        %v5690 = vunpack.c.h.b16 %v1805
        %v5691 = vunpack.c.l.b16 %v1806
        %v5692 = vunpack.c.h.b16 %v1806
        %v5693 = vunpack.c.l.b16 %v1807
        %v5694 = vunpack.c.h.b16 %v1807
        %v5695 = vunpack.c.l.b16 %v1808
        %v5696 = vunpack.c.h.b16 %v1808
        %v5697 = vunpack.c.l.b16 %v1809
        %v5698 = vunpack.c.h.b16 %v1809
        %v5699 = vunpack.c.l.b16 %v1810
        %v5700 = vunpack.c.h.b16 %v1810
        %v5701 = vunpack.c.l.b16 %v1811
        %v5702 = vunpack.c.h.b16 %v1811
        %v5703 = vunpack.c.l.b16 %v1812
        %v5704 = vunpack.c.h.b16 %v1812
        %v5705 = vunpack.c.l.b16 %v1813
        %v5706 = vunpack.c.h.b16 %v1813
        %v5707 = vunpack.c.l.b16 %v1814
        %v5708 = vunpack.c.h.b16 %v1814
        %v5709 = vunpack.c.l.b16 %v1815
        %v5710 = vunpack.c.h.b16 %v1815
        %v5711 = vunpack.c.l.b16 %v1816
        %v5712 = vunpack.c.h.b16 %v1816
        %v5713 = vunpack.c.l.b16 %v1817
        %v5714 = vunpack.c.h.b16 %v1817
        %v5715 = vunpack.c.l.b16 %v1818
        %v5716 = vunpack.c.h.b16 %v1818
        %v5717 = vunpack.c.l.b16 %v1819
        %v5718 = vunpack.c.h.b16 %v1819
        %v5719 = vunpack.c.l.b16 %v1820
        %v5720 = vunpack.c.h.b16 %v1820
        %v5721 = vunpack.c.l.b16 %v1821
        %v5722 = vunpack.c.h.b16 %v1821
        %v5723 = vunpack.c.l.b16 %v1822
        %v5724 = vunpack.c.h.b16 %v1822
        %v5725 = vunpack.c.l.b16 %v1823
        %v5726 = vunpack.c.h.b16 %v1823
        %v5727 = vunpack.c.l.b16 %v1824
        %v5728 = vunpack.c.h.b16 %v1824
        %v5729 = vunpack.c.l.b16 %v1825
        %v5730 = vunpack.c.h.b16 %v1825
        %v5731 = vunpack.c.l.b16 %v1826
        %v5732 = vunpack.c.h.b16 %v1826
        %v5733 = vunpack.c.l.b16 %v1827
        %v5734 = vunpack.c.h.b16 %v1827
        %v5735 = vunpack.c.l.b16 %v1828
        %v5736 = vunpack.c.h.b16 %v1828
        %v5737 = vunpack.c.l.b16 %v1829
        %v5738 = vunpack.c.h.b16 %v1829
        %v5739 = vunpack.c.l.b16 %v1830
        %v5740 = vunpack.c.h.b16 %v1830
        %v5741 = vunpack.c.l.b16 %v1831
        %v5742 = vunpack.c.h.b16 %v1831
        %v5743 = vunpack.c.l.b16 %v1832
        %v5744 = vunpack.c.h.b16 %v1832
        %v5745 = vunpack.c.l.b16 %v1833
        %v5746 = vunpack.c.h.b16 %v1833
        %v5747 = vunpack.c.l.b16 %v1834
        %v5748 = vunpack.c.h.b16 %v1834
        %v5749 = vunpack.c.l.b16 %v1835
        %v5750 = vunpack.c.h.b16 %v1835
        %v5751 = vunpack.c.l.b16 %v1836
        %v5752 = vunpack.c.h.b16 %v1836
        %v5753 = vunpack.c.l.b16 %v1837
        %v5754 = vunpack.c.h.b16 %v1837
        %v5755 = vunpack.c.l.b16 %v1838
        %v5756 = vunpack.c.h.b16 %v1838
        %v5757 = vunpack.c.l.b16 %v1839
        %v5758 = vunpack.c.h.b16 %v1839
        %v5759 = vunpack.c.l.b16 %v1840
        %v5760 = vunpack.c.h.b16 %v1840
        %v5761 = vpack.c.b16 %v3267, %v3265
        %v5762 = vpack.c.b16 %v3268, %v3266
        %v5763 = vpack.c.b16 %v3271, %v3269
        %v5764 = vpack.c.b16 %v3272, %v3270
        %v5765 = vpack.c.b16 %v3275, %v3273
        %v5766 = vpack.c.b16 %v3276, %v3274
        %v5767 = vpack.c.b16 %v3279, %v3277
        %v5768 = vpack.c.b16 %v3280, %v3278
        %v5769 = vpack.c.b16 %v3283, %v3281
        %v5770 = vpack.c.b16 %v3284, %v3282
        %v5771 = vpack.c.b16 %v3287, %v3285
        %v5772 = vpack.c.b16 %v3288, %v3286
        %v5773 = vpack.c.b16 %v3291, %v3289
        %v5774 = vpack.c.b16 %v3292, %v3290
        %v5775 = vpack.c.b16 %v3295, %v3293
        %v5776 = vpack.c.b16 %v3296, %v3294
        %v5777 = vpack.c.b16 %v3299, %v3297
        %v5778 = vpack.c.b16 %v3300, %v3298
        %v5779 = vpack.c.b16 %v3303, %v3301
        %v5780 = vpack.c.b16 %v3304, %v3302
        %v5781 = vpack.c.b16 %v3307, %v3305
        %v5782 = vpack.c.b16 %v3308, %v3306
        %v5783 = vpack.c.b16 %v3311, %v3309
        %v5784 = vpack.c.b16 %v3312, %v3310
        %v5785 = vpack.c.b16 %v3315, %v3313
        %v5786 = vpack.c.b16 %v3316, %v3314
        %v5787 = vpack.c.b16 %v3319, %v3317
        %v5788 = vpack.c.b16 %v3320, %v3318
        %v5789 = vpack.c.b16 %v3323, %v3321
        %v5790 = vpack.c.b16 %v3324, %v3322
        %v5791 = vpack.c.b16 %v3327, %v3325
        %v5792 = vpack.c.b16 %v3328, %v3326
        %v5793 = vpack.c.b16 %v3331, %v3329
        %v5794 = vpack.c.b16 %v3332, %v3330
        %v5795 = vpack.c.b16 %v3335, %v3333
        %v5796 = vpack.c.b16 %v3336, %v3334
        %v5797 = vpack.c.b16 %v3339, %v3337
        %v5798 = vpack.c.b16 %v3340, %v3338
        %v5799 = vpack.c.b16 %v3343, %v3341
        %v5800 = vpack.c.b16 %v3344, %v3342
        %v5801 = vpack.c.b16 %v3347, %v3345
        %v5802 = vpack.c.b16 %v3348, %v3346
        %v5803 = vpack.c.b16 %v3351, %v3349
        %v5804 = vpack.c.b16 %v3352, %v3350
        %v5805 = vpack.c.b16 %v3355, %v3353
        %v5806 = vpack.c.b16 %v3356, %v3354
        %v5807 = vpack.c.b16 %v3359, %v3357
        %v5808 = vpack.c.b16 %v3360, %v3358
        %v5809 = vpack.c.b16 %v3363, %v3361
        %v5810 = vpack.c.b16 %v3364, %v3362
        %v5811 = vpack.c.b16 %v3367, %v3365
        %v5812 = vpack.c.b16 %v3368, %v3366
        %v5813 = vpack.c.b16 %v3371, %v3369
        %v5814 = vpack.c.b16 %v3372, %v3370
        %v5815 = vpack.c.b16 %v3375, %v3373
        %v5816 = vpack.c.b16 %v3376, %v3374
        %v5817 = vpack.c.b16 %v3379, %v3377
        %v5818 = vpack.c.b16 %v3380, %v3378
        %v5819 = vpack.c.b16 %v3383, %v3381
        %v5820 = vpack.c.b16 %v3384, %v3382
        %v5821 = vpack.c.b16 %v3387, %v3385
        %v5822 = vpack.c.b16 %v3388, %v3386
        %v5823 = vpack.c.b16 %v3391, %v3389
        %v5824 = vpack.c.b16 %v3392, %v3390
        %v5825 = vpack.c.b16 %v3395, %v3393
        %v5826 = vpack.c.b16 %v3396, %v3394
        %v5827 = vpack.c.b16 %v3399, %v3397
        %v5828 = vpack.c.b16 %v3400, %v3398
        %v5829 = vpack.c.b16 %v3403, %v3401
        %v5830 = vpack.c.b16 %v3404, %v3402
        %v5831 = vpack.c.b16 %v3407, %v3405
        %v5832 = vpack.c.b16 %v3408, %v3406
        %v5833 = vpack.c.b16 %v3411, %v3409
        %v5834 = vpack.c.b16 %v3412, %v3410
        %v5835 = vpack.c.b16 %v3415, %v3413
        %v5836 = vpack.c.b16 %v3416, %v3414
        %v5837 = vpack.c.b16 %v3419, %v3417
        %v5838 = vpack.c.b16 %v3420, %v3418
        %v5839 = vpack.c.b16 %v3423, %v3421
        %v5840 = vpack.c.b16 %v3424, %v3422
        %v5841 = vpack.c.b16 %v3427, %v3425
        %v5842 = vpack.c.b16 %v3428, %v3426
        %v5843 = vpack.c.b16 %v3431, %v3429
        %v5844 = vpack.c.b16 %v3432, %v3430
        %v5845 = vpack.c.b16 %v3435, %v3433
        %v5846 = vpack.c.b16 %v3436, %v3434
        %v5847 = vpack.c.b16 %v3439, %v3437
        %v5848 = vpack.c.b16 %v3440, %v3438
        %v5849 = vpack.c.b16 %v3443, %v3441
        %v5850 = vpack.c.b16 %v3444, %v3442
        %v5851 = vpack.c.b16 %v3447, %v3445
        %v5852 = vpack.c.b16 %v3448, %v3446
        %v5853 = vpack.c.b16 %v3451, %v3449
        %v5854 = vpack.c.b16 %v3452, %v3450
        %v5855 = vpack.c.b16 %v3455, %v3453
        %v5856 = vpack.c.b16 %v3456, %v3454
        %v5857 = vpack.c.b16 %v3459, %v3457
        %v5858 = vpack.c.b16 %v3460, %v3458
        %v5859 = vpack.c.b16 %v3463, %v3461
        %v5860 = vpack.c.b16 %v3464, %v3462
        %v5861 = vpack.c.b16 %v3467, %v3465
        %v5862 = vpack.c.b16 %v3468, %v3466
        %v5863 = vpack.c.b16 %v3471, %v3469
        %v5864 = vpack.c.b16 %v3472, %v3470
        %v5865 = vpack.c.b16 %v3475, %v3473
        %v5866 = vpack.c.b16 %v3476, %v3474
        %v5867 = vpack.c.b16 %v3479, %v3477
        %v5868 = vpack.c.b16 %v3480, %v3478
        %v5869 = vpack.c.b16 %v3483, %v3481
        %v5870 = vpack.c.b16 %v3484, %v3482
        %v5871 = vpack.c.b16 %v3487, %v3485
        %v5872 = vpack.c.b16 %v3488, %v3486
        %v5873 = vpack.c.b16 %v3491, %v3489
        %v5874 = vpack.c.b16 %v3492, %v3490
        %v5875 = vpack.c.b16 %v3495, %v3493
        %v5876 = vpack.c.b16 %v3496, %v3494
        %v5877 = vpack.c.b16 %v3499, %v3497
        %v5878 = vpack.c.b16 %v3500, %v3498
        %v5879 = vpack.c.b16 %v3503, %v3501
        %v5880 = vpack.c.b16 %v3504, %v3502
        %v5881 = vpack.c.b16 %v3507, %v3505
        %v5882 = vpack.c.b16 %v3508, %v3506
        %v5883 = vpack.c.b16 %v3511, %v3509
        %v5884 = vpack.c.b16 %v3512, %v3510
        %v5885 = vpack.c.b16 %v3515, %v3513
        %v5886 = vpack.c.b16 %v3516, %v3514
        %v5887 = vpack.c.b16 %v3519, %v3517
        %v5888 = vpack.c.b16 %v3520, %v3518
        %v5889 = vpack.c.b16 %v3523, %v3521
        %v5890 = vpack.c.b16 %v3524, %v3522
        %v5891 = vpack.c.b16 %v3527, %v3525
        %v5892 = vpack.c.b16 %v3528, %v3526
        %v5893 = vpack.c.b16 %v3531, %v3529
        %v5894 = vpack.c.b16 %v3532, %v3530
        %v5895 = vpack.c.b16 %v3535, %v3533
        %v5896 = vpack.c.b16 %v3536, %v3534
        %v5897 = vpack.c.b16 %v3539, %v3537
        %v5898 = vpack.c.b16 %v3540, %v3538
        %v5899 = vpack.c.b16 %v3543, %v3541
        %v5900 = vpack.c.b16 %v3544, %v3542
        %v5901 = vpack.c.b16 %v3547, %v3545
        %v5902 = vpack.c.b16 %v3548, %v3546
        %v5903 = vpack.c.b16 %v3551, %v3549
        %v5904 = vpack.c.b16 %v3552, %v3550
        %v5905 = vpack.c.b16 %v3555, %v3553
        %v5906 = vpack.c.b16 %v3556, %v3554
        %v5907 = vpack.c.b16 %v3559, %v3557
        %v5908 = vpack.c.b16 %v3560, %v3558
        %v5909 = vpack.c.b16 %v3563, %v3561
        %v5910 = vpack.c.b16 %v3564, %v3562
        %v5911 = vpack.c.b16 %v3567, %v3565
        %v5912 = vpack.c.b16 %v3568, %v3566
        %v5913 = vpack.c.b16 %v3571, %v3569
        %v5914 = vpack.c.b16 %v3572, %v3570
        %v5915 = vpack.c.b16 %v3575, %v3573
        %v5916 = vpack.c.b16 %v3576, %v3574
        %v5917 = vpack.c.b16 %v3579, %v3577
        %v5918 = vpack.c.b16 %v3580, %v3578
        %v5919 = vpack.c.b16 %v3583, %v3581
        %v5920 = vpack.c.b16 %v3584, %v3582
        %v5921 = vpack.c.b16 %v3587, %v3585
        %v5922 = vpack.c.b16 %v3588, %v3586
        %v5923 = vpack.c.b16 %v3591, %v3589
        %v5924 = vpack.c.b16 %v3592, %v3590
        %v5925 = vpack.c.b16 %v3595, %v3593
        %v5926 = vpack.c.b16 %v3596, %v3594
        %v5927 = vpack.c.b16 %v3599, %v3597
        %v5928 = vpack.c.b16 %v3600, %v3598
        %v5929 = vpack.c.b16 %v3603, %v3601
        %v5930 = vpack.c.b16 %v3604, %v3602
        %v5931 = vpack.c.b16 %v3607, %v3605
        %v5932 = vpack.c.b16 %v3608, %v3606
        %v5933 = vpack.c.b16 %v3611, %v3609
        %v5934 = vpack.c.b16 %v3612, %v3610
        %v5935 = vpack.c.b16 %v3615, %v3613
        %v5936 = vpack.c.b16 %v3616, %v3614
        %v5937 = vpack.c.b16 %v3619, %v3617
        %v5938 = vpack.c.b16 %v3620, %v3618
        %v5939 = vpack.c.b16 %v3623, %v3621
        %v5940 = vpack.c.b16 %v3624, %v3622
        %v5941 = vpack.c.b16 %v3627, %v3625
        %v5942 = vpack.c.b16 %v3628, %v3626
        %v5943 = vpack.c.b16 %v3631, %v3629
        %v5944 = vpack.c.b16 %v3632, %v3630
        %v5945 = vpack.c.b16 %v3635, %v3633
        %v5946 = vpack.c.b16 %v3636, %v3634
        %v5947 = vpack.c.b16 %v3639, %v3637
        %v5948 = vpack.c.b16 %v3640, %v3638
        %v5949 = vpack.c.b16 %v3643, %v3641
        %v5950 = vpack.c.b16 %v3644, %v3642
        %v5951 = vpack.c.b16 %v3647, %v3645
        %v5952 = vpack.c.b16 %v3648, %v3646
        %v5953 = vpack.c.b16 %v3651, %v3649
        %v5954 = vpack.c.b16 %v3652, %v3650
        %v5955 = vpack.c.b16 %v3655, %v3653
        %v5956 = vpack.c.b16 %v3656, %v3654
        %v5957 = vpack.c.b16 %v3659, %v3657
        %v5958 = vpack.c.b16 %v3660, %v3658
        %v5959 = vpack.c.b16 %v3663, %v3661
        %v5960 = vpack.c.b16 %v3664, %v3662
        %v5961 = vpack.c.b16 %v3667, %v3665
        %v5962 = vpack.c.b16 %v3668, %v3666
        %v5963 = vpack.c.b16 %v3671, %v3669
        %v5964 = vpack.c.b16 %v3672, %v3670
        %v5965 = vpack.c.b16 %v3675, %v3673
        %v5966 = vpack.c.b16 %v3676, %v3674
        %v5967 = vpack.c.b16 %v3679, %v3677
        %v5968 = vpack.c.b16 %v3680, %v3678
        %v5969 = vpack.c.b16 %v3683, %v3681
        %v5970 = vpack.c.b16 %v3684, %v3682
        %v5971 = vpack.c.b16 %v3687, %v3685
        %v5972 = vpack.c.b16 %v3688, %v3686
        %v5973 = vpack.c.b16 %v3691, %v3689
        %v5974 = vpack.c.b16 %v3692, %v3690
        %v5975 = vpack.c.b16 %v3695, %v3693
        %v5976 = vpack.c.b16 %v3696, %v3694
        %v5977 = vpack.c.b16 %v3699, %v3697
        %v5978 = vpack.c.b16 %v3700, %v3698
        %v5979 = vpack.c.b16 %v3703, %v3701
        %v5980 = vpack.c.b16 %v3704, %v3702
        %v5981 = vpack.c.b16 %v3707, %v3705
        %v5982 = vpack.c.b16 %v3708, %v3706
        %v5983 = vpack.c.b16 %v3711, %v3709
        %v5984 = vpack.c.b16 %v3712, %v3710
        %v5985 = vpack.c.b16 %v3715, %v3713
        %v5986 = vpack.c.b16 %v3716, %v3714
        %v5987 = vpack.c.b16 %v3719, %v3717
        %v5988 = vpack.c.b16 %v3720, %v3718
        %v5989 = vpack.c.b16 %v3723, %v3721
        %v5990 = vpack.c.b16 %v3724, %v3722
        %v5991 = vpack.c.b16 %v3727, %v3725
        %v5992 = vpack.c.b16 %v3728, %v3726
        %v5993 = vpack.c.b16 %v3731, %v3729
        %v5994 = vpack.c.b16 %v3732, %v3730
        %v5995 = vpack.c.b16 %v3735, %v3733
        %v5996 = vpack.c.b16 %v3736, %v3734
        %v5997 = vpack.c.b16 %v3739, %v3737
        %v5998 = vpack.c.b16 %v3740, %v3738
        %v5999 = vpack.c.b16 %v3743, %v3741
        %v6000 = vpack.c.b16 %v3744, %v3742
        %v6001 = vpack.c.b16 %v3747, %v3745
        %v6002 = vpack.c.b16 %v3748, %v3746
        %v6003 = vpack.c.b16 %v3751, %v3749
        %v6004 = vpack.c.b16 %v3752, %v3750
        %v6005 = vpack.c.b16 %v3755, %v3753
        %v6006 = vpack.c.b16 %v3756, %v3754
        %v6007 = vpack.c.b16 %v3759, %v3757
        %v6008 = vpack.c.b16 %v3760, %v3758
        %v6009 = vpack.c.b16 %v3763, %v3761
        %v6010 = vpack.c.b16 %v3764, %v3762
        %v6011 = vpack.c.b16 %v3767, %v3765
        %v6012 = vpack.c.b16 %v3768, %v3766
        %v6013 = vpack.c.b16 %v3771, %v3769
        %v6014 = vpack.c.b16 %v3772, %v3770
        %v6015 = vpack.c.b16 %v3775, %v3773
        %v6016 = vpack.c.b16 %v3776, %v3774
        %v6017 = vpack.c.b16 %v3779, %v3777
        %v6018 = vpack.c.b16 %v3780, %v3778
        %v6019 = vpack.c.b16 %v3783, %v3781
        %v6020 = vpack.c.b16 %v3784, %v3782
        %v6021 = vpack.c.b16 %v3787, %v3785
        %v6022 = vpack.c.b16 %v3788, %v3786
        %v6023 = vpack.c.b16 %v3791, %v3789
        %v6024 = vpack.c.b16 %v3792, %v3790
        %v6025 = vpack.c.b16 %v3795, %v3793
        %v6026 = vpack.c.b16 %v3796, %v3794
        %v6027 = vpack.c.b16 %v3799, %v3797
        %v6028 = vpack.c.b16 %v3800, %v3798
        %v6029 = vpack.c.b16 %v3803, %v3801
        %v6030 = vpack.c.b16 %v3804, %v3802
        %v6031 = vpack.c.b16 %v3807, %v3805
        %v6032 = vpack.c.b16 %v3808, %v3806
        %v6033 = vpack.c.b16 %v3811, %v3809
        %v6034 = vpack.c.b16 %v3812, %v3810
        %v6035 = vpack.c.b16 %v3815, %v3813
        %v6036 = vpack.c.b16 %v3816, %v3814
        %v6037 = vpack.c.b16 %v3819, %v3817
        %v6038 = vpack.c.b16 %v3820, %v3818
        %v6039 = vpack.c.b16 %v3823, %v3821
        %v6040 = vpack.c.b16 %v3824, %v3822
        %v6041 = vpack.c.b16 %v3827, %v3825
        %v6042 = vpack.c.b16 %v3828, %v3826
        %v6043 = vpack.c.b16 %v3831, %v3829
        %v6044 = vpack.c.b16 %v3832, %v3830
        %v6045 = vpack.c.b16 %v3835, %v3833
        %v6046 = vpack.c.b16 %v3836, %v3834
        %v6047 = vpack.c.b16 %v3839, %v3837
        %v6048 = vpack.c.b16 %v3840, %v3838
        %v6049 = vpack.c.b16 %v3843, %v3841
        %v6050 = vpack.c.b16 %v3844, %v3842
        %v6051 = vpack.c.b16 %v3847, %v3845
        %v6052 = vpack.c.b16 %v3848, %v3846
        %v6053 = vpack.c.b16 %v3851, %v3849
        %v6054 = vpack.c.b16 %v3852, %v3850
        %v6055 = vpack.c.b16 %v3855, %v3853
        %v6056 = vpack.c.b16 %v3856, %v3854
        %v6057 = vpack.c.b16 %v3859, %v3857
        %v6058 = vpack.c.b16 %v3860, %v3858
        %v6059 = vpack.c.b16 %v3863, %v3861
        %v6060 = vpack.c.b16 %v3864, %v3862
        %v6061 = vpack.c.b16 %v3867, %v3865
        %v6062 = vpack.c.b16 %v3868, %v3866
        %v6063 = vpack.c.b16 %v3871, %v3869
        %v6064 = vpack.c.b16 %v3872, %v3870
        %v6065 = vpack.c.b16 %v3875, %v3873
        %v6066 = vpack.c.b16 %v3876, %v3874
        %v6067 = vpack.c.b16 %v3879, %v3877
        %v6068 = vpack.c.b16 %v3880, %v3878
        %v6069 = vpack.c.b16 %v3883, %v3881
        %v6070 = vpack.c.b16 %v3884, %v3882
        %v6071 = vpack.c.b16 %v3887, %v3885
        %v6072 = vpack.c.b16 %v3888, %v3886
        %v6073 = vpack.c.b16 %v3891, %v3889
        %v6074 = vpack.c.b16 %v3892, %v3890
        %v6075 = vpack.c.b16 %v3895, %v3893
        %v6076 = vpack.c.b16 %v3896, %v3894
        %v6077 = vpack.c.b16 %v3899, %v3897
        %v6078 = vpack.c.b16 %v3900, %v3898
        %v6079 = vpack.c.b16 %v3903, %v3901
        %v6080 = vpack.c.b16 %v3904, %v3902
        %v6081 = vpack.c.b16 %v3907, %v3905
        %v6082 = vpack.c.b16 %v3908, %v3906
        %v6083 = vpack.c.b16 %v3911, %v3909
        %v6084 = vpack.c.b16 %v3912, %v3910
        %v6085 = vpack.c.b16 %v3915, %v3913
        %v6086 = vpack.c.b16 %v3916, %v3914
        %v6087 = vpack.c.b16 %v3919, %v3917
        %v6088 = vpack.c.b16 %v3920, %v3918
        %v6089 = vpack.c.b16 %v3923, %v3921
        %v6090 = vpack.c.b16 %v3924, %v3922
        %v6091 = vpack.c.b16 %v3927, %v3925
        %v6092 = vpack.c.b16 %v3928, %v3926
        %v6093 = vpack.c.b16 %v3931, %v3929
        %v6094 = vpack.c.b16 %v3932, %v3930
        %v6095 = vpack.c.b16 %v3935, %v3933
        %v6096 = vpack.c.b16 %v3936, %v3934
        %v6097 = vpack.c.b16 %v3939, %v3937
        %v6098 = vpack.c.b16 %v3940, %v3938
        %v6099 = vpack.c.b16 %v3943, %v3941
        %v6100 = vpack.c.b16 %v3944, %v3942
        %v6101 = vpack.c.b16 %v3947, %v3945
        %v6102 = vpack.c.b16 %v3948, %v3946
        %v6103 = vpack.c.b16 %v3951, %v3949
        %v6104 = vpack.c.b16 %v3952, %v3950
        %v6105 = vpack.c.b16 %v3955, %v3953
        %v6106 = vpack.c.b16 %v3956, %v3954
        %v6107 = vpack.c.b16 %v3959, %v3957
        %v6108 = vpack.c.b16 %v3960, %v3958
        %v6109 = vpack.c.b16 %v3963, %v3961
        %v6110 = vpack.c.b16 %v3964, %v3962
        %v6111 = vpack.c.b16 %v3967, %v3965
        %v6112 = vpack.c.b16 %v3968, %v3966
        %v6113 = vpack.c.b16 %v3971, %v3969
        %v6114 = vpack.c.b16 %v3972, %v3970
        %v6115 = vpack.c.b16 %v3975, %v3973
        %v6116 = vpack.c.b16 %v3976, %v3974
        %v6117 = vpack.c.b16 %v3979, %v3977
        %v6118 = vpack.c.b16 %v3980, %v3978
        %v6119 = vpack.c.b16 %v3983, %v3981
        %v6120 = vpack.c.b16 %v3984, %v3982
        %v6121 = vpack.c.b16 %v3987, %v3985
        %v6122 = vpack.c.b16 %v3988, %v3986
        %v6123 = vpack.c.b16 %v3991, %v3989
        %v6124 = vpack.c.b16 %v3992, %v3990
        %v6125 = vpack.c.b16 %v3995, %v3993
        %v6126 = vpack.c.b16 %v3996, %v3994
        %v6127 = vpack.c.b16 %v3999, %v3997
        %v6128 = vpack.c.b16 %v4000, %v3998
        %v6129 = vpack.c.b16 %v4003, %v4001
        %v6130 = vpack.c.b16 %v4004, %v4002
        %v6131 = vpack.c.b16 %v4007, %v4005
        %v6132 = vpack.c.b16 %v4008, %v4006
        %v6133 = vpack.c.b16 %v4011, %v4009
        %v6134 = vpack.c.b16 %v4012, %v4010
        %v6135 = vpack.c.b16 %v4015, %v4013
        %v6136 = vpack.c.b16 %v4016, %v4014
        %v6137 = vpack.c.b16 %v4019, %v4017
        %v6138 = vpack.c.b16 %v4020, %v4018
        %v6139 = vpack.c.b16 %v4023, %v4021
        %v6140 = vpack.c.b16 %v4024, %v4022
        %v6141 = vpack.c.b16 %v4027, %v4025
        %v6142 = vpack.c.b16 %v4028, %v4026
        %v6143 = vpack.c.b16 %v4031, %v4029
        %v6144 = vpack.c.b16 %v4032, %v4030
        %v6145 = vpack.c.b16 %v4035, %v4033
        %v6146 = vpack.c.b16 %v4036, %v4034
        %v6147 = vpack.c.b16 %v4039, %v4037
        %v6148 = vpack.c.b16 %v4040, %v4038
        %v6149 = vpack.c.b16 %v4043, %v4041
        %v6150 = vpack.c.b16 %v4044, %v4042
        %v6151 = vpack.c.b16 %v4047, %v4045
        %v6152 = vpack.c.b16 %v4048, %v4046
        %v6153 = vpack.c.b16 %v4051, %v4049
        %v6154 = vpack.c.b16 %v4052, %v4050
        %v6155 = vpack.c.b16 %v4055, %v4053
        %v6156 = vpack.c.b16 %v4056, %v4054
        %v6157 = vpack.c.b16 %v4059, %v4057
        %v6158 = vpack.c.b16 %v4060, %v4058
        %v6159 = vpack.c.b16 %v4063, %v4061
        %v6160 = vpack.c.b16 %v4064, %v4062
        %v6161 = vpack.c.b16 %v4067, %v4065
        %v6162 = vpack.c.b16 %v4068, %v4066
        %v6163 = vpack.c.b16 %v4071, %v4069
        %v6164 = vpack.c.b16 %v4072, %v4070
        %v6165 = vpack.c.b16 %v4075, %v4073
        %v6166 = vpack.c.b16 %v4076, %v4074
        %v6167 = vpack.c.b16 %v4079, %v4077
        %v6168 = vpack.c.b16 %v4080, %v4078
        %v6169 = vpack.c.b16 %v4083, %v4081
        %v6170 = vpack.c.b16 %v4084, %v4082
        %v6171 = vpack.c.b16 %v4087, %v4085
        %v6172 = vpack.c.b16 %v4088, %v4086
        %v6173 = vpack.c.b16 %v4091, %v4089
        %v6174 = vpack.c.b16 %v4092, %v4090
        %v6175 = vpack.c.b16 %v4095, %v4093
        %v6176 = vpack.c.b16 %v4096, %v4094
        %v6177 = vpack.c.b16 %v4099, %v4097
        %v6178 = vpack.c.b16 %v4100, %v4098
        %v6179 = vpack.c.b16 %v4103, %v4101
        %v6180 = vpack.c.b16 %v4104, %v4102
        %v6181 = vpack.c.b16 %v4107, %v4105
        %v6182 = vpack.c.b16 %v4108, %v4106
        %v6183 = vpack.c.b16 %v4111, %v4109
        %v6184 = vpack.c.b16 %v4112, %v4110
        %v6185 = vpack.c.b16 %v4115, %v4113
        %v6186 = vpack.c.b16 %v4116, %v4114
        %v6187 = vpack.c.b16 %v4119, %v4117
        %v6188 = vpack.c.b16 %v4120, %v4118
        %v6189 = vpack.c.b16 %v4123, %v4121
        %v6190 = vpack.c.b16 %v4124, %v4122
        %v6191 = vpack.c.b16 %v4127, %v4125
        %v6192 = vpack.c.b16 %v4128, %v4126
        %v6193 = vpack.c.b16 %v4131, %v4129
        %v6194 = vpack.c.b16 %v4132, %v4130
        %v6195 = vpack.c.b16 %v4135, %v4133
        %v6196 = vpack.c.b16 %v4136, %v4134
        %v6197 = vpack.c.b16 %v4139, %v4137
        %v6198 = vpack.c.b16 %v4140, %v4138
        %v6199 = vpack.c.b16 %v4143, %v4141
        %v6200 = vpack.c.b16 %v4144, %v4142
        %v6201 = vpack.c.b16 %v4147, %v4145
        %v6202 = vpack.c.b16 %v4148, %v4146
        %v6203 = vpack.c.b16 %v4151, %v4149
        %v6204 = vpack.c.b16 %v4152, %v4150
        %v6205 = vpack.c.b16 %v4155, %v4153
        %v6206 = vpack.c.b16 %v4156, %v4154
        %v6207 = vpack.c.b16 %v4159, %v4157
        %v6208 = vpack.c.b16 %v4160, %v4158
        %v6209 = vpack.c.b16 %v4163, %v4161
        %v6210 = vpack.c.b16 %v4164, %v4162
        %v6211 = vpack.c.b16 %v4167, %v4165
        %v6212 = vpack.c.b16 %v4168, %v4166
        %v6213 = vpack.c.b16 %v4171, %v4169
        %v6214 = vpack.c.b16 %v4172, %v4170
        %v6215 = vpack.c.b16 %v4175, %v4173
        %v6216 = vpack.c.b16 %v4176, %v4174
        %v6217 = vpack.c.b16 %v4179, %v4177
        %v6218 = vpack.c.b16 %v4180, %v4178
        %v6219 = vpack.c.b16 %v4183, %v4181
        %v6220 = vpack.c.b16 %v4184, %v4182
        %v6221 = vpack.c.b16 %v4187, %v4185
        %v6222 = vpack.c.b16 %v4188, %v4186
        %v6223 = vpack.c.b16 %v4191, %v4189
        %v6224 = vpack.c.b16 %v4192, %v4190
        %v6225 = vpack.c.b16 %v4195, %v4193
        %v6226 = vpack.c.b16 %v4196, %v4194
        %v6227 = vpack.c.b16 %v4199, %v4197
        %v6228 = vpack.c.b16 %v4200, %v4198
        %v6229 = vpack.c.b16 %v4203, %v4201
        %v6230 = vpack.c.b16 %v4204, %v4202
        %v6231 = vpack.c.b16 %v4207, %v4205
        %v6232 = vpack.c.b16 %v4208, %v4206
        %v6233 = vpack.c.b16 %v4211, %v4209
        %v6234 = vpack.c.b16 %v4212, %v4210
        %v6235 = vpack.c.b16 %v4215, %v4213
        %v6236 = vpack.c.b16 %v4216, %v4214
        %v6237 = vpack.c.b16 %v4219, %v4217
        %v6238 = vpack.c.b16 %v4220, %v4218
        %v6239 = vpack.c.b16 %v4223, %v4221
        %v6240 = vpack.c.b16 %v4224, %v4222
        %v6241 = vpack.c.b16 %v4227, %v4225
        %v6242 = vpack.c.b16 %v4228, %v4226
        %v6243 = vpack.c.b16 %v4231, %v4229
        %v6244 = vpack.c.b16 %v4232, %v4230
        %v6245 = vpack.c.b16 %v4235, %v4233
        %v6246 = vpack.c.b16 %v4236, %v4234
        %v6247 = vpack.c.b16 %v4239, %v4237
        %v6248 = vpack.c.b16 %v4240, %v4238
        %v6249 = vpack.c.b16 %v4243, %v4241
        %v6250 = vpack.c.b16 %v4244, %v4242
        %v6251 = vpack.c.b16 %v4247, %v4245
        %v6252 = vpack.c.b16 %v4248, %v4246
        %v6253 = vpack.c.b16 %v4251, %v4249
        %v6254 = vpack.c.b16 %v4252, %v4250
        %v6255 = vpack.c.b16 %v4255, %v4253
        %v6256 = vpack.c.b16 %v4256, %v4254
        %v6257 = vpack.c.b16 %v4259, %v4257
        %v6258 = vpack.c.b16 %v4260, %v4258
        %v6259 = vpack.c.b16 %v4263, %v4261
        %v6260 = vpack.c.b16 %v4264, %v4262
        %v6261 = vpack.c.b16 %v4267, %v4265
        %v6262 = vpack.c.b16 %v4268, %v4266
        %v6263 = vpack.c.b16 %v4271, %v4269
        %v6264 = vpack.c.b16 %v4272, %v4270
        %v6265 = vpack.c.b16 %v4275, %v4273
        %v6266 = vpack.c.b16 %v4276, %v4274
        %v6267 = vpack.c.b16 %v4279, %v4277
        %v6268 = vpack.c.b16 %v4280, %v4278
        %v6269 = vpack.c.b16 %v4283, %v4281
        %v6270 = vpack.c.b16 %v4284, %v4282
        %v6271 = vpack.c.b16 %v4287, %v4285
        %v6272 = vpack.c.b16 %v4288, %v4286
        %v6273 = vpack.c.b16 %v4291, %v4289
        %v6274 = vpack.c.b16 %v4292, %v4290
        %v6275 = vpack.c.b16 %v4295, %v4293
        %v6276 = vpack.c.b16 %v4296, %v4294
        %v6277 = vpack.c.b16 %v4299, %v4297
        %v6278 = vpack.c.b16 %v4300, %v4298
        %v6279 = vpack.c.b16 %v4303, %v4301
        %v6280 = vpack.c.b16 %v4304, %v4302
        %v6281 = vpack.c.b16 %v4307, %v4305
        %v6282 = vpack.c.b16 %v4308, %v4306
        %v6283 = vpack.c.b16 %v4311, %v4309
        %v6284 = vpack.c.b16 %v4312, %v4310
        %v6285 = vpack.c.b16 %v4315, %v4313
        %v6286 = vpack.c.b16 %v4316, %v4314
        %v6287 = vpack.c.b16 %v4319, %v4317
        %v6288 = vpack.c.b16 %v4320, %v4318
        %v6289 = vpack.c.b16 %v4323, %v4321
        %v6290 = vpack.c.b16 %v4324, %v4322
        %v6291 = vpack.c.b16 %v4327, %v4325
        %v6292 = vpack.c.b16 %v4328, %v4326
        %v6293 = vpack.c.b16 %v4331, %v4329
        %v6294 = vpack.c.b16 %v4332, %v4330
        %v6295 = vpack.c.b16 %v4335, %v4333
        %v6296 = vpack.c.b16 %v4336, %v4334
        %v6297 = vpack.c.b16 %v4339, %v4337
        %v6298 = vpack.c.b16 %v4340, %v4338
        %v6299 = vpack.c.b16 %v4343, %v4341
        %v6300 = vpack.c.b16 %v4344, %v4342
        %v6301 = vpack.c.b16 %v4347, %v4345
        %v6302 = vpack.c.b16 %v4348, %v4346
        %v6303 = vpack.c.b16 %v4351, %v4349
        %v6304 = vpack.c.b16 %v4352, %v4350
        %v6305 = vpack.c.b16 %v4355, %v4353
        %v6306 = vpack.c.b16 %v4356, %v4354
        %v6307 = vpack.c.b16 %v4359, %v4357
        %v6308 = vpack.c.b16 %v4360, %v4358
        %v6309 = vpack.c.b16 %v4363, %v4361
        %v6310 = vpack.c.b16 %v4364, %v4362
        %v6311 = vpack.c.b16 %v4367, %v4365
        %v6312 = vpack.c.b16 %v4368, %v4366
        %v6313 = vpack.c.b16 %v4371, %v4369
        %v6314 = vpack.c.b16 %v4372, %v4370
        %v6315 = vpack.c.b16 %v4375, %v4373
        %v6316 = vpack.c.b16 %v4376, %v4374
        %v6317 = vpack.c.b16 %v4379, %v4377
        %v6318 = vpack.c.b16 %v4380, %v4378
        %v6319 = vpack.c.b16 %v4383, %v4381
        %v6320 = vpack.c.b16 %v4384, %v4382
        %v6321 = vpack.c.b16 %v4387, %v4385
        %v6322 = vpack.c.b16 %v4388, %v4386
        %v6323 = vpack.c.b16 %v4391, %v4389
        %v6324 = vpack.c.b16 %v4392, %v4390
        %v6325 = vpack.c.b16 %v4395, %v4393
        %v6326 = vpack.c.b16 %v4396, %v4394
        %v6327 = vpack.c.b16 %v4399, %v4397
        %v6328 = vpack.c.b16 %v4400, %v4398
        %v6329 = vpack.c.b16 %v4403, %v4401
        %v6330 = vpack.c.b16 %v4404, %v4402
        %v6331 = vpack.c.b16 %v4407, %v4405
        %v6332 = vpack.c.b16 %v4408, %v4406
        %v6333 = vpack.c.b16 %v4411, %v4409
        %v6334 = vpack.c.b16 %v4412, %v4410
        %v6335 = vpack.c.b16 %v4415, %v4413
        %v6336 = vpack.c.b16 %v4416, %v4414
        %v6337 = vpack.c.b16 %v4419, %v4417
        %v6338 = vpack.c.b16 %v4420, %v4418
        %v6339 = vpack.c.b16 %v4423, %v4421
        %v6340 = vpack.c.b16 %v4424, %v4422
        %v6341 = vpack.c.b16 %v4427, %v4425
        %v6342 = vpack.c.b16 %v4428, %v4426
        %v6343 = vpack.c.b16 %v4431, %v4429
        %v6344 = vpack.c.b16 %v4432, %v4430
        %v6345 = vpack.c.b16 %v4435, %v4433
        %v6346 = vpack.c.b16 %v4436, %v4434
        %v6347 = vpack.c.b16 %v4439, %v4437
        %v6348 = vpack.c.b16 %v4440, %v4438
        %v6349 = vpack.c.b16 %v4443, %v4441
        %v6350 = vpack.c.b16 %v4444, %v4442
        %v6351 = vpack.c.b16 %v4447, %v4445
        %v6352 = vpack.c.b16 %v4448, %v4446
        %v6353 = vpack.c.b16 %v4451, %v4449
        %v6354 = vpack.c.b16 %v4452, %v4450
        %v6355 = vpack.c.b16 %v4455, %v4453
        %v6356 = vpack.c.b16 %v4456, %v4454
        %v6357 = vpack.c.b16 %v4459, %v4457
        %v6358 = vpack.c.b16 %v4460, %v4458
        %v6359 = vpack.c.b16 %v4463, %v4461
        %v6360 = vpack.c.b16 %v4464, %v4462
        %v6361 = vpack.c.b16 %v4467, %v4465
        %v6362 = vpack.c.b16 %v4468, %v4466
        %v6363 = vpack.c.b16 %v4471, %v4469
        %v6364 = vpack.c.b16 %v4472, %v4470
        %v6365 = vpack.c.b16 %v4475, %v4473
        %v6366 = vpack.c.b16 %v4476, %v4474
        %v6367 = vpack.c.b16 %v4479, %v4477
        %v6368 = vpack.c.b16 %v4480, %v4478
        %v6369 = vpack.c.b16 %v4483, %v4481
        %v6370 = vpack.c.b16 %v4484, %v4482
        %v6371 = vpack.c.b16 %v4487, %v4485
        %v6372 = vpack.c.b16 %v4488, %v4486
        %v6373 = vpack.c.b16 %v4491, %v4489
        %v6374 = vpack.c.b16 %v4492, %v4490
        %v6375 = vpack.c.b16 %v4495, %v4493
        %v6376 = vpack.c.b16 %v4496, %v4494
        %v6377 = vpack.c.b16 %v4499, %v4497
        %v6378 = vpack.c.b16 %v4500, %v4498
        %v6379 = vpack.c.b16 %v4503, %v4501
        %v6380 = vpack.c.b16 %v4504, %v4502
        %v6381 = vpack.c.b16 %v4507, %v4505
        %v6382 = vpack.c.b16 %v4508, %v4506
        %v6383 = vpack.c.b16 %v4511, %v4509
        %v6384 = vpack.c.b16 %v4512, %v4510
        %v6385 = vpack.c.b16 %v4515, %v4513
        %v6386 = vpack.c.b16 %v4516, %v4514
        %v6387 = vpack.c.b16 %v4519, %v4517
        %v6388 = vpack.c.b16 %v4520, %v4518
        %v6389 = vpack.c.b16 %v4523, %v4521
        %v6390 = vpack.c.b16 %v4524, %v4522
        %v6391 = vpack.c.b16 %v4527, %v4525
        %v6392 = vpack.c.b16 %v4528, %v4526
        %v6393 = vpack.c.b16 %v4531, %v4529
        %v6394 = vpack.c.b16 %v4532, %v4530
        %v6395 = vpack.c.b16 %v4535, %v4533
        %v6396 = vpack.c.b16 %v4536, %v4534
        %v6397 = vpack.c.b16 %v4539, %v4537
        %v6398 = vpack.c.b16 %v4540, %v4538
        %v6399 = vpack.c.b16 %v4543, %v4541
        %v6400 = vpack.c.b16 %v4544, %v4542
        %v6401 = vpack.c.b16 %v4547, %v4545
        %v6402 = vpack.c.b16 %v4548, %v4546
        %v6403 = vpack.c.b16 %v4551, %v4549
        %v6404 = vpack.c.b16 %v4552, %v4550
        %v6405 = vpack.c.b16 %v4555, %v4553
        %v6406 = vpack.c.b16 %v4556, %v4554
        %v6407 = vpack.c.b16 %v4559, %v4557
        %v6408 = vpack.c.b16 %v4560, %v4558
        %v6409 = vpack.c.b16 %v4563, %v4561
        %v6410 = vpack.c.b16 %v4564, %v4562
        %v6411 = vpack.c.b16 %v4567, %v4565
        %v6412 = vpack.c.b16 %v4568, %v4566
        %v6413 = vpack.c.b16 %v4571, %v4569
        %v6414 = vpack.c.b16 %v4572, %v4570
        %v6415 = vpack.c.b16 %v4575, %v4573
        %v6416 = vpack.c.b16 %v4576, %v4574
        %v6417 = vpack.c.b16 %v4579, %v4577
        %v6418 = vpack.c.b16 %v4580, %v4578
        %v6419 = vpack.c.b16 %v4583, %v4581
        %v6420 = vpack.c.b16 %v4584, %v4582
        %v6421 = vpack.c.b16 %v4587, %v4585
        %v6422 = vpack.c.b16 %v4588, %v4586
        %v6423 = vpack.c.b16 %v4591, %v4589
        %v6424 = vpack.c.b16 %v4592, %v4590
        %v6425 = vpack.c.b16 %v4595, %v4593
        %v6426 = vpack.c.b16 %v4596, %v4594
        %v6427 = vpack.c.b16 %v4599, %v4597
        %v6428 = vpack.c.b16 %v4600, %v4598
        %v6429 = vpack.c.b16 %v4603, %v4601
        %v6430 = vpack.c.b16 %v4604, %v4602
        %v6431 = vpack.c.b16 %v4607, %v4605
        %v6432 = vpack.c.b16 %v4608, %v4606
        %v6433 = vpack.c.b16 %v4611, %v4609
        %v6434 = vpack.c.b16 %v4612, %v4610
        %v6435 = vpack.c.b16 %v4615, %v4613
        %v6436 = vpack.c.b16 %v4616, %v4614
        %v6437 = vpack.c.b16 %v4619, %v4617
        %v6438 = vpack.c.b16 %v4620, %v4618
        %v6439 = vpack.c.b16 %v4623, %v4621
        %v6440 = vpack.c.b16 %v4624, %v4622
        %v6441 = vpack.c.b16 %v4627, %v4625
        %v6442 = vpack.c.b16 %v4628, %v4626
        %v6443 = vpack.c.b16 %v4631, %v4629
        %v6444 = vpack.c.b16 %v4632, %v4630
        %v6445 = vpack.c.b16 %v4635, %v4633
        %v6446 = vpack.c.b16 %v4636, %v4634
        %v6447 = vpack.c.b16 %v4639, %v4637
        %v6448 = vpack.c.b16 %v4640, %v4638
        %v6449 = vpack.c.b16 %v4643, %v4641
        %v6450 = vpack.c.b16 %v4644, %v4642
        %v6451 = vpack.c.b16 %v4647, %v4645
        %v6452 = vpack.c.b16 %v4648, %v4646
        %v6453 = vpack.c.b16 %v4651, %v4649
        %v6454 = vpack.c.b16 %v4652, %v4650
        %v6455 = vpack.c.b16 %v4655, %v4653
        %v6456 = vpack.c.b16 %v4656, %v4654
        %v6457 = vpack.c.b16 %v4659, %v4657
        %v6458 = vpack.c.b16 %v4660, %v4658
        %v6459 = vpack.c.b16 %v4663, %v4661
        %v6460 = vpack.c.b16 %v4664, %v4662
        %v6461 = vpack.c.b16 %v4667, %v4665
        %v6462 = vpack.c.b16 %v4668, %v4666
        %v6463 = vpack.c.b16 %v4671, %v4669
        %v6464 = vpack.c.b16 %v4672, %v4670
        %v6465 = vpack.c.b16 %v4675, %v4673
        %v6466 = vpack.c.b16 %v4676, %v4674
        %v6467 = vpack.c.b16 %v4679, %v4677
        %v6468 = vpack.c.b16 %v4680, %v4678
        %v6469 = vpack.c.b16 %v4683, %v4681
        %v6470 = vpack.c.b16 %v4684, %v4682
        %v6471 = vpack.c.b16 %v4687, %v4685
        %v6472 = vpack.c.b16 %v4688, %v4686
        %v6473 = vpack.c.b16 %v4691, %v4689
        %v6474 = vpack.c.b16 %v4692, %v4690
        %v6475 = vpack.c.b16 %v4695, %v4693
        %v6476 = vpack.c.b16 %v4696, %v4694
        %v6477 = vpack.c.b16 %v4699, %v4697
        %v6478 = vpack.c.b16 %v4700, %v4698
        %v6479 = vpack.c.b16 %v4703, %v4701
        %v6480 = vpack.c.b16 %v4704, %v4702
        %v6481 = vpack.c.b16 %v4707, %v4705
        %v6482 = vpack.c.b16 %v4708, %v4706
        %v6483 = vpack.c.b16 %v4711, %v4709
        %v6484 = vpack.c.b16 %v4712, %v4710
        %v6485 = vpack.c.b16 %v4715, %v4713
        %v6486 = vpack.c.b16 %v4716, %v4714
        %v6487 = vpack.c.b16 %v4719, %v4717
        %v6488 = vpack.c.b16 %v4720, %v4718
        %v6489 = vpack.c.b16 %v4723, %v4721
        %v6490 = vpack.c.b16 %v4724, %v4722
        %v6491 = vpack.c.b16 %v4727, %v4725
        %v6492 = vpack.c.b16 %v4728, %v4726
        %v6493 = vpack.c.b16 %v4731, %v4729
        %v6494 = vpack.c.b16 %v4732, %v4730
        %v6495 = vpack.c.b16 %v4735, %v4733
        %v6496 = vpack.c.b16 %v4736, %v4734
        %v6497 = vpack.c.b16 %v4739, %v4737
        %v6498 = vpack.c.b16 %v4740, %v4738
        %v6499 = vpack.c.b16 %v4743, %v4741
        %v6500 = vpack.c.b16 %v4744, %v4742
        %v6501 = vpack.c.b16 %v4747, %v4745
        %v6502 = vpack.c.b16 %v4748, %v4746
        %v6503 = vpack.c.b16 %v4751, %v4749
        %v6504 = vpack.c.b16 %v4752, %v4750
        %v6505 = vpack.c.b16 %v4755, %v4753
        %v6506 = vpack.c.b16 %v4756, %v4754
        %v6507 = vpack.c.b16 %v4759, %v4757
        %v6508 = vpack.c.b16 %v4760, %v4758
        %v6509 = vpack.c.b16 %v4763, %v4761
        %v6510 = vpack.c.b16 %v4764, %v4762
        %v6511 = vpack.c.b16 %v4767, %v4765
        %v6512 = vpack.c.b16 %v4768, %v4766
        %v6513 = vpack.c.b16 %v4771, %v4769
        %v6514 = vpack.c.b16 %v4772, %v4770
        %v6515 = vpack.c.b16 %v4775, %v4773
        %v6516 = vpack.c.b16 %v4776, %v4774
        %v6517 = vpack.c.b16 %v4779, %v4777
        %v6518 = vpack.c.b16 %v4780, %v4778
        %v6519 = vpack.c.b16 %v4783, %v4781
        %v6520 = vpack.c.b16 %v4784, %v4782
        %v6521 = vpack.c.b16 %v4787, %v4785
        %v6522 = vpack.c.b16 %v4788, %v4786
        %v6523 = vpack.c.b16 %v4791, %v4789
        %v6524 = vpack.c.b16 %v4792, %v4790
        %v6525 = vpack.c.b16 %v4795, %v4793
        %v6526 = vpack.c.b16 %v4796, %v4794
        %v6527 = vpack.c.b16 %v4799, %v4797
        %v6528 = vpack.c.b16 %v4800, %v4798
        %v6529 = vpack.c.b16 %v4803, %v4801
        %v6530 = vpack.c.b16 %v4804, %v4802
        %v6531 = vpack.c.b16 %v4807, %v4805
        %v6532 = vpack.c.b16 %v4808, %v4806
        %v6533 = vpack.c.b16 %v4811, %v4809
        %v6534 = vpack.c.b16 %v4812, %v4810
        %v6535 = vpack.c.b16 %v4815, %v4813
        %v6536 = vpack.c.b16 %v4816, %v4814
        %v6537 = vpack.c.b16 %v4819, %v4817
        %v6538 = vpack.c.b16 %v4820, %v4818
        %v6539 = vpack.c.b16 %v4823, %v4821
        %v6540 = vpack.c.b16 %v4824, %v4822
        %v6541 = vpack.c.b16 %v4827, %v4825
        %v6542 = vpack.c.b16 %v4828, %v4826
        %v6543 = vpack.c.b16 %v4831, %v4829
        %v6544 = vpack.c.b16 %v4832, %v4830
        %v6545 = vpack.c.b16 %v4835, %v4833
        %v6546 = vpack.c.b16 %v4836, %v4834
        %v6547 = vpack.c.b16 %v4839, %v4837
        %v6548 = vpack.c.b16 %v4840, %v4838
        %v6549 = vpack.c.b16 %v4843, %v4841
        %v6550 = vpack.c.b16 %v4844, %v4842
        %v6551 = vpack.c.b16 %v4847, %v4845
        %v6552 = vpack.c.b16 %v4848, %v4846
        %v6553 = vpack.c.b16 %v4851, %v4849
        %v6554 = vpack.c.b16 %v4852, %v4850
        %v6555 = vpack.c.b16 %v4855, %v4853
        %v6556 = vpack.c.b16 %v4856, %v4854
        %v6557 = vpack.c.b16 %v4859, %v4857
        %v6558 = vpack.c.b16 %v4860, %v4858
        %v6559 = vpack.c.b16 %v4863, %v4861
        %v6560 = vpack.c.b16 %v4864, %v4862
        %v6561 = vpack.c.b16 %v4867, %v4865
        %v6562 = vpack.c.b16 %v4868, %v4866
        %v6563 = vpack.c.b16 %v4871, %v4869
        %v6564 = vpack.c.b16 %v4872, %v4870
        %v6565 = vpack.c.b16 %v4875, %v4873
        %v6566 = vpack.c.b16 %v4876, %v4874
        %v6567 = vpack.c.b16 %v4879, %v4877
        %v6568 = vpack.c.b16 %v4880, %v4878
        %v6569 = vpack.c.b16 %v4883, %v4881
        %v6570 = vpack.c.b16 %v4884, %v4882
        %v6571 = vpack.c.b16 %v4887, %v4885
        %v6572 = vpack.c.b16 %v4888, %v4886
        %v6573 = vpack.c.b16 %v4891, %v4889
        %v6574 = vpack.c.b16 %v4892, %v4890
        %v6575 = vpack.c.b16 %v4895, %v4893
        %v6576 = vpack.c.b16 %v4896, %v4894
        %v6577 = vpack.c.b16 %v4899, %v4897
        %v6578 = vpack.c.b16 %v4900, %v4898
        %v6579 = vpack.c.b16 %v4903, %v4901
        %v6580 = vpack.c.b16 %v4904, %v4902
        %v6581 = vpack.c.b16 %v4907, %v4905
        %v6582 = vpack.c.b16 %v4908, %v4906
        %v6583 = vpack.c.b16 %v4911, %v4909
        %v6584 = vpack.c.b16 %v4912, %v4910
        %v6585 = vpack.c.b16 %v4915, %v4913
        %v6586 = vpack.c.b16 %v4916, %v4914
        %v6587 = vpack.c.b16 %v4919, %v4917
        %v6588 = vpack.c.b16 %v4920, %v4918
        %v6589 = vpack.c.b16 %v4923, %v4921
        %v6590 = vpack.c.b16 %v4924, %v4922
        %v6591 = vpack.c.b16 %v4927, %v4925
        %v6592 = vpack.c.b16 %v4928, %v4926
        %v6593 = vpack.c.b16 %v4931, %v4929
        %v6594 = vpack.c.b16 %v4932, %v4930
        %v6595 = vpack.c.b16 %v4935, %v4933
        %v6596 = vpack.c.b16 %v4936, %v4934
        %v6597 = vpack.c.b16 %v4939, %v4937
        %v6598 = vpack.c.b16 %v4940, %v4938
        %v6599 = vpack.c.b16 %v4943, %v4941
        %v6600 = vpack.c.b16 %v4944, %v4942
        %v6601 = vpack.c.b16 %v4947, %v4945
        %v6602 = vpack.c.b16 %v4948, %v4946
        %v6603 = vpack.c.b16 %v4951, %v4949
        %v6604 = vpack.c.b16 %v4952, %v4950
        %v6605 = vpack.c.b16 %v4955, %v4953
        %v6606 = vpack.c.b16 %v4956, %v4954
        %v6607 = vpack.c.b16 %v4959, %v4957
        %v6608 = vpack.c.b16 %v4960, %v4958
        %v6609 = vpack.c.b16 %v4963, %v4961
        %v6610 = vpack.c.b16 %v4964, %v4962
        %v6611 = vpack.c.b16 %v4967, %v4965
        %v6612 = vpack.c.b16 %v4968, %v4966
        %v6613 = vpack.c.b16 %v4971, %v4969
        %v6614 = vpack.c.b16 %v4972, %v4970
        %v6615 = vpack.c.b16 %v4975, %v4973
        %v6616 = vpack.c.b16 %v4976, %v4974
        %v6617 = vpack.c.b16 %v4979, %v4977
        %v6618 = vpack.c.b16 %v4980, %v4978
        %v6619 = vpack.c.b16 %v4983, %v4981
        %v6620 = vpack.c.b16 %v4984, %v4982
        %v6621 = vpack.c.b16 %v4987, %v4985
        %v6622 = vpack.c.b16 %v4988, %v4986
        %v6623 = vpack.c.b16 %v4991, %v4989
        %v6624 = vpack.c.b16 %v4992, %v4990
        %v6625 = vpack.c.b16 %v4995, %v4993
        %v6626 = vpack.c.b16 %v4996, %v4994
        %v6627 = vpack.c.b16 %v4999, %v4997
        %v6628 = vpack.c.b16 %v5000, %v4998
        %v6629 = vpack.c.b16 %v5003, %v5001
        %v6630 = vpack.c.b16 %v5004, %v5002
        %v6631 = vpack.c.b16 %v5007, %v5005
        %v6632 = vpack.c.b16 %v5008, %v5006
        %v6633 = vpack.c.b16 %v5011, %v5009
        %v6634 = vpack.c.b16 %v5012, %v5010
        %v6635 = vpack.c.b16 %v5015, %v5013
        %v6636 = vpack.c.b16 %v5016, %v5014
        %v6637 = vpack.c.b16 %v5019, %v5017
        %v6638 = vpack.c.b16 %v5020, %v5018
        %v6639 = vpack.c.b16 %v5023, %v5021
        %v6640 = vpack.c.b16 %v5024, %v5022
        %v6641 = vpack.c.b16 %v5027, %v5025
        %v6642 = vpack.c.b16 %v5028, %v5026
        %v6643 = vpack.c.b16 %v5031, %v5029
        %v6644 = vpack.c.b16 %v5032, %v5030
        %v6645 = vpack.c.b16 %v5035, %v5033
        %v6646 = vpack.c.b16 %v5036, %v5034
        %v6647 = vpack.c.b16 %v5039, %v5037
        %v6648 = vpack.c.b16 %v5040, %v5038
        %v6649 = vpack.c.b16 %v5043, %v5041
        %v6650 = vpack.c.b16 %v5044, %v5042
        %v6651 = vpack.c.b16 %v5047, %v5045
        %v6652 = vpack.c.b16 %v5048, %v5046
        %v6653 = vpack.c.b16 %v5051, %v5049
        %v6654 = vpack.c.b16 %v5052, %v5050
        %v6655 = vpack.c.b16 %v5055, %v5053
        %v6656 = vpack.c.b16 %v5056, %v5054
        %v6657 = vpack.c.b16 %v5059, %v5057
        %v6658 = vpack.c.b16 %v5060, %v5058
        %v6659 = vpack.c.b16 %v5063, %v5061
        %v6660 = vpack.c.b16 %v5064, %v5062
        %v6661 = vpack.c.b16 %v5067, %v5065
        %v6662 = vpack.c.b16 %v5068, %v5066
        %v6663 = vpack.c.b16 %v5071, %v5069
        %v6664 = vpack.c.b16 %v5072, %v5070
        %v6665 = vpack.c.b16 %v5075, %v5073
        %v6666 = vpack.c.b16 %v5076, %v5074
        %v6667 = vpack.c.b16 %v5079, %v5077
        %v6668 = vpack.c.b16 %v5080, %v5078
        %v6669 = vpack.c.b16 %v5083, %v5081
        %v6670 = vpack.c.b16 %v5084, %v5082
        %v6671 = vpack.c.b16 %v5087, %v5085
        %v6672 = vpack.c.b16 %v5088, %v5086
        %v6673 = vpack.c.b16 %v5091, %v5089
        %v6674 = vpack.c.b16 %v5092, %v5090
        %v6675 = vpack.c.b16 %v5095, %v5093
        %v6676 = vpack.c.b16 %v5096, %v5094
        %v6677 = vpack.c.b16 %v5099, %v5097
        %v6678 = vpack.c.b16 %v5100, %v5098
        %v6679 = vpack.c.b16 %v5103, %v5101
        %v6680 = vpack.c.b16 %v5104, %v5102
        %v6681 = vpack.c.b16 %v5107, %v5105
        %v6682 = vpack.c.b16 %v5108, %v5106
        %v6683 = vpack.c.b16 %v5111, %v5109
        %v6684 = vpack.c.b16 %v5112, %v5110
        %v6685 = vpack.c.b16 %v5115, %v5113
        %v6686 = vpack.c.b16 %v5116, %v5114
        %v6687 = vpack.c.b16 %v5119, %v5117
        %v6688 = vpack.c.b16 %v5120, %v5118
        %v6689 = vpack.c.b16 %v5123, %v5121
        %v6690 = vpack.c.b16 %v5124, %v5122
        %v6691 = vpack.c.b16 %v5127, %v5125
        %v6692 = vpack.c.b16 %v5128, %v5126
        %v6693 = vpack.c.b16 %v5131, %v5129
        %v6694 = vpack.c.b16 %v5132, %v5130
        %v6695 = vpack.c.b16 %v5135, %v5133
        %v6696 = vpack.c.b16 %v5136, %v5134
        %v6697 = vpack.c.b16 %v5139, %v5137
        %v6698 = vpack.c.b16 %v5140, %v5138
        %v6699 = vpack.c.b16 %v5143, %v5141
        %v6700 = vpack.c.b16 %v5144, %v5142
        %v6701 = vpack.c.b16 %v5147, %v5145
        %v6702 = vpack.c.b16 %v5148, %v5146
        %v6703 = vpack.c.b16 %v5151, %v5149
        %v6704 = vpack.c.b16 %v5152, %v5150
        %v6705 = vpack.c.b16 %v5155, %v5153
        %v6706 = vpack.c.b16 %v5156, %v5154
        %v6707 = vpack.c.b16 %v5159, %v5157
        %v6708 = vpack.c.b16 %v5160, %v5158
        %v6709 = vpack.c.b16 %v5163, %v5161
        %v6710 = vpack.c.b16 %v5164, %v5162
        %v6711 = vpack.c.b16 %v5167, %v5165
        %v6712 = vpack.c.b16 %v5168, %v5166
        %v6713 = vpack.c.b16 %v5171, %v5169
        %v6714 = vpack.c.b16 %v5172, %v5170
        %v6715 = vpack.c.b16 %v5175, %v5173
        %v6716 = vpack.c.b16 %v5176, %v5174
        %v6717 = vpack.c.b16 %v5179, %v5177
        %v6718 = vpack.c.b16 %v5180, %v5178
        %v6719 = vpack.c.b16 %v5183, %v5181
        %v6720 = vpack.c.b16 %v5184, %v5182
        %v6721 = vpack.c.b16 %v5187, %v5185
        %v6722 = vpack.c.b16 %v5188, %v5186
        %v6723 = vpack.c.b16 %v5191, %v5189
        %v6724 = vpack.c.b16 %v5192, %v5190
        %v6725 = vpack.c.b16 %v5195, %v5193
        %v6726 = vpack.c.b16 %v5196, %v5194
        %v6727 = vpack.c.b16 %v5199, %v5197
        %v6728 = vpack.c.b16 %v5200, %v5198
        %v6729 = vpack.c.b16 %v5203, %v5201
        %v6730 = vpack.c.b16 %v5204, %v5202
        %v6731 = vpack.c.b16 %v5207, %v5205
        %v6732 = vpack.c.b16 %v5208, %v5206
        %v6733 = vpack.c.b16 %v5211, %v5209
        %v6734 = vpack.c.b16 %v5212, %v5210
        %v6735 = vpack.c.b16 %v5215, %v5213
        %v6736 = vpack.c.b16 %v5216, %v5214
        %v6737 = vpack.c.b16 %v5219, %v5217
        %v6738 = vpack.c.b16 %v5220, %v5218
        %v6739 = vpack.c.b16 %v5223, %v5221
        %v6740 = vpack.c.b16 %v5224, %v5222
        %v6741 = vpack.c.b16 %v5227, %v5225
        %v6742 = vpack.c.b16 %v5228, %v5226
        %v6743 = vpack.c.b16 %v5231, %v5229
        %v6744 = vpack.c.b16 %v5232, %v5230
        %v6745 = vpack.c.b16 %v5235, %v5233
        %v6746 = vpack.c.b16 %v5236, %v5234
        %v6747 = vpack.c.b16 %v5239, %v5237
        %v6748 = vpack.c.b16 %v5240, %v5238
        %v6749 = vpack.c.b16 %v5243, %v5241
        %v6750 = vpack.c.b16 %v5244, %v5242
        %v6751 = vpack.c.b16 %v5247, %v5245
        %v6752 = vpack.c.b16 %v5248, %v5246
        %v6753 = vpack.c.b16 %v5251, %v5249
        %v6754 = vpack.c.b16 %v5252, %v5250
        %v6755 = vpack.c.b16 %v5255, %v5253
        %v6756 = vpack.c.b16 %v5256, %v5254
        %v6757 = vpack.c.b16 %v5259, %v5257
        %v6758 = vpack.c.b16 %v5260, %v5258
        %v6759 = vpack.c.b16 %v5263, %v5261
        %v6760 = vpack.c.b16 %v5264, %v5262
        %v6761 = vpack.c.b16 %v5267, %v5265
        %v6762 = vpack.c.b16 %v5268, %v5266
        %v6763 = vpack.c.b16 %v5271, %v5269
        %v6764 = vpack.c.b16 %v5272, %v5270
        %v6765 = vpack.c.b16 %v5275, %v5273
        %v6766 = vpack.c.b16 %v5276, %v5274
        %v6767 = vpack.c.b16 %v5279, %v5277
        %v6768 = vpack.c.b16 %v5280, %v5278
        %v6769 = vpack.c.b16 %v5283, %v5281
        %v6770 = vpack.c.b16 %v5284, %v5282
        %v6771 = vpack.c.b16 %v5287, %v5285
        %v6772 = vpack.c.b16 %v5288, %v5286
        %v6773 = vpack.c.b16 %v5291, %v5289
        %v6774 = vpack.c.b16 %v5292, %v5290
        %v6775 = vpack.c.b16 %v5295, %v5293
        %v6776 = vpack.c.b16 %v5296, %v5294
        %v6777 = vpack.c.b16 %v5299, %v5297
        %v6778 = vpack.c.b16 %v5300, %v5298
        %v6779 = vpack.c.b16 %v5303, %v5301
        %v6780 = vpack.c.b16 %v5304, %v5302
        %v6781 = vpack.c.b16 %v5307, %v5305
        %v6782 = vpack.c.b16 %v5308, %v5306
        %v6783 = vpack.c.b16 %v5311, %v5309
        %v6784 = vpack.c.b16 %v5312, %v5310
        %v6785 = vpack.c.b16 %v5315, %v5313
        %v6786 = vpack.c.b16 %v5316, %v5314
        %v6787 = vpack.c.b16 %v5319, %v5317
        %v6788 = vpack.c.b16 %v5320, %v5318
        %v6789 = vpack.c.b16 %v5323, %v5321
        %v6790 = vpack.c.b16 %v5324, %v5322
        %v6791 = vpack.c.b16 %v5327, %v5325
        %v6792 = vpack.c.b16 %v5328, %v5326
        %v6793 = vpack.c.b16 %v5331, %v5329
        %v6794 = vpack.c.b16 %v5332, %v5330
        %v6795 = vpack.c.b16 %v5335, %v5333
        %v6796 = vpack.c.b16 %v5336, %v5334
        %v6797 = vpack.c.b16 %v5339, %v5337
        %v6798 = vpack.c.b16 %v5340, %v5338
        %v6799 = vpack.c.b16 %v5343, %v5341
        %v6800 = vpack.c.b16 %v5344, %v5342
        %v6801 = vpack.c.b16 %v5347, %v5345
        %v6802 = vpack.c.b16 %v5348, %v5346
        %v6803 = vpack.c.b16 %v5351, %v5349
        %v6804 = vpack.c.b16 %v5352, %v5350
        %v6805 = vpack.c.b16 %v5355, %v5353
        %v6806 = vpack.c.b16 %v5356, %v5354
        %v6807 = vpack.c.b16 %v5359, %v5357
        %v6808 = vpack.c.b16 %v5360, %v5358
        %v6809 = vpack.c.b16 %v5363, %v5361
        %v6810 = vpack.c.b16 %v5364, %v5362
        %v6811 = vpack.c.b16 %v5367, %v5365
        %v6812 = vpack.c.b16 %v5368, %v5366
        %v6813 = vpack.c.b16 %v5371, %v5369
        %v6814 = vpack.c.b16 %v5372, %v5370
        %v6815 = vpack.c.b16 %v5375, %v5373
        %v6816 = vpack.c.b16 %v5376, %v5374
        %v6817 = vpack.c.b16 %v5379, %v5377
        %v6818 = vpack.c.b16 %v5380, %v5378
        %v6819 = vpack.c.b16 %v5383, %v5381
        %v6820 = vpack.c.b16 %v5384, %v5382
        %v6821 = vpack.c.b16 %v5387, %v5385
        %v6822 = vpack.c.b16 %v5388, %v5386
        %v6823 = vpack.c.b16 %v5391, %v5389
        %v6824 = vpack.c.b16 %v5392, %v5390
        %v6825 = vpack.c.b16 %v5395, %v5393
        %v6826 = vpack.c.b16 %v5396, %v5394
        %v6827 = vpack.c.b16 %v5399, %v5397
        %v6828 = vpack.c.b16 %v5400, %v5398
        %v6829 = vpack.c.b16 %v5403, %v5401
        %v6830 = vpack.c.b16 %v5404, %v5402
        %v6831 = vpack.c.b16 %v5407, %v5405
        %v6832 = vpack.c.b16 %v5408, %v5406
        %v6833 = vpack.c.b16 %v5411, %v5409
        %v6834 = vpack.c.b16 %v5412, %v5410
        %v6835 = vpack.c.b16 %v5415, %v5413
        %v6836 = vpack.c.b16 %v5416, %v5414
        %v6837 = vpack.c.b16 %v5419, %v5417
        %v6838 = vpack.c.b16 %v5420, %v5418
        %v6839 = vpack.c.b16 %v5423, %v5421
        %v6840 = vpack.c.b16 %v5424, %v5422
        %v6841 = vpack.c.b16 %v5427, %v5425
        %v6842 = vpack.c.b16 %v5428, %v5426
        %v6843 = vpack.c.b16 %v5431, %v5429
        %v6844 = vpack.c.b16 %v5432, %v5430
        %v6845 = vpack.c.b16 %v5435, %v5433
        %v6846 = vpack.c.b16 %v5436, %v5434
        %v6847 = vpack.c.b16 %v5439, %v5437
        %v6848 = vpack.c.b16 %v5440, %v5438
        %v6849 = vpack.c.b16 %v5443, %v5441
        %v6850 = vpack.c.b16 %v5444, %v5442
        %v6851 = vpack.c.b16 %v5447, %v5445
        %v6852 = vpack.c.b16 %v5448, %v5446
        %v6853 = vpack.c.b16 %v5451, %v5449
        %v6854 = vpack.c.b16 %v5452, %v5450
        %v6855 = vpack.c.b16 %v5455, %v5453
        %v6856 = vpack.c.b16 %v5456, %v5454
        %v6857 = vpack.c.b16 %v5459, %v5457
        %v6858 = vpack.c.b16 %v5460, %v5458
        %v6859 = vpack.c.b16 %v5463, %v5461
        %v6860 = vpack.c.b16 %v5464, %v5462
        %v6861 = vpack.c.b16 %v5467, %v5465
        %v6862 = vpack.c.b16 %v5468, %v5466
        %v6863 = vpack.c.b16 %v5471, %v5469
        %v6864 = vpack.c.b16 %v5472, %v5470
        %v6865 = vpack.c.b16 %v5475, %v5473
        %v6866 = vpack.c.b16 %v5476, %v5474
        %v6867 = vpack.c.b16 %v5479, %v5477
        %v6868 = vpack.c.b16 %v5480, %v5478
        %v6869 = vpack.c.b16 %v5483, %v5481
        %v6870 = vpack.c.b16 %v5484, %v5482
        %v6871 = vpack.c.b16 %v5487, %v5485
        %v6872 = vpack.c.b16 %v5488, %v5486
        %v6873 = vpack.c.b16 %v5491, %v5489
        %v6874 = vpack.c.b16 %v5492, %v5490
        %v6875 = vpack.c.b16 %v5495, %v5493
        %v6876 = vpack.c.b16 %v5496, %v5494
        %v6877 = vpack.c.b16 %v5499, %v5497
        %v6878 = vpack.c.b16 %v5500, %v5498
        %v6879 = vpack.c.b16 %v5503, %v5501
        %v6880 = vpack.c.b16 %v5504, %v5502
        %v6881 = vpack.c.b16 %v5507, %v5505
        %v6882 = vpack.c.b16 %v5508, %v5506
        %v6883 = vpack.c.b16 %v5511, %v5509
        %v6884 = vpack.c.b16 %v5512, %v5510
        %v6885 = vpack.c.b16 %v5515, %v5513
        %v6886 = vpack.c.b16 %v5516, %v5514
        %v6887 = vpack.c.b16 %v5519, %v5517
        %v6888 = vpack.c.b16 %v5520, %v5518
        %v6889 = vpack.c.b16 %v5523, %v5521
        %v6890 = vpack.c.b16 %v5524, %v5522
        %v6891 = vpack.c.b16 %v5527, %v5525
        %v6892 = vpack.c.b16 %v5528, %v5526
        %v6893 = vpack.c.b16 %v5531, %v5529
        %v6894 = vpack.c.b16 %v5532, %v5530
        %v6895 = vpack.c.b16 %v5535, %v5533
        %v6896 = vpack.c.b16 %v5536, %v5534
        %v6897 = vpack.c.b16 %v5539, %v5537
        %v6898 = vpack.c.b16 %v5540, %v5538
        %v6899 = vpack.c.b16 %v5543, %v5541
        %v6900 = vpack.c.b16 %v5544, %v5542
        %v6901 = vpack.c.b16 %v5547, %v5545
        %v6902 = vpack.c.b16 %v5548, %v5546
        %v6903 = vpack.c.b16 %v5551, %v5549
        %v6904 = vpack.c.b16 %v5552, %v5550
        %v6905 = vpack.c.b16 %v5555, %v5553
        %v6906 = vpack.c.b16 %v5556, %v5554
        %v6907 = vpack.c.b16 %v5559, %v5557
        %v6908 = vpack.c.b16 %v5560, %v5558
        %v6909 = vpack.c.b16 %v5563, %v5561
        %v6910 = vpack.c.b16 %v5564, %v5562
        %v6911 = vpack.c.b16 %v5567, %v5565
        %v6912 = vpack.c.b16 %v5568, %v5566
        %v6913 = vpack.c.b16 %v5571, %v5569
        %v6914 = vpack.c.b16 %v5572, %v5570
        %v6915 = vpack.c.b16 %v5575, %v5573
        %v6916 = vpack.c.b16 %v5576, %v5574
        %v6917 = vpack.c.b16 %v5579, %v5577
        %v6918 = vpack.c.b16 %v5580, %v5578
        %v6919 = vpack.c.b16 %v5583, %v5581
        %v6920 = vpack.c.b16 %v5584, %v5582
        %v6921 = vpack.c.b16 %v5587, %v5585
        %v6922 = vpack.c.b16 %v5588, %v5586
        %v6923 = vpack.c.b16 %v5591, %v5589
        %v6924 = vpack.c.b16 %v5592, %v5590
        %v6925 = vpack.c.b16 %v5595, %v5593
        %v6926 = vpack.c.b16 %v5596, %v5594
        %v6927 = vpack.c.b16 %v5599, %v5597
        %v6928 = vpack.c.b16 %v5600, %v5598
        %v6929 = vpack.c.b16 %v5603, %v5601
        %v6930 = vpack.c.b16 %v5604, %v5602
        %v6931 = vpack.c.b16 %v5607, %v5605
        %v6932 = vpack.c.b16 %v5608, %v5606
        %v6933 = vpack.c.b16 %v5611, %v5609
        %v6934 = vpack.c.b16 %v5612, %v5610
        %v6935 = vpack.c.b16 %v5615, %v5613
        %v6936 = vpack.c.b16 %v5616, %v5614
        %v6937 = vpack.c.b16 %v5619, %v5617
        %v6938 = vpack.c.b16 %v5620, %v5618
        %v6939 = vpack.c.b16 %v5623, %v5621
        %v6940 = vpack.c.b16 %v5624, %v5622
        %v6941 = vpack.c.b16 %v5627, %v5625
        %v6942 = vpack.c.b16 %v5628, %v5626
        %v6943 = vpack.c.b16 %v5631, %v5629
        %v6944 = vpack.c.b16 %v5632, %v5630
        %v6945 = vpack.c.b16 %v5635, %v5633
        %v6946 = vpack.c.b16 %v5636, %v5634
        %v6947 = vpack.c.b16 %v5639, %v5637
        %v6948 = vpack.c.b16 %v5640, %v5638
        %v6949 = vpack.c.b16 %v5643, %v5641
        %v6950 = vpack.c.b16 %v5644, %v5642
        %v6951 = vpack.c.b16 %v5647, %v5645
        %v6952 = vpack.c.b16 %v5648, %v5646
        %v6953 = vpack.c.b16 %v5651, %v5649
        %v6954 = vpack.c.b16 %v5652, %v5650
        %v6955 = vpack.c.b16 %v5655, %v5653
        %v6956 = vpack.c.b16 %v5656, %v5654
        %v6957 = vpack.c.b16 %v5659, %v5657
        %v6958 = vpack.c.b16 %v5660, %v5658
        %v6959 = vpack.c.b16 %v5663, %v5661
        %v6960 = vpack.c.b16 %v5664, %v5662
        %v6961 = vpack.c.b16 %v5667, %v5665
        %v6962 = vpack.c.b16 %v5668, %v5666
        %v6963 = vpack.c.b16 %v5671, %v5669
        %v6964 = vpack.c.b16 %v5672, %v5670
        %v6965 = vpack.c.b16 %v5675, %v5673
        %v6966 = vpack.c.b16 %v5676, %v5674
        %v6967 = vpack.c.b16 %v5679, %v5677
        %v6968 = vpack.c.b16 %v5680, %v5678
        %v6969 = vpack.c.b16 %v5683, %v5681
        %v6970 = vpack.c.b16 %v5684, %v5682
        %v6971 = vpack.c.b16 %v5687, %v5685
        %v6972 = vpack.c.b16 %v5688, %v5686
        %v6973 = vpack.c.b16 %v5691, %v5689
        %v6974 = vpack.c.b16 %v5692, %v5690
        %v6975 = vpack.c.b16 %v5695, %v5693
        %v6976 = vpack.c.b16 %v5696, %v5694
        %v6977 = vpack.c.b16 %v5699, %v5697
        %v6978 = vpack.c.b16 %v5700, %v5698
        %v6979 = vpack.c.b16 %v5703, %v5701
        %v6980 = vpack.c.b16 %v5704, %v5702
        %v6981 = vpack.c.b16 %v5707, %v5705
        %v6982 = vpack.c.b16 %v5708, %v5706
        %v6983 = vpack.c.b16 %v5711, %v5709
        %v6984 = vpack.c.b16 %v5712, %v5710
        %v6985 = vpack.c.b16 %v5715, %v5713
        %v6986 = vpack.c.b16 %v5716, %v5714
        %v6987 = vpack.c.b16 %v5719, %v5717
        %v6988 = vpack.c.b16 %v5720, %v5718
        %v6989 = vpack.c.b16 %v5723, %v5721
        %v6990 = vpack.c.b16 %v5724, %v5722
        %v6991 = vpack.c.b16 %v5727, %v5725
        %v6992 = vpack.c.b16 %v5728, %v5726
        %v6993 = vpack.c.b16 %v5731, %v5729
        %v6994 = vpack.c.b16 %v5732, %v5730
        %v6995 = vpack.c.b16 %v5735, %v5733
        %v6996 = vpack.c.b16 %v5736, %v5734
        %v6997 = vpack.c.b16 %v5739, %v5737
        %v6998 = vpack.c.b16 %v5740, %v5738
        %v6999 = vpack.c.b16 %v5743, %v5741
        %v7000 = vpack.c.b16 %v5744, %v5742
        %v7001 = vpack.c.b16 %v5747, %v5745
        %v7002 = vpack.c.b16 %v5748, %v5746
        %v7003 = vpack.c.b16 %v5751, %v5749
        %v7004 = vpack.c.b16 %v5752, %v5750
        %v7005 = vpack.c.b16 %v5755, %v5753
        %v7006 = vpack.c.b16 %v5756, %v5754
        %v7007 = vpack.c.b16 %v5759, %v5757
        %v7008 = vpack.c.b16 %v5760, %v5758
        %8257 = vmatpush.bf16.msra.mxu0 %v5775
        %8258 = vmatpush.bf16.msra.mxu0 %v5773
        %8259 = vmatpush.bf16.msra.mxu0 %v5771
        %8260 = vmatpush.bf16.msra.mxu0 %v5769
        %8261 = vmatpush.bf16.msra.mxu0 %v5767
        %8262 = vmatpush.bf16.msra.mxu0 %v5765
        %8263 = vmatpush.bf16.msra.mxu0 %v5763
        %8264 = vmatpush.bf16.msra.mxu0 %v5761
        %8265 = vmatmul.bf16.gmra.mxu0 %v1843
        %v8266 = vpop.f32.mrf.mxu0
        %v8267 = vadd.f32 0.0, %v8266
        %v8268 = vpop.f32.mrf.mxu0
        %8269 = vdwg.mxu0
        %8270 = vmatpush.bf16.msra.mxu0 %v5791
        %8271 = vmatpush.bf16.msra.mxu0 %v5789
        %8272 = vmatpush.bf16.msra.mxu0 %v5787
        %8273 = vmatpush.bf16.msra.mxu0 %v5785
        %8274 = vmatpush.bf16.msra.mxu0 %v5783
        %8275 = vmatpush.bf16.msra.mxu0 %v5781
        %8276 = vmatpush.bf16.msra.mxu0 %v5779
        %8277 = vmatpush.bf16.msra.mxu0 %v5777
        %8278 = vmatmul.bf16.gmra.mxu0 %v1844
        %v8279 = vpop.f32.mrf.mxu0
        %v8280 = vadd.f32 %v8267, %v8279
        %v8281 = vpop.f32.mrf.mxu0
        %8282 = vdwg.mxu0
        %8283 = vmatpush.bf16.msra.mxu0 %v5807
        %8284 = vmatpush.bf16.msra.mxu0 %v5805
        %8285 = vmatpush.bf16.msra.mxu0 %v5803
        %8286 = vmatpush.bf16.msra.mxu0 %v5801
        %8287 = vmatpush.bf16.msra.mxu0 %v5799
        %8288 = vmatpush.bf16.msra.mxu0 %v5797
        %8289 = vmatpush.bf16.msra.mxu0 %v5795
        %8290 = vmatpush.bf16.msra.mxu0 %v5793
        %8291 = vmatmul.bf16.gmra.mxu0 %v1845
        %v8292 = vpop.f32.mrf.mxu0
        %v8293 = vadd.f32 %v8280, %v8292
        %v8294 = vpop.f32.mrf.mxu0
        %8295 = vdwg.mxu0
        %8296 = vmatpush.bf16.msra.mxu0 %v5823
        %8297 = vmatpush.bf16.msra.mxu0 %v5821
        %8298 = vmatpush.bf16.msra.mxu0 %v5819
        %8299 = vmatpush.bf16.msra.mxu0 %v5817
        %8300 = vmatpush.bf16.msra.mxu0 %v5815
        %8301 = vmatpush.bf16.msra.mxu0 %v5813
        %8302 = vmatpush.bf16.msra.mxu0 %v5811
        %8303 = vmatpush.bf16.msra.mxu0 %v5809
        %8304 = vmatmul.bf16.gmra.mxu0 %v1846
        %v8305 = vpop.f32.mrf.mxu0
        %v8306 = vadd.f32 %v8293, %v8305
        %v8307 = vpop.f32.mrf.mxu0
        %8308 = vdwg.mxu0
        %8309 = vmatpush.bf16.msra.mxu0 %v5839
        %8310 = vmatpush.bf16.msra.mxu0 %v5837
        %8311 = vmatpush.bf16.msra.mxu0 %v5835
        %8312 = vmatpush.bf16.msra.mxu0 %v5833
        %8313 = vmatpush.bf16.msra.mxu0 %v5831
        %8314 = vmatpush.bf16.msra.mxu0 %v5829
        %8315 = vmatpush.bf16.msra.mxu0 %v5827
        %8316 = vmatpush.bf16.msra.mxu0 %v5825
        %8317 = vmatmul.bf16.gmra.mxu0 %v1847
        %v8318 = vpop.f32.mrf.mxu0
        %v8319 = vadd.f32 %v8306, %v8318
        %v8320 = vpop.f32.mrf.mxu0
        %8321 = vdwg.mxu0
        %8322 = vmatpush.bf16.msra.mxu0 %v5855
        %8323 = vmatpush.bf16.msra.mxu0 %v5853
        %8324 = vmatpush.bf16.msra.mxu0 %v5851
        %8325 = vmatpush.bf16.msra.mxu0 %v5849
        %8326 = vmatpush.bf16.msra.mxu0 %v5847
        %8327 = vmatpush.bf16.msra.mxu0 %v5845
        %8328 = vmatpush.bf16.msra.mxu0 %v5843
        %8329 = vmatpush.bf16.msra.mxu0 %v5841
        %8330 = vmatmul.bf16.gmra.mxu0 %v1848
        %v8331 = vpop.f32.mrf.mxu0
        %v8332 = vadd.f32 %v8319, %v8331
        %v8333 = vpop.f32.mrf.mxu0
        %8334 = vdwg.mxu0
        %8335 = vmatpush.bf16.msra.mxu0 %v5871
        %8336 = vmatpush.bf16.msra.mxu0 %v5869
        %8337 = vmatpush.bf16.msra.mxu0 %v5867
        %8338 = vmatpush.bf16.msra.mxu0 %v5865
        %8339 = vmatpush.bf16.msra.mxu0 %v5863
        %8340 = vmatpush.bf16.msra.mxu0 %v5861
        %8341 = vmatpush.bf16.msra.mxu0 %v5859
        %8342 = vmatpush.bf16.msra.mxu0 %v5857
        %8343 = vmatmul.bf16.gmra.mxu0 %v1849
        %v8344 = vpop.f32.mrf.mxu0
        %v8345 = vadd.f32 %v8332, %v8344
        %v8346 = vpop.f32.mrf.mxu0
        %8347 = vdwg.mxu0
        %8348 = vmatpush.bf16.msra.mxu0 %v5887
        %8349 = vmatpush.bf16.msra.mxu0 %v5885
        %8350 = vmatpush.bf16.msra.mxu0 %v5883
        %8351 = vmatpush.bf16.msra.mxu0 %v5881
        %8352 = vmatpush.bf16.msra.mxu0 %v5879
        %8353 = vmatpush.bf16.msra.mxu0 %v5877
        %8354 = vmatpush.bf16.msra.mxu0 %v5875
        %8355 = vmatpush.bf16.msra.mxu0 %v5873
        %8356 = vmatmul.bf16.gmra.mxu0 %v1850
        %v8357 = vpop.f32.mrf.mxu0
        %v8358 = vadd.f32 %v8345, %v8357
        %v8359 = vpop.f32.mrf.mxu0
        %8360 = vdwg.mxu0
        %8361 = vmatpush.bf16.msra.mxu0 %v5903
        %8362 = vmatpush.bf16.msra.mxu0 %v5901
        %8363 = vmatpush.bf16.msra.mxu0 %v5899
        %8364 = vmatpush.bf16.msra.mxu0 %v5897
        %8365 = vmatpush.bf16.msra.mxu0 %v5895
        %8366 = vmatpush.bf16.msra.mxu0 %v5893
        %8367 = vmatpush.bf16.msra.mxu0 %v5891
        %8368 = vmatpush.bf16.msra.mxu0 %v5889
        %8369 = vmatmul.bf16.gmra.mxu0 %v1853
        %v8370 = vpop.f32.mrf.mxu0
        %v8371 = vadd.f32 %v8358, %v8370
        %v8372 = vpop.f32.mrf.mxu0
        %8373 = vdwg.mxu0
        %8374 = vmatpush.bf16.msra.mxu0 %v5919
        %8375 = vmatpush.bf16.msra.mxu0 %v5917
        %8376 = vmatpush.bf16.msra.mxu0 %v5915
        %8377 = vmatpush.bf16.msra.mxu0 %v5913
        %8378 = vmatpush.bf16.msra.mxu0 %v5911
        %8379 = vmatpush.bf16.msra.mxu0 %v5909
        %8380 = vmatpush.bf16.msra.mxu0 %v5907
        %8381 = vmatpush.bf16.msra.mxu0 %v5905
        %8382 = vmatmul.bf16.gmra.mxu0 %v1854
        %v8383 = vpop.f32.mrf.mxu0
        %v8384 = vadd.f32 %v8371, %v8383
        %v8385 = vpop.f32.mrf.mxu0
        %8386 = vdwg.mxu0
        %8387 = vmatpush.bf16.msra.mxu0 %v5935
        %8388 = vmatpush.bf16.msra.mxu0 %v5933
        %8389 = vmatpush.bf16.msra.mxu0 %v5931
        %8390 = vmatpush.bf16.msra.mxu0 %v5929
        %8391 = vmatpush.bf16.msra.mxu0 %v5927
        %8392 = vmatpush.bf16.msra.mxu0 %v5925
        %8393 = vmatpush.bf16.msra.mxu0 %v5923
        %8394 = vmatpush.bf16.msra.mxu0 %v5921
        %8395 = vmatmul.bf16.gmra.mxu0 %v1855
        %v8396 = vpop.f32.mrf.mxu0
        %v8397 = vadd.f32 %v8384, %v8396
        %v8398 = vpop.f32.mrf.mxu0
        %8399 = vdwg.mxu0
        %8400 = vmatpush.bf16.msra.mxu0 %v5951
        %8401 = vmatpush.bf16.msra.mxu0 %v5949
        %8402 = vmatpush.bf16.msra.mxu0 %v5947
        %8403 = vmatpush.bf16.msra.mxu0 %v5945
        %8404 = vmatpush.bf16.msra.mxu0 %v5943
        %8405 = vmatpush.bf16.msra.mxu0 %v5941
        %8406 = vmatpush.bf16.msra.mxu0 %v5939
        %8407 = vmatpush.bf16.msra.mxu0 %v5937
        %8408 = vmatmul.bf16.gmra.mxu0 %v1856
        %v8409 = vpop.f32.mrf.mxu0
        %v8410 = vadd.f32 %v8397, %v8409
        %v8411 = vpop.f32.mrf.mxu0
        %8412 = vdwg.mxu0
        %8413 = vmatpush.bf16.msra.mxu0 %v5967
        %8414 = vmatpush.bf16.msra.mxu0 %v5965
        %8415 = vmatpush.bf16.msra.mxu0 %v5963
        %8416 = vmatpush.bf16.msra.mxu0 %v5961
        %8417 = vmatpush.bf16.msra.mxu0 %v5959
        %8418 = vmatpush.bf16.msra.mxu0 %v5957
        %8419 = vmatpush.bf16.msra.mxu0 %v5955
        %8420 = vmatpush.bf16.msra.mxu0 %v5953
        %8421 = vmatmul.bf16.gmra.mxu0 %v1857
        %v8422 = vpop.f32.mrf.mxu0
        %v8423 = vadd.f32 %v8410, %v8422
        %v8424 = vpop.f32.mrf.mxu0
        %8425 = vdwg.mxu0
        %8426 = vmatpush.bf16.msra.mxu0 %v5983
        %8427 = vmatpush.bf16.msra.mxu0 %v5981
        %8428 = vmatpush.bf16.msra.mxu0 %v5979
        %8429 = vmatpush.bf16.msra.mxu0 %v5977
        %8430 = vmatpush.bf16.msra.mxu0 %v5975
        %8431 = vmatpush.bf16.msra.mxu0 %v5973
        %8432 = vmatpush.bf16.msra.mxu0 %v5971
        %8433 = vmatpush.bf16.msra.mxu0 %v5969
        %8434 = vmatmul.bf16.gmra.mxu0 %v1858
        %v8435 = vpop.f32.mrf.mxu0
        %v8436 = vadd.f32 %v8423, %v8435
        %v8437 = vpop.f32.mrf.mxu0
        %8438 = vdwg.mxu0
        %8439 = vmatpush.bf16.msra.mxu0 %v5999
        %8440 = vmatpush.bf16.msra.mxu0 %v5997
        %8441 = vmatpush.bf16.msra.mxu0 %v5995
        %8442 = vmatpush.bf16.msra.mxu0 %v5993
        %8443 = vmatpush.bf16.msra.mxu0 %v5991
        %8444 = vmatpush.bf16.msra.mxu0 %v5989
        %8445 = vmatpush.bf16.msra.mxu0 %v5987
        %8446 = vmatpush.bf16.msra.mxu0 %v5985
        %8447 = vmatmul.bf16.gmra.mxu0 %v1859
        %v8448 = vpop.f32.mrf.mxu0
        %v8449 = vadd.f32 %v8436, %v8448
        %v8450 = vpop.f32.mrf.mxu0
        %8451 = vdwg.mxu0
        %8452 = vmatpush.bf16.msra.mxu0 %v6015
        %8453 = vmatpush.bf16.msra.mxu0 %v6013
        %8454 = vmatpush.bf16.msra.mxu0 %v6011
        %8455 = vmatpush.bf16.msra.mxu0 %v6009
        %8456 = vmatpush.bf16.msra.mxu0 %v6007
        %8457 = vmatpush.bf16.msra.mxu0 %v6005
        %8458 = vmatpush.bf16.msra.mxu0 %v6003
        %8459 = vmatpush.bf16.msra.mxu0 %v6001
        %8460 = vmatmul.bf16.gmra.mxu0 %v1860
        %v8461 = vpop.f32.mrf.mxu0
        %v8462 = vadd.f32 %v8449, %v8461
        %v8463 = vpop.f32.mrf.mxu0
        %8464 = vdwg.mxu0
        %8465 = vmatpush.bf16.msra.mxu0 %v6031
        %8466 = vmatpush.bf16.msra.mxu0 %v6029
        %8467 = vmatpush.bf16.msra.mxu0 %v6027
        %8468 = vmatpush.bf16.msra.mxu0 %v6025
        %8469 = vmatpush.bf16.msra.mxu0 %v6023
        %8470 = vmatpush.bf16.msra.mxu0 %v6021
        %8471 = vmatpush.bf16.msra.mxu0 %v6019
        %8472 = vmatpush.bf16.msra.mxu0 %v6017
        %8473 = vmatmul.bf16.gmra.mxu0 %v1863
        %v8474 = vpop.f32.mrf.mxu0
        %v8475 = vadd.f32 %v8462, %v8474
        %v8476 = vpop.f32.mrf.mxu0
        %8477 = vdwg.mxu0
        %8478 = vmatpush.bf16.msra.mxu0 %v6047
        %8479 = vmatpush.bf16.msra.mxu0 %v6045
        %8480 = vmatpush.bf16.msra.mxu0 %v6043
        %8481 = vmatpush.bf16.msra.mxu0 %v6041
        %8482 = vmatpush.bf16.msra.mxu0 %v6039
        %8483 = vmatpush.bf16.msra.mxu0 %v6037
        %8484 = vmatpush.bf16.msra.mxu0 %v6035
        %8485 = vmatpush.bf16.msra.mxu0 %v6033
        %8486 = vmatmul.bf16.gmra.mxu0 %v1864
        %v8487 = vpop.f32.mrf.mxu0
        %v8488 = vadd.f32 %v8475, %v8487
        %v8489 = vpop.f32.mrf.mxu0
        %8490 = vdwg.mxu0
        %8491 = vmatpush.bf16.msra.mxu0 %v6063
        %8492 = vmatpush.bf16.msra.mxu0 %v6061
        %8493 = vmatpush.bf16.msra.mxu0 %v6059
        %8494 = vmatpush.bf16.msra.mxu0 %v6057
        %8495 = vmatpush.bf16.msra.mxu0 %v6055
        %8496 = vmatpush.bf16.msra.mxu0 %v6053
        %8497 = vmatpush.bf16.msra.mxu0 %v6051
        %8498 = vmatpush.bf16.msra.mxu0 %v6049
        %8499 = vmatmul.bf16.gmra.mxu0 %v1865
        %v8500 = vpop.f32.mrf.mxu0
        %v8501 = vadd.f32 %v8488, %v8500
        %v8502 = vpop.f32.mrf.mxu0
        %8503 = vdwg.mxu0
        %8504 = vmatpush.bf16.msra.mxu0 %v6079
        %8505 = vmatpush.bf16.msra.mxu0 %v6077
        %8506 = vmatpush.bf16.msra.mxu0 %v6075
        %8507 = vmatpush.bf16.msra.mxu0 %v6073
        %8508 = vmatpush.bf16.msra.mxu0 %v6071
        %8509 = vmatpush.bf16.msra.mxu0 %v6069
        %8510 = vmatpush.bf16.msra.mxu0 %v6067
        %8511 = vmatpush.bf16.msra.mxu0 %v6065
        %8512 = vmatmul.bf16.gmra.mxu0 %v1866
        %v8513 = vpop.f32.mrf.mxu0
        %v8514 = vadd.f32 %v8501, %v8513
        %v8515 = vpop.f32.mrf.mxu0
        %8516 = vdwg.mxu0
        %8517 = vmatpush.bf16.msra.mxu0 %v6095
        %8518 = vmatpush.bf16.msra.mxu0 %v6093
        %8519 = vmatpush.bf16.msra.mxu0 %v6091
        %8520 = vmatpush.bf16.msra.mxu0 %v6089
        %8521 = vmatpush.bf16.msra.mxu0 %v6087
        %8522 = vmatpush.bf16.msra.mxu0 %v6085
        %8523 = vmatpush.bf16.msra.mxu0 %v6083
        %8524 = vmatpush.bf16.msra.mxu0 %v6081
        %8525 = vmatmul.bf16.gmra.mxu0 %v1867
        %v8526 = vpop.f32.mrf.mxu0
        %v8527 = vadd.f32 %v8514, %v8526
        %v8528 = vpop.f32.mrf.mxu0
        %8529 = vdwg.mxu0
        %8530 = vmatpush.bf16.msra.mxu0 %v6111
        %8531 = vmatpush.bf16.msra.mxu0 %v6109
        %8532 = vmatpush.bf16.msra.mxu0 %v6107
        %8533 = vmatpush.bf16.msra.mxu0 %v6105
        %8534 = vmatpush.bf16.msra.mxu0 %v6103
        %8535 = vmatpush.bf16.msra.mxu0 %v6101
        %8536 = vmatpush.bf16.msra.mxu0 %v6099
        %8537 = vmatpush.bf16.msra.mxu0 %v6097
        %8538 = vmatmul.bf16.gmra.mxu0 %v1868
        %v8539 = vpop.f32.mrf.mxu0
        %v8540 = vadd.f32 %v8527, %v8539
        %v8541 = vpop.f32.mrf.mxu0
        %8542 = vdwg.mxu0
        %8543 = vmatpush.bf16.msra.mxu0 %v6127
        %8544 = vmatpush.bf16.msra.mxu0 %v6125
        %8545 = vmatpush.bf16.msra.mxu0 %v6123
        %8546 = vmatpush.bf16.msra.mxu0 %v6121
        %8547 = vmatpush.bf16.msra.mxu0 %v6119
        %8548 = vmatpush.bf16.msra.mxu0 %v6117
        %8549 = vmatpush.bf16.msra.mxu0 %v6115
        %8550 = vmatpush.bf16.msra.mxu0 %v6113
        %8551 = vmatmul.bf16.gmra.mxu0 %v1869
        %v8552 = vpop.f32.mrf.mxu0
        %v8553 = vadd.f32 %v8540, %v8552
        %v8554 = vpop.f32.mrf.mxu0
        %8555 = vdwg.mxu0
        %8556 = vmatpush.bf16.msra.mxu0 %v6143
        %8557 = vmatpush.bf16.msra.mxu0 %v6141
        %8558 = vmatpush.bf16.msra.mxu0 %v6139
        %8559 = vmatpush.bf16.msra.mxu0 %v6137
        %8560 = vmatpush.bf16.msra.mxu0 %v6135
        %8561 = vmatpush.bf16.msra.mxu0 %v6133
        %8562 = vmatpush.bf16.msra.mxu0 %v6131
        %8563 = vmatpush.bf16.msra.mxu0 %v6129
        %8564 = vmatmul.bf16.gmra.mxu0 %v1870
        %v8565 = vpop.f32.mrf.mxu0
        %v8566 = vadd.f32 %v8553, %v8565
        %v8567 = vpop.f32.mrf.mxu0
        %8568 = vdwg.mxu0
        %8569 = vmatpush.bf16.msra.mxu0 %v6159
        %8570 = vmatpush.bf16.msra.mxu0 %v6157
        %8571 = vmatpush.bf16.msra.mxu0 %v6155
        %8572 = vmatpush.bf16.msra.mxu0 %v6153
        %8573 = vmatpush.bf16.msra.mxu0 %v6151
        %8574 = vmatpush.bf16.msra.mxu0 %v6149
        %8575 = vmatpush.bf16.msra.mxu0 %v6147
        %8576 = vmatpush.bf16.msra.mxu0 %v6145
        %8577 = vmatmul.bf16.gmra.mxu0 %v1873
        %v8578 = vpop.f32.mrf.mxu0
        %v8579 = vadd.f32 %v8566, %v8578
        %v8580 = vpop.f32.mrf.mxu0
        %8581 = vdwg.mxu0
        %8582 = vmatpush.bf16.msra.mxu0 %v6175
        %8583 = vmatpush.bf16.msra.mxu0 %v6173
        %8584 = vmatpush.bf16.msra.mxu0 %v6171
        %8585 = vmatpush.bf16.msra.mxu0 %v6169
        %8586 = vmatpush.bf16.msra.mxu0 %v6167
        %8587 = vmatpush.bf16.msra.mxu0 %v6165
        %8588 = vmatpush.bf16.msra.mxu0 %v6163
        %8589 = vmatpush.bf16.msra.mxu0 %v6161
        %8590 = vmatmul.bf16.gmra.mxu0 %v1874
        %v8591 = vpop.f32.mrf.mxu0
        %v8592 = vadd.f32 %v8579, %v8591
        %v8593 = vpop.f32.mrf.mxu0
        %8594 = vdwg.mxu0
        %8595 = vmatpush.bf16.msra.mxu0 %v6191
        %8596 = vmatpush.bf16.msra.mxu0 %v6189
        %8597 = vmatpush.bf16.msra.mxu0 %v6187
        %8598 = vmatpush.bf16.msra.mxu0 %v6185
        %8599 = vmatpush.bf16.msra.mxu0 %v6183
        %8600 = vmatpush.bf16.msra.mxu0 %v6181
        %8601 = vmatpush.bf16.msra.mxu0 %v6179
        %8602 = vmatpush.bf16.msra.mxu0 %v6177
        %8603 = vmatmul.bf16.gmra.mxu0 %v1875
        %v8604 = vpop.f32.mrf.mxu0
        %v8605 = vadd.f32 %v8592, %v8604
        %v8606 = vpop.f32.mrf.mxu0
        %8607 = vdwg.mxu0
        %8608 = vmatpush.bf16.msra.mxu0 %v6207
        %8609 = vmatpush.bf16.msra.mxu0 %v6205
        %8610 = vmatpush.bf16.msra.mxu0 %v6203
        %8611 = vmatpush.bf16.msra.mxu0 %v6201
        %8612 = vmatpush.bf16.msra.mxu0 %v6199
        %8613 = vmatpush.bf16.msra.mxu0 %v6197
        %8614 = vmatpush.bf16.msra.mxu0 %v6195
        %8615 = vmatpush.bf16.msra.mxu0 %v6193
        %8616 = vmatmul.bf16.gmra.mxu0 %v1876
        %v8617 = vpop.f32.mrf.mxu0
        %v8618 = vadd.f32 %v8605, %v8617
        %v8619 = vpop.f32.mrf.mxu0
        %8620 = vdwg.mxu0
        %8621 = vmatpush.bf16.msra.mxu0 %v6223
        %8622 = vmatpush.bf16.msra.mxu0 %v6221
        %8623 = vmatpush.bf16.msra.mxu0 %v6219
        %8624 = vmatpush.bf16.msra.mxu0 %v6217
        %8625 = vmatpush.bf16.msra.mxu0 %v6215
        %8626 = vmatpush.bf16.msra.mxu0 %v6213
        %8627 = vmatpush.bf16.msra.mxu0 %v6211
        %8628 = vmatpush.bf16.msra.mxu0 %v6209
        %8629 = vmatmul.bf16.gmra.mxu0 %v1877
        %v8630 = vpop.f32.mrf.mxu0
        %v8631 = vadd.f32 %v8618, %v8630
        %v8632 = vpop.f32.mrf.mxu0
        %8633 = vdwg.mxu0
        %8634 = vmatpush.bf16.msra.mxu0 %v6239
        %8635 = vmatpush.bf16.msra.mxu0 %v6237
        %8636 = vmatpush.bf16.msra.mxu0 %v6235
        %8637 = vmatpush.bf16.msra.mxu0 %v6233
        %8638 = vmatpush.bf16.msra.mxu0 %v6231
        %8639 = vmatpush.bf16.msra.mxu0 %v6229
        %8640 = vmatpush.bf16.msra.mxu0 %v6227
        %8641 = vmatpush.bf16.msra.mxu0 %v6225
        %8642 = vmatmul.bf16.gmra.mxu0 %v1878
        %v8643 = vpop.f32.mrf.mxu0
        %v8644 = vadd.f32 %v8631, %v8643
        %v8645 = vpop.f32.mrf.mxu0
        %8646 = vdwg.mxu0
        %8647 = vmatpush.bf16.msra.mxu0 %v6255
        %8648 = vmatpush.bf16.msra.mxu0 %v6253
        %8649 = vmatpush.bf16.msra.mxu0 %v6251
        %8650 = vmatpush.bf16.msra.mxu0 %v6249
        %8651 = vmatpush.bf16.msra.mxu0 %v6247
        %8652 = vmatpush.bf16.msra.mxu0 %v6245
        %8653 = vmatpush.bf16.msra.mxu0 %v6243
        %8654 = vmatpush.bf16.msra.mxu0 %v6241
        %8655 = vmatmul.bf16.gmra.mxu0 %v1879
        %v8656 = vpop.f32.mrf.mxu0
        %v8657 = vadd.f32 %v8644, %v8656
        %v8658 = vpop.f32.mrf.mxu0
        %8659 = vdwg.mxu0
        %8660 = vmatpush.bf16.msra.mxu0 %v6271
        %8661 = vmatpush.bf16.msra.mxu0 %v6269
        %8662 = vmatpush.bf16.msra.mxu0 %v6267
        %8663 = vmatpush.bf16.msra.mxu0 %v6265
        %8664 = vmatpush.bf16.msra.mxu0 %v6263
        %8665 = vmatpush.bf16.msra.mxu0 %v6261
        %8666 = vmatpush.bf16.msra.mxu0 %v6259
        %8667 = vmatpush.bf16.msra.mxu0 %v6257
        %8668 = vmatmul.bf16.gmra.mxu0 %v1880
        %v8669 = vpop.f32.mrf.mxu0
        %v8670 = vadd.f32 %v8657, %v8669
        %v8671 = vpop.f32.mrf.mxu0
        %8672 = vdwg.mxu0
        %8673 = vmatpush.bf16.msra.mxu0 %v6287
        %8674 = vmatpush.bf16.msra.mxu0 %v6285
        %8675 = vmatpush.bf16.msra.mxu0 %v6283
        %8676 = vmatpush.bf16.msra.mxu0 %v6281
        %8677 = vmatpush.bf16.msra.mxu0 %v6279
        %8678 = vmatpush.bf16.msra.mxu0 %v6277
        %8679 = vmatpush.bf16.msra.mxu0 %v6275
        %8680 = vmatpush.bf16.msra.mxu0 %v6273
        %8681 = vmatmul.bf16.gmra.mxu0 %v1883
        %v8682 = vpop.f32.mrf.mxu0
        %v8683 = vadd.f32 %v8670, %v8682
        %v8684 = vpop.f32.mrf.mxu0
        %8685 = vdwg.mxu0
        %8686 = vmatpush.bf16.msra.mxu0 %v6303
        %8687 = vmatpush.bf16.msra.mxu0 %v6301
        %8688 = vmatpush.bf16.msra.mxu0 %v6299
        %8689 = vmatpush.bf16.msra.mxu0 %v6297
        %8690 = vmatpush.bf16.msra.mxu0 %v6295
        %8691 = vmatpush.bf16.msra.mxu0 %v6293
        %8692 = vmatpush.bf16.msra.mxu0 %v6291
        %8693 = vmatpush.bf16.msra.mxu0 %v6289
        %8694 = vmatmul.bf16.gmra.mxu0 %v1884
        %v8695 = vpop.f32.mrf.mxu0
        %v8696 = vadd.f32 %v8683, %v8695
        %v8697 = vpop.f32.mrf.mxu0
        %8698 = vdwg.mxu0
        %8699 = vmatpush.bf16.msra.mxu0 %v6319
        %8700 = vmatpush.bf16.msra.mxu0 %v6317
        %8701 = vmatpush.bf16.msra.mxu0 %v6315
        %8702 = vmatpush.bf16.msra.mxu0 %v6313
        %8703 = vmatpush.bf16.msra.mxu0 %v6311
        %8704 = vmatpush.bf16.msra.mxu0 %v6309
        %8705 = vmatpush.bf16.msra.mxu0 %v6307
        %8706 = vmatpush.bf16.msra.mxu0 %v6305
        %8707 = vmatmul.bf16.gmra.mxu0 %v1885
        %v8708 = vpop.f32.mrf.mxu0
        %v8709 = vadd.f32 %v8696, %v8708
        %v8710 = vpop.f32.mrf.mxu0
        %8711 = vdwg.mxu0
        %8712 = vmatpush.bf16.msra.mxu0 %v6335
        %8713 = vmatpush.bf16.msra.mxu0 %v6333
        %8714 = vmatpush.bf16.msra.mxu0 %v6331
        %8715 = vmatpush.bf16.msra.mxu0 %v6329
        %8716 = vmatpush.bf16.msra.mxu0 %v6327
        %8717 = vmatpush.bf16.msra.mxu0 %v6325
        %8718 = vmatpush.bf16.msra.mxu0 %v6323
        %8719 = vmatpush.bf16.msra.mxu0 %v6321
        %8720 = vmatmul.bf16.gmra.mxu0 %v1886
        %v8721 = vpop.f32.mrf.mxu0
        %v8722 = vadd.f32 %v8709, %v8721
        %v8723 = vpop.f32.mrf.mxu0
        %8724 = vdwg.mxu0
        %8725 = vmatpush.bf16.msra.mxu0 %v6351
        %8726 = vmatpush.bf16.msra.mxu0 %v6349
        %8727 = vmatpush.bf16.msra.mxu0 %v6347
        %8728 = vmatpush.bf16.msra.mxu0 %v6345
        %8729 = vmatpush.bf16.msra.mxu0 %v6343
        %8730 = vmatpush.bf16.msra.mxu0 %v6341
        %8731 = vmatpush.bf16.msra.mxu0 %v6339
        %8732 = vmatpush.bf16.msra.mxu0 %v6337
        %8733 = vmatmul.bf16.gmra.mxu0 %v1887
        %v8734 = vpop.f32.mrf.mxu0
        %v8735 = vadd.f32 %v8722, %v8734
        %v8736 = vpop.f32.mrf.mxu0
        %8737 = vdwg.mxu0
        %8738 = vmatpush.bf16.msra.mxu0 %v6367
        %8739 = vmatpush.bf16.msra.mxu0 %v6365
        %8740 = vmatpush.bf16.msra.mxu0 %v6363
        %8741 = vmatpush.bf16.msra.mxu0 %v6361
        %8742 = vmatpush.bf16.msra.mxu0 %v6359
        %8743 = vmatpush.bf16.msra.mxu0 %v6357
        %8744 = vmatpush.bf16.msra.mxu0 %v6355
        %8745 = vmatpush.bf16.msra.mxu0 %v6353
        %8746 = vmatmul.bf16.gmra.mxu0 %v1888
        %v8747 = vpop.f32.mrf.mxu0
        %v8748 = vadd.f32 %v8735, %v8747
        %v8749 = vpop.f32.mrf.mxu0
        %8750 = vdwg.mxu0
        %8751 = vmatpush.bf16.msra.mxu0 %v6383
        %8752 = vmatpush.bf16.msra.mxu0 %v6381
        %8753 = vmatpush.bf16.msra.mxu0 %v6379
        %8754 = vmatpush.bf16.msra.mxu0 %v6377
        %8755 = vmatpush.bf16.msra.mxu0 %v6375
        %8756 = vmatpush.bf16.msra.mxu0 %v6373
        %8757 = vmatpush.bf16.msra.mxu0 %v6371
        %8758 = vmatpush.bf16.msra.mxu0 %v6369
        %8759 = vmatmul.bf16.gmra.mxu0 %v1889
        %v8760 = vpop.f32.mrf.mxu0
        %v8761 = vadd.f32 %v8748, %v8760
        %v8762 = vpop.f32.mrf.mxu0
        %8763 = vdwg.mxu0
        %8764 = vmatpush.bf16.msra.mxu0 %v6399
        %8765 = vmatpush.bf16.msra.mxu0 %v6397
        %8766 = vmatpush.bf16.msra.mxu0 %v6395
        %8767 = vmatpush.bf16.msra.mxu0 %v6393
        %8768 = vmatpush.bf16.msra.mxu0 %v6391
        %8769 = vmatpush.bf16.msra.mxu0 %v6389
        %8770 = vmatpush.bf16.msra.mxu0 %v6387
        %8771 = vmatpush.bf16.msra.mxu0 %v6385
        %8772 = vmatmul.bf16.gmra.mxu0 %v1890
        %v8773 = vpop.f32.mrf.mxu0
        %v8774 = vadd.f32 %v8761, %v8773
        %v8775 = vpop.f32.mrf.mxu0
        %8776 = vdwg.mxu0
        %8777 = vmatpush.bf16.msra.mxu0 %v6415
        %8778 = vmatpush.bf16.msra.mxu0 %v6413
        %8779 = vmatpush.bf16.msra.mxu0 %v6411
        %8780 = vmatpush.bf16.msra.mxu0 %v6409
        %8781 = vmatpush.bf16.msra.mxu0 %v6407
        %8782 = vmatpush.bf16.msra.mxu0 %v6405
        %8783 = vmatpush.bf16.msra.mxu0 %v6403
        %8784 = vmatpush.bf16.msra.mxu0 %v6401
        %8785 = vmatmul.bf16.gmra.mxu0 %v1893
        %v8786 = vpop.f32.mrf.mxu0
        %v8787 = vadd.f32 %v8774, %v8786
        %v8788 = vpop.f32.mrf.mxu0
        %8789 = vdwg.mxu0
        %8790 = vmatpush.bf16.msra.mxu0 %v6431
        %8791 = vmatpush.bf16.msra.mxu0 %v6429
        %8792 = vmatpush.bf16.msra.mxu0 %v6427
        %8793 = vmatpush.bf16.msra.mxu0 %v6425
        %8794 = vmatpush.bf16.msra.mxu0 %v6423
        %8795 = vmatpush.bf16.msra.mxu0 %v6421
        %8796 = vmatpush.bf16.msra.mxu0 %v6419
        %8797 = vmatpush.bf16.msra.mxu0 %v6417
        %8798 = vmatmul.bf16.gmra.mxu0 %v1894
        %v8799 = vpop.f32.mrf.mxu0
        %v8800 = vadd.f32 %v8787, %v8799
        %v8801 = vpop.f32.mrf.mxu0
        %8802 = vdwg.mxu0
        %8803 = vmatpush.bf16.msra.mxu0 %v6447
        %8804 = vmatpush.bf16.msra.mxu0 %v6445
        %8805 = vmatpush.bf16.msra.mxu0 %v6443
        %8806 = vmatpush.bf16.msra.mxu0 %v6441
        %8807 = vmatpush.bf16.msra.mxu0 %v6439
        %8808 = vmatpush.bf16.msra.mxu0 %v6437
        %8809 = vmatpush.bf16.msra.mxu0 %v6435
        %8810 = vmatpush.bf16.msra.mxu0 %v6433
        %8811 = vmatmul.bf16.gmra.mxu0 %v1895
        %v8812 = vpop.f32.mrf.mxu0
        %v8813 = vadd.f32 %v8800, %v8812
        %v8814 = vpop.f32.mrf.mxu0
        %8815 = vdwg.mxu0
        %8816 = vmatpush.bf16.msra.mxu0 %v6463
        %8817 = vmatpush.bf16.msra.mxu0 %v6461
        %8818 = vmatpush.bf16.msra.mxu0 %v6459
        %8819 = vmatpush.bf16.msra.mxu0 %v6457
        %8820 = vmatpush.bf16.msra.mxu0 %v6455
        %8821 = vmatpush.bf16.msra.mxu0 %v6453
        %8822 = vmatpush.bf16.msra.mxu0 %v6451
        %8823 = vmatpush.bf16.msra.mxu0 %v6449
        %8824 = vmatmul.bf16.gmra.mxu0 %v1896
        %v8825 = vpop.f32.mrf.mxu0
        %v8826 = vadd.f32 %v8813, %v8825
        %v8827 = vpop.f32.mrf.mxu0
        %8828 = vdwg.mxu0
        %8829 = vmatpush.bf16.msra.mxu0 %v6479
        %8830 = vmatpush.bf16.msra.mxu0 %v6477
        %8831 = vmatpush.bf16.msra.mxu0 %v6475
        %8832 = vmatpush.bf16.msra.mxu0 %v6473
        %8833 = vmatpush.bf16.msra.mxu0 %v6471
        %8834 = vmatpush.bf16.msra.mxu0 %v6469
        %8835 = vmatpush.bf16.msra.mxu0 %v6467
        %8836 = vmatpush.bf16.msra.mxu0 %v6465
        %8837 = vmatmul.bf16.gmra.mxu0 %v1897
        %v8838 = vpop.f32.mrf.mxu0
        %v8839 = vadd.f32 %v8826, %v8838
        %v8840 = vpop.f32.mrf.mxu0
        %8841 = vdwg.mxu0
        %8842 = vmatpush.bf16.msra.mxu0 %v6495
        %8843 = vmatpush.bf16.msra.mxu0 %v6493
        %8844 = vmatpush.bf16.msra.mxu0 %v6491
        %8845 = vmatpush.bf16.msra.mxu0 %v6489
        %8846 = vmatpush.bf16.msra.mxu0 %v6487
        %8847 = vmatpush.bf16.msra.mxu0 %v6485
        %8848 = vmatpush.bf16.msra.mxu0 %v6483
        %8849 = vmatpush.bf16.msra.mxu0 %v6481
        %8850 = vmatmul.bf16.gmra.mxu0 %v1898
        %v8851 = vpop.f32.mrf.mxu0
        %v8852 = vadd.f32 %v8839, %v8851
        %v8853 = vpop.f32.mrf.mxu0
        %8854 = vdwg.mxu0
        %8855 = vmatpush.bf16.msra.mxu0 %v6511
        %8856 = vmatpush.bf16.msra.mxu0 %v6509
        %8857 = vmatpush.bf16.msra.mxu0 %v6507
        %8858 = vmatpush.bf16.msra.mxu0 %v6505
        %8859 = vmatpush.bf16.msra.mxu0 %v6503
        %8860 = vmatpush.bf16.msra.mxu0 %v6501
        %8861 = vmatpush.bf16.msra.mxu0 %v6499
        %8862 = vmatpush.bf16.msra.mxu0 %v6497
        %8863 = vmatmul.bf16.gmra.mxu0 %v1899
        %v8864 = vpop.f32.mrf.mxu0
        %v8865 = vadd.f32 %v8852, %v8864
        %v8866 = vpop.f32.mrf.mxu0
        %8867 = vdwg.mxu0
        %8868 = vmatpush.bf16.msra.mxu0 %v6527
        %8869 = vmatpush.bf16.msra.mxu0 %v6525
        %8870 = vmatpush.bf16.msra.mxu0 %v6523
        %8871 = vmatpush.bf16.msra.mxu0 %v6521
        %8872 = vmatpush.bf16.msra.mxu0 %v6519
        %8873 = vmatpush.bf16.msra.mxu0 %v6517
        %8874 = vmatpush.bf16.msra.mxu0 %v6515
        %8875 = vmatpush.bf16.msra.mxu0 %v6513
        %8876 = vmatmul.bf16.gmra.mxu0 %v1900
        %v8877 = vpop.f32.mrf.mxu0
        %v8878 = vadd.f32 %v8865, %v8877
        %v8879 = vpop.f32.mrf.mxu0
        %8880 = vdwg.mxu0
        %8881 = vmatpush.bf16.msra.mxu0 %v6543
        %8882 = vmatpush.bf16.msra.mxu0 %v6541
        %8883 = vmatpush.bf16.msra.mxu0 %v6539
        %8884 = vmatpush.bf16.msra.mxu0 %v6537
        %8885 = vmatpush.bf16.msra.mxu0 %v6535
        %8886 = vmatpush.bf16.msra.mxu0 %v6533
        %8887 = vmatpush.bf16.msra.mxu0 %v6531
        %8888 = vmatpush.bf16.msra.mxu0 %v6529
        %8889 = vmatmul.bf16.gmra.mxu0 %v1903
        %v8890 = vpop.f32.mrf.mxu0
        %v8891 = vadd.f32 %v8878, %v8890
        %v8892 = vpop.f32.mrf.mxu0
        %8893 = vdwg.mxu0
        %8894 = vmatpush.bf16.msra.mxu0 %v6559
        %8895 = vmatpush.bf16.msra.mxu0 %v6557
        %8896 = vmatpush.bf16.msra.mxu0 %v6555
        %8897 = vmatpush.bf16.msra.mxu0 %v6553
        %8898 = vmatpush.bf16.msra.mxu0 %v6551
        %8899 = vmatpush.bf16.msra.mxu0 %v6549
        %8900 = vmatpush.bf16.msra.mxu0 %v6547
        %8901 = vmatpush.bf16.msra.mxu0 %v6545
        %8902 = vmatmul.bf16.gmra.mxu0 %v1904
        %v8903 = vpop.f32.mrf.mxu0
        %v8904 = vadd.f32 %v8891, %v8903
        %v8905 = vpop.f32.mrf.mxu0
        %8906 = vdwg.mxu0
        %8907 = vmatpush.bf16.msra.mxu0 %v6575
        %8908 = vmatpush.bf16.msra.mxu0 %v6573
        %8909 = vmatpush.bf16.msra.mxu0 %v6571
        %8910 = vmatpush.bf16.msra.mxu0 %v6569
        %8911 = vmatpush.bf16.msra.mxu0 %v6567
        %8912 = vmatpush.bf16.msra.mxu0 %v6565
        %8913 = vmatpush.bf16.msra.mxu0 %v6563
        %8914 = vmatpush.bf16.msra.mxu0 %v6561
        %8915 = vmatmul.bf16.gmra.mxu0 %v1905
        %v8916 = vpop.f32.mrf.mxu0
        %v8917 = vadd.f32 %v8904, %v8916
        %v8918 = vpop.f32.mrf.mxu0
        %8919 = vdwg.mxu0
        %8920 = vmatpush.bf16.msra.mxu0 %v6591
        %8921 = vmatpush.bf16.msra.mxu0 %v6589
        %8922 = vmatpush.bf16.msra.mxu0 %v6587
        %8923 = vmatpush.bf16.msra.mxu0 %v6585
        %8924 = vmatpush.bf16.msra.mxu0 %v6583
        %8925 = vmatpush.bf16.msra.mxu0 %v6581
        %8926 = vmatpush.bf16.msra.mxu0 %v6579
        %8927 = vmatpush.bf16.msra.mxu0 %v6577
        %8928 = vmatmul.bf16.gmra.mxu0 %v1906
        %v8929 = vpop.f32.mrf.mxu0
        %v8930 = vadd.f32 %v8917, %v8929
        %v8931 = vpop.f32.mrf.mxu0
        %8932 = vdwg.mxu0
        %8933 = vmatpush.bf16.msra.mxu0 %v6607
        %8934 = vmatpush.bf16.msra.mxu0 %v6605
        %8935 = vmatpush.bf16.msra.mxu0 %v6603
        %8936 = vmatpush.bf16.msra.mxu0 %v6601
        %8937 = vmatpush.bf16.msra.mxu0 %v6599
        %8938 = vmatpush.bf16.msra.mxu0 %v6597
        %8939 = vmatpush.bf16.msra.mxu0 %v6595
        %8940 = vmatpush.bf16.msra.mxu0 %v6593
        %8941 = vmatmul.bf16.gmra.mxu0 %v1907
        %v8942 = vpop.f32.mrf.mxu0
        %v8943 = vadd.f32 %v8930, %v8942
        %v8944 = vpop.f32.mrf.mxu0
        %8945 = vdwg.mxu0
        %8946 = vmatpush.bf16.msra.mxu0 %v6623
        %8947 = vmatpush.bf16.msra.mxu0 %v6621
        %8948 = vmatpush.bf16.msra.mxu0 %v6619
        %8949 = vmatpush.bf16.msra.mxu0 %v6617
        %8950 = vmatpush.bf16.msra.mxu0 %v6615
        %8951 = vmatpush.bf16.msra.mxu0 %v6613
        %8952 = vmatpush.bf16.msra.mxu0 %v6611
        %8953 = vmatpush.bf16.msra.mxu0 %v6609
        %8954 = vmatmul.bf16.gmra.mxu0 %v1908
        %v8955 = vpop.f32.mrf.mxu0
        %v8956 = vadd.f32 %v8943, %v8955
        %v8957 = vpop.f32.mrf.mxu0
        %8958 = vdwg.mxu0
        %8959 = vmatpush.bf16.msra.mxu0 %v6639
        %8960 = vmatpush.bf16.msra.mxu0 %v6637
        %8961 = vmatpush.bf16.msra.mxu0 %v6635
        %8962 = vmatpush.bf16.msra.mxu0 %v6633
        %8963 = vmatpush.bf16.msra.mxu0 %v6631
        %8964 = vmatpush.bf16.msra.mxu0 %v6629
        %8965 = vmatpush.bf16.msra.mxu0 %v6627
        %8966 = vmatpush.bf16.msra.mxu0 %v6625
        %8967 = vmatmul.bf16.gmra.mxu0 %v1909
        %v8968 = vpop.f32.mrf.mxu0
        %v8969 = vadd.f32 %v8956, %v8968
        %v8970 = vpop.f32.mrf.mxu0
        %8971 = vdwg.mxu0
        %8972 = vmatpush.bf16.msra.mxu0 %v6655
        %8973 = vmatpush.bf16.msra.mxu0 %v6653
        %8974 = vmatpush.bf16.msra.mxu0 %v6651
        %8975 = vmatpush.bf16.msra.mxu0 %v6649
        %8976 = vmatpush.bf16.msra.mxu0 %v6647
        %8977 = vmatpush.bf16.msra.mxu0 %v6645
        %8978 = vmatpush.bf16.msra.mxu0 %v6643
        %8979 = vmatpush.bf16.msra.mxu0 %v6641
        %8980 = vmatmul.bf16.gmra.mxu0 %v1910
        %v8981 = vpop.f32.mrf.mxu0
        %v8982 = vadd.f32 %v8969, %v8981
        %v8983 = vpop.f32.mrf.mxu0
        %8984 = vdwg.mxu0
        %8985 = vmatpush.bf16.msra.mxu0 %v6671
        %8986 = vmatpush.bf16.msra.mxu0 %v6669
        %8987 = vmatpush.bf16.msra.mxu0 %v6667
        %8988 = vmatpush.bf16.msra.mxu0 %v6665
        %8989 = vmatpush.bf16.msra.mxu0 %v6663
        %8990 = vmatpush.bf16.msra.mxu0 %v6661
        %8991 = vmatpush.bf16.msra.mxu0 %v6659
        %8992 = vmatpush.bf16.msra.mxu0 %v6657
        %8993 = vmatmul.bf16.gmra.mxu0 %v1913
        %v8994 = vpop.f32.mrf.mxu0
        %v8995 = vadd.f32 %v8982, %v8994
        %v8996 = vpop.f32.mrf.mxu0
        %8997 = vdwg.mxu0
        %8998 = vmatpush.bf16.msra.mxu0 %v6687
        %8999 = vmatpush.bf16.msra.mxu0 %v6685
        %9000 = vmatpush.bf16.msra.mxu0 %v6683
        %9001 = vmatpush.bf16.msra.mxu0 %v6681
        %9002 = vmatpush.bf16.msra.mxu0 %v6679
        %9003 = vmatpush.bf16.msra.mxu0 %v6677
        %9004 = vmatpush.bf16.msra.mxu0 %v6675
        %9005 = vmatpush.bf16.msra.mxu0 %v6673
        %9006 = vmatmul.bf16.gmra.mxu0 %v1914
        %v9007 = vpop.f32.mrf.mxu0
        %v9008 = vadd.f32 %v8995, %v9007
        %v9009 = vpop.f32.mrf.mxu0
        %9010 = vdwg.mxu0
        %9011 = vmatpush.bf16.msra.mxu0 %v6703
        %9012 = vmatpush.bf16.msra.mxu0 %v6701
        %9013 = vmatpush.bf16.msra.mxu0 %v6699
        %9014 = vmatpush.bf16.msra.mxu0 %v6697
        %9015 = vmatpush.bf16.msra.mxu0 %v6695
        %9016 = vmatpush.bf16.msra.mxu0 %v6693
        %9017 = vmatpush.bf16.msra.mxu0 %v6691
        %9018 = vmatpush.bf16.msra.mxu0 %v6689
        %9019 = vmatmul.bf16.gmra.mxu0 %v1915
        %v9020 = vpop.f32.mrf.mxu0
        %v9021 = vadd.f32 %v9008, %v9020
        %v9022 = vpop.f32.mrf.mxu0
        %9023 = vdwg.mxu0
        %9024 = vmatpush.bf16.msra.mxu0 %v6719
        %9025 = vmatpush.bf16.msra.mxu0 %v6717
        %9026 = vmatpush.bf16.msra.mxu0 %v6715
        %9027 = vmatpush.bf16.msra.mxu0 %v6713
        %9028 = vmatpush.bf16.msra.mxu0 %v6711
        %9029 = vmatpush.bf16.msra.mxu0 %v6709
        %9030 = vmatpush.bf16.msra.mxu0 %v6707
        %9031 = vmatpush.bf16.msra.mxu0 %v6705
        %9032 = vmatmul.bf16.gmra.mxu0 %v1916
        %v9033 = vpop.f32.mrf.mxu0
        %v9034 = vadd.f32 %v9021, %v9033
        %v9035 = vpop.f32.mrf.mxu0
        %9036 = vdwg.mxu0
        %9037 = vmatpush.bf16.msra.mxu0 %v6735
        %9038 = vmatpush.bf16.msra.mxu0 %v6733
        %9039 = vmatpush.bf16.msra.mxu0 %v6731
        %9040 = vmatpush.bf16.msra.mxu0 %v6729
        %9041 = vmatpush.bf16.msra.mxu0 %v6727
        %9042 = vmatpush.bf16.msra.mxu0 %v6725
        %9043 = vmatpush.bf16.msra.mxu0 %v6723
        %9044 = vmatpush.bf16.msra.mxu0 %v6721
        %9045 = vmatmul.bf16.gmra.mxu0 %v1917
        %v9046 = vpop.f32.mrf.mxu0
        %v9047 = vadd.f32 %v9034, %v9046
        %v9048 = vpop.f32.mrf.mxu0
        %9049 = vdwg.mxu0
        %9050 = vmatpush.bf16.msra.mxu0 %v6751
        %9051 = vmatpush.bf16.msra.mxu0 %v6749
        %9052 = vmatpush.bf16.msra.mxu0 %v6747
        %9053 = vmatpush.bf16.msra.mxu0 %v6745
        %9054 = vmatpush.bf16.msra.mxu0 %v6743
        %9055 = vmatpush.bf16.msra.mxu0 %v6741
        %9056 = vmatpush.bf16.msra.mxu0 %v6739
        %9057 = vmatpush.bf16.msra.mxu0 %v6737
        %9058 = vmatmul.bf16.gmra.mxu0 %v1918
        %v9059 = vpop.f32.mrf.mxu0
        %v9060 = vadd.f32 %v9047, %v9059
        %v9061 = vpop.f32.mrf.mxu0
        %9062 = vdwg.mxu0
        %9063 = vmatpush.bf16.msra.mxu0 %v6767
        %9064 = vmatpush.bf16.msra.mxu0 %v6765
        %9065 = vmatpush.bf16.msra.mxu0 %v6763
        %9066 = vmatpush.bf16.msra.mxu0 %v6761
        %9067 = vmatpush.bf16.msra.mxu0 %v6759
        %9068 = vmatpush.bf16.msra.mxu0 %v6757
        %9069 = vmatpush.bf16.msra.mxu0 %v6755
        %9070 = vmatpush.bf16.msra.mxu0 %v6753
        %9071 = vmatmul.bf16.gmra.mxu0 %v1919
        %v9072 = vpop.f32.mrf.mxu0
        %v9073 = vadd.f32 %v9060, %v9072
        %v9074 = vpop.f32.mrf.mxu0
        %9075 = vdwg.mxu0
        %9076 = vmatpush.bf16.msra.mxu0 %v6783
        %9077 = vmatpush.bf16.msra.mxu0 %v6781
        %9078 = vmatpush.bf16.msra.mxu0 %v6779
        %9079 = vmatpush.bf16.msra.mxu0 %v6777
        %9080 = vmatpush.bf16.msra.mxu0 %v6775
        %9081 = vmatpush.bf16.msra.mxu0 %v6773
        %9082 = vmatpush.bf16.msra.mxu0 %v6771
        %9083 = vmatpush.bf16.msra.mxu0 %v6769
        %9084 = vmatmul.bf16.gmra.mxu0 %v1920
        %v9085 = vpop.f32.mrf.mxu0
        %v9086 = vadd.f32 %v9073, %v9085
        %v9087 = vpop.f32.mrf.mxu0
        %9088 = vdwg.mxu0
        %9089 = vmatpush.bf16.msra.mxu0 %v6799
        %9090 = vmatpush.bf16.msra.mxu0 %v6797
        %9091 = vmatpush.bf16.msra.mxu0 %v6795
        %9092 = vmatpush.bf16.msra.mxu0 %v6793
        %9093 = vmatpush.bf16.msra.mxu0 %v6791
        %9094 = vmatpush.bf16.msra.mxu0 %v6789
        %9095 = vmatpush.bf16.msra.mxu0 %v6787
        %9096 = vmatpush.bf16.msra.mxu0 %v6785
        %9097 = vmatmul.bf16.gmra.mxu0 %v1923
        %v9098 = vpop.f32.mrf.mxu0
        %v9099 = vadd.f32 %v9086, %v9098
        %v9100 = vpop.f32.mrf.mxu0
        %9101 = vdwg.mxu0
        %9102 = vmatpush.bf16.msra.mxu0 %v6815
        %9103 = vmatpush.bf16.msra.mxu0 %v6813
        %9104 = vmatpush.bf16.msra.mxu0 %v6811
        %9105 = vmatpush.bf16.msra.mxu0 %v6809
        %9106 = vmatpush.bf16.msra.mxu0 %v6807
        %9107 = vmatpush.bf16.msra.mxu0 %v6805
        %9108 = vmatpush.bf16.msra.mxu0 %v6803
        %9109 = vmatpush.bf16.msra.mxu0 %v6801
        %9110 = vmatmul.bf16.gmra.mxu0 %v1924
        %v9111 = vpop.f32.mrf.mxu0
        %v9112 = vadd.f32 %v9099, %v9111
        %v9113 = vpop.f32.mrf.mxu0
        %9114 = vdwg.mxu0
        %9115 = vmatpush.bf16.msra.mxu0 %v6831
        %9116 = vmatpush.bf16.msra.mxu0 %v6829
        %9117 = vmatpush.bf16.msra.mxu0 %v6827
        %9118 = vmatpush.bf16.msra.mxu0 %v6825
        %9119 = vmatpush.bf16.msra.mxu0 %v6823
        %9120 = vmatpush.bf16.msra.mxu0 %v6821
        %9121 = vmatpush.bf16.msra.mxu0 %v6819
        %9122 = vmatpush.bf16.msra.mxu0 %v6817
        %9123 = vmatmul.bf16.gmra.mxu0 %v1925
        %v9124 = vpop.f32.mrf.mxu0
        %v9125 = vadd.f32 %v9112, %v9124
        %v9126 = vpop.f32.mrf.mxu0
        %9127 = vdwg.mxu0
        %9128 = vmatpush.bf16.msra.mxu0 %v6847
        %9129 = vmatpush.bf16.msra.mxu0 %v6845
        %9130 = vmatpush.bf16.msra.mxu0 %v6843
        %9131 = vmatpush.bf16.msra.mxu0 %v6841
        %9132 = vmatpush.bf16.msra.mxu0 %v6839
        %9133 = vmatpush.bf16.msra.mxu0 %v6837
        %9134 = vmatpush.bf16.msra.mxu0 %v6835
        %9135 = vmatpush.bf16.msra.mxu0 %v6833
        %9136 = vmatmul.bf16.gmra.mxu0 %v1926
        %v9137 = vpop.f32.mrf.mxu0
        %v9138 = vadd.f32 %v9125, %v9137
        %v9139 = vpop.f32.mrf.mxu0
        %9140 = vdwg.mxu0
        %9141 = vmatpush.bf16.msra.mxu0 %v6863
        %9142 = vmatpush.bf16.msra.mxu0 %v6861
        %9143 = vmatpush.bf16.msra.mxu0 %v6859
        %9144 = vmatpush.bf16.msra.mxu0 %v6857
        %9145 = vmatpush.bf16.msra.mxu0 %v6855
        %9146 = vmatpush.bf16.msra.mxu0 %v6853
        %9147 = vmatpush.bf16.msra.mxu0 %v6851
        %9148 = vmatpush.bf16.msra.mxu0 %v6849
        %9149 = vmatmul.bf16.gmra.mxu0 %v1927
        %v9150 = vpop.f32.mrf.mxu0
        %v9151 = vadd.f32 %v9138, %v9150
        %v9152 = vpop.f32.mrf.mxu0
        %9153 = vdwg.mxu0
        %9154 = vmatpush.bf16.msra.mxu0 %v6879
        %9155 = vmatpush.bf16.msra.mxu0 %v6877
        %9156 = vmatpush.bf16.msra.mxu0 %v6875
        %9157 = vmatpush.bf16.msra.mxu0 %v6873
        %9158 = vmatpush.bf16.msra.mxu0 %v6871
        %9159 = vmatpush.bf16.msra.mxu0 %v6869
        %9160 = vmatpush.bf16.msra.mxu0 %v6867
        %9161 = vmatpush.bf16.msra.mxu0 %v6865
        %9162 = vmatmul.bf16.gmra.mxu0 %v1928
        %v9163 = vpop.f32.mrf.mxu0
        %v9164 = vadd.f32 %v9151, %v9163
        %v9165 = vpop.f32.mrf.mxu0
        %9166 = vdwg.mxu0
        %9167 = vmatpush.bf16.msra.mxu0 %v6895
        %9168 = vmatpush.bf16.msra.mxu0 %v6893
        %9169 = vmatpush.bf16.msra.mxu0 %v6891
        %9170 = vmatpush.bf16.msra.mxu0 %v6889
        %9171 = vmatpush.bf16.msra.mxu0 %v6887
        %9172 = vmatpush.bf16.msra.mxu0 %v6885
        %9173 = vmatpush.bf16.msra.mxu0 %v6883
        %9174 = vmatpush.bf16.msra.mxu0 %v6881
        %9175 = vmatmul.bf16.gmra.mxu0 %v1929
        %v9176 = vpop.f32.mrf.mxu0
        %v9177 = vadd.f32 %v9164, %v9176
        %v9178 = vpop.f32.mrf.mxu0
        %9179 = vdwg.mxu0
        %9180 = vmatpush.bf16.msra.mxu0 %v6911
        %9181 = vmatpush.bf16.msra.mxu0 %v6909
        %9182 = vmatpush.bf16.msra.mxu0 %v6907
        %9183 = vmatpush.bf16.msra.mxu0 %v6905
        %9184 = vmatpush.bf16.msra.mxu0 %v6903
        %9185 = vmatpush.bf16.msra.mxu0 %v6901
        %9186 = vmatpush.bf16.msra.mxu0 %v6899
        %9187 = vmatpush.bf16.msra.mxu0 %v6897
        %9188 = vmatmul.bf16.gmra.mxu0 %v1930
        %v9189 = vpop.f32.mrf.mxu0
        %v9190 = vadd.f32 %v9177, %v9189
        %v9191 = vpop.f32.mrf.mxu0
        %9192 = vdwg.mxu0
        %9193 = vmatpush.bf16.msra.mxu0 %v6927
        %9194 = vmatpush.bf16.msra.mxu0 %v6925
        %9195 = vmatpush.bf16.msra.mxu0 %v6923
        %9196 = vmatpush.bf16.msra.mxu0 %v6921
        %9197 = vmatpush.bf16.msra.mxu0 %v6919
        %9198 = vmatpush.bf16.msra.mxu0 %v6917
        %9199 = vmatpush.bf16.msra.mxu0 %v6915
        %9200 = vmatpush.bf16.msra.mxu0 %v6913
        %9201 = vmatmul.bf16.gmra.mxu0 %v1933
        %v9202 = vpop.f32.mrf.mxu0
        %v9203 = vadd.f32 %v9190, %v9202
        %v9204 = vpop.f32.mrf.mxu0
        %9205 = vdwg.mxu0
        %9206 = vmatpush.bf16.msra.mxu0 %v6943
        %9207 = vmatpush.bf16.msra.mxu0 %v6941
        %9208 = vmatpush.bf16.msra.mxu0 %v6939
        %9209 = vmatpush.bf16.msra.mxu0 %v6937
        %9210 = vmatpush.bf16.msra.mxu0 %v6935
        %9211 = vmatpush.bf16.msra.mxu0 %v6933
        %9212 = vmatpush.bf16.msra.mxu0 %v6931
        %9213 = vmatpush.bf16.msra.mxu0 %v6929
        %9214 = vmatmul.bf16.gmra.mxu0 %v1934
        %v9215 = vpop.f32.mrf.mxu0
        %v9216 = vadd.f32 %v9203, %v9215
        %v9217 = vpop.f32.mrf.mxu0
        %9218 = vdwg.mxu0
        %9219 = vmatpush.bf16.msra.mxu0 %v6959
        %9220 = vmatpush.bf16.msra.mxu0 %v6957
        %9221 = vmatpush.bf16.msra.mxu0 %v6955
        %9222 = vmatpush.bf16.msra.mxu0 %v6953
        %9223 = vmatpush.bf16.msra.mxu0 %v6951
        %9224 = vmatpush.bf16.msra.mxu0 %v6949
        %9225 = vmatpush.bf16.msra.mxu0 %v6947
        %9226 = vmatpush.bf16.msra.mxu0 %v6945
        %9227 = vmatmul.bf16.gmra.mxu0 %v1935
        %v9228 = vpop.f32.mrf.mxu0
        %v9229 = vadd.f32 %v9216, %v9228
        %v9230 = vpop.f32.mrf.mxu0
        %9231 = vdwg.mxu0
        %9232 = vmatpush.bf16.msra.mxu0 %v6975
        %9233 = vmatpush.bf16.msra.mxu0 %v6973
        %9234 = vmatpush.bf16.msra.mxu0 %v6971
        %9235 = vmatpush.bf16.msra.mxu0 %v6969
        %9236 = vmatpush.bf16.msra.mxu0 %v6967
        %9237 = vmatpush.bf16.msra.mxu0 %v6965
        %9238 = vmatpush.bf16.msra.mxu0 %v6963
        %9239 = vmatpush.bf16.msra.mxu0 %v6961
        %9240 = vmatmul.bf16.gmra.mxu0 %v1936
        %v9241 = vpop.f32.mrf.mxu0
        %v9242 = vadd.f32 %v9229, %v9241
        %v9243 = vpop.f32.mrf.mxu0
        %9244 = vdwg.mxu0
        %9245 = vmatpush.bf16.msra.mxu0 %v6991
        %9246 = vmatpush.bf16.msra.mxu0 %v6989
        %9247 = vmatpush.bf16.msra.mxu0 %v6987
        %9248 = vmatpush.bf16.msra.mxu0 %v6985
        %9249 = vmatpush.bf16.msra.mxu0 %v6983
        %9250 = vmatpush.bf16.msra.mxu0 %v6981
        %9251 = vmatpush.bf16.msra.mxu0 %v6979
        %9252 = vmatpush.bf16.msra.mxu0 %v6977
        %9253 = vmatmul.bf16.gmra.mxu0 %v1937
        %v9254 = vpop.f32.mrf.mxu0
        %v9255 = vadd.f32 %v9242, %v9254
        %v9256 = vpop.f32.mrf.mxu0
        %9257 = vdwg.mxu0
        %9258 = vmatpush.bf16.msra.mxu0 %v7007
        %9259 = vmatpush.bf16.msra.mxu0 %v7005
        %9260 = vmatpush.bf16.msra.mxu0 %v7003
        %9261 = vmatpush.bf16.msra.mxu0 %v7001
        %9262 = vmatpush.bf16.msra.mxu0 %v6999
        %9263 = vmatpush.bf16.msra.mxu0 %v6997
        %9264 = vmatpush.bf16.msra.mxu0 %v6995
        %9265 = vmatpush.bf16.msra.mxu0 %v6993
        %9266 = vmatmul.bf16.gmra.mxu0 %v1938
        %v9267 = vpop.f32.mrf.mxu0
        %v9268 = vadd.f32 %v9255, %v9267
        %v9269 = vpop.f32.mrf.mxu0
        %9270 = vdwg.mxu0
        %9271 = vmatpush.bf16.msra.mxu0 %v5776
        %9272 = vmatpush.bf16.msra.mxu0 %v5774
        %9273 = vmatpush.bf16.msra.mxu0 %v5772
        %9274 = vmatpush.bf16.msra.mxu0 %v5770
        %9275 = vmatpush.bf16.msra.mxu0 %v5768
        %9276 = vmatpush.bf16.msra.mxu0 %v5766
        %9277 = vmatpush.bf16.msra.mxu0 %v5764
        %9278 = vmatpush.bf16.msra.mxu0 %v5762
        %9279 = vmatmul.bf16.gmra.mxu0 %v1843
        %v9280 = vpop.f32.mrf.mxu0
        %v9281 = vadd.f32 0.0, %v9280
        %v9282 = vpop.f32.mrf.mxu0
        %9283 = vdwg.mxu0
        %9284 = vmatpush.bf16.msra.mxu0 %v5792
        %9285 = vmatpush.bf16.msra.mxu0 %v5790
        %9286 = vmatpush.bf16.msra.mxu0 %v5788
        %9287 = vmatpush.bf16.msra.mxu0 %v5786
        %9288 = vmatpush.bf16.msra.mxu0 %v5784
        %9289 = vmatpush.bf16.msra.mxu0 %v5782
        %9290 = vmatpush.bf16.msra.mxu0 %v5780
        %9291 = vmatpush.bf16.msra.mxu0 %v5778
        %9292 = vmatmul.bf16.gmra.mxu0 %v1844
        %v9293 = vpop.f32.mrf.mxu0
        %v9294 = vadd.f32 %v9281, %v9293
        %v9295 = vpop.f32.mrf.mxu0
        %9296 = vdwg.mxu0
        %9297 = vmatpush.bf16.msra.mxu0 %v5808
        %9298 = vmatpush.bf16.msra.mxu0 %v5806
        %9299 = vmatpush.bf16.msra.mxu0 %v5804
        %9300 = vmatpush.bf16.msra.mxu0 %v5802
        %9301 = vmatpush.bf16.msra.mxu0 %v5800
        %9302 = vmatpush.bf16.msra.mxu0 %v5798
        %9303 = vmatpush.bf16.msra.mxu0 %v5796
        %9304 = vmatpush.bf16.msra.mxu0 %v5794
        %9305 = vmatmul.bf16.gmra.mxu0 %v1845
        %v9306 = vpop.f32.mrf.mxu0
        %v9307 = vadd.f32 %v9294, %v9306
        %v9308 = vpop.f32.mrf.mxu0
        %9309 = vdwg.mxu0
        %9310 = vmatpush.bf16.msra.mxu0 %v5824
        %9311 = vmatpush.bf16.msra.mxu0 %v5822
        %9312 = vmatpush.bf16.msra.mxu0 %v5820
        %9313 = vmatpush.bf16.msra.mxu0 %v5818
        %9314 = vmatpush.bf16.msra.mxu0 %v5816
        %9315 = vmatpush.bf16.msra.mxu0 %v5814
        %9316 = vmatpush.bf16.msra.mxu0 %v5812
        %9317 = vmatpush.bf16.msra.mxu0 %v5810
        %9318 = vmatmul.bf16.gmra.mxu0 %v1846
        %v9319 = vpop.f32.mrf.mxu0
        %v9320 = vadd.f32 %v9307, %v9319
        %v9321 = vpop.f32.mrf.mxu0
        %9322 = vdwg.mxu0
        %9323 = vmatpush.bf16.msra.mxu0 %v5840
        %9324 = vmatpush.bf16.msra.mxu0 %v5838
        %9325 = vmatpush.bf16.msra.mxu0 %v5836
        %9326 = vmatpush.bf16.msra.mxu0 %v5834
        %9327 = vmatpush.bf16.msra.mxu0 %v5832
        %9328 = vmatpush.bf16.msra.mxu0 %v5830
        %9329 = vmatpush.bf16.msra.mxu0 %v5828
        %9330 = vmatpush.bf16.msra.mxu0 %v5826
        %9331 = vmatmul.bf16.gmra.mxu0 %v1847
        %v9332 = vpop.f32.mrf.mxu0
        %v9333 = vadd.f32 %v9320, %v9332
        %v9334 = vpop.f32.mrf.mxu0
        %9335 = vdwg.mxu0
        %9336 = vmatpush.bf16.msra.mxu0 %v5856
        %9337 = vmatpush.bf16.msra.mxu0 %v5854
        %9338 = vmatpush.bf16.msra.mxu0 %v5852
        %9339 = vmatpush.bf16.msra.mxu0 %v5850
        %9340 = vmatpush.bf16.msra.mxu0 %v5848
        %9341 = vmatpush.bf16.msra.mxu0 %v5846
        %9342 = vmatpush.bf16.msra.mxu0 %v5844
        %9343 = vmatpush.bf16.msra.mxu0 %v5842
        %9344 = vmatmul.bf16.gmra.mxu0 %v1848
        %v9345 = vpop.f32.mrf.mxu0
        %v9346 = vadd.f32 %v9333, %v9345
        %v9347 = vpop.f32.mrf.mxu0
        %9348 = vdwg.mxu0
        %9349 = vmatpush.bf16.msra.mxu0 %v5872
        %9350 = vmatpush.bf16.msra.mxu0 %v5870
        %9351 = vmatpush.bf16.msra.mxu0 %v5868
        %9352 = vmatpush.bf16.msra.mxu0 %v5866
        %9353 = vmatpush.bf16.msra.mxu0 %v5864
        %9354 = vmatpush.bf16.msra.mxu0 %v5862
        %9355 = vmatpush.bf16.msra.mxu0 %v5860
        %9356 = vmatpush.bf16.msra.mxu0 %v5858
        %9357 = vmatmul.bf16.gmra.mxu0 %v1849
        %v9358 = vpop.f32.mrf.mxu0
        %v9359 = vadd.f32 %v9346, %v9358
        %v9360 = vpop.f32.mrf.mxu0
        %9361 = vdwg.mxu0
        %9362 = vmatpush.bf16.msra.mxu0 %v5888
        %9363 = vmatpush.bf16.msra.mxu0 %v5886
        %9364 = vmatpush.bf16.msra.mxu0 %v5884
        %9365 = vmatpush.bf16.msra.mxu0 %v5882
        %9366 = vmatpush.bf16.msra.mxu0 %v5880
        %9367 = vmatpush.bf16.msra.mxu0 %v5878
        %9368 = vmatpush.bf16.msra.mxu0 %v5876
        %9369 = vmatpush.bf16.msra.mxu0 %v5874
        %9370 = vmatmul.bf16.gmra.mxu0 %v1850
        %v9371 = vpop.f32.mrf.mxu0
        %v9372 = vadd.f32 %v9359, %v9371
        %v9373 = vpop.f32.mrf.mxu0
        %9374 = vdwg.mxu0
        %9375 = vmatpush.bf16.msra.mxu0 %v5904
        %9376 = vmatpush.bf16.msra.mxu0 %v5902
        %9377 = vmatpush.bf16.msra.mxu0 %v5900
        %9378 = vmatpush.bf16.msra.mxu0 %v5898
        %9379 = vmatpush.bf16.msra.mxu0 %v5896
        %9380 = vmatpush.bf16.msra.mxu0 %v5894
        %9381 = vmatpush.bf16.msra.mxu0 %v5892
        %9382 = vmatpush.bf16.msra.mxu0 %v5890
        %9383 = vmatmul.bf16.gmra.mxu0 %v1853
        %v9384 = vpop.f32.mrf.mxu0
        %v9385 = vadd.f32 %v9372, %v9384
        %v9386 = vpop.f32.mrf.mxu0
        %9387 = vdwg.mxu0
        %9388 = vmatpush.bf16.msra.mxu0 %v5920
        %9389 = vmatpush.bf16.msra.mxu0 %v5918
        %9390 = vmatpush.bf16.msra.mxu0 %v5916
        %9391 = vmatpush.bf16.msra.mxu0 %v5914
        %9392 = vmatpush.bf16.msra.mxu0 %v5912
        %9393 = vmatpush.bf16.msra.mxu0 %v5910
        %9394 = vmatpush.bf16.msra.mxu0 %v5908
        %9395 = vmatpush.bf16.msra.mxu0 %v5906
        %9396 = vmatmul.bf16.gmra.mxu0 %v1854
        %v9397 = vpop.f32.mrf.mxu0
        %v9398 = vadd.f32 %v9385, %v9397
        %v9399 = vpop.f32.mrf.mxu0
        %9400 = vdwg.mxu0
        %9401 = vmatpush.bf16.msra.mxu0 %v5936
        %9402 = vmatpush.bf16.msra.mxu0 %v5934
        %9403 = vmatpush.bf16.msra.mxu0 %v5932
        %9404 = vmatpush.bf16.msra.mxu0 %v5930
        %9405 = vmatpush.bf16.msra.mxu0 %v5928
        %9406 = vmatpush.bf16.msra.mxu0 %v5926
        %9407 = vmatpush.bf16.msra.mxu0 %v5924
        %9408 = vmatpush.bf16.msra.mxu0 %v5922
        %9409 = vmatmul.bf16.gmra.mxu0 %v1855
        %v9410 = vpop.f32.mrf.mxu0
        %v9411 = vadd.f32 %v9398, %v9410
        %v9412 = vpop.f32.mrf.mxu0
        %9413 = vdwg.mxu0
        %9414 = vmatpush.bf16.msra.mxu0 %v5952
        %9415 = vmatpush.bf16.msra.mxu0 %v5950
        %9416 = vmatpush.bf16.msra.mxu0 %v5948
        %9417 = vmatpush.bf16.msra.mxu0 %v5946
        %9418 = vmatpush.bf16.msra.mxu0 %v5944
        %9419 = vmatpush.bf16.msra.mxu0 %v5942
        %9420 = vmatpush.bf16.msra.mxu0 %v5940
        %9421 = vmatpush.bf16.msra.mxu0 %v5938
        %9422 = vmatmul.bf16.gmra.mxu0 %v1856
        %v9423 = vpop.f32.mrf.mxu0
        %v9424 = vadd.f32 %v9411, %v9423
        %v9425 = vpop.f32.mrf.mxu0
        %9426 = vdwg.mxu0
        %9427 = vmatpush.bf16.msra.mxu0 %v5968
        %9428 = vmatpush.bf16.msra.mxu0 %v5966
        %9429 = vmatpush.bf16.msra.mxu0 %v5964
        %9430 = vmatpush.bf16.msra.mxu0 %v5962
        %9431 = vmatpush.bf16.msra.mxu0 %v5960
        %9432 = vmatpush.bf16.msra.mxu0 %v5958
        %9433 = vmatpush.bf16.msra.mxu0 %v5956
        %9434 = vmatpush.bf16.msra.mxu0 %v5954
        %9435 = vmatmul.bf16.gmra.mxu0 %v1857
        %v9436 = vpop.f32.mrf.mxu0
        %v9437 = vadd.f32 %v9424, %v9436
        %v9438 = vpop.f32.mrf.mxu0
        %9439 = vdwg.mxu0
        %9440 = vmatpush.bf16.msra.mxu0 %v5984
        %9441 = vmatpush.bf16.msra.mxu0 %v5982
        %9442 = vmatpush.bf16.msra.mxu0 %v5980
        %9443 = vmatpush.bf16.msra.mxu0 %v5978
        %9444 = vmatpush.bf16.msra.mxu0 %v5976
        %9445 = vmatpush.bf16.msra.mxu0 %v5974
        %9446 = vmatpush.bf16.msra.mxu0 %v5972
        %9447 = vmatpush.bf16.msra.mxu0 %v5970
        %9448 = vmatmul.bf16.gmra.mxu0 %v1858
        %v9449 = vpop.f32.mrf.mxu0
        %v9450 = vadd.f32 %v9437, %v9449
        %v9451 = vpop.f32.mrf.mxu0
        %9452 = vdwg.mxu0
        %9453 = vmatpush.bf16.msra.mxu0 %v6000
        %9454 = vmatpush.bf16.msra.mxu0 %v5998
        %9455 = vmatpush.bf16.msra.mxu0 %v5996
        %9456 = vmatpush.bf16.msra.mxu0 %v5994
        %9457 = vmatpush.bf16.msra.mxu0 %v5992
        %9458 = vmatpush.bf16.msra.mxu0 %v5990
        %9459 = vmatpush.bf16.msra.mxu0 %v5988
        %9460 = vmatpush.bf16.msra.mxu0 %v5986
        %9461 = vmatmul.bf16.gmra.mxu0 %v1859
        %v9462 = vpop.f32.mrf.mxu0
        %v9463 = vadd.f32 %v9450, %v9462
        %v9464 = vpop.f32.mrf.mxu0
        %9465 = vdwg.mxu0
        %9466 = vmatpush.bf16.msra.mxu0 %v6016
        %9467 = vmatpush.bf16.msra.mxu0 %v6014
        %9468 = vmatpush.bf16.msra.mxu0 %v6012
        %9469 = vmatpush.bf16.msra.mxu0 %v6010
        %9470 = vmatpush.bf16.msra.mxu0 %v6008
        %9471 = vmatpush.bf16.msra.mxu0 %v6006
        %9472 = vmatpush.bf16.msra.mxu0 %v6004
        %9473 = vmatpush.bf16.msra.mxu0 %v6002
        %9474 = vmatmul.bf16.gmra.mxu0 %v1860
        %v9475 = vpop.f32.mrf.mxu0
        %v9476 = vadd.f32 %v9463, %v9475
        %v9477 = vpop.f32.mrf.mxu0
        %9478 = vdwg.mxu0
        %9479 = vmatpush.bf16.msra.mxu0 %v6032
        %9480 = vmatpush.bf16.msra.mxu0 %v6030
        %9481 = vmatpush.bf16.msra.mxu0 %v6028
        %9482 = vmatpush.bf16.msra.mxu0 %v6026
        %9483 = vmatpush.bf16.msra.mxu0 %v6024
        %9484 = vmatpush.bf16.msra.mxu0 %v6022
        %9485 = vmatpush.bf16.msra.mxu0 %v6020
        %9486 = vmatpush.bf16.msra.mxu0 %v6018
        %9487 = vmatmul.bf16.gmra.mxu0 %v1863
        %v9488 = vpop.f32.mrf.mxu0
        %v9489 = vadd.f32 %v9476, %v9488
        %v9490 = vpop.f32.mrf.mxu0
        %9491 = vdwg.mxu0
        %9492 = vmatpush.bf16.msra.mxu0 %v6048
        %9493 = vmatpush.bf16.msra.mxu0 %v6046
        %9494 = vmatpush.bf16.msra.mxu0 %v6044
        %9495 = vmatpush.bf16.msra.mxu0 %v6042
        %9496 = vmatpush.bf16.msra.mxu0 %v6040
        %9497 = vmatpush.bf16.msra.mxu0 %v6038
        %9498 = vmatpush.bf16.msra.mxu0 %v6036
        %9499 = vmatpush.bf16.msra.mxu0 %v6034
        %9500 = vmatmul.bf16.gmra.mxu0 %v1864
        %v9501 = vpop.f32.mrf.mxu0
        %v9502 = vadd.f32 %v9489, %v9501
        %v9503 = vpop.f32.mrf.mxu0
        %9504 = vdwg.mxu0
        %9505 = vmatpush.bf16.msra.mxu0 %v6064
        %9506 = vmatpush.bf16.msra.mxu0 %v6062
        %9507 = vmatpush.bf16.msra.mxu0 %v6060
        %9508 = vmatpush.bf16.msra.mxu0 %v6058
        %9509 = vmatpush.bf16.msra.mxu0 %v6056
        %9510 = vmatpush.bf16.msra.mxu0 %v6054
        %9511 = vmatpush.bf16.msra.mxu0 %v6052
        %9512 = vmatpush.bf16.msra.mxu0 %v6050
        %9513 = vmatmul.bf16.gmra.mxu0 %v1865
        %v9514 = vpop.f32.mrf.mxu0
        %v9515 = vadd.f32 %v9502, %v9514
        %v9516 = vpop.f32.mrf.mxu0
        %9517 = vdwg.mxu0
        %9518 = vmatpush.bf16.msra.mxu0 %v6080
        %9519 = vmatpush.bf16.msra.mxu0 %v6078
        %9520 = vmatpush.bf16.msra.mxu0 %v6076
        %9521 = vmatpush.bf16.msra.mxu0 %v6074
        %9522 = vmatpush.bf16.msra.mxu0 %v6072
        %9523 = vmatpush.bf16.msra.mxu0 %v6070
        %9524 = vmatpush.bf16.msra.mxu0 %v6068
        %9525 = vmatpush.bf16.msra.mxu0 %v6066
        %9526 = vmatmul.bf16.gmra.mxu0 %v1866
        %v9527 = vpop.f32.mrf.mxu0
        %v9528 = vadd.f32 %v9515, %v9527
        %v9529 = vpop.f32.mrf.mxu0
        %9530 = vdwg.mxu0
        %9531 = vmatpush.bf16.msra.mxu0 %v6096
        %9532 = vmatpush.bf16.msra.mxu0 %v6094
        %9533 = vmatpush.bf16.msra.mxu0 %v6092
        %9534 = vmatpush.bf16.msra.mxu0 %v6090
        %9535 = vmatpush.bf16.msra.mxu0 %v6088
        %9536 = vmatpush.bf16.msra.mxu0 %v6086
        %9537 = vmatpush.bf16.msra.mxu0 %v6084
        %9538 = vmatpush.bf16.msra.mxu0 %v6082
        %9539 = vmatmul.bf16.gmra.mxu0 %v1867
        %v9540 = vpop.f32.mrf.mxu0
        %v9541 = vadd.f32 %v9528, %v9540
        %v9542 = vpop.f32.mrf.mxu0
        %9543 = vdwg.mxu0
        %9544 = vmatpush.bf16.msra.mxu0 %v6112
        %9545 = vmatpush.bf16.msra.mxu0 %v6110
        %9546 = vmatpush.bf16.msra.mxu0 %v6108
        %9547 = vmatpush.bf16.msra.mxu0 %v6106
        %9548 = vmatpush.bf16.msra.mxu0 %v6104
        %9549 = vmatpush.bf16.msra.mxu0 %v6102
        %9550 = vmatpush.bf16.msra.mxu0 %v6100
        %9551 = vmatpush.bf16.msra.mxu0 %v6098
        %9552 = vmatmul.bf16.gmra.mxu0 %v1868
        %v9553 = vpop.f32.mrf.mxu0
        %v9554 = vadd.f32 %v9541, %v9553
        %v9555 = vpop.f32.mrf.mxu0
        %9556 = vdwg.mxu0
        %9557 = vmatpush.bf16.msra.mxu0 %v6128
        %9558 = vmatpush.bf16.msra.mxu0 %v6126
        %9559 = vmatpush.bf16.msra.mxu0 %v6124
        %9560 = vmatpush.bf16.msra.mxu0 %v6122
        %9561 = vmatpush.bf16.msra.mxu0 %v6120
        %9562 = vmatpush.bf16.msra.mxu0 %v6118
        %9563 = vmatpush.bf16.msra.mxu0 %v6116
        %9564 = vmatpush.bf16.msra.mxu0 %v6114
        %9565 = vmatmul.bf16.gmra.mxu0 %v1869
        %v9566 = vpop.f32.mrf.mxu0
        %v9567 = vadd.f32 %v9554, %v9566
        %v9568 = vpop.f32.mrf.mxu0
        %9569 = vdwg.mxu0
        %9570 = vmatpush.bf16.msra.mxu0 %v6144
        %9571 = vmatpush.bf16.msra.mxu0 %v6142
        %9572 = vmatpush.bf16.msra.mxu0 %v6140
        %9573 = vmatpush.bf16.msra.mxu0 %v6138
        %9574 = vmatpush.bf16.msra.mxu0 %v6136
        %9575 = vmatpush.bf16.msra.mxu0 %v6134
        %9576 = vmatpush.bf16.msra.mxu0 %v6132
        %9577 = vmatpush.bf16.msra.mxu0 %v6130
        %9578 = vmatmul.bf16.gmra.mxu0 %v1870
        %v9579 = vpop.f32.mrf.mxu0
        %v9580 = vadd.f32 %v9567, %v9579
        %v9581 = vpop.f32.mrf.mxu0
        %9582 = vdwg.mxu0
        %9583 = vmatpush.bf16.msra.mxu0 %v6160
        %9584 = vmatpush.bf16.msra.mxu0 %v6158
        %9585 = vmatpush.bf16.msra.mxu0 %v6156
        %9586 = vmatpush.bf16.msra.mxu0 %v6154
        %9587 = vmatpush.bf16.msra.mxu0 %v6152
        %9588 = vmatpush.bf16.msra.mxu0 %v6150
        %9589 = vmatpush.bf16.msra.mxu0 %v6148
        %9590 = vmatpush.bf16.msra.mxu0 %v6146
        %9591 = vmatmul.bf16.gmra.mxu0 %v1873
        %v9592 = vpop.f32.mrf.mxu0
        %v9593 = vadd.f32 %v9580, %v9592
        %v9594 = vpop.f32.mrf.mxu0
        %9595 = vdwg.mxu0
        %9596 = vmatpush.bf16.msra.mxu0 %v6176
        %9597 = vmatpush.bf16.msra.mxu0 %v6174
        %9598 = vmatpush.bf16.msra.mxu0 %v6172
        %9599 = vmatpush.bf16.msra.mxu0 %v6170
        %9600 = vmatpush.bf16.msra.mxu0 %v6168
        %9601 = vmatpush.bf16.msra.mxu0 %v6166
        %9602 = vmatpush.bf16.msra.mxu0 %v6164
        %9603 = vmatpush.bf16.msra.mxu0 %v6162
        %9604 = vmatmul.bf16.gmra.mxu0 %v1874
        %v9605 = vpop.f32.mrf.mxu0
        %v9606 = vadd.f32 %v9593, %v9605
        %v9607 = vpop.f32.mrf.mxu0
        %9608 = vdwg.mxu0
        %9609 = vmatpush.bf16.msra.mxu0 %v6192
        %9610 = vmatpush.bf16.msra.mxu0 %v6190
        %9611 = vmatpush.bf16.msra.mxu0 %v6188
        %9612 = vmatpush.bf16.msra.mxu0 %v6186
        %9613 = vmatpush.bf16.msra.mxu0 %v6184
        %9614 = vmatpush.bf16.msra.mxu0 %v6182
        %9615 = vmatpush.bf16.msra.mxu0 %v6180
        %9616 = vmatpush.bf16.msra.mxu0 %v6178
        %9617 = vmatmul.bf16.gmra.mxu0 %v1875
        %v9618 = vpop.f32.mrf.mxu0
        %v9619 = vadd.f32 %v9606, %v9618
        %v9620 = vpop.f32.mrf.mxu0
        %9621 = vdwg.mxu0
        %9622 = vmatpush.bf16.msra.mxu0 %v6208
        %9623 = vmatpush.bf16.msra.mxu0 %v6206
        %9624 = vmatpush.bf16.msra.mxu0 %v6204
        %9625 = vmatpush.bf16.msra.mxu0 %v6202
        %9626 = vmatpush.bf16.msra.mxu0 %v6200
        %9627 = vmatpush.bf16.msra.mxu0 %v6198
        %9628 = vmatpush.bf16.msra.mxu0 %v6196
        %9629 = vmatpush.bf16.msra.mxu0 %v6194
        %9630 = vmatmul.bf16.gmra.mxu0 %v1876
        %v9631 = vpop.f32.mrf.mxu0
        %v9632 = vadd.f32 %v9619, %v9631
        %v9633 = vpop.f32.mrf.mxu0
        %9634 = vdwg.mxu0
        %9635 = vmatpush.bf16.msra.mxu0 %v6224
        %9636 = vmatpush.bf16.msra.mxu0 %v6222
        %9637 = vmatpush.bf16.msra.mxu0 %v6220
        %9638 = vmatpush.bf16.msra.mxu0 %v6218
        %9639 = vmatpush.bf16.msra.mxu0 %v6216
        %9640 = vmatpush.bf16.msra.mxu0 %v6214
        %9641 = vmatpush.bf16.msra.mxu0 %v6212
        %9642 = vmatpush.bf16.msra.mxu0 %v6210
        %9643 = vmatmul.bf16.gmra.mxu0 %v1877
        %v9644 = vpop.f32.mrf.mxu0
        %v9645 = vadd.f32 %v9632, %v9644
        %v9646 = vpop.f32.mrf.mxu0
        %9647 = vdwg.mxu0
        %9648 = vmatpush.bf16.msra.mxu0 %v6240
        %9649 = vmatpush.bf16.msra.mxu0 %v6238
        %9650 = vmatpush.bf16.msra.mxu0 %v6236
        %9651 = vmatpush.bf16.msra.mxu0 %v6234
        %9652 = vmatpush.bf16.msra.mxu0 %v6232
        %9653 = vmatpush.bf16.msra.mxu0 %v6230
        %9654 = vmatpush.bf16.msra.mxu0 %v6228
        %9655 = vmatpush.bf16.msra.mxu0 %v6226
        %9656 = vmatmul.bf16.gmra.mxu0 %v1878
        %v9657 = vpop.f32.mrf.mxu0
        %v9658 = vadd.f32 %v9645, %v9657
        %v9659 = vpop.f32.mrf.mxu0
        %9660 = vdwg.mxu0
        %9661 = vmatpush.bf16.msra.mxu0 %v6256
        %9662 = vmatpush.bf16.msra.mxu0 %v6254
        %9663 = vmatpush.bf16.msra.mxu0 %v6252
        %9664 = vmatpush.bf16.msra.mxu0 %v6250
        %9665 = vmatpush.bf16.msra.mxu0 %v6248
        %9666 = vmatpush.bf16.msra.mxu0 %v6246
        %9667 = vmatpush.bf16.msra.mxu0 %v6244
        %9668 = vmatpush.bf16.msra.mxu0 %v6242
        %9669 = vmatmul.bf16.gmra.mxu0 %v1879
        %v9670 = vpop.f32.mrf.mxu0
        %v9671 = vadd.f32 %v9658, %v9670
        %v9672 = vpop.f32.mrf.mxu0
        %9673 = vdwg.mxu0
        %9674 = vmatpush.bf16.msra.mxu0 %v6272
        %9675 = vmatpush.bf16.msra.mxu0 %v6270
        %9676 = vmatpush.bf16.msra.mxu0 %v6268
        %9677 = vmatpush.bf16.msra.mxu0 %v6266
        %9678 = vmatpush.bf16.msra.mxu0 %v6264
        %9679 = vmatpush.bf16.msra.mxu0 %v6262
        %9680 = vmatpush.bf16.msra.mxu0 %v6260
        %9681 = vmatpush.bf16.msra.mxu0 %v6258
        %9682 = vmatmul.bf16.gmra.mxu0 %v1880
        %v9683 = vpop.f32.mrf.mxu0
        %v9684 = vadd.f32 %v9671, %v9683
        %v9685 = vpop.f32.mrf.mxu0
        %9686 = vdwg.mxu0
        %9687 = vmatpush.bf16.msra.mxu0 %v6288
        %9688 = vmatpush.bf16.msra.mxu0 %v6286
        %9689 = vmatpush.bf16.msra.mxu0 %v6284
        %9690 = vmatpush.bf16.msra.mxu0 %v6282
        %9691 = vmatpush.bf16.msra.mxu0 %v6280
        %9692 = vmatpush.bf16.msra.mxu0 %v6278
        %9693 = vmatpush.bf16.msra.mxu0 %v6276
        %9694 = vmatpush.bf16.msra.mxu0 %v6274
        %9695 = vmatmul.bf16.gmra.mxu0 %v1883
        %v9696 = vpop.f32.mrf.mxu0
        %v9697 = vadd.f32 %v9684, %v9696
        %v9698 = vpop.f32.mrf.mxu0
        %9699 = vdwg.mxu0
        %9700 = vmatpush.bf16.msra.mxu0 %v6304
        %9701 = vmatpush.bf16.msra.mxu0 %v6302
        %9702 = vmatpush.bf16.msra.mxu0 %v6300
        %9703 = vmatpush.bf16.msra.mxu0 %v6298
        %9704 = vmatpush.bf16.msra.mxu0 %v6296
        %9705 = vmatpush.bf16.msra.mxu0 %v6294
        %9706 = vmatpush.bf16.msra.mxu0 %v6292
        %9707 = vmatpush.bf16.msra.mxu0 %v6290
        %9708 = vmatmul.bf16.gmra.mxu0 %v1884
        %v9709 = vpop.f32.mrf.mxu0
        %v9710 = vadd.f32 %v9697, %v9709
        %v9711 = vpop.f32.mrf.mxu0
        %9712 = vdwg.mxu0
        %9713 = vmatpush.bf16.msra.mxu0 %v6320
        %9714 = vmatpush.bf16.msra.mxu0 %v6318
        %9715 = vmatpush.bf16.msra.mxu0 %v6316
        %9716 = vmatpush.bf16.msra.mxu0 %v6314
        %9717 = vmatpush.bf16.msra.mxu0 %v6312
        %9718 = vmatpush.bf16.msra.mxu0 %v6310
        %9719 = vmatpush.bf16.msra.mxu0 %v6308
        %9720 = vmatpush.bf16.msra.mxu0 %v6306
        %9721 = vmatmul.bf16.gmra.mxu0 %v1885
        %v9722 = vpop.f32.mrf.mxu0
        %v9723 = vadd.f32 %v9710, %v9722
        %v9724 = vpop.f32.mrf.mxu0
        %9725 = vdwg.mxu0
        %9726 = vmatpush.bf16.msra.mxu0 %v6336
        %9727 = vmatpush.bf16.msra.mxu0 %v6334
        %9728 = vmatpush.bf16.msra.mxu0 %v6332
        %9729 = vmatpush.bf16.msra.mxu0 %v6330
        %9730 = vmatpush.bf16.msra.mxu0 %v6328
        %9731 = vmatpush.bf16.msra.mxu0 %v6326
        %9732 = vmatpush.bf16.msra.mxu0 %v6324
        %9733 = vmatpush.bf16.msra.mxu0 %v6322
        %9734 = vmatmul.bf16.gmra.mxu0 %v1886
        %v9735 = vpop.f32.mrf.mxu0
        %v9736 = vadd.f32 %v9723, %v9735
        %v9737 = vpop.f32.mrf.mxu0
        %9738 = vdwg.mxu0
        %9739 = vmatpush.bf16.msra.mxu0 %v6352
        %9740 = vmatpush.bf16.msra.mxu0 %v6350
        %9741 = vmatpush.bf16.msra.mxu0 %v6348
        %9742 = vmatpush.bf16.msra.mxu0 %v6346
        %9743 = vmatpush.bf16.msra.mxu0 %v6344
        %9744 = vmatpush.bf16.msra.mxu0 %v6342
        %9745 = vmatpush.bf16.msra.mxu0 %v6340
        %9746 = vmatpush.bf16.msra.mxu0 %v6338
        %9747 = vmatmul.bf16.gmra.mxu0 %v1887
        %v9748 = vpop.f32.mrf.mxu0
        %v9749 = vadd.f32 %v9736, %v9748
        %v9750 = vpop.f32.mrf.mxu0
        %9751 = vdwg.mxu0
        %9752 = vmatpush.bf16.msra.mxu0 %v6368
        %9753 = vmatpush.bf16.msra.mxu0 %v6366
        %9754 = vmatpush.bf16.msra.mxu0 %v6364
        %9755 = vmatpush.bf16.msra.mxu0 %v6362
        %9756 = vmatpush.bf16.msra.mxu0 %v6360
        %9757 = vmatpush.bf16.msra.mxu0 %v6358
        %9758 = vmatpush.bf16.msra.mxu0 %v6356
        %9759 = vmatpush.bf16.msra.mxu0 %v6354
        %9760 = vmatmul.bf16.gmra.mxu0 %v1888
        %v9761 = vpop.f32.mrf.mxu0
        %v9762 = vadd.f32 %v9749, %v9761
        %v9763 = vpop.f32.mrf.mxu0
        %9764 = vdwg.mxu0
        %9765 = vmatpush.bf16.msra.mxu0 %v6384
        %9766 = vmatpush.bf16.msra.mxu0 %v6382
        %9767 = vmatpush.bf16.msra.mxu0 %v6380
        %9768 = vmatpush.bf16.msra.mxu0 %v6378
        %9769 = vmatpush.bf16.msra.mxu0 %v6376
        %9770 = vmatpush.bf16.msra.mxu0 %v6374
        %9771 = vmatpush.bf16.msra.mxu0 %v6372
        %9772 = vmatpush.bf16.msra.mxu0 %v6370
        %9773 = vmatmul.bf16.gmra.mxu0 %v1889
        %v9774 = vpop.f32.mrf.mxu0
        %v9775 = vadd.f32 %v9762, %v9774
        %v9776 = vpop.f32.mrf.mxu0
        %9777 = vdwg.mxu0
        %9778 = vmatpush.bf16.msra.mxu0 %v6400
        %9779 = vmatpush.bf16.msra.mxu0 %v6398
        %9780 = vmatpush.bf16.msra.mxu0 %v6396
        %9781 = vmatpush.bf16.msra.mxu0 %v6394
        %9782 = vmatpush.bf16.msra.mxu0 %v6392
        %9783 = vmatpush.bf16.msra.mxu0 %v6390
        %9784 = vmatpush.bf16.msra.mxu0 %v6388
        %9785 = vmatpush.bf16.msra.mxu0 %v6386
        %9786 = vmatmul.bf16.gmra.mxu0 %v1890
        %v9787 = vpop.f32.mrf.mxu0
        %v9788 = vadd.f32 %v9775, %v9787
        %v9789 = vpop.f32.mrf.mxu0
        %9790 = vdwg.mxu0
        %9791 = vmatpush.bf16.msra.mxu0 %v6416
        %9792 = vmatpush.bf16.msra.mxu0 %v6414
        %9793 = vmatpush.bf16.msra.mxu0 %v6412
        %9794 = vmatpush.bf16.msra.mxu0 %v6410
        %9795 = vmatpush.bf16.msra.mxu0 %v6408
        %9796 = vmatpush.bf16.msra.mxu0 %v6406
        %9797 = vmatpush.bf16.msra.mxu0 %v6404
        %9798 = vmatpush.bf16.msra.mxu0 %v6402
        %9799 = vmatmul.bf16.gmra.mxu0 %v1893
        %v9800 = vpop.f32.mrf.mxu0
        %v9801 = vadd.f32 %v9788, %v9800
        %v9802 = vpop.f32.mrf.mxu0
        %9803 = vdwg.mxu0
        %9804 = vmatpush.bf16.msra.mxu0 %v6432
        %9805 = vmatpush.bf16.msra.mxu0 %v6430
        %9806 = vmatpush.bf16.msra.mxu0 %v6428
        %9807 = vmatpush.bf16.msra.mxu0 %v6426
        %9808 = vmatpush.bf16.msra.mxu0 %v6424
        %9809 = vmatpush.bf16.msra.mxu0 %v6422
        %9810 = vmatpush.bf16.msra.mxu0 %v6420
        %9811 = vmatpush.bf16.msra.mxu0 %v6418
        %9812 = vmatmul.bf16.gmra.mxu0 %v1894
        %v9813 = vpop.f32.mrf.mxu0
        %v9814 = vadd.f32 %v9801, %v9813
        %v9815 = vpop.f32.mrf.mxu0
        %9816 = vdwg.mxu0
        %9817 = vmatpush.bf16.msra.mxu0 %v6448
        %9818 = vmatpush.bf16.msra.mxu0 %v6446
        %9819 = vmatpush.bf16.msra.mxu0 %v6444
        %9820 = vmatpush.bf16.msra.mxu0 %v6442
        %9821 = vmatpush.bf16.msra.mxu0 %v6440
        %9822 = vmatpush.bf16.msra.mxu0 %v6438
        %9823 = vmatpush.bf16.msra.mxu0 %v6436
        %9824 = vmatpush.bf16.msra.mxu0 %v6434
        %9825 = vmatmul.bf16.gmra.mxu0 %v1895
        %v9826 = vpop.f32.mrf.mxu0
        %v9827 = vadd.f32 %v9814, %v9826
        %v9828 = vpop.f32.mrf.mxu0
        %9829 = vdwg.mxu0
        %9830 = vmatpush.bf16.msra.mxu0 %v6464
        %9831 = vmatpush.bf16.msra.mxu0 %v6462
        %9832 = vmatpush.bf16.msra.mxu0 %v6460
        %9833 = vmatpush.bf16.msra.mxu0 %v6458
        %9834 = vmatpush.bf16.msra.mxu0 %v6456
        %9835 = vmatpush.bf16.msra.mxu0 %v6454
        %9836 = vmatpush.bf16.msra.mxu0 %v6452
        %9837 = vmatpush.bf16.msra.mxu0 %v6450
        %9838 = vmatmul.bf16.gmra.mxu0 %v1896
        %v9839 = vpop.f32.mrf.mxu0
        %v9840 = vadd.f32 %v9827, %v9839
        %v9841 = vpop.f32.mrf.mxu0
        %9842 = vdwg.mxu0
        %9843 = vmatpush.bf16.msra.mxu0 %v6480
        %9844 = vmatpush.bf16.msra.mxu0 %v6478
        %9845 = vmatpush.bf16.msra.mxu0 %v6476
        %9846 = vmatpush.bf16.msra.mxu0 %v6474
        %9847 = vmatpush.bf16.msra.mxu0 %v6472
        %9848 = vmatpush.bf16.msra.mxu0 %v6470
        %9849 = vmatpush.bf16.msra.mxu0 %v6468
        %9850 = vmatpush.bf16.msra.mxu0 %v6466
        %9851 = vmatmul.bf16.gmra.mxu0 %v1897
        %v9852 = vpop.f32.mrf.mxu0
        %v9853 = vadd.f32 %v9840, %v9852
        %v9854 = vpop.f32.mrf.mxu0
        %9855 = vdwg.mxu0
        %9856 = vmatpush.bf16.msra.mxu0 %v6496
        %9857 = vmatpush.bf16.msra.mxu0 %v6494
        %9858 = vmatpush.bf16.msra.mxu0 %v6492
        %9859 = vmatpush.bf16.msra.mxu0 %v6490
        %9860 = vmatpush.bf16.msra.mxu0 %v6488
        %9861 = vmatpush.bf16.msra.mxu0 %v6486
        %9862 = vmatpush.bf16.msra.mxu0 %v6484
        %9863 = vmatpush.bf16.msra.mxu0 %v6482
        %9864 = vmatmul.bf16.gmra.mxu0 %v1898
        %v9865 = vpop.f32.mrf.mxu0
        %v9866 = vadd.f32 %v9853, %v9865
        %v9867 = vpop.f32.mrf.mxu0
        %9868 = vdwg.mxu0
        %9869 = vmatpush.bf16.msra.mxu0 %v6512
        %9870 = vmatpush.bf16.msra.mxu0 %v6510
        %9871 = vmatpush.bf16.msra.mxu0 %v6508
        %9872 = vmatpush.bf16.msra.mxu0 %v6506
        %9873 = vmatpush.bf16.msra.mxu0 %v6504
        %9874 = vmatpush.bf16.msra.mxu0 %v6502
        %9875 = vmatpush.bf16.msra.mxu0 %v6500
        %9876 = vmatpush.bf16.msra.mxu0 %v6498
        %9877 = vmatmul.bf16.gmra.mxu0 %v1899
        %v9878 = vpop.f32.mrf.mxu0
        %v9879 = vadd.f32 %v9866, %v9878
        %v9880 = vpop.f32.mrf.mxu0
        %9881 = vdwg.mxu0
        %9882 = vmatpush.bf16.msra.mxu0 %v6528
        %9883 = vmatpush.bf16.msra.mxu0 %v6526
        %9884 = vmatpush.bf16.msra.mxu0 %v6524
        %9885 = vmatpush.bf16.msra.mxu0 %v6522
        %9886 = vmatpush.bf16.msra.mxu0 %v6520
        %9887 = vmatpush.bf16.msra.mxu0 %v6518
        %9888 = vmatpush.bf16.msra.mxu0 %v6516
        %9889 = vmatpush.bf16.msra.mxu0 %v6514
        %9890 = vmatmul.bf16.gmra.mxu0 %v1900
        %v9891 = vpop.f32.mrf.mxu0
        %v9892 = vadd.f32 %v9879, %v9891
        %v9893 = vpop.f32.mrf.mxu0
        %9894 = vdwg.mxu0
        %9895 = vmatpush.bf16.msra.mxu0 %v6544
        %9896 = vmatpush.bf16.msra.mxu0 %v6542
        %9897 = vmatpush.bf16.msra.mxu0 %v6540
        %9898 = vmatpush.bf16.msra.mxu0 %v6538
        %9899 = vmatpush.bf16.msra.mxu0 %v6536
        %9900 = vmatpush.bf16.msra.mxu0 %v6534
        %9901 = vmatpush.bf16.msra.mxu0 %v6532
        %9902 = vmatpush.bf16.msra.mxu0 %v6530
        %9903 = vmatmul.bf16.gmra.mxu0 %v1903
        %v9904 = vpop.f32.mrf.mxu0
        %v9905 = vadd.f32 %v9892, %v9904
        %v9906 = vpop.f32.mrf.mxu0
        %9907 = vdwg.mxu0
        %9908 = vmatpush.bf16.msra.mxu0 %v6560
        %9909 = vmatpush.bf16.msra.mxu0 %v6558
        %9910 = vmatpush.bf16.msra.mxu0 %v6556
        %9911 = vmatpush.bf16.msra.mxu0 %v6554
        %9912 = vmatpush.bf16.msra.mxu0 %v6552
        %9913 = vmatpush.bf16.msra.mxu0 %v6550
        %9914 = vmatpush.bf16.msra.mxu0 %v6548
        %9915 = vmatpush.bf16.msra.mxu0 %v6546
        %9916 = vmatmul.bf16.gmra.mxu0 %v1904
        %v9917 = vpop.f32.mrf.mxu0
        %v9918 = vadd.f32 %v9905, %v9917
        %v9919 = vpop.f32.mrf.mxu0
        %9920 = vdwg.mxu0
        %9921 = vmatpush.bf16.msra.mxu0 %v6576
        %9922 = vmatpush.bf16.msra.mxu0 %v6574
        %9923 = vmatpush.bf16.msra.mxu0 %v6572
        %9924 = vmatpush.bf16.msra.mxu0 %v6570
        %9925 = vmatpush.bf16.msra.mxu0 %v6568
        %9926 = vmatpush.bf16.msra.mxu0 %v6566
        %9927 = vmatpush.bf16.msra.mxu0 %v6564
        %9928 = vmatpush.bf16.msra.mxu0 %v6562
        %9929 = vmatmul.bf16.gmra.mxu0 %v1905
        %v9930 = vpop.f32.mrf.mxu0
        %v9931 = vadd.f32 %v9918, %v9930
        %v9932 = vpop.f32.mrf.mxu0
        %9933 = vdwg.mxu0
        %9934 = vmatpush.bf16.msra.mxu0 %v6592
        %9935 = vmatpush.bf16.msra.mxu0 %v6590
        %9936 = vmatpush.bf16.msra.mxu0 %v6588
        %9937 = vmatpush.bf16.msra.mxu0 %v6586
        %9938 = vmatpush.bf16.msra.mxu0 %v6584
        %9939 = vmatpush.bf16.msra.mxu0 %v6582
        %9940 = vmatpush.bf16.msra.mxu0 %v6580
        %9941 = vmatpush.bf16.msra.mxu0 %v6578
        %9942 = vmatmul.bf16.gmra.mxu0 %v1906
        %v9943 = vpop.f32.mrf.mxu0
        %v9944 = vadd.f32 %v9931, %v9943
        %v9945 = vpop.f32.mrf.mxu0
        %9946 = vdwg.mxu0
        %9947 = vmatpush.bf16.msra.mxu0 %v6608
        %9948 = vmatpush.bf16.msra.mxu0 %v6606
        %9949 = vmatpush.bf16.msra.mxu0 %v6604
        %9950 = vmatpush.bf16.msra.mxu0 %v6602
        %9951 = vmatpush.bf16.msra.mxu0 %v6600
        %9952 = vmatpush.bf16.msra.mxu0 %v6598
        %9953 = vmatpush.bf16.msra.mxu0 %v6596
        %9954 = vmatpush.bf16.msra.mxu0 %v6594
        %9955 = vmatmul.bf16.gmra.mxu0 %v1907
        %v9956 = vpop.f32.mrf.mxu0
        %v9957 = vadd.f32 %v9944, %v9956
        %v9958 = vpop.f32.mrf.mxu0
        %9959 = vdwg.mxu0
        %9960 = vmatpush.bf16.msra.mxu0 %v6624
        %9961 = vmatpush.bf16.msra.mxu0 %v6622
        %9962 = vmatpush.bf16.msra.mxu0 %v6620
        %9963 = vmatpush.bf16.msra.mxu0 %v6618
        %9964 = vmatpush.bf16.msra.mxu0 %v6616
        %9965 = vmatpush.bf16.msra.mxu0 %v6614
        %9966 = vmatpush.bf16.msra.mxu0 %v6612
        %9967 = vmatpush.bf16.msra.mxu0 %v6610
        %9968 = vmatmul.bf16.gmra.mxu0 %v1908
        %v9969 = vpop.f32.mrf.mxu0
        %v9970 = vadd.f32 %v9957, %v9969
        %v9971 = vpop.f32.mrf.mxu0
        %9972 = vdwg.mxu0
        %9973 = vmatpush.bf16.msra.mxu0 %v6640
        %9974 = vmatpush.bf16.msra.mxu0 %v6638
        %9975 = vmatpush.bf16.msra.mxu0 %v6636
        %9976 = vmatpush.bf16.msra.mxu0 %v6634
        %9977 = vmatpush.bf16.msra.mxu0 %v6632
        %9978 = vmatpush.bf16.msra.mxu0 %v6630
        %9979 = vmatpush.bf16.msra.mxu0 %v6628
        %9980 = vmatpush.bf16.msra.mxu0 %v6626
        %9981 = vmatmul.bf16.gmra.mxu0 %v1909
        %v9982 = vpop.f32.mrf.mxu0
        %v9983 = vadd.f32 %v9970, %v9982
        %v9984 = vpop.f32.mrf.mxu0
        %9985 = vdwg.mxu0
        %9986 = vmatpush.bf16.msra.mxu0 %v6656
        %9987 = vmatpush.bf16.msra.mxu0 %v6654
        %9988 = vmatpush.bf16.msra.mxu0 %v6652
        %9989 = vmatpush.bf16.msra.mxu0 %v6650
        %9990 = vmatpush.bf16.msra.mxu0 %v6648
        %9991 = vmatpush.bf16.msra.mxu0 %v6646
        %9992 = vmatpush.bf16.msra.mxu0 %v6644
        %9993 = vmatpush.bf16.msra.mxu0 %v6642
        %9994 = vmatmul.bf16.gmra.mxu0 %v1910
        %v9995 = vpop.f32.mrf.mxu0
        %v9996 = vadd.f32 %v9983, %v9995
        %v9997 = vpop.f32.mrf.mxu0
        %9998 = vdwg.mxu0
        %9999 = vmatpush.bf16.msra.mxu0 %v6672
        %10000 = vmatpush.bf16.msra.mxu0 %v6670
        %10001 = vmatpush.bf16.msra.mxu0 %v6668
        %10002 = vmatpush.bf16.msra.mxu0 %v6666
        %10003 = vmatpush.bf16.msra.mxu0 %v6664
        %10004 = vmatpush.bf16.msra.mxu0 %v6662
        %10005 = vmatpush.bf16.msra.mxu0 %v6660
        %10006 = vmatpush.bf16.msra.mxu0 %v6658
        %10007 = vmatmul.bf16.gmra.mxu0 %v1913
        %v10008 = vpop.f32.mrf.mxu0
        %v10009 = vadd.f32 %v9996, %v10008
        %v10010 = vpop.f32.mrf.mxu0
        %10011 = vdwg.mxu0
        %10012 = vmatpush.bf16.msra.mxu0 %v6688
        %10013 = vmatpush.bf16.msra.mxu0 %v6686
        %10014 = vmatpush.bf16.msra.mxu0 %v6684
        %10015 = vmatpush.bf16.msra.mxu0 %v6682
        %10016 = vmatpush.bf16.msra.mxu0 %v6680
        %10017 = vmatpush.bf16.msra.mxu0 %v6678
        %10018 = vmatpush.bf16.msra.mxu0 %v6676
        %10019 = vmatpush.bf16.msra.mxu0 %v6674
        %10020 = vmatmul.bf16.gmra.mxu0 %v1914
        %v10021 = vpop.f32.mrf.mxu0
        %v10022 = vadd.f32 %v10009, %v10021
        %v10023 = vpop.f32.mrf.mxu0
        %10024 = vdwg.mxu0
        %10025 = vmatpush.bf16.msra.mxu0 %v6704
        %10026 = vmatpush.bf16.msra.mxu0 %v6702
        %10027 = vmatpush.bf16.msra.mxu0 %v6700
        %10028 = vmatpush.bf16.msra.mxu0 %v6698
        %10029 = vmatpush.bf16.msra.mxu0 %v6696
        %10030 = vmatpush.bf16.msra.mxu0 %v6694
        %10031 = vmatpush.bf16.msra.mxu0 %v6692
        %10032 = vmatpush.bf16.msra.mxu0 %v6690
        %10033 = vmatmul.bf16.gmra.mxu0 %v1915
        %v10034 = vpop.f32.mrf.mxu0
        %v10035 = vadd.f32 %v10022, %v10034
        %v10036 = vpop.f32.mrf.mxu0
        %10037 = vdwg.mxu0
        %10038 = vmatpush.bf16.msra.mxu0 %v6720
        %10039 = vmatpush.bf16.msra.mxu0 %v6718
        %10040 = vmatpush.bf16.msra.mxu0 %v6716
        %10041 = vmatpush.bf16.msra.mxu0 %v6714
        %10042 = vmatpush.bf16.msra.mxu0 %v6712
        %10043 = vmatpush.bf16.msra.mxu0 %v6710
        %10044 = vmatpush.bf16.msra.mxu0 %v6708
        %10045 = vmatpush.bf16.msra.mxu0 %v6706
        %10046 = vmatmul.bf16.gmra.mxu0 %v1916
        %v10047 = vpop.f32.mrf.mxu0
        %v10048 = vadd.f32 %v10035, %v10047
        %v10049 = vpop.f32.mrf.mxu0
        %10050 = vdwg.mxu0
        %10051 = vmatpush.bf16.msra.mxu0 %v6736
        %10052 = vmatpush.bf16.msra.mxu0 %v6734
        %10053 = vmatpush.bf16.msra.mxu0 %v6732
        %10054 = vmatpush.bf16.msra.mxu0 %v6730
        %10055 = vmatpush.bf16.msra.mxu0 %v6728
        %10056 = vmatpush.bf16.msra.mxu0 %v6726
        %10057 = vmatpush.bf16.msra.mxu0 %v6724
        %10058 = vmatpush.bf16.msra.mxu0 %v6722
        %10059 = vmatmul.bf16.gmra.mxu0 %v1917
        %v10060 = vpop.f32.mrf.mxu0
        %v10061 = vadd.f32 %v10048, %v10060
        %v10062 = vpop.f32.mrf.mxu0
        %10063 = vdwg.mxu0
        %10064 = vmatpush.bf16.msra.mxu0 %v6752
        %10065 = vmatpush.bf16.msra.mxu0 %v6750
        %10066 = vmatpush.bf16.msra.mxu0 %v6748
        %10067 = vmatpush.bf16.msra.mxu0 %v6746
        %10068 = vmatpush.bf16.msra.mxu0 %v6744
        %10069 = vmatpush.bf16.msra.mxu0 %v6742
        %10070 = vmatpush.bf16.msra.mxu0 %v6740
        %10071 = vmatpush.bf16.msra.mxu0 %v6738
        %10072 = vmatmul.bf16.gmra.mxu0 %v1918
        %v10073 = vpop.f32.mrf.mxu0
        %v10074 = vadd.f32 %v10061, %v10073
        %v10075 = vpop.f32.mrf.mxu0
        %10076 = vdwg.mxu0
        %10077 = vmatpush.bf16.msra.mxu0 %v6768
        %10078 = vmatpush.bf16.msra.mxu0 %v6766
        %10079 = vmatpush.bf16.msra.mxu0 %v6764
        %10080 = vmatpush.bf16.msra.mxu0 %v6762
        %10081 = vmatpush.bf16.msra.mxu0 %v6760
        %10082 = vmatpush.bf16.msra.mxu0 %v6758
        %10083 = vmatpush.bf16.msra.mxu0 %v6756
        %10084 = vmatpush.bf16.msra.mxu0 %v6754
        %10085 = vmatmul.bf16.gmra.mxu0 %v1919
        %v10086 = vpop.f32.mrf.mxu0
        %v10087 = vadd.f32 %v10074, %v10086
        %v10088 = vpop.f32.mrf.mxu0
        %10089 = vdwg.mxu0
        %10090 = vmatpush.bf16.msra.mxu0 %v6784
        %10091 = vmatpush.bf16.msra.mxu0 %v6782
        %10092 = vmatpush.bf16.msra.mxu0 %v6780
        %10093 = vmatpush.bf16.msra.mxu0 %v6778
        %10094 = vmatpush.bf16.msra.mxu0 %v6776
        %10095 = vmatpush.bf16.msra.mxu0 %v6774
        %10096 = vmatpush.bf16.msra.mxu0 %v6772
        %10097 = vmatpush.bf16.msra.mxu0 %v6770
        %10098 = vmatmul.bf16.gmra.mxu0 %v1920
        %v10099 = vpop.f32.mrf.mxu0
        %v10100 = vadd.f32 %v10087, %v10099
        %v10101 = vpop.f32.mrf.mxu0
        %10102 = vdwg.mxu0
        %10103 = vmatpush.bf16.msra.mxu0 %v6800
        %10104 = vmatpush.bf16.msra.mxu0 %v6798
        %10105 = vmatpush.bf16.msra.mxu0 %v6796
        %10106 = vmatpush.bf16.msra.mxu0 %v6794
        %10107 = vmatpush.bf16.msra.mxu0 %v6792
        %10108 = vmatpush.bf16.msra.mxu0 %v6790
        %10109 = vmatpush.bf16.msra.mxu0 %v6788
        %10110 = vmatpush.bf16.msra.mxu0 %v6786
        %10111 = vmatmul.bf16.gmra.mxu0 %v1923
        %v10112 = vpop.f32.mrf.mxu0
        %v10113 = vadd.f32 %v10100, %v10112
        %v10114 = vpop.f32.mrf.mxu0
        %10115 = vdwg.mxu0
        %10116 = vmatpush.bf16.msra.mxu0 %v6816
        %10117 = vmatpush.bf16.msra.mxu0 %v6814
        %10118 = vmatpush.bf16.msra.mxu0 %v6812
        %10119 = vmatpush.bf16.msra.mxu0 %v6810
        %10120 = vmatpush.bf16.msra.mxu0 %v6808
        %10121 = vmatpush.bf16.msra.mxu0 %v6806
        %10122 = vmatpush.bf16.msra.mxu0 %v6804
        %10123 = vmatpush.bf16.msra.mxu0 %v6802
        %10124 = vmatmul.bf16.gmra.mxu0 %v1924
        %v10125 = vpop.f32.mrf.mxu0
        %v10126 = vadd.f32 %v10113, %v10125
        %v10127 = vpop.f32.mrf.mxu0
        %10128 = vdwg.mxu0
        %10129 = vmatpush.bf16.msra.mxu0 %v6832
        %10130 = vmatpush.bf16.msra.mxu0 %v6830
        %10131 = vmatpush.bf16.msra.mxu0 %v6828
        %10132 = vmatpush.bf16.msra.mxu0 %v6826
        %10133 = vmatpush.bf16.msra.mxu0 %v6824
        %10134 = vmatpush.bf16.msra.mxu0 %v6822
        %10135 = vmatpush.bf16.msra.mxu0 %v6820
        %10136 = vmatpush.bf16.msra.mxu0 %v6818
        %10137 = vmatmul.bf16.gmra.mxu0 %v1925
        %v10138 = vpop.f32.mrf.mxu0
        %v10139 = vadd.f32 %v10126, %v10138
        %v10140 = vpop.f32.mrf.mxu0
        %10141 = vdwg.mxu0
        %10142 = vmatpush.bf16.msra.mxu0 %v6848
        %10143 = vmatpush.bf16.msra.mxu0 %v6846
        %10144 = vmatpush.bf16.msra.mxu0 %v6844
        %10145 = vmatpush.bf16.msra.mxu0 %v6842
        %10146 = vmatpush.bf16.msra.mxu0 %v6840
        %10147 = vmatpush.bf16.msra.mxu0 %v6838
        %10148 = vmatpush.bf16.msra.mxu0 %v6836
        %10149 = vmatpush.bf16.msra.mxu0 %v6834
        %10150 = vmatmul.bf16.gmra.mxu0 %v1926
        %v10151 = vpop.f32.mrf.mxu0
        %v10152 = vadd.f32 %v10139, %v10151
        %v10153 = vpop.f32.mrf.mxu0
        %10154 = vdwg.mxu0
        %10155 = vmatpush.bf16.msra.mxu0 %v6864
        %10156 = vmatpush.bf16.msra.mxu0 %v6862
        %10157 = vmatpush.bf16.msra.mxu0 %v6860
        %10158 = vmatpush.bf16.msra.mxu0 %v6858
        %10159 = vmatpush.bf16.msra.mxu0 %v6856
        %10160 = vmatpush.bf16.msra.mxu0 %v6854
        %10161 = vmatpush.bf16.msra.mxu0 %v6852
        %10162 = vmatpush.bf16.msra.mxu0 %v6850
        %10163 = vmatmul.bf16.gmra.mxu0 %v1927
        %v10164 = vpop.f32.mrf.mxu0
        %v10165 = vadd.f32 %v10152, %v10164
        %v10166 = vpop.f32.mrf.mxu0
        %10167 = vdwg.mxu0
        %10168 = vmatpush.bf16.msra.mxu0 %v6880
        %10169 = vmatpush.bf16.msra.mxu0 %v6878
        %10170 = vmatpush.bf16.msra.mxu0 %v6876
        %10171 = vmatpush.bf16.msra.mxu0 %v6874
        %10172 = vmatpush.bf16.msra.mxu0 %v6872
        %10173 = vmatpush.bf16.msra.mxu0 %v6870
        %10174 = vmatpush.bf16.msra.mxu0 %v6868
        %10175 = vmatpush.bf16.msra.mxu0 %v6866
        %10176 = vmatmul.bf16.gmra.mxu0 %v1928
        %v10177 = vpop.f32.mrf.mxu0
        %v10178 = vadd.f32 %v10165, %v10177
        %v10179 = vpop.f32.mrf.mxu0
        %10180 = vdwg.mxu0
        %10181 = vmatpush.bf16.msra.mxu0 %v6896
        %10182 = vmatpush.bf16.msra.mxu0 %v6894
        %10183 = vmatpush.bf16.msra.mxu0 %v6892
        %10184 = vmatpush.bf16.msra.mxu0 %v6890
        %10185 = vmatpush.bf16.msra.mxu0 %v6888
        %10186 = vmatpush.bf16.msra.mxu0 %v6886
        %10187 = vmatpush.bf16.msra.mxu0 %v6884
        %10188 = vmatpush.bf16.msra.mxu0 %v6882
        %10189 = vmatmul.bf16.gmra.mxu0 %v1929
        %v10190 = vpop.f32.mrf.mxu0
        %v10191 = vadd.f32 %v10178, %v10190
        %v10192 = vpop.f32.mrf.mxu0
        %10193 = vdwg.mxu0
        %10194 = vmatpush.bf16.msra.mxu0 %v6912
        %10195 = vmatpush.bf16.msra.mxu0 %v6910
        %10196 = vmatpush.bf16.msra.mxu0 %v6908
        %10197 = vmatpush.bf16.msra.mxu0 %v6906
        %10198 = vmatpush.bf16.msra.mxu0 %v6904
        %10199 = vmatpush.bf16.msra.mxu0 %v6902
        %10200 = vmatpush.bf16.msra.mxu0 %v6900
        %10201 = vmatpush.bf16.msra.mxu0 %v6898
        %10202 = vmatmul.bf16.gmra.mxu0 %v1930
        %v10203 = vpop.f32.mrf.mxu0
        %v10204 = vadd.f32 %v10191, %v10203
        %v10205 = vpop.f32.mrf.mxu0
        %10206 = vdwg.mxu0
        %10207 = vmatpush.bf16.msra.mxu0 %v6928
        %10208 = vmatpush.bf16.msra.mxu0 %v6926
        %10209 = vmatpush.bf16.msra.mxu0 %v6924
        %10210 = vmatpush.bf16.msra.mxu0 %v6922
        %10211 = vmatpush.bf16.msra.mxu0 %v6920
        %10212 = vmatpush.bf16.msra.mxu0 %v6918
        %10213 = vmatpush.bf16.msra.mxu0 %v6916
        %10214 = vmatpush.bf16.msra.mxu0 %v6914
        %10215 = vmatmul.bf16.gmra.mxu0 %v1933
        %v10216 = vpop.f32.mrf.mxu0
        %v10217 = vadd.f32 %v10204, %v10216
        %v10218 = vpop.f32.mrf.mxu0
        %10219 = vdwg.mxu0
        %10220 = vmatpush.bf16.msra.mxu0 %v6944
        %10221 = vmatpush.bf16.msra.mxu0 %v6942
        %10222 = vmatpush.bf16.msra.mxu0 %v6940
        %10223 = vmatpush.bf16.msra.mxu0 %v6938
        %10224 = vmatpush.bf16.msra.mxu0 %v6936
        %10225 = vmatpush.bf16.msra.mxu0 %v6934
        %10226 = vmatpush.bf16.msra.mxu0 %v6932
        %10227 = vmatpush.bf16.msra.mxu0 %v6930
        %10228 = vmatmul.bf16.gmra.mxu0 %v1934
        %v10229 = vpop.f32.mrf.mxu0
        %v10230 = vadd.f32 %v10217, %v10229
        %v10231 = vpop.f32.mrf.mxu0
        %10232 = vdwg.mxu0
        %10233 = vmatpush.bf16.msra.mxu0 %v6960
        %10234 = vmatpush.bf16.msra.mxu0 %v6958
        %10235 = vmatpush.bf16.msra.mxu0 %v6956
        %10236 = vmatpush.bf16.msra.mxu0 %v6954
        %10237 = vmatpush.bf16.msra.mxu0 %v6952
        %10238 = vmatpush.bf16.msra.mxu0 %v6950
        %10239 = vmatpush.bf16.msra.mxu0 %v6948
        %10240 = vmatpush.bf16.msra.mxu0 %v6946
        %10241 = vmatmul.bf16.gmra.mxu0 %v1935
        %v10242 = vpop.f32.mrf.mxu0
        %v10243 = vadd.f32 %v10230, %v10242
        %v10244 = vpop.f32.mrf.mxu0
        %10245 = vdwg.mxu0
        %10246 = vmatpush.bf16.msra.mxu0 %v6976
        %10247 = vmatpush.bf16.msra.mxu0 %v6974
        %10248 = vmatpush.bf16.msra.mxu0 %v6972
        %10249 = vmatpush.bf16.msra.mxu0 %v6970
        %10250 = vmatpush.bf16.msra.mxu0 %v6968
        %10251 = vmatpush.bf16.msra.mxu0 %v6966
        %10252 = vmatpush.bf16.msra.mxu0 %v6964
        %10253 = vmatpush.bf16.msra.mxu0 %v6962
        %10254 = vmatmul.bf16.gmra.mxu0 %v1936
        %v10255 = vpop.f32.mrf.mxu0
        %v10256 = vadd.f32 %v10243, %v10255
        %v10257 = vpop.f32.mrf.mxu0
        %10258 = vdwg.mxu0
        %10259 = vmatpush.bf16.msra.mxu0 %v6992
        %10260 = vmatpush.bf16.msra.mxu0 %v6990
        %10261 = vmatpush.bf16.msra.mxu0 %v6988
        %10262 = vmatpush.bf16.msra.mxu0 %v6986
        %10263 = vmatpush.bf16.msra.mxu0 %v6984
        %10264 = vmatpush.bf16.msra.mxu0 %v6982
        %10265 = vmatpush.bf16.msra.mxu0 %v6980
        %10266 = vmatpush.bf16.msra.mxu0 %v6978
        %10267 = vmatmul.bf16.gmra.mxu0 %v1937
        %v10268 = vpop.f32.mrf.mxu0
        %v10269 = vadd.f32 %v10256, %v10268
        %v10270 = vpop.f32.mrf.mxu0
        %10271 = vdwg.mxu0
        %10272 = vmatpush.bf16.msra.mxu0 %v7008
        %10273 = vmatpush.bf16.msra.mxu0 %v7006
        %10274 = vmatpush.bf16.msra.mxu0 %v7004
        %10275 = vmatpush.bf16.msra.mxu0 %v7002
        %10276 = vmatpush.bf16.msra.mxu0 %v7000
        %10277 = vmatpush.bf16.msra.mxu0 %v6998
        %10278 = vmatpush.bf16.msra.mxu0 %v6996
        %10279 = vmatpush.bf16.msra.mxu0 %v6994
        %10280 = vmatmul.bf16.gmra.mxu0 %v1938
        %v10281 = vpop.f32.mrf.mxu0
        %v10282 = vadd.f32 %v10269, %v10281
        %v10283 = vpop.f32.mrf.mxu0
        %10284 = vdwg.mxu0
        %v10287 = vrot.slane %v10282, 6
        %vm10288 = vcmask 1041408
        %v10289 = vsel %vm10288, %v9268, %v10287
        %v10291 = vadd.f32 %v582, %v10289
        %10292 = vst [vmem:[#allocation2] sm:$0xf] %v10291
        %p10293 = scmp.eq.s32.totalorder %s33, 1
        // Predicated region
        $region109: #{multimodal_forward.1} parent=71 // pred_check
          %p10294 = pneg %p10293
        $region110: #{multimodal_forward.1} parent=71 // pred_check_branch
          %10296 = sbr.rel (%p10294) target = $region112
        $region111: #{multimodal_forward.1} parent=71 // pred_region
          %v10297 = vld [vmem:[#allocation2] sm:$0xf]
          %v10298 = vld [vmem:[#allocation6] sm:$0x3]
          %v10300 = vperm.slane %v10298, 0
          %v10301 = vperm.slane %v10298, 1
          %v10302 = vrot.slane %v10301, 6
          %v10303 = vsel %vm10288, %v10300, %v10302
          %v10305 = vadd.f32 %v10297, %v10303
          %v10306 = vmax.f32 %v10305, 0.0
          %v10307 = vld [vmem:[%s6] sm:$0xff]
          %v10308 = vld [vmem:[%s6 + $0x8] sm:$0xff]
          %v10309 = vld [vmem:[%s6 + $0x10] sm:$0xff]
          %v10310 = vld [vmem:[%s6 + $0x18] sm:$0xff]
          %v10311 = vld [vmem:[%s6 + $0x20] sm:$0xff]
          %v10312 = vld [vmem:[%s6 + $0x28] sm:$0xff]
          %v10313 = vld [vmem:[%s6 + $0x30] sm:$0xff]
          %v10314 = vld [vmem:[%s6 + $0x38] sm:$0xff]
          %v10315 = vld [vmem:[%s6 + $0x40] sm:$0xff]
          %v10316 = vld [vmem:[%s6 + $0x48] sm:$0xff]
          %v10317 = vld [vmem:[%s6 + $0x50] sm:$0xff]
          %v10318 = vld [vmem:[%s6 + $0x58] sm:$0xff]
          %v10319 = vld [vmem:[%s6 + $0x60] sm:$0xff]
          %v10320 = vld [vmem:[%s6 + $0x68] sm:$0xff]
          %v10321 = vld [vmem:[%s6 + $0x70] sm:$0xff]
          %v10322 = vld [vmem:[%s6 + $0x78] sm:$0xff]
          %v10323 = vld [vmem:[%s6 + $0x80] sm:$0xff]
          %v10324 = vld [vmem:[%s6 + $0x88] sm:$0xff]
          %v10325 = vld [vmem:[%s6 + $0x90] sm:$0xff]
          %v10326 = vld [vmem:[%s6 + $0x98] sm:$0xff]
          %v10327 = vld [vmem:[%s6 + $0xa0] sm:$0xff]
          %v10328 = vld [vmem:[%s6 + $0xa8] sm:$0xff]
          %v10329 = vld [vmem:[%s6 + $0xb0] sm:$0xff]
          %v10330 = vld [vmem:[%s6 + $0xb8] sm:$0xff]
          %v10331 = vld [vmem:[%s6 + $0xc0] sm:$0xff]
          %v10332 = vld [vmem:[%s6 + $0xc8] sm:$0xff]
          %v10333 = vld [vmem:[%s6 + $0xd0] sm:$0xff]
          %v10334 = vld [vmem:[%s6 + $0xd8] sm:$0xff]
          %v10335 = vld [vmem:[%s6 + $0xe0] sm:$0xff]
          %v10336 = vld [vmem:[%s6 + $0xe8] sm:$0xff]
          %v10337 = vld [vmem:[%s6 + $0xf0] sm:$0xff]
          %v10338 = vld [vmem:[%s6 + $0xf8] sm:$0xff]
          %v10339 = vld [vmem:[#allocation11] sm:$0x1]
          %v10341 = vperm.slane %v10339, 0
          %10344 = vst [vmem:[#allocation1] ss:$4 sm:$0xff] %v10306
          %v10345 = vld.sshfl [vmem:[#allocation1] sm:$0xff pattern:$0x73625140]
          %v10346 = vld.sshfl [vmem:[#allocation1 + $0x8] sm:$0xff pattern:$0x73625140]
          %10349 = vmatpush.msra.mxu0 %v10322
          %10350 = vmatpush.msra.mxu0 %v10321
          %10351 = vmatpush.msra.mxu0 %v10320
          %10352 = vmatpush.msra.mxu0 %v10319
          %10353 = vmatpush.msra.mxu0 %v10318
          %10354 = vmatpush.msra.mxu0 %v10317
          %10355 = vmatpush.msra.mxu0 %v10316
          %10356 = vmatpush.msra.mxu0 %v10315
          %10357 = vmatpush.msra.mxu0 %v10314
          %10358 = vmatpush.msra.mxu0 %v10313
          %10359 = vmatpush.msra.mxu0 %v10312
          %10360 = vmatpush.msra.mxu0 %v10311
          %10361 = vmatpush.msra.mxu0 %v10310
          %10362 = vmatpush.msra.mxu0 %v10309
          %10363 = vmatpush.msra.mxu0 %v10308
          %10364 = vmatpush.msra.mxu0 %v10307
          %10365 = vmatmul.f32.gmra.mxu0 %v10345
          %v10366 = vpop.f32.mrf.mxu0
          %v10367 = vadd.f32 %v10341, %v10366
          %10368 = vdwg.mxu0
          %10369 = vmatpush.msra.mxu0 %v10338
          %10370 = vmatpush.msra.mxu0 %v10337
          %10371 = vmatpush.msra.mxu0 %v10336
          %10372 = vmatpush.msra.mxu0 %v10335
          %10373 = vmatpush.msra.mxu0 %v10334
          %10374 = vmatpush.msra.mxu0 %v10333
          %10375 = vmatpush.msra.mxu0 %v10332
          %10376 = vmatpush.msra.mxu0 %v10331
          %10377 = vmatpush.msra.mxu0 %v10330
          %10378 = vmatpush.msra.mxu0 %v10329
          %10379 = vmatpush.msra.mxu0 %v10328
          %10380 = vmatpush.msra.mxu0 %v10327
          %10381 = vmatpush.msra.mxu0 %v10326
          %10382 = vmatpush.msra.mxu0 %v10325
          %10383 = vmatpush.msra.mxu0 %v10324
          %10384 = vmatpush.msra.mxu0 %v10323
          %10385 = vmatmul.f32.gmra.mxu0 %v10346
          %v10386 = vpop.f32.mrf.mxu0
          %v10387 = vadd.f32 %v10367, %v10386
          %10388 = vdwg.mxu0
          %v10389 = vld [vmem:[#allocation8] sm:$0x3f]
          %v10390 = vld [vmem:[%s4] sm:$0xff]
          %v10391 = vld [vmem:[%s4 + $0x8] sm:$0xff]
          %v10392 = vld [vmem:[%s4 + $0x10] sm:$0xff]
          %v10393 = vld [vmem:[%s4 + $0x18] sm:$0xff]
          %v10394 = vld [vmem:[%s4 + $0x20] sm:$0xff]
          %v10395 = vld [vmem:[%s4 + $0x28] sm:$0xff]
          %v10396 = vld [vmem:[%s4 + $0x30] sm:$0xff]
          %v10397 = vld [vmem:[%s4 + $0x38] sm:$0xff]
          %v10398 = vld [vmem:[%s4 + $0x40] sm:$0xff]
          %v10399 = vld [vmem:[%s4 + $0x48] sm:$0xff]
          %v10400 = vld [vmem:[%s4 + $0x50] sm:$0xff]
          %v10401 = vld [vmem:[%s4 + $0x58] sm:$0xff]
          %v10402 = vld [vmem:[%s4 + $0x60] sm:$0xff]
          %v10403 = vld [vmem:[%s4 + $0x68] sm:$0xff]
          %v10404 = vld [vmem:[%s4 + $0x70] sm:$0xff]
          %v10405 = vld [vmem:[%s4 + $0x78] sm:$0xff]
          %v10406 = vld [vmem:[%s4 + $0x80] sm:$0xff]
          %v10407 = vld [vmem:[%s4 + $0x88] sm:$0xff]
          %v10408 = vld [vmem:[%s4 + $0x90] sm:$0xff]
          %v10409 = vld [vmem:[%s4 + $0x98] sm:$0xff]
          %v10410 = vld [vmem:[%s4 + $0xa0] sm:$0xff]
          %v10411 = vld [vmem:[%s4 + $0xa8] sm:$0xff]
          %v10412 = vld [vmem:[%s4 + $0xb0] sm:$0xff]
          %v10413 = vld [vmem:[%s4 + $0xb8] sm:$0xff]
          %v10414 = vld [vmem:[%s4 + $0xc0] sm:$0xff]
          %v10415 = vld [vmem:[%s4 + $0xc8] sm:$0xff]
          %v10416 = vld [vmem:[%s4 + $0xd0] sm:$0xff]
          %v10417 = vld [vmem:[%s4 + $0xd8] sm:$0xff]
          %v10418 = vld [vmem:[%s4 + $0xe0] sm:$0xff]
          %v10419 = vld [vmem:[%s4 + $0xe8] sm:$0xff]
          %v10420 = vld [vmem:[%s4 + $0xf0] sm:$0xff]
          %v10421 = vld [vmem:[%s4 + $0xf8] sm:$0xff]
          %v10422 = vld [vmem:[%s4 + $0x100] sm:$0xff]
          %v10423 = vld [vmem:[%s4 + $0x108] sm:$0xff]
          %v10424 = vld [vmem:[%s4 + $0x110] sm:$0xff]
          %v10425 = vld [vmem:[%s4 + $0x118] sm:$0xff]
          %v10426 = vld [vmem:[%s4 + $0x120] sm:$0xff]
          %v10427 = vld [vmem:[%s4 + $0x128] sm:$0xff]
          %v10428 = vld [vmem:[%s4 + $0x130] sm:$0xff]
          %v10429 = vld [vmem:[%s4 + $0x138] sm:$0xff]
          %v10430 = vld [vmem:[%s4 + $0x140] sm:$0xff]
          %v10431 = vld [vmem:[%s4 + $0x148] sm:$0xff]
          %v10432 = vld [vmem:[%s4 + $0x150] sm:$0xff]
          %v10433 = vld [vmem:[%s4 + $0x158] sm:$0xff]
          %v10434 = vld [vmem:[%s4 + $0x160] sm:$0xff]
          %v10435 = vld [vmem:[%s4 + $0x168] sm:$0xff]
          %v10436 = vld [vmem:[%s4 + $0x170] sm:$0xff]
          %v10437 = vld [vmem:[%s4 + $0x178] sm:$0xff]
          %v10438 = vld [vmem:[#allocation9] sm:$0x1]
          %v10440 = vperm.slane %v10438, 0
          %10443 = vst [vmem:[#allocation1] ss:$4 sm:$0xff] %v10389
          %v10444 = vld.sshfl [vmem:[#allocation1] sm:$0xff pattern:$0x73625140]
          %v10445 = vld.sshfl [vmem:[#allocation1 + $0x8] sm:$0xff pattern:$0x73625140]
          %v10446 = vld.sshfl [vmem:[#allocation1 + $0x10] sm:$0xff pattern:$0x73625140]
          %10450 = vmatpush.msra.mxu0 %v10405
          %10451 = vmatpush.msra.mxu0 %v10404
          %10452 = vmatpush.msra.mxu0 %v10403
          %10453 = vmatpush.msra.mxu0 %v10402
          %10454 = vmatpush.msra.mxu0 %v10401
          %10455 = vmatpush.msra.mxu0 %v10400
          %10456 = vmatpush.msra.mxu0 %v10399
          %10457 = vmatpush.msra.mxu0 %v10398
          %10458 = vmatpush.msra.mxu0 %v10397
          %10459 = vmatpush.msra.mxu0 %v10396
          %10460 = vmatpush.msra.mxu0 %v10395
          %10461 = vmatpush.msra.mxu0 %v10394
          %10462 = vmatpush.msra.mxu0 %v10393
          %10463 = vmatpush.msra.mxu0 %v10392
          %10464 = vmatpush.msra.mxu0 %v10391
          %10465 = vmatpush.msra.mxu0 %v10390
          %10466 = vmatmul.f32.gmra.mxu0 %v10444
          %v10467 = vpop.f32.mrf.mxu0
          %v10468 = vadd.f32 %v10440, %v10467
          %10469 = vdwg.mxu0
          %10470 = vmatpush.msra.mxu0 %v10421
          %10471 = vmatpush.msra.mxu0 %v10420
          %10472 = vmatpush.msra.mxu0 %v10419
          %10473 = vmatpush.msra.mxu0 %v10418
          %10474 = vmatpush.msra.mxu0 %v10417
          %10475 = vmatpush.msra.mxu0 %v10416
          %10476 = vmatpush.msra.mxu0 %v10415
          %10477 = vmatpush.msra.mxu0 %v10414
          %10478 = vmatpush.msra.mxu0 %v10413
          %10479 = vmatpush.msra.mxu0 %v10412
          %10480 = vmatpush.msra.mxu0 %v10411
          %10481 = vmatpush.msra.mxu0 %v10410
          %10482 = vmatpush.msra.mxu0 %v10409
          %10483 = vmatpush.msra.mxu0 %v10408
          %10484 = vmatpush.msra.mxu0 %v10407
          %10485 = vmatpush.msra.mxu0 %v10406
          %10486 = vmatmul.f32.gmra.mxu0 %v10445
          %v10487 = vpop.f32.mrf.mxu0
          %v10488 = vadd.f32 %v10468, %v10487
          %10489 = vdwg.mxu0
          %10490 = vmatpush.msra.mxu0 %v10437
          %10491 = vmatpush.msra.mxu0 %v10436
          %10492 = vmatpush.msra.mxu0 %v10435
          %10493 = vmatpush.msra.mxu0 %v10434
          %10494 = vmatpush.msra.mxu0 %v10433
          %10495 = vmatpush.msra.mxu0 %v10432
          %10496 = vmatpush.msra.mxu0 %v10431
          %10497 = vmatpush.msra.mxu0 %v10430
          %10498 = vmatpush.msra.mxu0 %v10429
          %10499 = vmatpush.msra.mxu0 %v10428
          %10500 = vmatpush.msra.mxu0 %v10427
          %10501 = vmatpush.msra.mxu0 %v10426
          %10502 = vmatpush.msra.mxu0 %v10425
          %10503 = vmatpush.msra.mxu0 %v10424
          %10504 = vmatpush.msra.mxu0 %v10423
          %10505 = vmatpush.msra.mxu0 %v10422
          %10506 = vmatmul.f32.gmra.mxu0 %v10446
          %v10507 = vpop.f32.mrf.mxu0
          %v10508 = vadd.f32 %v10488, %v10507
          %10509 = vdwg.mxu0
          %v10510 = vmax.f32 %v10508, 0.0
          %v10511 = vld [vmem:[#allocation12] sm:$0xff]
          %v10512 = vld [vmem:[#allocation12 + $0x8] sm:$0xff]
          %v10513 = vld [vmem:[#allocation12 + $0x10] sm:$0xff]
          %v10514 = vld [vmem:[#allocation12 + $0x18] sm:$0xff]
          %v10515 = vld [vmem:[#allocation12 + $0x20] sm:$0xff]
          %v10516 = vld [vmem:[#allocation12 + $0x28] sm:$0xff]
          %v10517 = vld [vmem:[#allocation12 + $0x30] sm:$0xff]
          %v10518 = vld [vmem:[#allocation12 + $0x38] sm:$0xff]
          %v10519 = vld [vmem:[#allocation14] sm:$0xff]
          %v10520 = vld [vmem:[#allocation14 + $0x8] sm:$0xff]
          %v10521 = vld [vmem:[#allocation14 + $0x10] sm:$0xff]
          %v10522 = vld [vmem:[#allocation14 + $0x18] sm:$0xff]
          %v10523 = vld [vmem:[#allocation14 + $0x20] sm:$0xff]
          %v10524 = vld [vmem:[#allocation14 + $0x28] sm:$0xff]
          %v10525 = vld [vmem:[#allocation14 + $0x30] sm:$0xff]
          %v10526 = vld [vmem:[#allocation14 + $0x38] sm:$0xff]
          %vm10527 = vcmask 261120
          %v10529 = vsel %vm10527, %v10387, 0
          %10531 = vmatpush.msra.mxu0 0.0
          %10532 = vmatpush.msra.mxu0 0.0
          %10533 = vmatpush.msra.mxu0 0.0
          %10534 = vmatpush.msra.mxu0 0.0
          %10535 = vmatpush.msra.mxu0 0.0
          %10536 = vmatpush.msra.mxu0 0.0
          %10537 = vmatpush.msra.mxu0 0.0
          %10538 = vmatpush.msra.mxu0 0.0
          %10539 = vmatpush.msra.mxu0 0.0
          %10540 = vmatpush.msra.mxu0 0.0
          %10541 = vmatpush.msra.mxu0 0.0
          %10542 = vmatpush.msra.mxu0 0.0
          %10543 = vmatpush.msra.mxu0 %v10525
          %10544 = vmatpush.msra.mxu0 %v10523
          %10545 = vmatpush.msra.mxu0 %v10521
          %10546 = vmatpush.msra.mxu0 %v10519
          %10547 = vmatmul.f32.gmra.mxu0 %v10529
          %v10548 = vpop.f32.mrf.mxu0
          %v10549 = vadd.f32 0.0, %v10548
          %10550 = vdwg.mxu0
          %10551 = vmatpush.msra.mxu0 0.0
          %10552 = vmatpush.msra.mxu0 0.0
          %10553 = vmatpush.msra.mxu0 0.0
          %10554 = vmatpush.msra.mxu0 0.0
          %10555 = vmatpush.msra.mxu0 0.0
          %10556 = vmatpush.msra.mxu0 0.0
          %10557 = vmatpush.msra.mxu0 0.0
          %10558 = vmatpush.msra.mxu0 0.0
          %10559 = vmatpush.msra.mxu0 0.0
          %10560 = vmatpush.msra.mxu0 0.0
          %10561 = vmatpush.msra.mxu0 0.0
          %10562 = vmatpush.msra.mxu0 0.0
          %10563 = vmatpush.msra.mxu0 %v10526
          %10564 = vmatpush.msra.mxu0 %v10524
          %10565 = vmatpush.msra.mxu0 %v10522
          %10566 = vmatpush.msra.mxu0 %v10520
          %10567 = vmatmul.f32.gmra.mxu0 %v10529
          %v10568 = vpop.f32.mrf.mxu0
          %v10569 = vadd.f32 0.0, %v10568
          %10570 = vdwg.mxu0
          %v10572 = vsel %vm10527, %v10510, 0
          %10574 = vmatpush.msra.mxu0 0.0
          %10575 = vmatpush.msra.mxu0 0.0
          %10576 = vmatpush.msra.mxu0 0.0
          %10577 = vmatpush.msra.mxu0 0.0
          %10578 = vmatpush.msra.mxu0 0.0
          %10579 = vmatpush.msra.mxu0 0.0
          %10580 = vmatpush.msra.mxu0 0.0
          %10581 = vmatpush.msra.mxu0 0.0
          %10582 = vmatpush.msra.mxu0 0.0
          %10583 = vmatpush.msra.mxu0 0.0
          %10584 = vmatpush.msra.mxu0 0.0
          %10585 = vmatpush.msra.mxu0 0.0
          %10586 = vmatpush.msra.mxu0 %v10517
          %10587 = vmatpush.msra.mxu0 %v10515
          %10588 = vmatpush.msra.mxu0 %v10513
          %10589 = vmatpush.msra.mxu0 %v10511
          %10590 = vmatmul.f32.gmra.mxu0 %v10572
          %v10591 = vpop.f32.mrf.mxu0
          %v10592 = vadd.f32 %v10549, %v10591
          %10593 = vdwg.mxu0
          %10594 = vmatpush.msra.mxu0 0.0
          %10595 = vmatpush.msra.mxu0 0.0
          %10596 = vmatpush.msra.mxu0 0.0
          %10597 = vmatpush.msra.mxu0 0.0
          %10598 = vmatpush.msra.mxu0 0.0
          %10599 = vmatpush.msra.mxu0 0.0
          %10600 = vmatpush.msra.mxu0 0.0
          %10601 = vmatpush.msra.mxu0 0.0
          %10602 = vmatpush.msra.mxu0 0.0
          %10603 = vmatpush.msra.mxu0 0.0
          %10604 = vmatpush.msra.mxu0 0.0
          %10605 = vmatpush.msra.mxu0 0.0
          %10606 = vmatpush.msra.mxu0 %v10518
          %10607 = vmatpush.msra.mxu0 %v10516
          %10608 = vmatpush.msra.mxu0 %v10514
          %10609 = vmatpush.msra.mxu0 %v10512
          %10610 = vmatmul.f32.gmra.mxu0 %v10572
          %v10611 = vpop.f32.mrf.mxu0
          %v10612 = vadd.f32 %v10569, %v10611
          %10613 = vdwg.mxu0
          %v10614 = vld [vmem:[#allocation15] sm:$0x3]
          %v10616 = vperm.slane %v10614, 0
          %v10617 = vperm.slane %v10614, 1
          %v10620 = vadd.f32 %v10592, %v10616
          %v10621 = vadd.f32 %v10612, %v10617
          %v10622 = vmax.f32 %v10620, 0.0
          %v10623 = vmax.f32 %v10621, 0.0
          %v10624 = vld [vmem:[%s11] sm:$0xff]
          %v10625 = vld [vmem:[%s11 + $0x8] sm:$0xff]
          %v10626 = vld [vmem:[%s11 + $0x10] sm:$0xff]
          %v10627 = vld [vmem:[%s11 + $0x18] sm:$0xff]
          %v10628 = vld [vmem:[%s11 + $0x20] sm:$0xff]
          %v10629 = vld [vmem:[%s11 + $0x28] sm:$0xff]
          %v10630 = vld [vmem:[%s11 + $0x30] sm:$0xff]
          %v10631 = vld [vmem:[%s11 + $0x38] sm:$0xff]
          %v10632 = vld [vmem:[%s11 + $0x40] sm:$0xff]
          %v10633 = vld [vmem:[%s11 + $0x48] sm:$0xff]
          %v10634 = vld [vmem:[%s11 + $0x50] sm:$0xff]
          %v10635 = vld [vmem:[%s11 + $0x58] sm:$0xff]
          %v10636 = vld [vmem:[%s11 + $0x60] sm:$0xff]
          %v10637 = vld [vmem:[%s11 + $0x68] sm:$0xff]
          %v10638 = vld [vmem:[%s11 + $0x70] sm:$0xff]
          %v10639 = vld [vmem:[%s11 + $0x78] sm:$0xff]
          %v10640 = vld [vmem:[%s11 + $0x80] sm:$0xff]
          %v10641 = vld [vmem:[%s11 + $0x88] sm:$0xff]
          %v10642 = vld [vmem:[%s11 + $0x90] sm:$0xff]
          %v10643 = vld [vmem:[%s11 + $0x98] sm:$0xff]
          %v10644 = vld [vmem:[%s11 + $0xa0] sm:$0xff]
          %v10645 = vld [vmem:[%s11 + $0xa8] sm:$0xff]
          %v10646 = vld [vmem:[%s11 + $0xb0] sm:$0xff]
          %v10647 = vld [vmem:[%s11 + $0xb8] sm:$0xff]
          %v10648 = vld [vmem:[%s11 + $0xc0] sm:$0xff]
          %v10649 = vld [vmem:[%s11 + $0xc8] sm:$0xff]
          %v10650 = vld [vmem:[%s11 + $0xd0] sm:$0xff]
          %v10651 = vld [vmem:[%s11 + $0xd8] sm:$0xff]
          %v10652 = vld [vmem:[%s11 + $0xe0] sm:$0xff]
          %v10653 = vld [vmem:[%s11 + $0xe8] sm:$0xff]
          %v10654 = vld [vmem:[%s11 + $0xf0] sm:$0xff]
          %v10655 = vld [vmem:[%s11 + $0xf8] sm:$0xff]
          %v10656 = vld [vmem:[#allocation3] sm:$0x1]
          %v10658 = vperm.slane %v10656, 0
          %10660 = vmatpush.msra.mxu0 %v10639
          %10661 = vmatpush.msra.mxu0 %v10638
          %10662 = vmatpush.msra.mxu0 %v10637
          %10663 = vmatpush.msra.mxu0 %v10636
          %10664 = vmatpush.msra.mxu0 %v10635
          %10665 = vmatpush.msra.mxu0 %v10634
          %10666 = vmatpush.msra.mxu0 %v10633
          %10667 = vmatpush.msra.mxu0 %v10632
          %10668 = vmatpush.msra.mxu0 %v10631
          %10669 = vmatpush.msra.mxu0 %v10630
          %10670 = vmatpush.msra.mxu0 %v10629
          %10671 = vmatpush.msra.mxu0 %v10628
          %10672 = vmatpush.msra.mxu0 %v10627
          %10673 = vmatpush.msra.mxu0 %v10626
          %10674 = vmatpush.msra.mxu0 %v10625
          %10675 = vmatpush.msra.mxu0 %v10624
          %10676 = vmatmul.f32.gmra.mxu0 %v10622
          %v10677 = vpop.f32.mrf.mxu0
          %v10678 = vadd.f32 %v10658, %v10677
          %10679 = vdwg.mxu0
          %10680 = vmatpush.msra.mxu0 %v10655
          %10681 = vmatpush.msra.mxu0 %v10654
          %10682 = vmatpush.msra.mxu0 %v10653
          %10683 = vmatpush.msra.mxu0 %v10652
          %10684 = vmatpush.msra.mxu0 %v10651
          %10685 = vmatpush.msra.mxu0 %v10650
          %10686 = vmatpush.msra.mxu0 %v10649
          %10687 = vmatpush.msra.mxu0 %v10648
          %10688 = vmatpush.msra.mxu0 %v10647
          %10689 = vmatpush.msra.mxu0 %v10646
          %10690 = vmatpush.msra.mxu0 %v10645
          %10691 = vmatpush.msra.mxu0 %v10644
          %10692 = vmatpush.msra.mxu0 %v10643
          %10693 = vmatpush.msra.mxu0 %v10642
          %10694 = vmatpush.msra.mxu0 %v10641
          %10695 = vmatpush.msra.mxu0 %v10640
          %10696 = vmatmul.f32.gmra.mxu0 %v10623
          %v10697 = vpop.f32.mrf.mxu0
          %v10698 = vadd.f32 %v10678, %v10697
          %10699 = vdwg.mxu0
          %vm10700 = vcmask 1024
          %10701 = vst.msk [vmem:[%s13] sm:$0x3] %vm10700, %v10698
        $region112: #{multimodal_forward.1} parent=71 // pred_fallthru
          _
        // Predicated region
        $region113: #{multimodal_forward.1} parent=71 // pred_check
          %p10702 = pneg %p329
        $region114: #{multimodal_forward.1} parent=71 // pred_check_branch
          %10704 = sbr.rel (%p10702) target = $region116
        $region115: #{multimodal_forward.1} parent=71 // pred_region
          _
        $region116: #{multimodal_forward.1} parent=71 // pred_fallthru
          _
        // Predicated region
        $region117: #{multimodal_forward.1} parent=71 // pred_check
          %p10705 = pneg %p329
        $region118: #{multimodal_forward.1} parent=71 // pred_check_branch
          %10707 = sbr.rel (%p10705) target = $region120
        $region119: #{multimodal_forward.1} parent=71 // pred_region
          _
        $region120: #{multimodal_forward.1} parent=71 // pred_fallthru
          _
      $region72: #{multimodal_forward.1} parent=5 // pred_fallthru
        _
      %p10708 = scmp.le.s32.totalorder 2, %s28
      // Predicated region
      $region121: #{multimodal_forward.1} parent=5 // pred_check
        %p10709 = pneg %p10708
      $region122: #{multimodal_forward.1} parent=5 // pred_check_branch
        %10711 = sbr.rel (%p10709) target = $region124
      $region123: #{multimodal_forward.1} parent=5 // pred_region
        %s10712 = ssub.s32 %s28, 2
      $region124: #{multimodal_forward.1} parent=5 // pred_fallthru
        _
    $region6: #{multimodal_forward.1} parent=1 // loop_footer
      %s32 = sadd.s32 1, %s28
    $region7: #{multimodal_forward.1} parent=1 // loop_footer_branch
      %27 = sbr.rel target = $region3
    $region8: #{multimodal_forward.1} parent=1 // loop_exit
      _
    %10713 = vsyncpa [#allocation5], 1
    %s10714 = scalar_lea.sflag [#allocation5], 1
    %10715 = vsyncpa %s10714, 1
    %10716 = vsyncpa [#allocation7], 1
    %10717 = vsyncpa [#allocation10], 1
    %10718 = vsyncpa [#allocation13], 1
    %10719 = vsyncpa [#allocation16], 1

</llo_original>
